<compile_context>
chip_gen: v6e
topology: v6e:2x2x1
jax: 0.10.0
libtpu: 0.0.40
codegen_flags: <defaults>
</compile_context>

<pallas_src>
import functools

import jax
import jax.numpy as jnp
from jax.experimental import pallas as pl
from jax.experimental.pallas import tpu as pltpu

EPS = 1e-5
_HP = jax.lax.Precision.HIGHEST


def _layernorm(x, gamma, beta):
    mu = jnp.mean(x, axis=-1, keepdims=True)
    var = jnp.mean((x - mu) ** 2, axis=-1, keepdims=True)
    return (x - mu) * jax.lax.rsqrt(var + EPS) * gamma + beta


def _gelu_tanh(x):
    # TODO(synk): nn.GELU default is exact erf-GELU; tanh approximation used (EUP-friendly).
    c = 0.7978845608028654  # sqrt(2/pi)
    return 0.5 * x * (1.0 + jnp.tanh(c * (x + 0.044715 * x * x * x)))


def block_kernel(x_ref, mask_r_ref, mask_k_ref, rpb_ref,
                 g1_ref, b1_ref, wqkv_ref, wproj_ref, bproj_ref,
                 g2_ref, b2_ref, wfc1_ref, bfc1_ref, wfc2_ref, bfc2_ref,
                 out_ref, attn_ref, *, num_heads, scale):
    x = x_ref[0].astype(jnp.float32)            # (N, C)
    mask_r = mask_r_ref[0].astype(jnp.float32)  # (N, 1) token mask over rows
    mask_k = mask_k_ref[0].astype(jnp.float32)  # (1, N) token mask over keys
    N, C = x.shape
    H = num_heads
    dh = C // H

    # Additive key-padding bias rebuilt in-kernel: 0 = attend, -1e9 = blocked key.
    key_bias = (mask_k - 1.0) * 1e9             # (1, N), broadcast over heads/queries

    # ---- norm1 (MaskedLayerNorm) ----
    xn = _layernorm(x, g1_ref[...], b1_ref[...]) * mask_r

    # ---- self-attention (qkv_bias=False) ----
    qkv = jnp.dot(xn, wqkv_ref[...], precision=_HP,
                  preferred_element_type=jnp.float32)             # (N, 3C)

    def split_heads(t):                                           # (N, C) -> (H, N, dh)
        return jnp.transpose(t.reshape(N, H, dh), (1, 0, 2))

    q = split_heads(qkv[:, :C] * scale)                           # scale folded into q
    k = split_heads(qkv[:, C:2 * C])
    v = split_heads(qkv[:, 2 * C:])

    s = jnp.einsum("hnd,hmd->hnm", q, k, precision=_HP,
                   preferred_element_type=jnp.float32)            # (H, N, N)
    s = s + rpb_ref[...] + key_bias
    s = s - jnp.max(s, axis=-1, keepdims=True)
    p = jnp.exp(s)
    p = p * (1.0 / jnp.sum(p, axis=-1, keepdims=True))
    attn_ref[0] = p.astype(attn_ref.dtype)                        # single direct store

    o = jnp.einsum("hnm,hmd->hnd", p, v, precision=_HP,
                   preferred_element_type=jnp.float32)            # (H, N, dh)
    o = jnp.transpose(o, (1, 0, 2)).reshape(N, C)                 # merge heads
    a_out = jnp.dot(o, wproj_ref[...], precision=_HP,
                    preferred_element_type=jnp.float32) + bproj_ref[...]

    # residual 1 (drop_path == Identity)
    x1 = x + a_out

    # ---- norm2 + MLP ----
    xn2 = _layernorm(x1, g2_ref[...], b2_ref[...]) * mask_r
    h1 = _gelu_tanh(jnp.dot(xn2, wfc1_ref[...], precision=_HP,
                            preferred_element_type=jnp.float32) + bfc1_ref[...])
    ffn = jnp.dot(h1, wfc2_ref[...], precision=_HP,
                  preferred_element_type=jnp.float32) + bfc2_ref[...]
    ffn = ffn * mask_r                                            # `ffn * x_mask.unsqueeze(-1)`

    out_ref[0] = (x1 + ffn).astype(out_ref.dtype)


def block_forward(x, x_mask, rpb, params, num_heads):
    B, N, C = x.shape
    H = num_heads
    Hm = params["wfc1"].shape[1]
    scale = (C // H) ** -0.5

    mask_r = x_mask.reshape(B, N, 1).astype(x.dtype)
    mask_k = x_mask.reshape(B, 1, N).astype(x.dtype)

    kernel = functools.partial(block_kernel, num_heads=H, scale=scale)
    bcast2 = lambda b: (0, 0)
    bcast3 = lambda b: (0, 0, 0)

    out_x, attn = pl.pallas_call(
        kernel,
        out_shape=(jax.ShapeDtypeStruct((B, N, C), x.dtype),
                   jax.ShapeDtypeStruct((B, H, N, N), x.dtype)),
        grid=(B,),
        in_specs=[
            pl.BlockSpec((1, N, C), lambda b: (b, 0, 0)),   # x
            pl.BlockSpec((1, N, 1), lambda b: (b, 0, 0)),   # row mask
            pl.BlockSpec((1, 1, N), lambda b: (b, 0, 0)),   # key mask
            pl.BlockSpec((H, N, N), bcast3),                # rpb (shared over batch)
            pl.BlockSpec((1, C), bcast2),                   # gamma1
            pl.BlockSpec((1, C), bcast2),                   # beta1
            pl.BlockSpec((C, 3 * C), bcast2),               # Wqkv  (in, out)
            pl.BlockSpec((C, C), bcast2),                   # Wproj (in, out)
            pl.BlockSpec((1, C), bcast2),                   # bproj
            pl.BlockSpec((1, C), bcast2),                   # gamma2
            pl.BlockSpec((1, C), bcast2),                   # beta2
            pl.BlockSpec((C, Hm), bcast2),                  # Wfc1
            pl.BlockSpec((1, Hm), bcast2),                  # bfc1
            pl.BlockSpec((Hm, C), bcast2),                  # Wfc2
            pl.BlockSpec((1, C), bcast2),                   # bfc2
        ],
        out_specs=(
            pl.BlockSpec((1, N, C), lambda b: (b, 0, 0)),
            pl.BlockSpec((1, H, N, N), lambda b: (b, 0, 0, 0)),
        ),
        compiler_params=pltpu.CompilerParams(
            dimension_semantics=("parallel",)),
    )(x, mask_r, mask_k, rpb,
      params["g1"], params["b1"], params["wqkv"], params["wproj"],
      params["bproj"], params["g2"], params["b2"],
      params["wfc1"], params["bfc1"], params["wfc2"], params["bfc2"])
    return out_x, attn


def ref_forward(x, x_mask, rpb, p, H):
    """Pure-JAX reference of the same Block semantics (y=None path)."""
    B, N, C = x.shape
    dh = C // H
    scale = dh ** -0.5
    mask_r = x_mask[..., None]                                # (B,N,1)
    key_bias = (x_mask[:, None, None, :] - 1.0) * 1e9          # (B,1,1,N)

    xn = _layernorm(x, p["g1"], p["b1"]) * mask_r
    qkv = jnp.dot(xn, p["wqkv"], precision=_HP)                # (B,N,3C)
    qkv = qkv.reshape(B, N, 3, H, dh).transpose(2, 0, 3, 1, 4)  # (3,B,H,N,dh)
    q, k, v = qkv[0] * scale, qkv[1], qkv[2]
    s = jnp.einsum("bhnd,bhmd->bhnm", q, k, precision=_HP)
    s = s + rpb[None, :, :, :] + key_bias
    attn = jax.nn.softmax(s, axis=-1)
    o = jnp.einsum("bhnm,bhmd->bhnd", attn, v, precision=_HP)
    o = o.transpose(0, 2, 1, 3).reshape(B, N, C)
    o = jnp.dot(o, p["wproj"], precision=_HP) + p["bproj"]
    x1 = x + o
    xn2 = _layernorm(x1, p["g2"], p["b2"]) * mask_r
    h1 = _gelu_tanh(jnp.dot(xn2, p["wfc1"], precision=_HP) + p["bfc1"])
    ffn = (jnp.dot(h1, p["wfc2"], precision=_HP) + p["bfc2"]) * mask_r
    return x1 + ffn, attn


if __name__ == "__main__":
    jax.config.update("jax_default_matmul_precision", "highest")

    B, N, C, H = 2, 8, 32, 4
    mlp_ratio = 4.0
    Hm = int(C * mlp_ratio)

    key = jax.random.PRNGKey(0)
    ks = jax.random.split(key, 6)

    x = jax.random.normal(ks[0], (B, N, C), dtype=jnp.float32)

    # x_mask: batch 0 fully valid, batch 1 has last 2 tokens masked out.
    x_mask = jnp.ones((B, N), dtype=jnp.float32).at[1, -2:].set(0.0)

    # Relative position bias, shared across batch, per head.
    rpb = 0.02 * jax.random.normal(ks[1], (H, N, N), dtype=jnp.float32)

    # Deterministic synthetic parameters (weights stored as (in, out)).
    params = {
        "g1": jnp.ones((1, C), jnp.float32),
        "b1": jnp.zeros((1, C), jnp.float32),
        "wqkv": 0.1 * jax.random.normal(ks[2], (C, 3 * C), jnp.float32),
        "wproj": 0.1 * jax.random.normal(ks[3], (C, C), jnp.float32),
        "bproj": jnp.zeros((1, C), jnp.float32),
        "g2": jnp.ones((1, C), jnp.float32),
        "b2": jnp.zeros((1, C), jnp.float32),
        "wfc1": 0.1 * jax.random.normal(ks[4], (C, Hm), jnp.float32),
        "bfc1": jnp.zeros((1, Hm), jnp.float32),
        "wfc2": 0.1 * jax.random.normal(ks[5], (Hm, C), jnp.float32),
        "bfc2": jnp.zeros((1, C), jnp.float32),
    }

    out_x, attn = block_forward(x, x_mask, rpb, params, num_heads=H)
    out_x = jax.block_until_ready(out_x)
    attn = jax.block_until_ready(attn)

    ref_x, ref_attn = ref_forward(x, x_mask, rpb, params, H)

    assert out_x.shape == (B, N, C) and attn.shape == (B, H, N, N)
    assert jnp.allclose(out_x, ref_x, atol=2e-3, rtol=2e-3), "x mismatch"
    assert jnp.allclose(attn, ref_attn, atol=2e-3, rtol=2e-3), "attn mismatch"

    print("KERNEL_OK")
</pallas_src>

<mosaic_0001>
module attributes {stable_mosaic.version = 11 : i64} {
  func.func @block_kernel(%arg0: i32, %arg1: memref<1x8x32xf32, #tpu.memory_space<vmem>>, %arg2: memref<1x8x1xf32, #tpu.memory_space<vmem>>, %arg3: memref<1x1x8xf32, #tpu.memory_space<vmem>>, %arg4: memref<4x8x8xf32, #tpu.memory_space<vmem>>, %arg5: memref<1x32xf32, #tpu.memory_space<vmem>>, %arg6: memref<1x32xf32, #tpu.memory_space<vmem>>, %arg7: memref<32x96xf32, #tpu.memory_space<vmem>>, %arg8: memref<32x32xf32, #tpu.memory_space<vmem>>, %arg9: memref<1x32xf32, #tpu.memory_space<vmem>>, %arg10: memref<1x32xf32, #tpu.memory_space<vmem>>, %arg11: memref<1x32xf32, #tpu.memory_space<vmem>>, %arg12: memref<32x128xf32, #tpu.memory_space<vmem>>, %arg13: memref<1x128xf32, #tpu.memory_space<vmem>>, %arg14: memref<128x32xf32, #tpu.memory_space<vmem>>, %arg15: memref<1x32xf32, #tpu.memory_space<vmem>>, %arg16: memref<1x8x32xf32, #tpu.memory_space<vmem>>, %arg17: memref<1x4x8x8xf32, #tpu.memory_space<vmem>>) attributes {dimension_semantics = [#tpu.dimension_semantics<parallel>], iteration_bounds = array<i64: 2>, scalar_prefetch = 0 : i64, scratch_operands = 0 : i64, tpu.core_type = #tpu.core_type<tc>, window_params = [{transform_indices = @transform_0, window_bounds = array<i64: 1, 8, 32>}, {transform_indices = @transform_1, window_bounds = array<i64: 1, 8, 1>}, {transform_indices = @transform_2, window_bounds = array<i64: 1, 1, 8>}, {pipeline_mode = #tpu.pipeline_mode<synchronous>, transform_indices = @transform_3, window_bounds = array<i64: 4, 8, 8>}, {pipeline_mode = #tpu.pipeline_mode<synchronous>, transform_indices = @transform_4, window_bounds = array<i64: 1, 32>}, {pipeline_mode = #tpu.pipeline_mode<synchronous>, transform_indices = @transform_5, window_bounds = array<i64: 1, 32>}, {pipeline_mode = #tpu.pipeline_mode<synchronous>, transform_indices = @transform_6, window_bounds = array<i64: 32, 96>}, {pipeline_mode = #tpu.pipeline_mode<synchronous>, transform_indices = @transform_7, window_bounds = array<i64: 32, 32>}, {pipeline_mode = #tpu.pipeline_mode<synchronous>, transform_indices = @transform_8, window_bounds = array<i64: 1, 32>}, {pipeline_mode = #tpu.pipeline_mode<synchronous>, transform_indices = @transform_9, window_bounds = array<i64: 1, 32>}, {pipeline_mode = #tpu.pipeline_mode<synchronous>, transform_indices = @transform_10, window_bounds = array<i64: 1, 32>}, {pipeline_mode = #tpu.pipeline_mode<synchronous>, transform_indices = @transform_11, window_bounds = array<i64: 32, 128>}, {pipeline_mode = #tpu.pipeline_mode<synchronous>, transform_indices = @transform_12, window_bounds = array<i64: 1, 128>}, {pipeline_mode = #tpu.pipeline_mode<synchronous>, transform_indices = @transform_13, window_bounds = array<i64: 128, 32>}, {pipeline_mode = #tpu.pipeline_mode<synchronous>, transform_indices = @transform_14, window_bounds = array<i64: 1, 32>}, {transform_indices = @transform_15, window_bounds = array<i64: 1, 8, 32>}, {transform_indices = @transform_16, window_bounds = array<i64: 1, 4, 8, 8>}]} {
    %c0 = arith.constant 0 : index
    %c0_0 = arith.constant 0 : index
    %c0_1 = arith.constant 0 : index
    %0 = vector.load %arg1[%c0, %c0_0, %c0_1] : memref<1x8x32xf32, #tpu.memory_space<vmem>>, vector<1x8x32xf32>
    %1 = vector.shape_cast %0 : vector<1x8x32xf32> to vector<8x32xf32>
    %c0_2 = arith.constant 0 : index
    %c0_3 = arith.constant 0 : index
    %c0_4 = arith.constant 0 : index
    %2 = vector.load %arg2[%c0_2, %c0_3, %c0_4] : memref<1x8x1xf32, #tpu.memory_space<vmem>>, vector<1x8x1xf32>
    %3 = vector.shape_cast %2 : vector<1x8x1xf32> to vector<8x1xf32>
    %c0_5 = arith.constant 0 : index
    %c0_6 = arith.constant 0 : index
    %c0_7 = arith.constant 0 : index
    %4 = vector.load %arg3[%c0_5, %c0_6, %c0_7] : memref<1x1x8xf32, #tpu.memory_space<vmem>>, vector<1x1x8xf32>
    %5 = vector.shape_cast %4 : vector<1x1x8xf32> to vector<1x8xf32>
    %cst = arith.constant 1.000000e+00 : f32
    %6 = vector.broadcast %cst : f32 to vector<1x8xf32>
    %7 = arith.subf %5, %6 : vector<1x8xf32>
    %cst_8 = arith.constant 1.000000e+09 : f32
    %8 = vector.broadcast %cst_8 : f32 to vector<1x8xf32>
    %9 = arith.mulf %7, %8 : vector<1x8xf32>
    %c0_9 = arith.constant 0 : index
    %c0_10 = arith.constant 0 : index
    %10 = vector.load %arg5[%c0_9, %c0_10] : memref<1x32xf32, #tpu.memory_space<vmem>>, vector<1x32xf32>
    %c0_11 = arith.constant 0 : index
    %c0_12 = arith.constant 0 : index
    %11 = vector.load %arg6[%c0_11, %c0_12] : memref<1x32xf32, #tpu.memory_space<vmem>>, vector<1x32xf32>
    %cst_13 = arith.constant dense<0.000000e+00> : vector<8xf32>
    %12 = vector.multi_reduction <add>, %1, %cst_13 [1] : vector<8x32xf32> to vector<8xf32>
    %13 = vector.shape_cast %12 : vector<8xf32> to vector<8x1xf32>
    %cst_14 = arith.constant 3.200000e+01 : f32
    %14 = vector.broadcast %cst_14 : f32 to vector<8x1xf32>
    %15 = arith.divf %13, %14 : vector<8x1xf32>
    %16 = vector.broadcast %15 : vector<8x1xf32> to vector<8x32xf32>
    %17 = arith.subf %1, %16 : vector<8x32xf32>
    %18 = arith.mulf %17, %17 : vector<8x32xf32>
    %cst_15 = arith.constant dense<0.000000e+00> : vector<8xf32>
    %19 = vector.multi_reduction <add>, %18, %cst_15 [1] : vector<8x32xf32> to vector<8xf32>
    %20 = vector.shape_cast %19 : vector<8xf32> to vector<8x1xf32>
    %cst_16 = arith.constant 3.200000e+01 : f32
    %21 = vector.broadcast %cst_16 : f32 to vector<8x1xf32>
    %22 = arith.divf %20, %21 : vector<8x1xf32>
    %23 = vector.broadcast %15 : vector<8x1xf32> to vector<8x32xf32>
    %24 = arith.subf %1, %23 : vector<8x32xf32>
    %cst_17 = arith.constant 9.99999974E-6 : f32
    %25 = vector.broadcast %cst_17 : f32 to vector<8x1xf32>
    %26 = arith.addf %22, %25 : vector<8x1xf32>
    %27 = math.rsqrt %26 : vector<8x1xf32>
    %28 = vector.broadcast %27 : vector<8x1xf32> to vector<8x32xf32>
    %29 = arith.mulf %24, %28 : vector<8x32xf32>
    %30 = vector.broadcast %10 : vector<1x32xf32> to vector<8x32xf32>
    %31 = arith.mulf %29, %30 : vector<8x32xf32>
    %32 = vector.broadcast %11 : vector<1x32xf32> to vector<8x32xf32>
    %33 = arith.addf %31, %32 : vector<8x32xf32>
    %34 = vector.broadcast %3 : vector<8x1xf32> to vector<8x32xf32>
    %35 = arith.mulf %33, %34 : vector<8x32xf32>
    %c0_18 = arith.constant 0 : index
    %c0_19 = arith.constant 0 : index
    %36 = vector.load %arg7[%c0_18, %c0_19] : memref<32x96xf32, #tpu.memory_space<vmem>>, vector<32x96xf32>
    %cst_20 = arith.constant dense<0.000000e+00> : vector<8x96xf32>
    %37 = tpu.matmul %35, %36, %cst_20 {dimension_numbers = #tpu.dot_dimension_numbers<[1], [0], [0], [1], [0, 0, 1, 1], [], []>, precision = #tpu.contract_precision<fp32>} : vector<8x32xf32>, vector<32x96xf32>, vector<8x96xf32> -> vector<8x96xf32>
    %38 = vector.extract_strided_slice %37 {offsets = [0, 0], sizes = [8, 32], strides = [1, 1]} : vector<8x96xf32> to vector<8x32xf32>
    %cst_21 = arith.constant 0.353553385 : f32
    %39 = vector.broadcast %cst_21 : f32 to vector<8x32xf32>
    %40 = arith.mulf %38, %39 : vector<8x32xf32>
    %41 = vector.shape_cast %40 : vector<8x32xf32> to vector<8x4x8xf32>
    %42 = tpu.transpose %41, [1, 0, 2] : vector<8x4x8xf32> -> vector<4x8x8xf32>
    %43 = vector.extract_strided_slice %37 {offsets = [0, 32], sizes = [8, 32], strides = [1, 1]} : vector<8x96xf32> to vector<8x32xf32>
    %44 = vector.shape_cast %43 : vector<8x32xf32> to vector<8x4x8xf32>
    %45 = tpu.transpose %44, [1, 0, 2] : vector<8x4x8xf32> -> vector<4x8x8xf32>
    %46 = vector.extract_strided_slice %37 {offsets = [0, 64], sizes = [8, 32], strides = [1, 1]} : vector<8x96xf32> to vector<8x32xf32>
    %47 = vector.shape_cast %46 : vector<8x32xf32> to vector<8x4x8xf32>
    %48 = tpu.transpose %47, [1, 0, 2] : vector<8x4x8xf32> -> vector<4x8x8xf32>
    "tpu.trace_start"() <{level = 10 : i32, message = "hnd,hmd->hnm"}> : () -> ()
    %cst_22 = arith.constant dense<0.000000e+00> : vector<4x8x8xf32>
    %49 = tpu.matmul %42, %45, %cst_22 {dimension_numbers = #tpu.dot_dimension_numbers<[2], [2], [1], [1], [0, 0, 0, 1, 1, 1], [0], [0]>, precision = #tpu.contract_precision<fp32>} : vector<4x8x8xf32>, vector<4x8x8xf32>, vector<4x8x8xf32> -> vector<4x8x8xf32>
    "tpu.trace_stop"() : () -> ()
    %c0_23 = arith.constant 0 : index
    %c0_24 = arith.constant 0 : index
    %c0_25 = arith.constant 0 : index
    %50 = vector.load %arg4[%c0_23, %c0_24, %c0_25] : memref<4x8x8xf32, #tpu.memory_space<vmem>>, vector<4x8x8xf32>
    %51 = arith.addf %49, %50 : vector<4x8x8xf32>
    %52 = vector.shape_cast %9 : vector<1x8xf32> to vector<1x1x8xf32>
    %53 = vector.broadcast %52 : vector<1x1x8xf32> to vector<4x8x8xf32>
    %54 = arith.addf %51, %53 : vector<4x8x8xf32>
    %cst_26 = arith.constant dense<0xFF800000> : vector<4x8xf32>
    %55 = vector.multi_reduction <maximumf>, %54, %cst_26 [2] : vector<4x8x8xf32> to vector<4x8xf32>
    %56 = vector.shape_cast %55 : vector<4x8xf32> to vector<4x8x1xf32>
    %57 = vector.broadcast %56 : vector<4x8x1xf32> to vector<4x8x8xf32>
    %58 = arith.subf %54, %57 : vector<4x8x8xf32>
    %59 = math.exp %58 : vector<4x8x8xf32>
    %cst_27 = arith.constant dense<0.000000e+00> : vector<4x8xf32>
    %60 = vector.multi_reduction <add>, %59, %cst_27 [2] : vector<4x8x8xf32> to vector<4x8xf32>
    %61 = vector.shape_cast %60 : vector<4x8xf32> to vector<4x8x1xf32>
    %cst_28 = arith.constant 1.000000e+00 : f32
    %62 = vector.broadcast %cst_28 : f32 to vector<4x8x1xf32>
    %63 = arith.divf %62, %61 : vector<4x8x1xf32>
    %64 = vector.broadcast %63 : vector<4x8x1xf32> to vector<4x8x8xf32>
    %65 = arith.mulf %59, %64 : vector<4x8x8xf32>
    %c0_29 = arith.constant 0 : index
    %c0_30 = arith.constant 0 : index
    %c0_31 = arith.constant 0 : index
    %c0_32 = arith.constant 0 : index
    %66 = vector.load %arg17[%c0_29, %c0_30, %c0_31, %c0_32] : memref<1x4x8x8xf32, #tpu.memory_space<vmem>>, vector<1x4x8x8xf32>
    %67 = vector.shape_cast %66 : vector<1x4x8x8xf32> to vector<4x8x8xf32>
    %68 = vector.shape_cast %65 : vector<4x8x8xf32> to vector<1x4x8x8xf32>
    tpu.vector_store %arg17[%c0_29, %c0_30, %c0_31, %c0_32], %68 {strides = array<i32>} : memref<1x4x8x8xf32, #tpu.memory_space<vmem>>, vector<1x4x8x8xf32>,
    "tpu.trace_start"() <{level = 10 : i32, message = "hnm,hmd->hnd"}> : () -> ()
    %cst_33 = arith.constant dense<0.000000e+00> : vector<4x8x8xf32>
    %69 = tpu.matmul %65, %48, %cst_33 {dimension_numbers = #tpu.dot_dimension_numbers<[2], [1], [1], [2], [0, 0, 0, 1, 1, 2], [0], [0]>, precision = #tpu.contract_precision<fp32>} : vector<4x8x8xf32>, vector<4x8x8xf32>, vector<4x8x8xf32> -> vector<4x8x8xf32>
    "tpu.trace_stop"() : () -> ()
    %70 = tpu.transpose %69, [1, 0, 2] : vector<4x8x8xf32> -> vector<8x4x8xf32>
    %71 = vector.shape_cast %70 : vector<8x4x8xf32> to vector<8x32xf32>
    %c0_34 = arith.constant 0 : index
    %c0_35 = arith.constant 0 : index
    %72 = vector.load %arg8[%c0_34, %c0_35] : memref<32x32xf32, #tpu.memory_space<vmem>>, vector<32x32xf32>
    %cst_36 = arith.constant dense<0.000000e+00> : vector<8x32xf32>
    %73 = tpu.matmul %71, %72, %cst_36 {dimension_numbers = #tpu.dot_dimension_numbers<[1], [0], [0], [1], [0, 0, 1, 1], [], []>, precision = #tpu.contract_precision<fp32>} : vector<8x32xf32>, vector<32x32xf32>, vector<8x32xf32> -> vector<8x32xf32>
    %c0_37 = arith.constant 0 : index
    %c0_38 = arith.constant 0 : index
    %74 = vector.load %arg9[%c0_37, %c0_38] : memref<1x32xf32, #tpu.memory_space<vmem>>, vector<1x32xf32>
    %75 = vector.broadcast %74 : vector<1x32xf32> to vector<8x32xf32>
    %76 = arith.addf %73, %75 : vector<8x32xf32>
    %77 = arith.addf %1, %76 : vector<8x32xf32>
    %c0_39 = arith.constant 0 : index
    %c0_40 = arith.constant 0 : index
    %78 = vector.load %arg10[%c0_39, %c0_40] : memref<1x32xf32, #tpu.memory_space<vmem>>, vector<1x32xf32>
    %c0_41 = arith.constant 0 : index
    %c0_42 = arith.constant 0 : index
    %79 = vector.load %arg11[%c0_41, %c0_42] : memref<1x32xf32, #tpu.memory_space<vmem>>, vector<1x32xf32>
    %cst_43 = arith.constant dense<0.000000e+00> : vector<8xf32>
    %80 = vector.multi_reduction <add>, %77, %cst_43 [1] : vector<8x32xf32> to vector<8xf32>
    %81 = vector.shape_cast %80 : vector<8xf32> to vector<8x1xf32>
    %cst_44 = arith.constant 3.200000e+01 : f32
    %82 = vector.broadcast %cst_44 : f32 to vector<8x1xf32>
    %83 = arith.divf %81, %82 : vector<8x1xf32>
    %84 = vector.broadcast %83 : vector<8x1xf32> to vector<8x32xf32>
    %85 = arith.subf %77, %84 : vector<8x32xf32>
    %86 = arith.mulf %85, %85 : vector<8x32xf32>
    %cst_45 = arith.constant dense<0.000000e+00> : vector<8xf32>
    %87 = vector.multi_reduction <add>, %86, %cst_45 [1] : vector<8x32xf32> to vector<8xf32>
    %88 = vector.shape_cast %87 : vector<8xf32> to vector<8x1xf32>
    %cst_46 = arith.constant 3.200000e+01 : f32
    %89 = vector.broadcast %cst_46 : f32 to vector<8x1xf32>
    %90 = arith.divf %88, %89 : vector<8x1xf32>
    %91 = vector.broadcast %83 : vector<8x1xf32> to vector<8x32xf32>
    %92 = arith.subf %77, %91 : vector<8x32xf32>
    %cst_47 = arith.constant 9.99999974E-6 : f32
    %93 = vector.broadcast %cst_47 : f32 to vector<8x1xf32>
    %94 = arith.addf %90, %93 : vector<8x1xf32>
    %95 = math.rsqrt %94 : vector<8x1xf32>
    %96 = vector.broadcast %95 : vector<8x1xf32> to vector<8x32xf32>
    %97 = arith.mulf %92, %96 : vector<8x32xf32>
    %98 = vector.broadcast %78 : vector<1x32xf32> to vector<8x32xf32>
    %99 = arith.mulf %97, %98 : vector<8x32xf32>
    %100 = vector.broadcast %79 : vector<1x32xf32> to vector<8x32xf32>
    %101 = arith.addf %99, %100 : vector<8x32xf32>
    %102 = vector.broadcast %3 : vector<8x1xf32> to vector<8x32xf32>
    %103 = arith.mulf %101, %102 : vector<8x32xf32>
    %c0_48 = arith.constant 0 : index
    %c0_49 = arith.constant 0 : index
    %104 = vector.load %arg12[%c0_48, %c0_49] : memref<32x128xf32, #tpu.memory_space<vmem>>, vector<32x128xf32>
    %cst_50 = arith.constant dense<0.000000e+00> : vector<8x128xf32>
    %105 = tpu.matmul %103, %104, %cst_50 {dimension_numbers = #tpu.dot_dimension_numbers<[1], [0], [0], [1], [0, 0, 1, 1], [], []>, precision = #tpu.contract_precision<fp32>} : vector<8x32xf32>, vector<32x128xf32>, vector<8x128xf32> -> vector<8x128xf32>
    %c0_51 = arith.constant 0 : index
    %c0_52 = arith.constant 0 : index
    %106 = vector.load %arg13[%c0_51, %c0_52] : memref<1x128xf32, #tpu.memory_space<vmem>>, vector<1x128xf32>
    %107 = vector.broadcast %106 : vector<1x128xf32> to vector<8x128xf32>
    %108 = arith.addf %105, %107 : vector<8x128xf32>
    %cst_53 = arith.constant 5.000000e-01 : f32
    %109 = vector.broadcast %cst_53 : f32 to vector<8x128xf32>
    %110 = arith.mulf %109, %108 : vector<8x128xf32>
    %cst_54 = arith.constant 4.471500e-02 : f32
    %111 = vector.broadcast %cst_54 : f32 to vector<8x128xf32>
    %112 = arith.mulf %111, %108 : vector<8x128xf32>
    %113 = arith.mulf %112, %108 : vector<8x128xf32>
    %114 = arith.mulf %113, %108 : vector<8x128xf32>
    %115 = arith.addf %108, %114 : vector<8x128xf32>
    %cst_55 = arith.constant 0.797884583 : f32
    %116 = vector.broadcast %cst_55 : f32 to vector<8x128xf32>
    %117 = arith.mulf %116, %115 : vector<8x128xf32>
    %118 = math.tanh %117 : vector<8x128xf32>
    %cst_56 = arith.constant 1.000000e+00 : f32
    %119 = vector.broadcast %cst_56 : f32 to vector<8x128xf32>
    %120 = arith.addf %119, %118 : vector<8x128xf32>
    %121 = arith.mulf %110, %120 : vector<8x128xf32>
    %c0_57 = arith.constant 0 : index
    %c0_58 = arith.constant 0 : index
    %122 = vector.load %arg14[%c0_57, %c0_58] : memref<128x32xf32, #tpu.memory_space<vmem>>, vector<128x32xf32>
    %cst_59 = arith.constant dense<0.000000e+00> : vector<8x32xf32>
    %123 = tpu.matmul %121, %122, %cst_59 {dimension_numbers = #tpu.dot_dimension_numbers<[1], [0], [0], [1], [0, 0, 1, 1], [], []>, precision = #tpu.contract_precision<fp32>} : vector<8x128xf32>, vector<128x32xf32>, vector<8x32xf32> -> vector<8x32xf32>
    %c0_60 = arith.constant 0 : index
    %c0_61 = arith.constant 0 : index
    %124 = vector.load %arg15[%c0_60, %c0_61] : memref<1x32xf32, #tpu.memory_space<vmem>>, vector<1x32xf32>
    %125 = vector.broadcast %124 : vector<1x32xf32> to vector<8x32xf32>
    %126 = arith.addf %123, %125 : vector<8x32xf32>
    %127 = vector.broadcast %3 : vector<8x1xf32> to vector<8x32xf32>
    %128 = arith.mulf %126, %127 : vector<8x32xf32>
    %129 = arith.addf %77, %128 : vector<8x32xf32>
    %c0_62 = arith.constant 0 : index
    %c0_63 = arith.constant 0 : index
    %c0_64 = arith.constant 0 : index
    %130 = vector.load %arg16[%c0_62, %c0_63, %c0_64] : memref<1x8x32xf32, #tpu.memory_space<vmem>>, vector<1x8x32xf32>
    %131 = vector.shape_cast %130 : vector<1x8x32xf32> to vector<8x32xf32>
    %132 = vector.shape_cast %129 : vector<8x32xf32> to vector<1x8x32xf32>
    tpu.vector_store %arg16[%c0_62, %c0_63, %c0_64], %132 {strides = array<i32>} : memref<1x8x32xf32, #tpu.memory_space<vmem>>, vector<1x8x32xf32>,
    return
  }
  func.func @transform_0(%arg0: i32) -> (i32, i32, i32) {
    %c0_i32 = arith.constant 0 : i32
    %c0_i32_0 = arith.constant 0 : i32
    %c0_i32_1 = arith.constant 0 : i32
    return %arg0, %c0_i32, %c0_i32_0 : i32, i32, i32
  }
  func.func @transform_1(%arg0: i32) -> (i32, i32, i32) {
    %c0_i32 = arith.constant 0 : i32
    %c0_i32_0 = arith.constant 0 : i32
    %c0_i32_1 = arith.constant 0 : i32
    return %arg0, %c0_i32, %c0_i32_0 : i32, i32, i32
  }
  func.func @transform_2(%arg0: i32) -> (i32, i32, i32) {
    %c0_i32 = arith.constant 0 : i32
    %c0_i32_0 = arith.constant 0 : i32
    %c0_i32_1 = arith.constant 0 : i32
    return %arg0, %c0_i32, %c0_i32_0 : i32, i32, i32
  }
  func.func @transform_3(%arg0: i32) -> (i32, i32, i32) {
    %c0_i32 = arith.constant 0 : i32
    %c0_i32_0 = arith.constant 0 : i32
    %c0_i32_1 = arith.constant 0 : i32
    %c0_i32_2 = arith.constant 0 : i32
    return %c0_i32, %c0_i32_0, %c0_i32_1 : i32, i32, i32
  }
  func.func @transform_4(%arg0: i32) -> (i32, i32) {
    %c0_i32 = arith.constant 0 : i32
    %c0_i32_0 = arith.constant 0 : i32
    %c0_i32_1 = arith.constant 0 : i32
    return %c0_i32, %c0_i32_0 : i32, i32
  }
  func.func @transform_5(%arg0: i32) -> (i32, i32) {
    %c0_i32 = arith.constant 0 : i32
    %c0_i32_0 = arith.constant 0 : i32
    %c0_i32_1 = arith.constant 0 : i32
    return %c0_i32, %c0_i32_0 : i32, i32
  }
  func.func @transform_6(%arg0: i32) -> (i32, i32) {
    %c0_i32 = arith.constant 0 : i32
    %c0_i32_0 = arith.constant 0 : i32
    %c0_i32_1 = arith.constant 0 : i32
    return %c0_i32, %c0_i32_0 : i32, i32
  }
  func.func @transform_7(%arg0: i32) -> (i32, i32) {
    %c0_i32 = arith.constant 0 : i32
    %c0_i32_0 = arith.constant 0 : i32
    %c0_i32_1 = arith.constant 0 : i32
    return %c0_i32, %c0_i32_0 : i32, i32
  }
  func.func @transform_8(%arg0: i32) -> (i32, i32) {
    %c0_i32 = arith.constant 0 : i32
    %c0_i32_0 = arith.constant 0 : i32
    %c0_i32_1 = arith.constant 0 : i32
    return %c0_i32, %c0_i32_0 : i32, i32
  }
  func.func @transform_9(%arg0: i32) -> (i32, i32) {
    %c0_i32 = arith.constant 0 : i32
    %c0_i32_0 = arith.constant 0 : i32
    %c0_i32_1 = arith.constant 0 : i32
    return %c0_i32, %c0_i32_0 : i32, i32
  }
  func.func @transform_10(%arg0: i32) -> (i32, i32) {
    %c0_i32 = arith.constant 0 : i32
    %c0_i32_0 = arith.constant 0 : i32
    %c0_i32_1 = arith.constant 0 : i32
    return %c0_i32, %c0_i32_0 : i32, i32
  }
  func.func @transform_11(%arg0: i32) -> (i32, i32) {
    %c0_i32 = arith.constant 0 : i32
    %c0_i32_0 = arith.constant 0 : i32
    %c0_i32_1 = arith.constant 0 : i32
    return %c0_i32, %c0_i32_0 : i32, i32
  }
  func.func @transform_12(%arg0: i32) -> (i32, i32) {
    %c0_i32 = arith.constant 0 : i32
    %c0_i32_0 = arith.constant 0 : i32
    %c0_i32_1 = arith.constant 0 : i32
    return %c0_i32, %c0_i32_0 : i32, i32
  }
  func.func @transform_13(%arg0: i32) -> (i32, i32) {
    %c0_i32 = arith.constant 0 : i32
    %c0_i32_0 = arith.constant 0 : i32
    %c0_i32_1 = arith.constant 0 : i32
    return %c0_i32, %c0_i32_0 : i32, i32
  }
  func.func @transform_14(%arg0: i32) -> (i32, i32) {
    %c0_i32 = arith.constant 0 : i32
    %c0_i32_0 = arith.constant 0 : i32
    %c0_i32_1 = arith.constant 0 : i32
    return %c0_i32, %c0_i32_0 : i32, i32
  }
  func.func @transform_15(%arg0: i32) -> (i32, i32, i32) {
    %c0_i32 = arith.constant 0 : i32
    %c0_i32_0 = arith.constant 0 : i32
    %c0_i32_1 = arith.constant 0 : i32
    return %arg0, %c0_i32, %c0_i32_0 : i32, i32, i32
  }
  func.func @transform_16(%arg0: i32) -> (i32, i32, i32, i32) {
    %c0_i32 = arith.constant 0 : i32
    %c0_i32_0 = arith.constant 0 : i32
    %c0_i32_1 = arith.constant 0 : i32
    %c0_i32_2 = arith.constant 0 : i32
    return %arg0, %c0_i32, %c0_i32_0, %c0_i32_1 : i32, i32, i32, i32
  }
}

</mosaic_0001>

<llo_original>
// kernel: tpu_custom_call.1
$region0: #{tpu_custom_call.1}
  #allocation0 [shape = 'u32[]', space=smem, size = 0x4, offset = 0x4, fixed_abs, tag = 'smem constant byte address 0x4 - core index']
  #allocation1 [shape = 'u32[144,128]{1,0:T(1,128)}', space=vmem, size = 0x12000, scoped, tag = 'internal scratch']
  %s0 = inlined_call_operand.vmem [shape: f32[2,8,32], index: 0, kind: input, shape index: {}]
  %s1 = inlined_call_operand.vmem [shape: f32[2,8,1], index: 1, kind: input, shape index: {}]
  %s2 = inlined_call_operand.vmem [shape: f32[2,1,8], index: 2, kind: input, shape index: {}]
  %s3 = inlined_call_operand.vmem [shape: f32[4,8,8], index: 3, kind: input, shape index: {}]
  %s4 = inlined_call_operand.vmem [shape: f32[1,32], index: 4, kind: input, shape index: {}]
  %s5 = inlined_call_operand.vmem [shape: f32[1,32], index: 5, kind: input, shape index: {}]
  %s6 = inlined_call_operand.vmem [shape: f32[32,96], index: 6, kind: input, shape index: {}]
  %s7 = inlined_call_operand.vmem [shape: f32[32,32], index: 7, kind: input, shape index: {}]
  %s8 = inlined_call_operand.vmem [shape: f32[1,32], index: 8, kind: input, shape index: {}]
  %s9 = inlined_call_operand.vmem [shape: f32[1,32], index: 9, kind: input, shape index: {}]
  %s10 = inlined_call_operand.vmem [shape: f32[1,32], index: 10, kind: input, shape index: {}]
  %s11 = inlined_call_operand.vmem [shape: f32[32,128], index: 11, kind: input, shape index: {}]
  %s12 = inlined_call_operand.vmem [shape: f32[1,128], index: 12, kind: input, shape index: {}]
  %s13 = inlined_call_operand.vmem [shape: f32[128,32], index: 13, kind: input, shape index: {}]
  %s14 = inlined_call_operand.vmem [shape: f32[1,32], index: 14, kind: input, shape index: {}]
  %s15 = inlined_call_operand.hbm [shape: f32[2,8,32], index: 15, kind: output, shape index: {0}]
  %s16 = inlined_call_operand.hbm [shape: f32[2,4,8,8], index: 16, kind: output, shape index: {1}]
  %17 = xla_tuple %s15, %s16
  %s18 = sld [smem:[#allocation0]]
  $region101: #{tpu_custom_call.1} parent=0
    _
  %s20 = ssub.s32 1, %s18
  %s21 = scalar_select 0, %s20, %s18
  $region1: #{tpu_custom_call.1} parent=0
    #allocation2 [shape = 'u8[8192]{0}', space=vmem, size = 0x2000, scoped, tag = 'output window, operand 0']
    #allocation3 [shape = 's32[2]{0}', space=sflag, size = 0x8, scoped, tag = 'scoped memory for tpu_custom_call.1']
    #allocation4 [shape = 'u8[32768]{0}', space=vmem, size = 0x8000, scoped, tag = 'output window, operand 1']
    #allocation5 [shape = 's32[2]{0}', space=sflag, size = 0x8, scoped, tag = 'scoped memory for tpu_custom_call.1']
    %22 = vsyncpa [#allocation3], 0
    %s23 = scalar_lea.sflag [#allocation3], 1
    %24 = vsyncpa %s23, 0
    %25 = vsyncpa [#allocation5], 0
    %s26 = scalar_lea.sflag [#allocation5], 1
    %27 = vsyncpa %s26, 0
    loop: start=0, step=1, limit=4
    $region2: #{tpu_custom_call.1} parent=1 // loop_pre_header
      _
    $region3: #{tpu_custom_call.1} parent=1 // loop_header
      %s29 = sphi 0, %s33
      %p30 = scmp.ge.s32.totalorder %s29, 4
      %s39 = sphi 0, %s41
      %s42 = sphi 0, %s39
      %s43 = sphi 0, %s42
      %s59 = sphi 0, %s43
      %s65 = sphi 0, %s67
      %s68 = sphi 0, %s65
      %s69 = sphi 0, %s68
      %s85 = sphi 0, %s69
      %s91 = sphi 0, %s93
      %s94 = sphi 0, %s91
      %s95 = sphi 0, %s94
      %s111 = sphi 0, %s95
      %s115 = sphi 0, %s115
      %s117 = sphi 0, %s115
      %s118 = sphi 0, %s117
      %s132 = sphi 0, %s118
      %s136 = sphi 0, %s136
      %s138 = sphi 0, %s136
      %s139 = sphi 0, %s138
      %s153 = sphi 0, %s139
      %s157 = sphi 0, %s157
      %s159 = sphi 0, %s157
      %s160 = sphi 0, %s159
      %s174 = sphi 0, %s160
      %s178 = sphi 0, %s178
      %s180 = sphi 0, %s178
      %s181 = sphi 0, %s180
      %s195 = sphi 0, %s181
      %s199 = sphi 0, %s199
      %s201 = sphi 0, %s199
      %s202 = sphi 0, %s201
      %s216 = sphi 0, %s202
      %s220 = sphi 0, %s220
      %s222 = sphi 0, %s220
      %s223 = sphi 0, %s222
      %s237 = sphi 0, %s223
      %s241 = sphi 0, %s241
      %s243 = sphi 0, %s241
      %s244 = sphi 0, %s243
      %s258 = sphi 0, %s244
      %s262 = sphi 0, %s262
      %s264 = sphi 0, %s262
      %s265 = sphi 0, %s264
      %s279 = sphi 0, %s265
      %s283 = sphi 0, %s283
      %s285 = sphi 0, %s283
      %s286 = sphi 0, %s285
      %s300 = sphi 0, %s286
      %s304 = sphi 0, %s304
      %s306 = sphi 0, %s304
      %s307 = sphi 0, %s306
      %s321 = sphi 0, %s307
      %s325 = sphi 0, %s325
      %s327 = sphi 0, %s325
      %s328 = sphi 0, %s327
      %s342 = sphi 0, %s328
      %s346 = sphi 0, %s346
      %s348 = sphi 0, %s346
      %s349 = sphi 0, %s348
      %s363 = sphi 0, %s349
      %s369 = sphi 0, %s371
      %s372 = sphi 0, %s369
      %s373 = sphi 0, %s372
      %s389 = sphi 0, %s373
      %s395 = sphi 0, %s397
      %s398 = sphi 0, %s395
      %s399 = sphi 0, %s398
      %s415 = sphi 0, %s399
    $region4: #{tpu_custom_call.1} parent=1 // loop_header_branch
      %32 = sbr.rel (%p30) target = $region8
    $region5: #{tpu_custom_call.1} parent=1 // loop_body
      %s34 = ssub.s32 %s29, 1
      %s35 = ssub.s32 %s29, 2
      %s36 = sadd.s32 %s29, 1
      %s37 = ssub.s32 %s29, %s36
      %p38 = scmp.eq.s32.totalorder %s37, 0
      %s40 = sadd.s32 %s39, 1
      %s41 = scalar_select %p38, %s39, %s40
      %p44 = pneg %p38
      %p45 = scmp.eq.s32.totalorder %s29, 1
      %p46 = por %p44, %p45
      %p47 = scmp.ne.s32.totalorder %s39, %s42
      %p48 = scmp.eq.s32.totalorder %s29, 0
      %p49 = por %p47, %p48
      %p50 = scmp.ne.s32.totalorder %s39, %s42
      %p51 = scmp.eq.s32.totalorder %s34, 1
      %p52 = por %p50, %p51
      %p53 = scmp.ne.s32.totalorder %s42, %s43
      %p54 = scmp.eq.s32.totalorder %s34, 0
      %p55 = por %p53, %p54
      %p56 = scmp.ne.s32.totalorder %s42, %s43
      %p57 = scmp.eq.s32.totalorder %s35, 1
      %p58 = por %p56, %p57
      %p60 = scmp.ne.s32.totalorder %s43, %s59
      %p61 = scmp.eq.s32.totalorder %s35, 0
      %p62 = por %p60, %p61
      %s63 = ssub.s32 %s29, %s36
      %p64 = scmp.eq.s32.totalorder %s63, 0
      %s66 = sadd.s32 %s65, 1
      %s67 = scalar_select %p64, %s65, %s66
      %p70 = pneg %p64
      %p71 = scmp.eq.s32.totalorder %s29, 1
      %p72 = por %p70, %p71
      %p73 = scmp.ne.s32.totalorder %s65, %s68
      %p74 = scmp.eq.s32.totalorder %s29, 0
      %p75 = por %p73, %p74
      %p76 = scmp.ne.s32.totalorder %s65, %s68
      %p77 = scmp.eq.s32.totalorder %s34, 1
      %p78 = por %p76, %p77
      %p79 = scmp.ne.s32.totalorder %s68, %s69
      %p80 = scmp.eq.s32.totalorder %s34, 0
      %p81 = por %p79, %p80
      %p82 = scmp.ne.s32.totalorder %s68, %s69
      %p83 = scmp.eq.s32.totalorder %s35, 1
      %p84 = por %p82, %p83
      %p86 = scmp.ne.s32.totalorder %s69, %s85
      %p87 = scmp.eq.s32.totalorder %s35, 0
      %p88 = por %p86, %p87
      %s89 = ssub.s32 %s29, %s36
      %p90 = scmp.eq.s32.totalorder %s89, 0
      %s92 = sadd.s32 %s91, 1
      %s93 = scalar_select %p90, %s91, %s92
      %p96 = pneg %p90
      %p97 = scmp.eq.s32.totalorder %s29, 1
      %p98 = por %p96, %p97
      %p99 = scmp.ne.s32.totalorder %s91, %s94
      %p100 = scmp.eq.s32.totalorder %s29, 0
      %p101 = por %p99, %p100
      %p102 = scmp.ne.s32.totalorder %s91, %s94
      %p103 = scmp.eq.s32.totalorder %s34, 1
      %p104 = por %p102, %p103
      %p105 = scmp.ne.s32.totalorder %s94, %s95
      %p106 = scmp.eq.s32.totalorder %s34, 0
      %p107 = por %p105, %p106
      %p108 = scmp.ne.s32.totalorder %s94, %s95
      %p109 = scmp.eq.s32.totalorder %s35, 1
      %p110 = por %p108, %p109
      %p112 = scmp.ne.s32.totalorder %s95, %s111
      %p113 = scmp.eq.s32.totalorder %s35, 0
      %p114 = por %p112, %p113
      %s116 = sadd.s32 %s115, 1
      %p119 = scmp.eq.s32.totalorder %s29, 1
      %p120 = scmp.ne.s32.totalorder %s115, %s117
      %p121 = scmp.eq.s32.totalorder %s29, 0
      %p122 = por %p120, %p121
      %p123 = scmp.ne.s32.totalorder %s115, %s117
      %p124 = scmp.eq.s32.totalorder %s34, 1
      %p125 = por %p123, %p124
      %p126 = scmp.ne.s32.totalorder %s117, %s118
      %p127 = scmp.eq.s32.totalorder %s34, 0
      %p128 = por %p126, %p127
      %p129 = scmp.ne.s32.totalorder %s117, %s118
      %p130 = scmp.eq.s32.totalorder %s35, 1
      %p131 = por %p129, %p130
      %p133 = scmp.ne.s32.totalorder %s118, %s132
      %p134 = scmp.eq.s32.totalorder %s35, 0
      %p135 = por %p133, %p134
      %s137 = sadd.s32 %s136, 1
      %p140 = scmp.eq.s32.totalorder %s29, 1
      %p141 = scmp.ne.s32.totalorder %s136, %s138
      %p142 = scmp.eq.s32.totalorder %s29, 0
      %p143 = por %p141, %p142
      %p144 = scmp.ne.s32.totalorder %s136, %s138
      %p145 = scmp.eq.s32.totalorder %s34, 1
      %p146 = por %p144, %p145
      %p147 = scmp.ne.s32.totalorder %s138, %s139
      %p148 = scmp.eq.s32.totalorder %s34, 0
      %p149 = por %p147, %p148
      %p150 = scmp.ne.s32.totalorder %s138, %s139
      %p151 = scmp.eq.s32.totalorder %s35, 1
      %p152 = por %p150, %p151
      %p154 = scmp.ne.s32.totalorder %s139, %s153
      %p155 = scmp.eq.s32.totalorder %s35, 0
      %p156 = por %p154, %p155
      %s158 = sadd.s32 %s157, 1
      %p161 = scmp.eq.s32.totalorder %s29, 1
      %p162 = scmp.ne.s32.totalorder %s157, %s159
      %p163 = scmp.eq.s32.totalorder %s29, 0
      %p164 = por %p162, %p163
      %p165 = scmp.ne.s32.totalorder %s157, %s159
      %p166 = scmp.eq.s32.totalorder %s34, 1
      %p167 = por %p165, %p166
      %p168 = scmp.ne.s32.totalorder %s159, %s160
      %p169 = scmp.eq.s32.totalorder %s34, 0
      %p170 = por %p168, %p169
      %p171 = scmp.ne.s32.totalorder %s159, %s160
      %p172 = scmp.eq.s32.totalorder %s35, 1
      %p173 = por %p171, %p172
      %p175 = scmp.ne.s32.totalorder %s160, %s174
      %p176 = scmp.eq.s32.totalorder %s35, 0
      %p177 = por %p175, %p176
      %s179 = sadd.s32 %s178, 1
      %p182 = scmp.eq.s32.totalorder %s29, 1
      %p183 = scmp.ne.s32.totalorder %s178, %s180
      %p184 = scmp.eq.s32.totalorder %s29, 0
      %p185 = por %p183, %p184
      %p186 = scmp.ne.s32.totalorder %s178, %s180
      %p187 = scmp.eq.s32.totalorder %s34, 1
      %p188 = por %p186, %p187
      %p189 = scmp.ne.s32.totalorder %s180, %s181
      %p190 = scmp.eq.s32.totalorder %s34, 0
      %p191 = por %p189, %p190
      %p192 = scmp.ne.s32.totalorder %s180, %s181
      %p193 = scmp.eq.s32.totalorder %s35, 1
      %p194 = por %p192, %p193
      %p196 = scmp.ne.s32.totalorder %s181, %s195
      %p197 = scmp.eq.s32.totalorder %s35, 0
      %p198 = por %p196, %p197
      %s200 = sadd.s32 %s199, 1
      %p203 = scmp.eq.s32.totalorder %s29, 1
      %p204 = scmp.ne.s32.totalorder %s199, %s201
      %p205 = scmp.eq.s32.totalorder %s29, 0
      %p206 = por %p204, %p205
      %p207 = scmp.ne.s32.totalorder %s199, %s201
      %p208 = scmp.eq.s32.totalorder %s34, 1
      %p209 = por %p207, %p208
      %p210 = scmp.ne.s32.totalorder %s201, %s202
      %p211 = scmp.eq.s32.totalorder %s34, 0
      %p212 = por %p210, %p211
      %p213 = scmp.ne.s32.totalorder %s201, %s202
      %p214 = scmp.eq.s32.totalorder %s35, 1
      %p215 = por %p213, %p214
      %p217 = scmp.ne.s32.totalorder %s202, %s216
      %p218 = scmp.eq.s32.totalorder %s35, 0
      %p219 = por %p217, %p218
      %s221 = sadd.s32 %s220, 1
      %p224 = scmp.eq.s32.totalorder %s29, 1
      %p225 = scmp.ne.s32.totalorder %s220, %s222
      %p226 = scmp.eq.s32.totalorder %s29, 0
      %p227 = por %p225, %p226
      %p228 = scmp.ne.s32.totalorder %s220, %s222
      %p229 = scmp.eq.s32.totalorder %s34, 1
      %p230 = por %p228, %p229
      %p231 = scmp.ne.s32.totalorder %s222, %s223
      %p232 = scmp.eq.s32.totalorder %s34, 0
      %p233 = por %p231, %p232
      %p234 = scmp.ne.s32.totalorder %s222, %s223
      %p235 = scmp.eq.s32.totalorder %s35, 1
      %p236 = por %p234, %p235
      %p238 = scmp.ne.s32.totalorder %s223, %s237
      %p239 = scmp.eq.s32.totalorder %s35, 0
      %p240 = por %p238, %p239
      %s242 = sadd.s32 %s241, 1
      %p245 = scmp.eq.s32.totalorder %s29, 1
      %p246 = scmp.ne.s32.totalorder %s241, %s243
      %p247 = scmp.eq.s32.totalorder %s29, 0
      %p248 = por %p246, %p247
      %p249 = scmp.ne.s32.totalorder %s241, %s243
      %p250 = scmp.eq.s32.totalorder %s34, 1
      %p251 = por %p249, %p250
      %p252 = scmp.ne.s32.totalorder %s243, %s244
      %p253 = scmp.eq.s32.totalorder %s34, 0
      %p254 = por %p252, %p253
      %p255 = scmp.ne.s32.totalorder %s243, %s244
      %p256 = scmp.eq.s32.totalorder %s35, 1
      %p257 = por %p255, %p256
      %p259 = scmp.ne.s32.totalorder %s244, %s258
      %p260 = scmp.eq.s32.totalorder %s35, 0
      %p261 = por %p259, %p260
      %s263 = sadd.s32 %s262, 1
      %p266 = scmp.eq.s32.totalorder %s29, 1
      %p267 = scmp.ne.s32.totalorder %s262, %s264
      %p268 = scmp.eq.s32.totalorder %s29, 0
      %p269 = por %p267, %p268
      %p270 = scmp.ne.s32.totalorder %s262, %s264
      %p271 = scmp.eq.s32.totalorder %s34, 1
      %p272 = por %p270, %p271
      %p273 = scmp.ne.s32.totalorder %s264, %s265
      %p274 = scmp.eq.s32.totalorder %s34, 0
      %p275 = por %p273, %p274
      %p276 = scmp.ne.s32.totalorder %s264, %s265
      %p277 = scmp.eq.s32.totalorder %s35, 1
      %p278 = por %p276, %p277
      %p280 = scmp.ne.s32.totalorder %s265, %s279
      %p281 = scmp.eq.s32.totalorder %s35, 0
      %p282 = por %p280, %p281
      %s284 = sadd.s32 %s283, 1
      %p287 = scmp.eq.s32.totalorder %s29, 1
      %p288 = scmp.ne.s32.totalorder %s283, %s285
      %p289 = scmp.eq.s32.totalorder %s29, 0
      %p290 = por %p288, %p289
      %p291 = scmp.ne.s32.totalorder %s283, %s285
      %p292 = scmp.eq.s32.totalorder %s34, 1
      %p293 = por %p291, %p292
      %p294 = scmp.ne.s32.totalorder %s285, %s286
      %p295 = scmp.eq.s32.totalorder %s34, 0
      %p296 = por %p294, %p295
      %p297 = scmp.ne.s32.totalorder %s285, %s286
      %p298 = scmp.eq.s32.totalorder %s35, 1
      %p299 = por %p297, %p298
      %p301 = scmp.ne.s32.totalorder %s286, %s300
      %p302 = scmp.eq.s32.totalorder %s35, 0
      %p303 = por %p301, %p302
      %s305 = sadd.s32 %s304, 1
      %p308 = scmp.eq.s32.totalorder %s29, 1
      %p309 = scmp.ne.s32.totalorder %s304, %s306
      %p310 = scmp.eq.s32.totalorder %s29, 0
      %p311 = por %p309, %p310
      %p312 = scmp.ne.s32.totalorder %s304, %s306
      %p313 = scmp.eq.s32.totalorder %s34, 1
      %p314 = por %p312, %p313
      %p315 = scmp.ne.s32.totalorder %s306, %s307
      %p316 = scmp.eq.s32.totalorder %s34, 0
      %p317 = por %p315, %p316
      %p318 = scmp.ne.s32.totalorder %s306, %s307
      %p319 = scmp.eq.s32.totalorder %s35, 1
      %p320 = por %p318, %p319
      %p322 = scmp.ne.s32.totalorder %s307, %s321
      %p323 = scmp.eq.s32.totalorder %s35, 0
      %p324 = por %p322, %p323
      %s326 = sadd.s32 %s325, 1
      %p329 = scmp.eq.s32.totalorder %s29, 1
      %p330 = scmp.ne.s32.totalorder %s325, %s327
      %p331 = scmp.eq.s32.totalorder %s29, 0
      %p332 = por %p330, %p331
      %p333 = scmp.ne.s32.totalorder %s325, %s327
      %p334 = scmp.eq.s32.totalorder %s34, 1
      %p335 = por %p333, %p334
      %p336 = scmp.ne.s32.totalorder %s327, %s328
      %p337 = scmp.eq.s32.totalorder %s34, 0
      %p338 = por %p336, %p337
      %p339 = scmp.ne.s32.totalorder %s327, %s328
      %p340 = scmp.eq.s32.totalorder %s35, 1
      %p341 = por %p339, %p340
      %p343 = scmp.ne.s32.totalorder %s328, %s342
      %p344 = scmp.eq.s32.totalorder %s35, 0
      %p345 = por %p343, %p344
      %s347 = sadd.s32 %s346, 1
      %p350 = scmp.eq.s32.totalorder %s29, 1
      %p351 = scmp.ne.s32.totalorder %s346, %s348
      %p352 = scmp.eq.s32.totalorder %s29, 0
      %p353 = por %p351, %p352
      %p354 = scmp.ne.s32.totalorder %s346, %s348
      %p355 = scmp.eq.s32.totalorder %s34, 1
      %p356 = por %p354, %p355
      %p357 = scmp.ne.s32.totalorder %s348, %s349
      %p358 = scmp.eq.s32.totalorder %s34, 0
      %p359 = por %p357, %p358
      %p360 = scmp.ne.s32.totalorder %s348, %s349
      %p361 = scmp.eq.s32.totalorder %s35, 1
      %p362 = por %p360, %p361
      %p364 = scmp.ne.s32.totalorder %s349, %s363
      %p365 = scmp.eq.s32.totalorder %s35, 0
      %p366 = por %p364, %p365
      %s367 = ssub.s32 %s29, %s36
      %p368 = scmp.eq.s32.totalorder %s367, 0
      %s370 = sadd.s32 %s369, 1
      %s371 = scalar_select %p368, %s369, %s370
      %p374 = pneg %p368
      %p375 = scmp.eq.s32.totalorder %s29, 1
      %p376 = por %p374, %p375
      %p377 = scmp.ne.s32.totalorder %s369, %s372
      %p378 = scmp.eq.s32.totalorder %s29, 0
      %p379 = por %p377, %p378
      %p380 = scmp.ne.s32.totalorder %s369, %s372
      %p381 = scmp.eq.s32.totalorder %s34, 1
      %p382 = por %p380, %p381
      %p383 = scmp.ne.s32.totalorder %s372, %s373
      %p384 = scmp.eq.s32.totalorder %s34, 0
      %p385 = por %p383, %p384
      %p386 = scmp.ne.s32.totalorder %s372, %s373
      %p387 = scmp.eq.s32.totalorder %s35, 1
      %p388 = por %p386, %p387
      %p390 = scmp.ne.s32.totalorder %s373, %s389
      %p391 = scmp.eq.s32.totalorder %s35, 0
      %p392 = por %p390, %p391
      %s393 = ssub.s32 %s29, %s36
      %p394 = scmp.eq.s32.totalorder %s393, 0
      %s396 = sadd.s32 %s395, 1
      %s397 = scalar_select %p394, %s395, %s396
      %p400 = pneg %p394
      %p401 = scmp.eq.s32.totalorder %s29, 1
      %p402 = por %p400, %p401
      %p403 = scmp.ne.s32.totalorder %s395, %s398
      %p404 = scmp.eq.s32.totalorder %s29, 0
      %p405 = por %p403, %p404
      %p406 = scmp.ne.s32.totalorder %s395, %s398
      %p407 = scmp.eq.s32.totalorder %s34, 1
      %p408 = por %p406, %p407
      %p409 = scmp.ne.s32.totalorder %s398, %s399
      %p410 = scmp.eq.s32.totalorder %s34, 0
      %p411 = por %p409, %p410
      %p412 = scmp.ne.s32.totalorder %s398, %s399
      %p413 = scmp.eq.s32.totalorder %s35, 1
      %p414 = por %p412, %p413
      %p416 = scmp.ne.s32.totalorder %s399, %s415
      %p417 = scmp.eq.s32.totalorder %s35, 0
      %p418 = por %p416, %p417
      %p419 = scmp.le.s32.totalorder 1, %s29
      %p420 = scmp.lt.s32.totalorder %s29, 3
      %p421 = pnand %p419, %p420
      %p422 = pneg %p421
      // Predicated region
      $region9: #{tpu_custom_call.1} parent=5 // pred_check
        _
      $region10: #{tpu_custom_call.1} parent=5 // pred_check_branch
        %424 = sbr.rel (%p421) target = $region12
      $region11: #{tpu_custom_call.1} parent=5 // pred_region
        %s425 = ssub.s32 %s29, 1
        // Predicated region
        $region13: #{tpu_custom_call.1} parent=11 // pred_check
          %p426 = pneg %p128
        $region14: #{tpu_custom_call.1} parent=11 // pred_check_branch
          %428 = sbr.rel (%p426) target = $region16
        $region15: #{tpu_custom_call.1} parent=11 // pred_region
          _
        $region16: #{tpu_custom_call.1} parent=11 // pred_fallthru
          _
        // Predicated region
        $region17: #{tpu_custom_call.1} parent=11 // pred_check
          %p429 = pneg %p149
        $region18: #{tpu_custom_call.1} parent=11 // pred_check_branch
          %431 = sbr.rel (%p429) target = $region20
        $region19: #{tpu_custom_call.1} parent=11 // pred_region
          _
        $region20: #{tpu_custom_call.1} parent=11 // pred_fallthru
          _
        // Predicated region
        $region21: #{tpu_custom_call.1} parent=11 // pred_check
          %p432 = pneg %p170
        $region22: #{tpu_custom_call.1} parent=11 // pred_check_branch
          %434 = sbr.rel (%p432) target = $region24
        $region23: #{tpu_custom_call.1} parent=11 // pred_region
          _
        $region24: #{tpu_custom_call.1} parent=11 // pred_fallthru
          _
        // Predicated region
        $region25: #{tpu_custom_call.1} parent=11 // pred_check
          %p435 = pneg %p191
        $region26: #{tpu_custom_call.1} parent=11 // pred_check_branch
          %437 = sbr.rel (%p435) target = $region28
        $region27: #{tpu_custom_call.1} parent=11 // pred_region
          _
        $region28: #{tpu_custom_call.1} parent=11 // pred_fallthru
          _
        // Predicated region
        $region29: #{tpu_custom_call.1} parent=11 // pred_check
          %p438 = pneg %p212
        $region30: #{tpu_custom_call.1} parent=11 // pred_check_branch
          %440 = sbr.rel (%p438) target = $region32
        $region31: #{tpu_custom_call.1} parent=11 // pred_region
          _
        $region32: #{tpu_custom_call.1} parent=11 // pred_fallthru
          _
        // Predicated region
        $region33: #{tpu_custom_call.1} parent=11 // pred_check
          %p441 = pneg %p233
        $region34: #{tpu_custom_call.1} parent=11 // pred_check_branch
          %443 = sbr.rel (%p441) target = $region36
        $region35: #{tpu_custom_call.1} parent=11 // pred_region
          _
        $region36: #{tpu_custom_call.1} parent=11 // pred_fallthru
          _
        // Predicated region
        $region37: #{tpu_custom_call.1} parent=11 // pred_check
          %p444 = pneg %p254
        $region38: #{tpu_custom_call.1} parent=11 // pred_check_branch
          %446 = sbr.rel (%p444) target = $region40
        $region39: #{tpu_custom_call.1} parent=11 // pred_region
          _
        $region40: #{tpu_custom_call.1} parent=11 // pred_fallthru
          _
        // Predicated region
        $region41: #{tpu_custom_call.1} parent=11 // pred_check
          %p447 = pneg %p275
        $region42: #{tpu_custom_call.1} parent=11 // pred_check_branch
          %449 = sbr.rel (%p447) target = $region44
        $region43: #{tpu_custom_call.1} parent=11 // pred_region
          _
        $region44: #{tpu_custom_call.1} parent=11 // pred_fallthru
          _
        // Predicated region
        $region45: #{tpu_custom_call.1} parent=11 // pred_check
          %p450 = pneg %p296
        $region46: #{tpu_custom_call.1} parent=11 // pred_check_branch
          %452 = sbr.rel (%p450) target = $region48
        $region47: #{tpu_custom_call.1} parent=11 // pred_region
          _
        $region48: #{tpu_custom_call.1} parent=11 // pred_fallthru
          _
        // Predicated region
        $region49: #{tpu_custom_call.1} parent=11 // pred_check
          %p453 = pneg %p317
        $region50: #{tpu_custom_call.1} parent=11 // pred_check_branch
          %455 = sbr.rel (%p453) target = $region52
        $region51: #{tpu_custom_call.1} parent=11 // pred_region
          _
        $region52: #{tpu_custom_call.1} parent=11 // pred_fallthru
          _
        // Predicated region
        $region53: #{tpu_custom_call.1} parent=11 // pred_check
          %p456 = pneg %p338
        $region54: #{tpu_custom_call.1} parent=11 // pred_check_branch
          %458 = sbr.rel (%p456) target = $region56
        $region55: #{tpu_custom_call.1} parent=11 // pred_region
          _
        $region56: #{tpu_custom_call.1} parent=11 // pred_fallthru
          _
        // Predicated region
        $region57: #{tpu_custom_call.1} parent=11 // pred_check
          %p459 = pneg %p359
        $region58: #{tpu_custom_call.1} parent=11 // pred_check_branch
          %461 = sbr.rel (%p459) target = $region60
        $region59: #{tpu_custom_call.1} parent=11 // pred_region
          _
        $region60: #{tpu_custom_call.1} parent=11 // pred_fallthru
          _
      $region12: #{tpu_custom_call.1} parent=5 // pred_fallthru
        _
      %p462 = scmp.lt.s32.totalorder %s29, 2
      // Predicated region
      $region61: #{tpu_custom_call.1} parent=5 // pred_check
        %p463 = pneg %p462
      $region62: #{tpu_custom_call.1} parent=5 // pred_check_branch
        %465 = sbr.rel (%p463) target = $region64
      $region63: #{tpu_custom_call.1} parent=5 // pred_region
        // Predicated region
        $region65: #{tpu_custom_call.1} parent=63 // pred_check
          %p466 = pneg %p49
        $region66: #{tpu_custom_call.1} parent=63 // pred_check_branch
          %468 = sbr.rel (%p466) target = $region68
        $region67: #{tpu_custom_call.1} parent=63 // pred_region
          %p469 = scmp.lt.s32.totalorder %s29, 1
          %s470 = scalar_select %p469, %s29, 1
          %s471 = smul.addr %s470, 8
          %s472 = scalar_lea.vmem %s0, %s471
        $region68: #{tpu_custom_call.1} parent=63 // pred_fallthru
          _
        // Predicated region
        $region69: #{tpu_custom_call.1} parent=63 // pred_check
          %p473 = pneg %p75
        $region70: #{tpu_custom_call.1} parent=63 // pred_check_branch
          %475 = sbr.rel (%p473) target = $region72
        $region71: #{tpu_custom_call.1} parent=63 // pred_region
          %p476 = scmp.lt.s32.totalorder %s29, 1
          %s477 = scalar_select %p476, %s29, 1
          %s478 = smul.addr %s477, 8
          %s479 = scalar_lea.vmem %s1, %s478
        $region72: #{tpu_custom_call.1} parent=63 // pred_fallthru
          _
        // Predicated region
        $region73: #{tpu_custom_call.1} parent=63 // pred_check
          %p480 = pneg %p101
        $region74: #{tpu_custom_call.1} parent=63 // pred_check_branch
          %482 = sbr.rel (%p480) target = $region76
        $region75: #{tpu_custom_call.1} parent=63 // pred_region
          %p483 = scmp.lt.s32.totalorder %s29, 1
          %s484 = scalar_select %p483, %s29, 1
          %s485 = scalar_lea.vmem %s2, %s484
        $region76: #{tpu_custom_call.1} parent=63 // pred_fallthru
          _
      $region64: #{tpu_custom_call.1} parent=5 // pred_fallthru
        _
      %p486 = scmp.le.s32.totalorder 1, %s29
      %p487 = scmp.lt.s32.totalorder %s29, 3
      %p488 = pnand %p486, %p487
      %p489 = pneg %p488
      // Predicated region
      $region77: #{tpu_custom_call.1} parent=5 // pred_check
        _
      $region78: #{tpu_custom_call.1} parent=5 // pred_check_branch
        %491 = sbr.rel (%p488) target = $region80
      $region79: #{tpu_custom_call.1} parent=5 // pred_region
        %s492 = ssub.s32 %s29, 1
        %p493 = scmp.lt.s32.totalorder %s34, 1
        %s494 = scalar_select %p493, %s34, 1
        %s495 = smul.addr %s494, 8
        %s496 = scalar_lea.vmem %s0, %s495
        %p497 = pneg %p55
        %p498 = pneg %p52
        %p499 = scmp.lt.s32.totalorder %s34, 1
        %s500 = scalar_select %p499, %s34, 1
        %s501 = smul.addr %s500, 8
        %s502 = scalar_lea.vmem %s1, %s501
        %p503 = pneg %p81
        %p504 = pneg %p78
        %p505 = scmp.lt.s32.totalorder %s34, 1
        %s506 = scalar_select %p505, %s34, 1
        %s507 = scalar_lea.vmem %s2, %s506
        %p508 = pneg %p107
        %p509 = pneg %p104
        %p510 = pneg %p128
        %p511 = pneg %p125
        %p512 = pneg %p149
        %p513 = pneg %p146
        %p514 = pneg %p170
        %p515 = pneg %p167
        %p516 = pneg %p191
        %p517 = pneg %p188
        %p518 = pneg %p212
        %p519 = pneg %p209
        %p520 = pneg %p233
        %p521 = pneg %p230
        %p522 = pneg %p254
        %p523 = pneg %p251
        %p524 = pneg %p275
        %p525 = pneg %p272
        %p526 = pneg %p296
        %p527 = pneg %p293
        %p528 = pneg %p317
        %p529 = pneg %p314
        %p530 = pneg %p338
        %p531 = pneg %p335
        %p532 = pneg %p359
        %p533 = pneg %p356
        %p534 = pneg %p385
        %p535 = pneg %p382
        %s536 = sand.u32 %s372, 1
        %s537 = scalar_lea.sflag [#allocation3], %s536
        %s538 = sand.u32 %s372, 1
        %s539 = smul.addr %s538, 8
        %s540 = scalar_lea.vmem [#allocation2], %s539
        %p541 = pneg %p411
        %p542 = pneg %p408
        %s543 = sand.u32 %s398, 1
        %s544 = scalar_lea.sflag [#allocation5], %s543
        %s545 = sand.u32 %s398, 1
        %s546 = smul.addr %s545, 32
        %s547 = scalar_lea.vmem [#allocation4], %s546
        %p548 = scmp.lt.s32.totalorder %s34, 1
        %s549 = scalar_select %p548, %s34, 1
        %s550 = smul.addr %s549, 8
        %s551 = scalar_lea.vmem %s0, %s550
        %p552 = scmp.lt.s32.totalorder %s34, 1
        %s553 = scalar_select %p552, %s34, 1
        %s554 = smul.addr %s553, 8
        %s555 = scalar_lea.vmem %s1, %s554
        %p556 = scmp.lt.s32.totalorder %s34, 1
        %s557 = scalar_select %p556, %s34, 1
        %s558 = scalar_lea.vmem %s2, %s557
        %v559 = vld [vmem:[%s551] sm:$0xff]
        %v560 = vld [vmem:[%s555] sm:$0xff]
        %v561 = vld [vmem:[%s558] sm:$0x1]
        %v562 = vsub.f32 %v561, 1.0
        %v563 = vmul.f32 %v562, 1e+09
        %v564 = vld [vmem:[%s4] sm:$0x1]
        %v565 = vld [vmem:[%s5] sm:$0x1]
        %vm566 = vcmask 261120
        %v567 = vsel %vm566, %v559, 0.0
        %568 = vadd.xlane.f32.xlu0 %v567
        %v569 = vpop.xlane.xlu0 %568
        %v570 = vrcp.pop 32.0
        %v571 = vmul.f32 %v569, %v570
        %v572 = vsub.f32 %v559, %v571
        %v573 = vmul.f32 %v572, %v572
        %v574 = vsel %vm566, %v573, 0.0
        %575 = vadd.xlane.f32.xlu0 %v574
        %v576 = vpop.xlane.xlu0 %575
        %v577 = vmul.f32 %v576, %v570
        %v578 = vadd.f32 %v577, 1e-05
        %v579 = vrsqrt.pop %v578
        %v580 = vmul.f32 %v572, %v579
        %v582 = vlaneseq
        %v583 = vshrl.u32 %v582, 7
        %v584 = vsub.s32 0, %v583
        %v585 = vrot.slane %v564, %v584
        %v587 = vmul.f32 %v580, %v585
        %v589 = vlaneseq
        %v590 = vshrl.u32 %v589, 7
        %v591 = vsub.s32 0, %v590
        %v592 = vrot.slane %v565, %v591
        %v594 = vadd.f32 %v587, %v592
        %596 = vset.pattern.permute.xlu0 0
        %597 = vperm.xlu0 %596, %v560
        %v598 = vpop.permute.xlu0 %597
        %v600 = vmul.f32 %v594, %v598
        %v601 = vld [vmem:[%s6] sm:$0xff]
        %v602 = vld [vmem:[%s6 + $0x8] sm:$0xff]
        %v603 = vld [vmem:[%s6 + $0x10] sm:$0xff]
        %v604 = vld [vmem:[%s6 + $0x18] sm:$0xff]
        %v606 = vsel %vm566, %v600, 0
        %608 = vmatprep.subr.mxu0 0.0
        %609 = vmatpush1.msra.mxu0 0.0
        %610 = vmatprep.subr.mxu0 0.0
        %611 = vmatpush1.msra.mxu0 0.0
        %612 = vmatprep.subr.mxu0 0.0
        %613 = vmatpush1.msra.mxu0 0.0
        %614 = vmatprep.subr.mxu0 0.0
        %615 = vmatpush1.msra.mxu0 0.0
        %616 = vmatprep.subr.mxu0 0.0
        %617 = vmatpush1.msra.mxu0 0.0
        %618 = vmatprep.subr.mxu0 0.0
        %619 = vmatpush1.msra.mxu0 0.0
        %620 = vmatprep.subr.mxu0 0.0
        %621 = vmatpush1.msra.mxu0 0.0
        %622 = vmatprep.subr.mxu0 0.0
        %623 = vmatpush1.msra.mxu0 0.0
        %624 = vmatprep.subr.mxu0 0.0
        %625 = vmatpush1.msra.mxu0 0.0
        %626 = vmatprep.subr.mxu0 0.0
        %627 = vmatpush1.msra.mxu0 0.0
        %628 = vmatprep.subr.mxu0 0.0
        %629 = vmatpush1.msra.mxu0 0.0
        %630 = vmatprep.subr.mxu0 0.0
        %631 = vmatpush1.msra.mxu0 0.0
        %632 = vmatprep.subr.mxu0 0.0
        %v633 = vand.u32 %v604, 4294901760
        %634 = vmatpush1.msra.mxu0 %v633
        %635 = vmatprep.subr.mxu0 0.0
        %v636 = vand.u32 %v603, 4294901760
        %637 = vmatpush1.msra.mxu0 %v636
        %638 = vmatprep.subr.mxu0 0.0
        %v639 = vand.u32 %v602, 4294901760
        %640 = vmatpush1.msra.mxu0 %v639
        %641 = vmatprep.subr.mxu0 0.0
        %v642 = vand.u32 %v601, 4294901760
        %643 = vmatpush1.msra.mxu0 %v642
        %644 = vmatprep.subr.mxu0 0.0
        %645 = vmatpush2.msra.mxu0 0.0
        %646 = vmatprep.subr.mxu0 0.0
        %647 = vmatpush2.msra.mxu0 0.0
        %648 = vmatprep.subr.mxu0 0.0
        %649 = vmatpush2.msra.mxu0 0.0
        %650 = vmatprep.subr.mxu0 0.0
        %651 = vmatpush2.msra.mxu0 0.0
        %652 = vmatprep.subr.mxu0 0.0
        %653 = vmatpush2.msra.mxu0 0.0
        %654 = vmatprep.subr.mxu0 0.0
        %655 = vmatpush2.msra.mxu0 0.0
        %656 = vmatprep.subr.mxu0 0.0
        %657 = vmatpush2.msra.mxu0 0.0
        %658 = vmatprep.subr.mxu0 0.0
        %659 = vmatpush2.msra.mxu0 0.0
        %660 = vmatprep.subr.mxu0 0.0
        %661 = vmatpush2.msra.mxu0 0.0
        %662 = vmatprep.subr.mxu0 0.0
        %663 = vmatpush2.msra.mxu0 0.0
        %664 = vmatprep.subr.mxu0 0.0
        %665 = vmatpush2.msra.mxu0 0.0
        %666 = vmatprep.subr.mxu0 0.0
        %667 = vmatpush2.msra.mxu0 0.0
        %668 = vmatprep.subr.mxu0 0.0
        %669 = vmatpush2.msra.mxu0 0.0
        %670 = vmatprep.subr.mxu0 0.0
        %671 = vmatpush2.msra.mxu0 0.0
        %672 = vmatprep.subr.mxu0 0.0
        %673 = vmatpush2.msra.mxu0 0.0
        %674 = vmatprep.subr.mxu0 0.0
        %675 = vmatpush2.msra.mxu0 0.0
        %676 = vmatprep.mubr.f32.mxu0 0.0
        %v677 = vand.u32 %v606, 4294901760
        %v678 = vsub.f32 %v606, %v677
        %v679 = vand.u32 %v678, 4294901760
        %v680 = vsub.f32 %v678, %v679
        %v681 = vand.u32 %v680, 4294901760
        %682 = vmatmul.mubr.f32.gmra.mxu0 %v681
        %v683 = vpop.f32.mrf.mxu0
        %v684 = vadd.f32 0.0, %v683
        %v685 = vpop.f32.mrf.mxu0
        %686 = vdwg.mxu0
        %687 = vmatprep.subr.mxu0 0.0
        %688 = vmatpush1.msra.mxu0 0.0
        %689 = vmatprep.subr.mxu0 0.0
        %690 = vmatpush1.msra.mxu0 0.0
        %691 = vmatprep.subr.mxu0 0.0
        %692 = vmatpush1.msra.mxu0 0.0
        %693 = vmatprep.subr.mxu0 0.0
        %694 = vmatpush1.msra.mxu0 0.0
        %695 = vmatprep.subr.mxu0 0.0
        %696 = vmatpush1.msra.mxu0 0.0
        %697 = vmatprep.subr.mxu0 0.0
        %698 = vmatpush1.msra.mxu0 0.0
        %699 = vmatprep.subr.mxu0 0.0
        %700 = vmatpush1.msra.mxu0 0.0
        %701 = vmatprep.subr.mxu0 0.0
        %702 = vmatpush1.msra.mxu0 0.0
        %703 = vmatprep.subr.mxu0 0.0
        %704 = vmatpush1.msra.mxu0 0.0
        %705 = vmatprep.subr.mxu0 0.0
        %706 = vmatpush1.msra.mxu0 0.0
        %707 = vmatprep.subr.mxu0 0.0
        %708 = vmatpush1.msra.mxu0 0.0
        %709 = vmatprep.subr.mxu0 0.0
        %710 = vmatpush1.msra.mxu0 0.0
        %711 = vmatprep.subr.mxu0 0.0
        %v712 = vand.u32 %v604, 4294901760
        %v713 = vsub.f32 %v604, %v712
        %v714 = vand.u32 %v713, 4294901760
        %v715 = vsub.f32 %v713, %v714
        %v716 = vand.u32 %v715, 4294901760
        %717 = vmatpush1.msra.mxu0 %v716
        %718 = vmatprep.subr.mxu0 0.0
        %v719 = vand.u32 %v603, 4294901760
        %v720 = vsub.f32 %v603, %v719
        %v721 = vand.u32 %v720, 4294901760
        %v722 = vsub.f32 %v720, %v721
        %v723 = vand.u32 %v722, 4294901760
        %724 = vmatpush1.msra.mxu0 %v723
        %725 = vmatprep.subr.mxu0 0.0
        %v726 = vand.u32 %v602, 4294901760
        %v727 = vsub.f32 %v602, %v726
        %v728 = vand.u32 %v727, 4294901760
        %v729 = vsub.f32 %v727, %v728
        %v730 = vand.u32 %v729, 4294901760
        %731 = vmatpush1.msra.mxu0 %v730
        %732 = vmatprep.subr.mxu0 0.0
        %v733 = vand.u32 %v601, 4294901760
        %v734 = vsub.f32 %v601, %v733
        %v735 = vand.u32 %v734, 4294901760
        %v736 = vsub.f32 %v734, %v735
        %v737 = vand.u32 %v736, 4294901760
        %738 = vmatpush1.msra.mxu0 %v737
        %739 = vmatprep.subr.mxu0 0.0
        %740 = vmatpush2.msra.mxu0 0.0
        %741 = vmatprep.subr.mxu0 0.0
        %742 = vmatpush2.msra.mxu0 0.0
        %743 = vmatprep.subr.mxu0 0.0
        %744 = vmatpush2.msra.mxu0 0.0
        %745 = vmatprep.subr.mxu0 0.0
        %746 = vmatpush2.msra.mxu0 0.0
        %747 = vmatprep.subr.mxu0 0.0
        %748 = vmatpush2.msra.mxu0 0.0
        %749 = vmatprep.subr.mxu0 0.0
        %750 = vmatpush2.msra.mxu0 0.0
        %751 = vmatprep.subr.mxu0 0.0
        %752 = vmatpush2.msra.mxu0 0.0
        %753 = vmatprep.subr.mxu0 0.0
        %754 = vmatpush2.msra.mxu0 0.0
        %755 = vmatprep.subr.mxu0 0.0
        %756 = vmatpush2.msra.mxu0 0.0
        %757 = vmatprep.subr.mxu0 0.0
        %758 = vmatpush2.msra.mxu0 0.0
        %759 = vmatprep.subr.mxu0 0.0
        %760 = vmatpush2.msra.mxu0 0.0
        %761 = vmatprep.subr.mxu0 0.0
        %762 = vmatpush2.msra.mxu0 0.0
        %763 = vmatprep.subr.mxu0 0.0
        %764 = vmatpush2.msra.mxu0 0.0
        %765 = vmatprep.subr.mxu0 0.0
        %766 = vmatpush2.msra.mxu0 0.0
        %767 = vmatprep.subr.mxu0 0.0
        %768 = vmatpush2.msra.mxu0 0.0
        %769 = vmatprep.subr.mxu0 0.0
        %770 = vmatpush2.msra.mxu0 0.0
        %771 = vmatprep.mubr.f32.mxu0 0.0
        %v772 = vand.u32 %v606, 4294901760
        %773 = vmatmul.mubr.f32.gmra.mxu0 %v772
        %v774 = vpop.f32.mrf.mxu0
        %v775 = vadd.f32 %v684, %v774
        %v776 = vpop.f32.mrf.mxu0
        %777 = vdwg.mxu0
        %778 = vmatprep.subr.mxu0 0.0
        %779 = vmatpush1.msra.mxu0 0.0
        %780 = vmatprep.subr.mxu0 0.0
        %781 = vmatpush1.msra.mxu0 0.0
        %782 = vmatprep.subr.mxu0 0.0
        %783 = vmatpush1.msra.mxu0 0.0
        %784 = vmatprep.subr.mxu0 0.0
        %785 = vmatpush1.msra.mxu0 0.0
        %786 = vmatprep.subr.mxu0 0.0
        %787 = vmatpush1.msra.mxu0 0.0
        %788 = vmatprep.subr.mxu0 0.0
        %789 = vmatpush1.msra.mxu0 0.0
        %790 = vmatprep.subr.mxu0 0.0
        %791 = vmatpush1.msra.mxu0 0.0
        %792 = vmatprep.subr.mxu0 0.0
        %793 = vmatpush1.msra.mxu0 0.0
        %794 = vmatprep.subr.mxu0 0.0
        %795 = vmatpush1.msra.mxu0 0.0
        %796 = vmatprep.subr.mxu0 0.0
        %797 = vmatpush1.msra.mxu0 0.0
        %798 = vmatprep.subr.mxu0 0.0
        %799 = vmatpush1.msra.mxu0 0.0
        %800 = vmatprep.subr.mxu0 0.0
        %801 = vmatpush1.msra.mxu0 0.0
        %802 = vmatprep.subr.mxu0 0.0
        %v803 = vand.u32 %v604, 4294901760
        %v804 = vsub.f32 %v604, %v803
        %805 = vmatpush1.msra.mxu0 %v804
        %806 = vmatprep.subr.mxu0 0.0
        %v807 = vand.u32 %v603, 4294901760
        %v808 = vsub.f32 %v603, %v807
        %809 = vmatpush1.msra.mxu0 %v808
        %810 = vmatprep.subr.mxu0 0.0
        %v811 = vand.u32 %v602, 4294901760
        %v812 = vsub.f32 %v602, %v811
        %813 = vmatpush1.msra.mxu0 %v812
        %814 = vmatprep.subr.mxu0 0.0
        %v815 = vand.u32 %v601, 4294901760
        %v816 = vsub.f32 %v601, %v815
        %817 = vmatpush1.msra.mxu0 %v816
        %818 = vmatprep.subr.mxu0 0.0
        %819 = vmatpush2.msra.mxu0 0.0
        %820 = vmatprep.subr.mxu0 0.0
        %821 = vmatpush2.msra.mxu0 0.0
        %822 = vmatprep.subr.mxu0 0.0
        %823 = vmatpush2.msra.mxu0 0.0
        %824 = vmatprep.subr.mxu0 0.0
        %825 = vmatpush2.msra.mxu0 0.0
        %826 = vmatprep.subr.mxu0 0.0
        %827 = vmatpush2.msra.mxu0 0.0
        %828 = vmatprep.subr.mxu0 0.0
        %829 = vmatpush2.msra.mxu0 0.0
        %830 = vmatprep.subr.mxu0 0.0
        %831 = vmatpush2.msra.mxu0 0.0
        %832 = vmatprep.subr.mxu0 0.0
        %833 = vmatpush2.msra.mxu0 0.0
        %834 = vmatprep.subr.mxu0 0.0
        %835 = vmatpush2.msra.mxu0 0.0
        %836 = vmatprep.subr.mxu0 0.0
        %837 = vmatpush2.msra.mxu0 0.0
        %838 = vmatprep.subr.mxu0 0.0
        %839 = vmatpush2.msra.mxu0 0.0
        %840 = vmatprep.subr.mxu0 0.0
        %841 = vmatpush2.msra.mxu0 0.0
        %842 = vmatprep.subr.mxu0 0.0
        %843 = vmatpush2.msra.mxu0 0.0
        %844 = vmatprep.subr.mxu0 0.0
        %845 = vmatpush2.msra.mxu0 0.0
        %846 = vmatprep.subr.mxu0 0.0
        %847 = vmatpush2.msra.mxu0 0.0
        %848 = vmatprep.subr.mxu0 0.0
        %849 = vmatpush2.msra.mxu0 0.0
        %850 = vmatprep.mubr.f32.mxu0 0.0
        %v851 = vand.u32 %v606, 4294901760
        %v852 = vsub.f32 %v606, %v851
        %853 = vmatmul.mubr.f32.gmra.mxu0 %v852
        %v854 = vpop.f32.mrf.mxu0
        %v855 = vadd.f32 %v775, %v854
        %v856 = vpop.f32.mrf.mxu0
        %857 = vdwg.mxu0
        %858 = vmatprep.subr.mxu0 0.0
        %859 = vmatpush1.msra.mxu0 0.0
        %860 = vmatprep.subr.mxu0 0.0
        %861 = vmatpush1.msra.mxu0 0.0
        %862 = vmatprep.subr.mxu0 0.0
        %863 = vmatpush1.msra.mxu0 0.0
        %864 = vmatprep.subr.mxu0 0.0
        %865 = vmatpush1.msra.mxu0 0.0
        %866 = vmatprep.subr.mxu0 0.0
        %867 = vmatpush1.msra.mxu0 0.0
        %868 = vmatprep.subr.mxu0 0.0
        %869 = vmatpush1.msra.mxu0 0.0
        %870 = vmatprep.subr.mxu0 0.0
        %871 = vmatpush1.msra.mxu0 0.0
        %872 = vmatprep.subr.mxu0 0.0
        %873 = vmatpush1.msra.mxu0 0.0
        %874 = vmatprep.subr.mxu0 0.0
        %875 = vmatpush1.msra.mxu0 0.0
        %876 = vmatprep.subr.mxu0 0.0
        %877 = vmatpush1.msra.mxu0 0.0
        %878 = vmatprep.subr.mxu0 0.0
        %879 = vmatpush1.msra.mxu0 0.0
        %880 = vmatprep.subr.mxu0 0.0
        %881 = vmatpush1.msra.mxu0 0.0
        %882 = vmatprep.subr.mxu0 0.0
        %v883 = vand.u32 %v604, 4294901760
        %884 = vmatpush1.msra.mxu0 %v883
        %885 = vmatprep.subr.mxu0 0.0
        %v886 = vand.u32 %v603, 4294901760
        %887 = vmatpush1.msra.mxu0 %v886
        %888 = vmatprep.subr.mxu0 0.0
        %v889 = vand.u32 %v602, 4294901760
        %890 = vmatpush1.msra.mxu0 %v889
        %891 = vmatprep.subr.mxu0 0.0
        %v892 = vand.u32 %v601, 4294901760
        %893 = vmatpush1.msra.mxu0 %v892
        %894 = vmatprep.subr.mxu0 0.0
        %895 = vmatpush2.msra.mxu0 0.0
        %896 = vmatprep.subr.mxu0 0.0
        %897 = vmatpush2.msra.mxu0 0.0
        %898 = vmatprep.subr.mxu0 0.0
        %899 = vmatpush2.msra.mxu0 0.0
        %900 = vmatprep.subr.mxu0 0.0
        %901 = vmatpush2.msra.mxu0 0.0
        %902 = vmatprep.subr.mxu0 0.0
        %903 = vmatpush2.msra.mxu0 0.0
        %904 = vmatprep.subr.mxu0 0.0
        %905 = vmatpush2.msra.mxu0 0.0
        %906 = vmatprep.subr.mxu0 0.0
        %907 = vmatpush2.msra.mxu0 0.0
        %908 = vmatprep.subr.mxu0 0.0
        %909 = vmatpush2.msra.mxu0 0.0
        %910 = vmatprep.subr.mxu0 0.0
        %911 = vmatpush2.msra.mxu0 0.0
        %912 = vmatprep.subr.mxu0 0.0
        %913 = vmatpush2.msra.mxu0 0.0
        %914 = vmatprep.subr.mxu0 0.0
        %915 = vmatpush2.msra.mxu0 0.0
        %916 = vmatprep.subr.mxu0 0.0
        %917 = vmatpush2.msra.mxu0 0.0
        %918 = vmatprep.subr.mxu0 0.0
        %919 = vmatpush2.msra.mxu0 0.0
        %920 = vmatprep.subr.mxu0 0.0
        %921 = vmatpush2.msra.mxu0 0.0
        %922 = vmatprep.subr.mxu0 0.0
        %923 = vmatpush2.msra.mxu0 0.0
        %924 = vmatprep.subr.mxu0 0.0
        %925 = vmatpush2.msra.mxu0 0.0
        %926 = vmatprep.mubr.f32.mxu0 0.0
        %v927 = vand.u32 %v606, 4294901760
        %v928 = vsub.f32 %v606, %v927
        %v929 = vand.u32 %v928, 4294901760
        %930 = vmatmul.mubr.f32.gmra.mxu0 %v929
        %v931 = vpop.f32.mrf.mxu0
        %v932 = vadd.f32 %v855, %v931
        %v933 = vpop.f32.mrf.mxu0
        %934 = vdwg.mxu0
        %935 = vmatprep.subr.mxu0 0.0
        %936 = vmatpush1.msra.mxu0 0.0
        %937 = vmatprep.subr.mxu0 0.0
        %938 = vmatpush1.msra.mxu0 0.0
        %939 = vmatprep.subr.mxu0 0.0
        %940 = vmatpush1.msra.mxu0 0.0
        %941 = vmatprep.subr.mxu0 0.0
        %942 = vmatpush1.msra.mxu0 0.0
        %943 = vmatprep.subr.mxu0 0.0
        %944 = vmatpush1.msra.mxu0 0.0
        %945 = vmatprep.subr.mxu0 0.0
        %946 = vmatpush1.msra.mxu0 0.0
        %947 = vmatprep.subr.mxu0 0.0
        %948 = vmatpush1.msra.mxu0 0.0
        %949 = vmatprep.subr.mxu0 0.0
        %950 = vmatpush1.msra.mxu0 0.0
        %951 = vmatprep.subr.mxu0 0.0
        %952 = vmatpush1.msra.mxu0 0.0
        %953 = vmatprep.subr.mxu0 0.0
        %954 = vmatpush1.msra.mxu0 0.0
        %955 = vmatprep.subr.mxu0 0.0
        %956 = vmatpush1.msra.mxu0 0.0
        %957 = vmatprep.subr.mxu0 0.0
        %958 = vmatpush1.msra.mxu0 0.0
        %959 = vmatprep.subr.mxu0 0.0
        %v960 = vand.u32 %v604, 4294901760
        %v961 = vsub.f32 %v604, %v960
        %v962 = vand.u32 %v961, 4294901760
        %963 = vmatpush1.msra.mxu0 %v962
        %964 = vmatprep.subr.mxu0 0.0
        %v965 = vand.u32 %v603, 4294901760
        %v966 = vsub.f32 %v603, %v965
        %v967 = vand.u32 %v966, 4294901760
        %968 = vmatpush1.msra.mxu0 %v967
        %969 = vmatprep.subr.mxu0 0.0
        %v970 = vand.u32 %v602, 4294901760
        %v971 = vsub.f32 %v602, %v970
        %v972 = vand.u32 %v971, 4294901760
        %973 = vmatpush1.msra.mxu0 %v972
        %974 = vmatprep.subr.mxu0 0.0
        %v975 = vand.u32 %v601, 4294901760
        %v976 = vsub.f32 %v601, %v975
        %v977 = vand.u32 %v976, 4294901760
        %978 = vmatpush1.msra.mxu0 %v977
        %979 = vmatprep.subr.mxu0 0.0
        %980 = vmatpush2.msra.mxu0 0.0
        %981 = vmatprep.subr.mxu0 0.0
        %982 = vmatpush2.msra.mxu0 0.0
        %983 = vmatprep.subr.mxu0 0.0
        %984 = vmatpush2.msra.mxu0 0.0
        %985 = vmatprep.subr.mxu0 0.0
        %986 = vmatpush2.msra.mxu0 0.0
        %987 = vmatprep.subr.mxu0 0.0
        %988 = vmatpush2.msra.mxu0 0.0
        %989 = vmatprep.subr.mxu0 0.0
        %990 = vmatpush2.msra.mxu0 0.0
        %991 = vmatprep.subr.mxu0 0.0
        %992 = vmatpush2.msra.mxu0 0.0
        %993 = vmatprep.subr.mxu0 0.0
        %994 = vmatpush2.msra.mxu0 0.0
        %995 = vmatprep.subr.mxu0 0.0
        %996 = vmatpush2.msra.mxu0 0.0
        %997 = vmatprep.subr.mxu0 0.0
        %998 = vmatpush2.msra.mxu0 0.0
        %999 = vmatprep.subr.mxu0 0.0
        %1000 = vmatpush2.msra.mxu0 0.0
        %1001 = vmatprep.subr.mxu0 0.0
        %1002 = vmatpush2.msra.mxu0 0.0
        %1003 = vmatprep.subr.mxu0 0.0
        %1004 = vmatpush2.msra.mxu0 0.0
        %1005 = vmatprep.subr.mxu0 0.0
        %1006 = vmatpush2.msra.mxu0 0.0
        %1007 = vmatprep.subr.mxu0 0.0
        %1008 = vmatpush2.msra.mxu0 0.0
        %1009 = vmatprep.subr.mxu0 0.0
        %1010 = vmatpush2.msra.mxu0 0.0
        %1011 = vmatprep.mubr.f32.mxu0 0.0
        %v1012 = vand.u32 %v606, 4294901760
        %1013 = vmatmul.mubr.f32.gmra.mxu0 %v1012
        %v1014 = vpop.f32.mrf.mxu0
        %v1015 = vadd.f32 %v932, %v1014
        %v1016 = vpop.f32.mrf.mxu0
        %1017 = vdwg.mxu0
        %1018 = vmatprep.subr.mxu0 0.0
        %1019 = vmatpush1.msra.mxu0 0.0
        %1020 = vmatprep.subr.mxu0 0.0
        %1021 = vmatpush1.msra.mxu0 0.0
        %1022 = vmatprep.subr.mxu0 0.0
        %1023 = vmatpush1.msra.mxu0 0.0
        %1024 = vmatprep.subr.mxu0 0.0
        %1025 = vmatpush1.msra.mxu0 0.0
        %1026 = vmatprep.subr.mxu0 0.0
        %1027 = vmatpush1.msra.mxu0 0.0
        %1028 = vmatprep.subr.mxu0 0.0
        %1029 = vmatpush1.msra.mxu0 0.0
        %1030 = vmatprep.subr.mxu0 0.0
        %1031 = vmatpush1.msra.mxu0 0.0
        %1032 = vmatprep.subr.mxu0 0.0
        %1033 = vmatpush1.msra.mxu0 0.0
        %1034 = vmatprep.subr.mxu0 0.0
        %1035 = vmatpush1.msra.mxu0 0.0
        %1036 = vmatprep.subr.mxu0 0.0
        %1037 = vmatpush1.msra.mxu0 0.0
        %1038 = vmatprep.subr.mxu0 0.0
        %1039 = vmatpush1.msra.mxu0 0.0
        %1040 = vmatprep.subr.mxu0 0.0
        %1041 = vmatpush1.msra.mxu0 0.0
        %1042 = vmatprep.subr.mxu0 0.0
        %v1043 = vand.u32 %v604, 4294901760
        %1044 = vmatpush1.msra.mxu0 %v1043
        %1045 = vmatprep.subr.mxu0 0.0
        %v1046 = vand.u32 %v603, 4294901760
        %1047 = vmatpush1.msra.mxu0 %v1046
        %1048 = vmatprep.subr.mxu0 0.0
        %v1049 = vand.u32 %v602, 4294901760
        %1050 = vmatpush1.msra.mxu0 %v1049
        %1051 = vmatprep.subr.mxu0 0.0
        %v1052 = vand.u32 %v601, 4294901760
        %1053 = vmatpush1.msra.mxu0 %v1052
        %1054 = vmatprep.subr.mxu0 0.0
        %1055 = vmatpush2.msra.mxu0 0.0
        %1056 = vmatprep.subr.mxu0 0.0
        %1057 = vmatpush2.msra.mxu0 0.0
        %1058 = vmatprep.subr.mxu0 0.0
        %1059 = vmatpush2.msra.mxu0 0.0
        %1060 = vmatprep.subr.mxu0 0.0
        %1061 = vmatpush2.msra.mxu0 0.0
        %1062 = vmatprep.subr.mxu0 0.0
        %1063 = vmatpush2.msra.mxu0 0.0
        %1064 = vmatprep.subr.mxu0 0.0
        %1065 = vmatpush2.msra.mxu0 0.0
        %1066 = vmatprep.subr.mxu0 0.0
        %1067 = vmatpush2.msra.mxu0 0.0
        %1068 = vmatprep.subr.mxu0 0.0
        %1069 = vmatpush2.msra.mxu0 0.0
        %1070 = vmatprep.subr.mxu0 0.0
        %1071 = vmatpush2.msra.mxu0 0.0
        %1072 = vmatprep.subr.mxu0 0.0
        %1073 = vmatpush2.msra.mxu0 0.0
        %1074 = vmatprep.subr.mxu0 0.0
        %1075 = vmatpush2.msra.mxu0 0.0
        %1076 = vmatprep.subr.mxu0 0.0
        %1077 = vmatpush2.msra.mxu0 0.0
        %1078 = vmatprep.subr.mxu0 0.0
        %1079 = vmatpush2.msra.mxu0 0.0
        %1080 = vmatprep.subr.mxu0 0.0
        %1081 = vmatpush2.msra.mxu0 0.0
        %1082 = vmatprep.subr.mxu0 0.0
        %1083 = vmatpush2.msra.mxu0 0.0
        %1084 = vmatprep.subr.mxu0 0.0
        %1085 = vmatpush2.msra.mxu0 0.0
        %1086 = vmatprep.mubr.f32.mxu0 0.0
        %v1087 = vand.u32 %v606, 4294901760
        %1088 = vmatmul.mubr.f32.gmra.mxu0 %v1087
        %v1089 = vpop.f32.mrf.mxu0
        %v1090 = vadd.f32 %v1015, %v1089
        %v1091 = vpop.f32.mrf.mxu0
        %1092 = vdwg.mxu0
        %v1093 = vmul.f32 %v1090, 0.35355338
        %1095 = vrot.lane.b32.xlu0 %v1093, 120
        %v1096 = vpop.permute.xlu0 %1095
        %1098 = vrot.lane.b32.xlu0 %v1093, 112
        %v1099 = vpop.permute.xlu0 %1098
        %1101 = vrot.lane.b32.xlu0 %v1093, 104
        %v1102 = vpop.permute.xlu0 %1101
        %v1104 = vcombine.low %v1093, %v1099
        %v1105 = vcombine.high %v1093, %v1099
        %v1107 = vunpack.c.l.s4 1983009808
        %v1108 = vunpack.c.0.s8 %v1107
        %v1109 = vlaneseq
        %v1110 = vshrl.u32 %v1109, 7
        %v1111 = vsub.s32 %v1108, %v1110
        %v1112 = vrot.slane %v1104, %v1111
        %v1114 = vunpack.c.l.s4 1983009808
        %v1115 = vunpack.c.0.s8 %v1114
        %v1116 = vlaneseq
        %v1117 = vshrl.u32 %v1116, 7
        %v1118 = vsub.s32 %v1115, %v1117
        %v1119 = vrot.slane %v1105, %v1118
        %v1120 = vcombine.low %v1096, %v1102
        %v1121 = vcombine.high %v1096, %v1102
        %v1123 = vunpack.c.l.s4 1983009808
        %v1124 = vunpack.c.0.s8 %v1123
        %v1125 = vlaneseq
        %v1126 = vshrl.u32 %v1125, 7
        %v1127 = vsub.s32 %v1124, %v1126
        %v1128 = vrot.slane %v1120, %v1127
        %v1130 = vunpack.c.l.s4 1983009808
        %v1131 = vunpack.c.0.s8 %v1130
        %v1132 = vlaneseq
        %v1133 = vshrl.u32 %v1132, 7
        %v1134 = vsub.s32 %v1131, %v1133
        %v1135 = vrot.slane %v1121, %v1134
        %v1136 = vcombine.low %v1112, %v1128
        %v1137 = vcombine.high %v1112, %v1128
        %v1139 = vunpack.c.l.s4 1934713408
        %v1140 = vunpack.c.0.s8 %v1139
        %v1141 = vlaneseq
        %v1142 = vshrl.u32 %v1141, 7
        %v1143 = vsub.s32 %v1140, %v1142
        %v1144 = vrot.slane %v1136, %v1143
        %v1146 = vunpack.c.l.s4 1934713408
        %v1147 = vunpack.c.0.s8 %v1146
        %v1148 = vlaneseq
        %v1149 = vshrl.u32 %v1148, 7
        %v1150 = vsub.s32 %v1147, %v1149
        %v1151 = vrot.slane %v1137, %v1150
        %v1152 = vcombine.low %v1119, %v1135
        %v1153 = vcombine.high %v1119, %v1135
        %v1155 = vunpack.c.l.s4 1934713408
        %v1156 = vunpack.c.0.s8 %v1155
        %v1157 = vlaneseq
        %v1158 = vshrl.u32 %v1157, 7
        %v1159 = vsub.s32 %v1156, %v1158
        %v1160 = vrot.slane %v1152, %v1159
        %v1162 = vunpack.c.l.s4 1934713408
        %v1163 = vunpack.c.0.s8 %v1162
        %v1164 = vlaneseq
        %v1165 = vshrl.u32 %v1164, 7
        %v1166 = vsub.s32 %v1163, %v1165
        %v1167 = vrot.slane %v1153, %v1166
        %v1168 = vcombine.high %v1144, 0.0
        %v1169 = vcombine.high %v1151, 0.0
        %v1170 = vcombine.high %v1160, 0.0
        %v1171 = vcombine.high %v1167, 0.0
        %v1172 = vcombine.low %v1144, %v1151
        %v1174 = vunpack.c.l.s4 1983009808
        %v1175 = vunpack.c.0.s8 %v1174
        %v1176 = vlaneseq
        %v1177 = vshrl.u32 %v1176, 7
        %v1178 = vsub.s32 %v1175, %v1177
        %v1179 = vrot.slane %v1172, %v1178
        %v1180 = vcombine.low %v1168, %v1169
        %v1182 = vunpack.c.l.s4 1983009808
        %v1183 = vunpack.c.0.s8 %v1182
        %v1184 = vlaneseq
        %v1185 = vshrl.u32 %v1184, 7
        %v1186 = vsub.s32 %v1183, %v1185
        %v1187 = vrot.slane %v1180, %v1186
        %v1188 = vcombine.low %v1160, %v1167
        %v1190 = vunpack.c.l.s4 1983009808
        %v1191 = vunpack.c.0.s8 %v1190
        %v1192 = vlaneseq
        %v1193 = vshrl.u32 %v1192, 7
        %v1194 = vsub.s32 %v1191, %v1193
        %v1195 = vrot.slane %v1188, %v1194
        %v1196 = vcombine.low %v1170, %v1171
        %v1198 = vunpack.c.l.s4 1983009808
        %v1199 = vunpack.c.0.s8 %v1198
        %v1200 = vlaneseq
        %v1201 = vshrl.u32 %v1200, 7
        %v1202 = vsub.s32 %v1199, %v1201
        %v1203 = vrot.slane %v1196, %v1202
        %v1204 = vcombine.low %v1179, %v1187
        %v1205 = vcombine.high %v1179, %v1187
        %v1207 = vunpack.c.l.s4 1934713408
        %v1208 = vunpack.c.0.s8 %v1207
        %v1209 = vlaneseq
        %v1210 = vshrl.u32 %v1209, 7
        %v1211 = vsub.s32 %v1208, %v1210
        %v1212 = vrot.slane %v1204, %v1211
        %v1214 = vunpack.c.l.s4 1934713408
        %v1215 = vunpack.c.0.s8 %v1214
        %v1216 = vlaneseq
        %v1217 = vshrl.u32 %v1216, 7
        %v1218 = vsub.s32 %v1215, %v1217
        %v1219 = vrot.slane %v1205, %v1218
        %v1220 = vcombine.low %v1195, %v1203
        %v1221 = vcombine.high %v1195, %v1203
        %v1223 = vunpack.c.l.s4 1934713408
        %v1224 = vunpack.c.0.s8 %v1223
        %v1225 = vlaneseq
        %v1226 = vshrl.u32 %v1225, 7
        %v1227 = vsub.s32 %v1224, %v1226
        %v1228 = vrot.slane %v1220, %v1227
        %v1230 = vunpack.c.l.s4 1934713408
        %v1231 = vunpack.c.0.s8 %v1230
        %v1232 = vlaneseq
        %v1233 = vshrl.u32 %v1232, 7
        %v1234 = vsub.s32 %v1231, %v1233
        %v1235 = vrot.slane %v1221, %v1234
        %v1236 = vcombine.low %v1212, %v1228
        %v1237 = vcombine.high %v1212, %v1228
        %v1238 = vcombine.low %v1219, %v1235
        %v1239 = vcombine.high %v1219, %v1235
        %1241 = vrot.lane.b32.xlu0 %v1090, 120
        %v1242 = vpop.permute.xlu0 %1241
        %1243 = vrot.lane.b32.xlu0 %v1090, 112
        %v1244 = vpop.permute.xlu0 %1243
        %1245 = vrot.lane.b32.xlu0 %v1090, 104
        %v1246 = vpop.permute.xlu0 %1245
        %1247 = vrot.lane.b32.xlu0 %v1090, 96
        %v1248 = vpop.permute.xlu0 %1247
        %1249 = vrot.lane.b32.xlu0 %v1242, 96
        %v1250 = vpop.permute.xlu0 %1249
        %1251 = vrot.lane.b32.xlu0 %v1244, 96
        %v1252 = vpop.permute.xlu0 %1251
        %1253 = vrot.lane.b32.xlu0 %v1246, 96
        %v1254 = vpop.permute.xlu0 %1253
        %v1259 = vcombine.low %v1248, %v1252
        %v1260 = vcombine.high %v1248, %v1252
        %v1262 = vunpack.c.l.s4 1983009808
        %v1263 = vunpack.c.0.s8 %v1262
        %v1264 = vlaneseq
        %v1265 = vshrl.u32 %v1264, 7
        %v1266 = vsub.s32 %v1263, %v1265
        %v1267 = vrot.slane %v1259, %v1266
        %v1269 = vunpack.c.l.s4 1983009808
        %v1270 = vunpack.c.0.s8 %v1269
        %v1271 = vlaneseq
        %v1272 = vshrl.u32 %v1271, 7
        %v1273 = vsub.s32 %v1270, %v1272
        %v1274 = vrot.slane %v1260, %v1273
        %v1275 = vcombine.low %v1250, %v1254
        %v1276 = vcombine.high %v1250, %v1254
        %v1278 = vunpack.c.l.s4 1983009808
        %v1279 = vunpack.c.0.s8 %v1278
        %v1280 = vlaneseq
        %v1281 = vshrl.u32 %v1280, 7
        %v1282 = vsub.s32 %v1279, %v1281
        %v1283 = vrot.slane %v1275, %v1282
        %v1285 = vunpack.c.l.s4 1983009808
        %v1286 = vunpack.c.0.s8 %v1285
        %v1287 = vlaneseq
        %v1288 = vshrl.u32 %v1287, 7
        %v1289 = vsub.s32 %v1286, %v1288
        %v1290 = vrot.slane %v1276, %v1289
        %v1291 = vcombine.low %v1267, %v1283
        %v1292 = vcombine.high %v1267, %v1283
        %v1294 = vunpack.c.l.s4 1934713408
        %v1295 = vunpack.c.0.s8 %v1294
        %v1296 = vlaneseq
        %v1297 = vshrl.u32 %v1296, 7
        %v1298 = vsub.s32 %v1295, %v1297
        %v1299 = vrot.slane %v1291, %v1298
        %v1301 = vunpack.c.l.s4 1934713408
        %v1302 = vunpack.c.0.s8 %v1301
        %v1303 = vlaneseq
        %v1304 = vshrl.u32 %v1303, 7
        %v1305 = vsub.s32 %v1302, %v1304
        %v1306 = vrot.slane %v1292, %v1305
        %v1307 = vcombine.low %v1274, %v1290
        %v1308 = vcombine.high %v1274, %v1290
        %v1310 = vunpack.c.l.s4 1934713408
        %v1311 = vunpack.c.0.s8 %v1310
        %v1312 = vlaneseq
        %v1313 = vshrl.u32 %v1312, 7
        %v1314 = vsub.s32 %v1311, %v1313
        %v1315 = vrot.slane %v1307, %v1314
        %v1317 = vunpack.c.l.s4 1934713408
        %v1318 = vunpack.c.0.s8 %v1317
        %v1319 = vlaneseq
        %v1320 = vshrl.u32 %v1319, 7
        %v1321 = vsub.s32 %v1318, %v1320
        %v1322 = vrot.slane %v1308, %v1321
        %v1323 = vcombine.high %v1299, 0.0
        %v1324 = vcombine.high %v1306, 0.0
        %v1325 = vcombine.high %v1315, 0.0
        %v1326 = vcombine.high %v1322, 0.0
        %v1327 = vcombine.low %v1299, %v1306
        %v1329 = vunpack.c.l.s4 1983009808
        %v1330 = vunpack.c.0.s8 %v1329
        %v1331 = vlaneseq
        %v1332 = vshrl.u32 %v1331, 7
        %v1333 = vsub.s32 %v1330, %v1332
        %v1334 = vrot.slane %v1327, %v1333
        %v1335 = vcombine.low %v1323, %v1324
        %v1337 = vunpack.c.l.s4 1983009808
        %v1338 = vunpack.c.0.s8 %v1337
        %v1339 = vlaneseq
        %v1340 = vshrl.u32 %v1339, 7
        %v1341 = vsub.s32 %v1338, %v1340
        %v1342 = vrot.slane %v1335, %v1341
        %v1343 = vcombine.low %v1315, %v1322
        %v1345 = vunpack.c.l.s4 1983009808
        %v1346 = vunpack.c.0.s8 %v1345
        %v1347 = vlaneseq
        %v1348 = vshrl.u32 %v1347, 7
        %v1349 = vsub.s32 %v1346, %v1348
        %v1350 = vrot.slane %v1343, %v1349
        %v1351 = vcombine.low %v1325, %v1326
        %v1353 = vunpack.c.l.s4 1983009808
        %v1354 = vunpack.c.0.s8 %v1353
        %v1355 = vlaneseq
        %v1356 = vshrl.u32 %v1355, 7
        %v1357 = vsub.s32 %v1354, %v1356
        %v1358 = vrot.slane %v1351, %v1357
        %v1359 = vcombine.low %v1334, %v1342
        %v1360 = vcombine.high %v1334, %v1342
        %v1362 = vunpack.c.l.s4 1934713408
        %v1363 = vunpack.c.0.s8 %v1362
        %v1364 = vlaneseq
        %v1365 = vshrl.u32 %v1364, 7
        %v1366 = vsub.s32 %v1363, %v1365
        %v1367 = vrot.slane %v1359, %v1366
        %v1369 = vunpack.c.l.s4 1934713408
        %v1370 = vunpack.c.0.s8 %v1369
        %v1371 = vlaneseq
        %v1372 = vshrl.u32 %v1371, 7
        %v1373 = vsub.s32 %v1370, %v1372
        %v1374 = vrot.slane %v1360, %v1373
        %v1375 = vcombine.low %v1350, %v1358
        %v1376 = vcombine.high %v1350, %v1358
        %v1378 = vunpack.c.l.s4 1934713408
        %v1379 = vunpack.c.0.s8 %v1378
        %v1380 = vlaneseq
        %v1381 = vshrl.u32 %v1380, 7
        %v1382 = vsub.s32 %v1379, %v1381
        %v1383 = vrot.slane %v1375, %v1382
        %v1385 = vunpack.c.l.s4 1934713408
        %v1386 = vunpack.c.0.s8 %v1385
        %v1387 = vlaneseq
        %v1388 = vshrl.u32 %v1387, 7
        %v1389 = vsub.s32 %v1386, %v1388
        %v1390 = vrot.slane %v1376, %v1389
        %v1391 = vcombine.low %v1367, %v1383
        %v1392 = vcombine.high %v1367, %v1383
        %v1393 = vcombine.low %v1374, %v1390
        %v1394 = vcombine.high %v1374, %v1390
        %1395 = vrot.lane.b32.xlu0 %v1090, 64
        %v1396 = vpop.permute.xlu0 %1395
        %1397 = vrot.lane.b32.xlu0 %v1242, 64
        %v1398 = vpop.permute.xlu0 %1397
        %1399 = vrot.lane.b32.xlu0 %v1244, 64
        %v1400 = vpop.permute.xlu0 %1399
        %1401 = vrot.lane.b32.xlu0 %v1246, 64
        %v1402 = vpop.permute.xlu0 %1401
        %v1407 = vcombine.low %v1396, %v1400
        %v1408 = vcombine.high %v1396, %v1400
        %v1410 = vunpack.c.l.s4 1983009808
        %v1411 = vunpack.c.0.s8 %v1410
        %v1412 = vlaneseq
        %v1413 = vshrl.u32 %v1412, 7
        %v1414 = vsub.s32 %v1411, %v1413
        %v1415 = vrot.slane %v1407, %v1414
        %v1417 = vunpack.c.l.s4 1983009808
        %v1418 = vunpack.c.0.s8 %v1417
        %v1419 = vlaneseq
        %v1420 = vshrl.u32 %v1419, 7
        %v1421 = vsub.s32 %v1418, %v1420
        %v1422 = vrot.slane %v1408, %v1421
        %v1423 = vcombine.low %v1398, %v1402
        %v1424 = vcombine.high %v1398, %v1402
        %v1426 = vunpack.c.l.s4 1983009808
        %v1427 = vunpack.c.0.s8 %v1426
        %v1428 = vlaneseq
        %v1429 = vshrl.u32 %v1428, 7
        %v1430 = vsub.s32 %v1427, %v1429
        %v1431 = vrot.slane %v1423, %v1430
        %v1433 = vunpack.c.l.s4 1983009808
        %v1434 = vunpack.c.0.s8 %v1433
        %v1435 = vlaneseq
        %v1436 = vshrl.u32 %v1435, 7
        %v1437 = vsub.s32 %v1434, %v1436
        %v1438 = vrot.slane %v1424, %v1437
        %v1439 = vcombine.low %v1415, %v1431
        %v1440 = vcombine.high %v1415, %v1431
        %v1442 = vunpack.c.l.s4 1934713408
        %v1443 = vunpack.c.0.s8 %v1442
        %v1444 = vlaneseq
        %v1445 = vshrl.u32 %v1444, 7
        %v1446 = vsub.s32 %v1443, %v1445
        %v1447 = vrot.slane %v1439, %v1446
        %v1449 = vunpack.c.l.s4 1934713408
        %v1450 = vunpack.c.0.s8 %v1449
        %v1451 = vlaneseq
        %v1452 = vshrl.u32 %v1451, 7
        %v1453 = vsub.s32 %v1450, %v1452
        %v1454 = vrot.slane %v1440, %v1453
        %v1455 = vcombine.low %v1422, %v1438
        %v1456 = vcombine.high %v1422, %v1438
        %v1458 = vunpack.c.l.s4 1934713408
        %v1459 = vunpack.c.0.s8 %v1458
        %v1460 = vlaneseq
        %v1461 = vshrl.u32 %v1460, 7
        %v1462 = vsub.s32 %v1459, %v1461
        %v1463 = vrot.slane %v1455, %v1462
        %v1465 = vunpack.c.l.s4 1934713408
        %v1466 = vunpack.c.0.s8 %v1465
        %v1467 = vlaneseq
        %v1468 = vshrl.u32 %v1467, 7
        %v1469 = vsub.s32 %v1466, %v1468
        %v1470 = vrot.slane %v1456, %v1469
        %v1471 = vcombine.high %v1447, 0.0
        %v1472 = vcombine.high %v1454, 0.0
        %v1473 = vcombine.high %v1463, 0.0
        %v1474 = vcombine.high %v1470, 0.0
        %v1475 = vcombine.low %v1447, %v1454
        %v1477 = vunpack.c.l.s4 1983009808
        %v1478 = vunpack.c.0.s8 %v1477
        %v1479 = vlaneseq
        %v1480 = vshrl.u32 %v1479, 7
        %v1481 = vsub.s32 %v1478, %v1480
        %v1482 = vrot.slane %v1475, %v1481
        %v1483 = vcombine.low %v1471, %v1472
        %v1485 = vunpack.c.l.s4 1983009808
        %v1486 = vunpack.c.0.s8 %v1485
        %v1487 = vlaneseq
        %v1488 = vshrl.u32 %v1487, 7
        %v1489 = vsub.s32 %v1486, %v1488
        %v1490 = vrot.slane %v1483, %v1489
        %v1491 = vcombine.low %v1463, %v1470
        %v1493 = vunpack.c.l.s4 1983009808
        %v1494 = vunpack.c.0.s8 %v1493
        %v1495 = vlaneseq
        %v1496 = vshrl.u32 %v1495, 7
        %v1497 = vsub.s32 %v1494, %v1496
        %v1498 = vrot.slane %v1491, %v1497
        %v1499 = vcombine.low %v1473, %v1474
        %v1501 = vunpack.c.l.s4 1983009808
        %v1502 = vunpack.c.0.s8 %v1501
        %v1503 = vlaneseq
        %v1504 = vshrl.u32 %v1503, 7
        %v1505 = vsub.s32 %v1502, %v1504
        %v1506 = vrot.slane %v1499, %v1505
        %v1507 = vcombine.low %v1482, %v1490
        %v1508 = vcombine.high %v1482, %v1490
        %v1510 = vunpack.c.l.s4 1934713408
        %v1511 = vunpack.c.0.s8 %v1510
        %v1512 = vlaneseq
        %v1513 = vshrl.u32 %v1512, 7
        %v1514 = vsub.s32 %v1511, %v1513
        %v1515 = vrot.slane %v1507, %v1514
        %v1517 = vunpack.c.l.s4 1934713408
        %v1518 = vunpack.c.0.s8 %v1517
        %v1519 = vlaneseq
        %v1520 = vshrl.u32 %v1519, 7
        %v1521 = vsub.s32 %v1518, %v1520
        %v1522 = vrot.slane %v1508, %v1521
        %v1523 = vcombine.low %v1498, %v1506
        %v1524 = vcombine.high %v1498, %v1506
        %v1526 = vunpack.c.l.s4 1934713408
        %v1527 = vunpack.c.0.s8 %v1526
        %v1528 = vlaneseq
        %v1529 = vshrl.u32 %v1528, 7
        %v1530 = vsub.s32 %v1527, %v1529
        %v1531 = vrot.slane %v1523, %v1530
        %v1533 = vunpack.c.l.s4 1934713408
        %v1534 = vunpack.c.0.s8 %v1533
        %v1535 = vlaneseq
        %v1536 = vshrl.u32 %v1535, 7
        %v1537 = vsub.s32 %v1534, %v1536
        %v1538 = vrot.slane %v1524, %v1537
        %v1539 = vcombine.low %v1515, %v1531
        %v1540 = vcombine.high %v1515, %v1531
        %v1541 = vcombine.low %v1522, %v1538
        %v1542 = vcombine.high %v1522, %v1538
        %v1543 = vld [vmem:[%s3] sm:$0xff]
        %v1544 = vld [vmem:[%s3 + $0x8] sm:$0xff]
        %v1545 = vld [vmem:[%s3 + $0x10] sm:$0xff]
        %v1546 = vld [vmem:[%s3 + $0x18] sm:$0xff]
        %vm1547 = vcmask 64512
        %v1549 = vsel %vm1547, %v1236, 0
        %v1552 = vsel %vm1547, %v1391, 0
        %1554 = vmatprep.subr.mxu0 0.0
        %1555 = vmatpush1.xpose.msra.mxu0 0.0
        %1556 = vmatprep.subr.mxu0 0.0
        %1557 = vmatpush1.xpose.msra.mxu0 0.0
        %1558 = vmatprep.subr.mxu0 0.0
        %1559 = vmatpush1.xpose.msra.mxu0 0.0
        %1560 = vmatprep.subr.mxu0 0.0
        %1561 = vmatpush1.xpose.msra.mxu0 0.0
        %1562 = vmatprep.subr.mxu0 0.0
        %1563 = vmatpush1.xpose.msra.mxu0 0.0
        %1564 = vmatprep.subr.mxu0 0.0
        %1565 = vmatpush1.xpose.msra.mxu0 0.0
        %1566 = vmatprep.subr.mxu0 0.0
        %1567 = vmatpush1.xpose.msra.mxu0 0.0
        %1568 = vmatprep.subr.mxu0 0.0
        %1569 = vmatpush1.xpose.msra.mxu0 0.0
        %1570 = vmatprep.subr.mxu0 0.0
        %1571 = vmatpush1.xpose.msra.mxu0 0.0
        %1572 = vmatprep.subr.mxu0 0.0
        %1573 = vmatpush1.xpose.msra.mxu0 0.0
        %1574 = vmatprep.subr.mxu0 0.0
        %1575 = vmatpush1.xpose.msra.mxu0 0.0
        %1576 = vmatprep.subr.mxu0 0.0
        %1577 = vmatpush1.xpose.msra.mxu0 0.0
        %1578 = vmatprep.subr.mxu0 0.0
        %1579 = vmatpush1.xpose.msra.mxu0 0.0
        %1580 = vmatprep.subr.mxu0 0.0
        %1581 = vmatpush1.xpose.msra.mxu0 0.0
        %1582 = vmatprep.subr.mxu0 0.0
        %1583 = vmatpush1.xpose.msra.mxu0 0.0
        %1584 = vmatprep.subr.mxu0 0.0
        %v1585 = vand.u32 %v1552, 4294901760
        %1586 = vmatpush1.xpose.msra.mxu0 %v1585
        %1587 = vmatprep.subr.mxu0 0.0
        %1588 = vmatpush2.xpose.msra.mxu0 0.0
        %1589 = vmatprep.subr.mxu0 0.0
        %1590 = vmatpush2.xpose.msra.mxu0 0.0
        %1591 = vmatprep.subr.mxu0 0.0
        %1592 = vmatpush2.xpose.msra.mxu0 0.0
        %1593 = vmatprep.subr.mxu0 0.0
        %1594 = vmatpush2.xpose.msra.mxu0 0.0
        %1595 = vmatprep.subr.mxu0 0.0
        %1596 = vmatpush2.xpose.msra.mxu0 0.0
        %1597 = vmatprep.subr.mxu0 0.0
        %1598 = vmatpush2.xpose.msra.mxu0 0.0
        %1599 = vmatprep.subr.mxu0 0.0
        %1600 = vmatpush2.xpose.msra.mxu0 0.0
        %1601 = vmatprep.subr.mxu0 0.0
        %1602 = vmatpush2.xpose.msra.mxu0 0.0
        %1603 = vmatprep.subr.mxu0 0.0
        %1604 = vmatpush2.xpose.msra.mxu0 0.0
        %1605 = vmatprep.subr.mxu0 0.0
        %1606 = vmatpush2.xpose.msra.mxu0 0.0
        %1607 = vmatprep.subr.mxu0 0.0
        %1608 = vmatpush2.xpose.msra.mxu0 0.0
        %1609 = vmatprep.subr.mxu0 0.0
        %1610 = vmatpush2.xpose.msra.mxu0 0.0
        %1611 = vmatprep.subr.mxu0 0.0
        %1612 = vmatpush2.xpose.msra.mxu0 0.0
        %1613 = vmatprep.subr.mxu0 0.0
        %1614 = vmatpush2.xpose.msra.mxu0 0.0
        %1615 = vmatprep.subr.mxu0 0.0
        %1616 = vmatpush2.xpose.msra.mxu0 0.0
        %1617 = vmatprep.subr.mxu0 0.0
        %1618 = vmatpush2.xpose.msra.mxu0 0.0
        %1619 = vmatprep.mubr.f32.mxu0 0.0
        %v1620 = vand.u32 %v1549, 4294901760
        %v1621 = vsub.f32 %v1549, %v1620
        %v1622 = vand.u32 %v1621, 4294901760
        %v1623 = vsub.f32 %v1621, %v1622
        %v1624 = vand.u32 %v1623, 4294901760
        %1625 = vmatmul.mubr.f32.gmra.mxu0 %v1624
        %v1626 = vpop.f32.mrf.mxu0
        %v1627 = vadd.f32 %v1543, %v1626
        %v1628 = vpop.f32.mrf.mxu0
        %1629 = vdwg.mxu0
        %1630 = vmatprep.subr.mxu0 0.0
        %1631 = vmatpush1.xpose.msra.mxu0 0.0
        %1632 = vmatprep.subr.mxu0 0.0
        %1633 = vmatpush1.xpose.msra.mxu0 0.0
        %1634 = vmatprep.subr.mxu0 0.0
        %1635 = vmatpush1.xpose.msra.mxu0 0.0
        %1636 = vmatprep.subr.mxu0 0.0
        %1637 = vmatpush1.xpose.msra.mxu0 0.0
        %1638 = vmatprep.subr.mxu0 0.0
        %1639 = vmatpush1.xpose.msra.mxu0 0.0
        %1640 = vmatprep.subr.mxu0 0.0
        %1641 = vmatpush1.xpose.msra.mxu0 0.0
        %1642 = vmatprep.subr.mxu0 0.0
        %1643 = vmatpush1.xpose.msra.mxu0 0.0
        %1644 = vmatprep.subr.mxu0 0.0
        %1645 = vmatpush1.xpose.msra.mxu0 0.0
        %1646 = vmatprep.subr.mxu0 0.0
        %1647 = vmatpush1.xpose.msra.mxu0 0.0
        %1648 = vmatprep.subr.mxu0 0.0
        %1649 = vmatpush1.xpose.msra.mxu0 0.0
        %1650 = vmatprep.subr.mxu0 0.0
        %1651 = vmatpush1.xpose.msra.mxu0 0.0
        %1652 = vmatprep.subr.mxu0 0.0
        %1653 = vmatpush1.xpose.msra.mxu0 0.0
        %1654 = vmatprep.subr.mxu0 0.0
        %1655 = vmatpush1.xpose.msra.mxu0 0.0
        %1656 = vmatprep.subr.mxu0 0.0
        %1657 = vmatpush1.xpose.msra.mxu0 0.0
        %1658 = vmatprep.subr.mxu0 0.0
        %1659 = vmatpush1.xpose.msra.mxu0 0.0
        %1660 = vmatprep.subr.mxu0 0.0
        %v1661 = vand.u32 %v1552, 4294901760
        %v1662 = vsub.f32 %v1552, %v1661
        %v1663 = vand.u32 %v1662, 4294901760
        %v1664 = vsub.f32 %v1662, %v1663
        %v1665 = vand.u32 %v1664, 4294901760
        %1666 = vmatpush1.xpose.msra.mxu0 %v1665
        %1667 = vmatprep.subr.mxu0 0.0
        %1668 = vmatpush2.xpose.msra.mxu0 0.0
        %1669 = vmatprep.subr.mxu0 0.0
        %1670 = vmatpush2.xpose.msra.mxu0 0.0
        %1671 = vmatprep.subr.mxu0 0.0
        %1672 = vmatpush2.xpose.msra.mxu0 0.0
        %1673 = vmatprep.subr.mxu0 0.0
        %1674 = vmatpush2.xpose.msra.mxu0 0.0
        %1675 = vmatprep.subr.mxu0 0.0
        %1676 = vmatpush2.xpose.msra.mxu0 0.0
        %1677 = vmatprep.subr.mxu0 0.0
        %1678 = vmatpush2.xpose.msra.mxu0 0.0
        %1679 = vmatprep.subr.mxu0 0.0
        %1680 = vmatpush2.xpose.msra.mxu0 0.0
        %1681 = vmatprep.subr.mxu0 0.0
        %1682 = vmatpush2.xpose.msra.mxu0 0.0
        %1683 = vmatprep.subr.mxu0 0.0
        %1684 = vmatpush2.xpose.msra.mxu0 0.0
        %1685 = vmatprep.subr.mxu0 0.0
        %1686 = vmatpush2.xpose.msra.mxu0 0.0
        %1687 = vmatprep.subr.mxu0 0.0
        %1688 = vmatpush2.xpose.msra.mxu0 0.0
        %1689 = vmatprep.subr.mxu0 0.0
        %1690 = vmatpush2.xpose.msra.mxu0 0.0
        %1691 = vmatprep.subr.mxu0 0.0
        %1692 = vmatpush2.xpose.msra.mxu0 0.0
        %1693 = vmatprep.subr.mxu0 0.0
        %1694 = vmatpush2.xpose.msra.mxu0 0.0
        %1695 = vmatprep.subr.mxu0 0.0
        %1696 = vmatpush2.xpose.msra.mxu0 0.0
        %1697 = vmatprep.subr.mxu0 0.0
        %1698 = vmatpush2.xpose.msra.mxu0 0.0
        %1699 = vmatprep.mubr.f32.mxu0 0.0
        %v1700 = vand.u32 %v1549, 4294901760
        %1701 = vmatmul.mubr.f32.gmra.mxu0 %v1700
        %v1702 = vpop.f32.mrf.mxu0
        %v1703 = vadd.f32 %v1627, %v1702
        %v1704 = vpop.f32.mrf.mxu0
        %1705 = vdwg.mxu0
        %1706 = vmatprep.subr.mxu0 0.0
        %1707 = vmatpush1.xpose.msra.mxu0 0.0
        %1708 = vmatprep.subr.mxu0 0.0
        %1709 = vmatpush1.xpose.msra.mxu0 0.0
        %1710 = vmatprep.subr.mxu0 0.0
        %1711 = vmatpush1.xpose.msra.mxu0 0.0
        %1712 = vmatprep.subr.mxu0 0.0
        %1713 = vmatpush1.xpose.msra.mxu0 0.0
        %1714 = vmatprep.subr.mxu0 0.0
        %1715 = vmatpush1.xpose.msra.mxu0 0.0
        %1716 = vmatprep.subr.mxu0 0.0
        %1717 = vmatpush1.xpose.msra.mxu0 0.0
        %1718 = vmatprep.subr.mxu0 0.0
        %1719 = vmatpush1.xpose.msra.mxu0 0.0
        %1720 = vmatprep.subr.mxu0 0.0
        %1721 = vmatpush1.xpose.msra.mxu0 0.0
        %1722 = vmatprep.subr.mxu0 0.0
        %1723 = vmatpush1.xpose.msra.mxu0 0.0
        %1724 = vmatprep.subr.mxu0 0.0
        %1725 = vmatpush1.xpose.msra.mxu0 0.0
        %1726 = vmatprep.subr.mxu0 0.0
        %1727 = vmatpush1.xpose.msra.mxu0 0.0
        %1728 = vmatprep.subr.mxu0 0.0
        %1729 = vmatpush1.xpose.msra.mxu0 0.0
        %1730 = vmatprep.subr.mxu0 0.0
        %1731 = vmatpush1.xpose.msra.mxu0 0.0
        %1732 = vmatprep.subr.mxu0 0.0
        %1733 = vmatpush1.xpose.msra.mxu0 0.0
        %1734 = vmatprep.subr.mxu0 0.0
        %1735 = vmatpush1.xpose.msra.mxu0 0.0
        %1736 = vmatprep.subr.mxu0 0.0
        %v1737 = vand.u32 %v1552, 4294901760
        %v1738 = vsub.f32 %v1552, %v1737
        %1739 = vmatpush1.xpose.msra.mxu0 %v1738
        %1740 = vmatprep.subr.mxu0 0.0
        %1741 = vmatpush2.xpose.msra.mxu0 0.0
        %1742 = vmatprep.subr.mxu0 0.0
        %1743 = vmatpush2.xpose.msra.mxu0 0.0
        %1744 = vmatprep.subr.mxu0 0.0
        %1745 = vmatpush2.xpose.msra.mxu0 0.0
        %1746 = vmatprep.subr.mxu0 0.0
        %1747 = vmatpush2.xpose.msra.mxu0 0.0
        %1748 = vmatprep.subr.mxu0 0.0
        %1749 = vmatpush2.xpose.msra.mxu0 0.0
        %1750 = vmatprep.subr.mxu0 0.0
        %1751 = vmatpush2.xpose.msra.mxu0 0.0
        %1752 = vmatprep.subr.mxu0 0.0
        %1753 = vmatpush2.xpose.msra.mxu0 0.0
        %1754 = vmatprep.subr.mxu0 0.0
        %1755 = vmatpush2.xpose.msra.mxu0 0.0
        %1756 = vmatprep.subr.mxu0 0.0
        %1757 = vmatpush2.xpose.msra.mxu0 0.0
        %1758 = vmatprep.subr.mxu0 0.0
        %1759 = vmatpush2.xpose.msra.mxu0 0.0
        %1760 = vmatprep.subr.mxu0 0.0
        %1761 = vmatpush2.xpose.msra.mxu0 0.0
        %1762 = vmatprep.subr.mxu0 0.0
        %1763 = vmatpush2.xpose.msra.mxu0 0.0
        %1764 = vmatprep.subr.mxu0 0.0
        %1765 = vmatpush2.xpose.msra.mxu0 0.0
        %1766 = vmatprep.subr.mxu0 0.0
        %1767 = vmatpush2.xpose.msra.mxu0 0.0
        %1768 = vmatprep.subr.mxu0 0.0
        %1769 = vmatpush2.xpose.msra.mxu0 0.0
        %1770 = vmatprep.subr.mxu0 0.0
        %1771 = vmatpush2.xpose.msra.mxu0 0.0
        %1772 = vmatprep.mubr.f32.mxu0 0.0
        %v1773 = vand.u32 %v1549, 4294901760
        %v1774 = vsub.f32 %v1549, %v1773
        %1775 = vmatmul.mubr.f32.gmra.mxu0 %v1774
        %v1776 = vpop.f32.mrf.mxu0
        %v1777 = vadd.f32 %v1703, %v1776
        %v1778 = vpop.f32.mrf.mxu0
        %1779 = vdwg.mxu0
        %1780 = vmatprep.subr.mxu0 0.0
        %1781 = vmatpush1.xpose.msra.mxu0 0.0
        %1782 = vmatprep.subr.mxu0 0.0
        %1783 = vmatpush1.xpose.msra.mxu0 0.0
        %1784 = vmatprep.subr.mxu0 0.0
        %1785 = vmatpush1.xpose.msra.mxu0 0.0
        %1786 = vmatprep.subr.mxu0 0.0
        %1787 = vmatpush1.xpose.msra.mxu0 0.0
        %1788 = vmatprep.subr.mxu0 0.0
        %1789 = vmatpush1.xpose.msra.mxu0 0.0
        %1790 = vmatprep.subr.mxu0 0.0
        %1791 = vmatpush1.xpose.msra.mxu0 0.0
        %1792 = vmatprep.subr.mxu0 0.0
        %1793 = vmatpush1.xpose.msra.mxu0 0.0
        %1794 = vmatprep.subr.mxu0 0.0
        %1795 = vmatpush1.xpose.msra.mxu0 0.0
        %1796 = vmatprep.subr.mxu0 0.0
        %1797 = vmatpush1.xpose.msra.mxu0 0.0
        %1798 = vmatprep.subr.mxu0 0.0
        %1799 = vmatpush1.xpose.msra.mxu0 0.0
        %1800 = vmatprep.subr.mxu0 0.0
        %1801 = vmatpush1.xpose.msra.mxu0 0.0
        %1802 = vmatprep.subr.mxu0 0.0
        %1803 = vmatpush1.xpose.msra.mxu0 0.0
        %1804 = vmatprep.subr.mxu0 0.0
        %1805 = vmatpush1.xpose.msra.mxu0 0.0
        %1806 = vmatprep.subr.mxu0 0.0
        %1807 = vmatpush1.xpose.msra.mxu0 0.0
        %1808 = vmatprep.subr.mxu0 0.0
        %1809 = vmatpush1.xpose.msra.mxu0 0.0
        %1810 = vmatprep.subr.mxu0 0.0
        %v1811 = vand.u32 %v1552, 4294901760
        %1812 = vmatpush1.xpose.msra.mxu0 %v1811
        %1813 = vmatprep.subr.mxu0 0.0
        %1814 = vmatpush2.xpose.msra.mxu0 0.0
        %1815 = vmatprep.subr.mxu0 0.0
        %1816 = vmatpush2.xpose.msra.mxu0 0.0
        %1817 = vmatprep.subr.mxu0 0.0
        %1818 = vmatpush2.xpose.msra.mxu0 0.0
        %1819 = vmatprep.subr.mxu0 0.0
        %1820 = vmatpush2.xpose.msra.mxu0 0.0
        %1821 = vmatprep.subr.mxu0 0.0
        %1822 = vmatpush2.xpose.msra.mxu0 0.0
        %1823 = vmatprep.subr.mxu0 0.0
        %1824 = vmatpush2.xpose.msra.mxu0 0.0
        %1825 = vmatprep.subr.mxu0 0.0
        %1826 = vmatpush2.xpose.msra.mxu0 0.0
        %1827 = vmatprep.subr.mxu0 0.0
        %1828 = vmatpush2.xpose.msra.mxu0 0.0
        %1829 = vmatprep.subr.mxu0 0.0
        %1830 = vmatpush2.xpose.msra.mxu0 0.0
        %1831 = vmatprep.subr.mxu0 0.0
        %1832 = vmatpush2.xpose.msra.mxu0 0.0
        %1833 = vmatprep.subr.mxu0 0.0
        %1834 = vmatpush2.xpose.msra.mxu0 0.0
        %1835 = vmatprep.subr.mxu0 0.0
        %1836 = vmatpush2.xpose.msra.mxu0 0.0
        %1837 = vmatprep.subr.mxu0 0.0
        %1838 = vmatpush2.xpose.msra.mxu0 0.0
        %1839 = vmatprep.subr.mxu0 0.0
        %1840 = vmatpush2.xpose.msra.mxu0 0.0
        %1841 = vmatprep.subr.mxu0 0.0
        %1842 = vmatpush2.xpose.msra.mxu0 0.0
        %1843 = vmatprep.subr.mxu0 0.0
        %1844 = vmatpush2.xpose.msra.mxu0 0.0
        %1845 = vmatprep.mubr.f32.mxu0 0.0
        %v1846 = vand.u32 %v1549, 4294901760
        %v1847 = vsub.f32 %v1549, %v1846
        %v1848 = vand.u32 %v1847, 4294901760
        %1849 = vmatmul.mubr.f32.gmra.mxu0 %v1848
        %v1850 = vpop.f32.mrf.mxu0
        %v1851 = vadd.f32 %v1777, %v1850
        %v1852 = vpop.f32.mrf.mxu0
        %1853 = vdwg.mxu0
        %1854 = vmatprep.subr.mxu0 0.0
        %1855 = vmatpush1.xpose.msra.mxu0 0.0
        %1856 = vmatprep.subr.mxu0 0.0
        %1857 = vmatpush1.xpose.msra.mxu0 0.0
        %1858 = vmatprep.subr.mxu0 0.0
        %1859 = vmatpush1.xpose.msra.mxu0 0.0
        %1860 = vmatprep.subr.mxu0 0.0
        %1861 = vmatpush1.xpose.msra.mxu0 0.0
        %1862 = vmatprep.subr.mxu0 0.0
        %1863 = vmatpush1.xpose.msra.mxu0 0.0
        %1864 = vmatprep.subr.mxu0 0.0
        %1865 = vmatpush1.xpose.msra.mxu0 0.0
        %1866 = vmatprep.subr.mxu0 0.0
        %1867 = vmatpush1.xpose.msra.mxu0 0.0
        %1868 = vmatprep.subr.mxu0 0.0
        %1869 = vmatpush1.xpose.msra.mxu0 0.0
        %1870 = vmatprep.subr.mxu0 0.0
        %1871 = vmatpush1.xpose.msra.mxu0 0.0
        %1872 = vmatprep.subr.mxu0 0.0
        %1873 = vmatpush1.xpose.msra.mxu0 0.0
        %1874 = vmatprep.subr.mxu0 0.0
        %1875 = vmatpush1.xpose.msra.mxu0 0.0
        %1876 = vmatprep.subr.mxu0 0.0
        %1877 = vmatpush1.xpose.msra.mxu0 0.0
        %1878 = vmatprep.subr.mxu0 0.0
        %1879 = vmatpush1.xpose.msra.mxu0 0.0
        %1880 = vmatprep.subr.mxu0 0.0
        %1881 = vmatpush1.xpose.msra.mxu0 0.0
        %1882 = vmatprep.subr.mxu0 0.0
        %1883 = vmatpush1.xpose.msra.mxu0 0.0
        %1884 = vmatprep.subr.mxu0 0.0
        %v1885 = vand.u32 %v1552, 4294901760
        %v1886 = vsub.f32 %v1552, %v1885
        %v1887 = vand.u32 %v1886, 4294901760
        %1888 = vmatpush1.xpose.msra.mxu0 %v1887
        %1889 = vmatprep.subr.mxu0 0.0
        %1890 = vmatpush2.xpose.msra.mxu0 0.0
        %1891 = vmatprep.subr.mxu0 0.0
        %1892 = vmatpush2.xpose.msra.mxu0 0.0
        %1893 = vmatprep.subr.mxu0 0.0
        %1894 = vmatpush2.xpose.msra.mxu0 0.0
        %1895 = vmatprep.subr.mxu0 0.0
        %1896 = vmatpush2.xpose.msra.mxu0 0.0
        %1897 = vmatprep.subr.mxu0 0.0
        %1898 = vmatpush2.xpose.msra.mxu0 0.0
        %1899 = vmatprep.subr.mxu0 0.0
        %1900 = vmatpush2.xpose.msra.mxu0 0.0
        %1901 = vmatprep.subr.mxu0 0.0
        %1902 = vmatpush2.xpose.msra.mxu0 0.0
        %1903 = vmatprep.subr.mxu0 0.0
        %1904 = vmatpush2.xpose.msra.mxu0 0.0
        %1905 = vmatprep.subr.mxu0 0.0
        %1906 = vmatpush2.xpose.msra.mxu0 0.0
        %1907 = vmatprep.subr.mxu0 0.0
        %1908 = vmatpush2.xpose.msra.mxu0 0.0
        %1909 = vmatprep.subr.mxu0 0.0
        %1910 = vmatpush2.xpose.msra.mxu0 0.0
        %1911 = vmatprep.subr.mxu0 0.0
        %1912 = vmatpush2.xpose.msra.mxu0 0.0
        %1913 = vmatprep.subr.mxu0 0.0
        %1914 = vmatpush2.xpose.msra.mxu0 0.0
        %1915 = vmatprep.subr.mxu0 0.0
        %1916 = vmatpush2.xpose.msra.mxu0 0.0
        %1917 = vmatprep.subr.mxu0 0.0
        %1918 = vmatpush2.xpose.msra.mxu0 0.0
        %1919 = vmatprep.subr.mxu0 0.0
        %1920 = vmatpush2.xpose.msra.mxu0 0.0
        %1921 = vmatprep.mubr.f32.mxu0 0.0
        %v1922 = vand.u32 %v1549, 4294901760
        %1923 = vmatmul.mubr.f32.gmra.mxu0 %v1922
        %v1924 = vpop.f32.mrf.mxu0
        %v1925 = vadd.f32 %v1851, %v1924
        %v1926 = vpop.f32.mrf.mxu0
        %1927 = vdwg.mxu0
        %1928 = vmatprep.subr.mxu0 0.0
        %1929 = vmatpush1.xpose.msra.mxu0 0.0
        %1930 = vmatprep.subr.mxu0 0.0
        %1931 = vmatpush1.xpose.msra.mxu0 0.0
        %1932 = vmatprep.subr.mxu0 0.0
        %1933 = vmatpush1.xpose.msra.mxu0 0.0
        %1934 = vmatprep.subr.mxu0 0.0
        %1935 = vmatpush1.xpose.msra.mxu0 0.0
        %1936 = vmatprep.subr.mxu0 0.0
        %1937 = vmatpush1.xpose.msra.mxu0 0.0
        %1938 = vmatprep.subr.mxu0 0.0
        %1939 = vmatpush1.xpose.msra.mxu0 0.0
        %1940 = vmatprep.subr.mxu0 0.0
        %1941 = vmatpush1.xpose.msra.mxu0 0.0
        %1942 = vmatprep.subr.mxu0 0.0
        %1943 = vmatpush1.xpose.msra.mxu0 0.0
        %1944 = vmatprep.subr.mxu0 0.0
        %1945 = vmatpush1.xpose.msra.mxu0 0.0
        %1946 = vmatprep.subr.mxu0 0.0
        %1947 = vmatpush1.xpose.msra.mxu0 0.0
        %1948 = vmatprep.subr.mxu0 0.0
        %1949 = vmatpush1.xpose.msra.mxu0 0.0
        %1950 = vmatprep.subr.mxu0 0.0
        %1951 = vmatpush1.xpose.msra.mxu0 0.0
        %1952 = vmatprep.subr.mxu0 0.0
        %1953 = vmatpush1.xpose.msra.mxu0 0.0
        %1954 = vmatprep.subr.mxu0 0.0
        %1955 = vmatpush1.xpose.msra.mxu0 0.0
        %1956 = vmatprep.subr.mxu0 0.0
        %1957 = vmatpush1.xpose.msra.mxu0 0.0
        %1958 = vmatprep.subr.mxu0 0.0
        %v1959 = vand.u32 %v1552, 4294901760
        %1960 = vmatpush1.xpose.msra.mxu0 %v1959
        %1961 = vmatprep.subr.mxu0 0.0
        %1962 = vmatpush2.xpose.msra.mxu0 0.0
        %1963 = vmatprep.subr.mxu0 0.0
        %1964 = vmatpush2.xpose.msra.mxu0 0.0
        %1965 = vmatprep.subr.mxu0 0.0
        %1966 = vmatpush2.xpose.msra.mxu0 0.0
        %1967 = vmatprep.subr.mxu0 0.0
        %1968 = vmatpush2.xpose.msra.mxu0 0.0
        %1969 = vmatprep.subr.mxu0 0.0
        %1970 = vmatpush2.xpose.msra.mxu0 0.0
        %1971 = vmatprep.subr.mxu0 0.0
        %1972 = vmatpush2.xpose.msra.mxu0 0.0
        %1973 = vmatprep.subr.mxu0 0.0
        %1974 = vmatpush2.xpose.msra.mxu0 0.0
        %1975 = vmatprep.subr.mxu0 0.0
        %1976 = vmatpush2.xpose.msra.mxu0 0.0
        %1977 = vmatprep.subr.mxu0 0.0
        %1978 = vmatpush2.xpose.msra.mxu0 0.0
        %1979 = vmatprep.subr.mxu0 0.0
        %1980 = vmatpush2.xpose.msra.mxu0 0.0
        %1981 = vmatprep.subr.mxu0 0.0
        %1982 = vmatpush2.xpose.msra.mxu0 0.0
        %1983 = vmatprep.subr.mxu0 0.0
        %1984 = vmatpush2.xpose.msra.mxu0 0.0
        %1985 = vmatprep.subr.mxu0 0.0
        %1986 = vmatpush2.xpose.msra.mxu0 0.0
        %1987 = vmatprep.subr.mxu0 0.0
        %1988 = vmatpush2.xpose.msra.mxu0 0.0
        %1989 = vmatprep.subr.mxu0 0.0
        %1990 = vmatpush2.xpose.msra.mxu0 0.0
        %1991 = vmatprep.subr.mxu0 0.0
        %1992 = vmatpush2.xpose.msra.mxu0 0.0
        %1993 = vmatprep.mubr.f32.mxu0 0.0
        %v1994 = vand.u32 %v1549, 4294901760
        %1995 = vmatmul.mubr.f32.gmra.mxu0 %v1994
        %v1996 = vpop.f32.mrf.mxu0
        %v1997 = vadd.f32 %v1925, %v1996
        %v1998 = vpop.f32.mrf.mxu0
        %1999 = vdwg.mxu0
        %v2001 = vsel %vm1547, %v1237, 0
        %v2004 = vsel %vm1547, %v1392, 0
        %2006 = vmatprep.subr.mxu0 0.0
        %2007 = vmatpush1.xpose.msra.mxu0 0.0
        %2008 = vmatprep.subr.mxu0 0.0
        %2009 = vmatpush1.xpose.msra.mxu0 0.0
        %2010 = vmatprep.subr.mxu0 0.0
        %2011 = vmatpush1.xpose.msra.mxu0 0.0
        %2012 = vmatprep.subr.mxu0 0.0
        %2013 = vmatpush1.xpose.msra.mxu0 0.0
        %2014 = vmatprep.subr.mxu0 0.0
        %2015 = vmatpush1.xpose.msra.mxu0 0.0
        %2016 = vmatprep.subr.mxu0 0.0
        %2017 = vmatpush1.xpose.msra.mxu0 0.0
        %2018 = vmatprep.subr.mxu0 0.0
        %2019 = vmatpush1.xpose.msra.mxu0 0.0
        %2020 = vmatprep.subr.mxu0 0.0
        %2021 = vmatpush1.xpose.msra.mxu0 0.0
        %2022 = vmatprep.subr.mxu0 0.0
        %2023 = vmatpush1.xpose.msra.mxu0 0.0
        %2024 = vmatprep.subr.mxu0 0.0
        %2025 = vmatpush1.xpose.msra.mxu0 0.0
        %2026 = vmatprep.subr.mxu0 0.0
        %2027 = vmatpush1.xpose.msra.mxu0 0.0
        %2028 = vmatprep.subr.mxu0 0.0
        %2029 = vmatpush1.xpose.msra.mxu0 0.0
        %2030 = vmatprep.subr.mxu0 0.0
        %2031 = vmatpush1.xpose.msra.mxu0 0.0
        %2032 = vmatprep.subr.mxu0 0.0
        %2033 = vmatpush1.xpose.msra.mxu0 0.0
        %2034 = vmatprep.subr.mxu0 0.0
        %2035 = vmatpush1.xpose.msra.mxu0 0.0
        %2036 = vmatprep.subr.mxu0 0.0
        %v2037 = vand.u32 %v2004, 4294901760
        %2038 = vmatpush1.xpose.msra.mxu0 %v2037
        %2039 = vmatprep.subr.mxu0 0.0
        %2040 = vmatpush2.xpose.msra.mxu0 0.0
        %2041 = vmatprep.subr.mxu0 0.0
        %2042 = vmatpush2.xpose.msra.mxu0 0.0
        %2043 = vmatprep.subr.mxu0 0.0
        %2044 = vmatpush2.xpose.msra.mxu0 0.0
        %2045 = vmatprep.subr.mxu0 0.0
        %2046 = vmatpush2.xpose.msra.mxu0 0.0
        %2047 = vmatprep.subr.mxu0 0.0
        %2048 = vmatpush2.xpose.msra.mxu0 0.0
        %2049 = vmatprep.subr.mxu0 0.0
        %2050 = vmatpush2.xpose.msra.mxu0 0.0
        %2051 = vmatprep.subr.mxu0 0.0
        %2052 = vmatpush2.xpose.msra.mxu0 0.0
        %2053 = vmatprep.subr.mxu0 0.0
        %2054 = vmatpush2.xpose.msra.mxu0 0.0
        %2055 = vmatprep.subr.mxu0 0.0
        %2056 = vmatpush2.xpose.msra.mxu0 0.0
        %2057 = vmatprep.subr.mxu0 0.0
        %2058 = vmatpush2.xpose.msra.mxu0 0.0
        %2059 = vmatprep.subr.mxu0 0.0
        %2060 = vmatpush2.xpose.msra.mxu0 0.0
        %2061 = vmatprep.subr.mxu0 0.0
        %2062 = vmatpush2.xpose.msra.mxu0 0.0
        %2063 = vmatprep.subr.mxu0 0.0
        %2064 = vmatpush2.xpose.msra.mxu0 0.0
        %2065 = vmatprep.subr.mxu0 0.0
        %2066 = vmatpush2.xpose.msra.mxu0 0.0
        %2067 = vmatprep.subr.mxu0 0.0
        %2068 = vmatpush2.xpose.msra.mxu0 0.0
        %2069 = vmatprep.subr.mxu0 0.0
        %2070 = vmatpush2.xpose.msra.mxu0 0.0
        %2071 = vmatprep.mubr.f32.mxu0 0.0
        %v2072 = vand.u32 %v2001, 4294901760
        %v2073 = vsub.f32 %v2001, %v2072
        %v2074 = vand.u32 %v2073, 4294901760
        %v2075 = vsub.f32 %v2073, %v2074
        %v2076 = vand.u32 %v2075, 4294901760
        %2077 = vmatmul.mubr.f32.gmra.mxu0 %v2076
        %v2078 = vpop.f32.mrf.mxu0
        %v2079 = vadd.f32 %v1544, %v2078
        %v2080 = vpop.f32.mrf.mxu0
        %2081 = vdwg.mxu0
        %2082 = vmatprep.subr.mxu0 0.0
        %2083 = vmatpush1.xpose.msra.mxu0 0.0
        %2084 = vmatprep.subr.mxu0 0.0
        %2085 = vmatpush1.xpose.msra.mxu0 0.0
        %2086 = vmatprep.subr.mxu0 0.0
        %2087 = vmatpush1.xpose.msra.mxu0 0.0
        %2088 = vmatprep.subr.mxu0 0.0
        %2089 = vmatpush1.xpose.msra.mxu0 0.0
        %2090 = vmatprep.subr.mxu0 0.0
        %2091 = vmatpush1.xpose.msra.mxu0 0.0
        %2092 = vmatprep.subr.mxu0 0.0
        %2093 = vmatpush1.xpose.msra.mxu0 0.0
        %2094 = vmatprep.subr.mxu0 0.0
        %2095 = vmatpush1.xpose.msra.mxu0 0.0
        %2096 = vmatprep.subr.mxu0 0.0
        %2097 = vmatpush1.xpose.msra.mxu0 0.0
        %2098 = vmatprep.subr.mxu0 0.0
        %2099 = vmatpush1.xpose.msra.mxu0 0.0
        %2100 = vmatprep.subr.mxu0 0.0
        %2101 = vmatpush1.xpose.msra.mxu0 0.0
        %2102 = vmatprep.subr.mxu0 0.0
        %2103 = vmatpush1.xpose.msra.mxu0 0.0
        %2104 = vmatprep.subr.mxu0 0.0
        %2105 = vmatpush1.xpose.msra.mxu0 0.0
        %2106 = vmatprep.subr.mxu0 0.0
        %2107 = vmatpush1.xpose.msra.mxu0 0.0
        %2108 = vmatprep.subr.mxu0 0.0
        %2109 = vmatpush1.xpose.msra.mxu0 0.0
        %2110 = vmatprep.subr.mxu0 0.0
        %2111 = vmatpush1.xpose.msra.mxu0 0.0
        %2112 = vmatprep.subr.mxu0 0.0
        %v2113 = vand.u32 %v2004, 4294901760
        %v2114 = vsub.f32 %v2004, %v2113
        %v2115 = vand.u32 %v2114, 4294901760
        %v2116 = vsub.f32 %v2114, %v2115
        %v2117 = vand.u32 %v2116, 4294901760
        %2118 = vmatpush1.xpose.msra.mxu0 %v2117
        %2119 = vmatprep.subr.mxu0 0.0
        %2120 = vmatpush2.xpose.msra.mxu0 0.0
        %2121 = vmatprep.subr.mxu0 0.0
        %2122 = vmatpush2.xpose.msra.mxu0 0.0
        %2123 = vmatprep.subr.mxu0 0.0
        %2124 = vmatpush2.xpose.msra.mxu0 0.0
        %2125 = vmatprep.subr.mxu0 0.0
        %2126 = vmatpush2.xpose.msra.mxu0 0.0
        %2127 = vmatprep.subr.mxu0 0.0
        %2128 = vmatpush2.xpose.msra.mxu0 0.0
        %2129 = vmatprep.subr.mxu0 0.0
        %2130 = vmatpush2.xpose.msra.mxu0 0.0
        %2131 = vmatprep.subr.mxu0 0.0
        %2132 = vmatpush2.xpose.msra.mxu0 0.0
        %2133 = vmatprep.subr.mxu0 0.0
        %2134 = vmatpush2.xpose.msra.mxu0 0.0
        %2135 = vmatprep.subr.mxu0 0.0
        %2136 = vmatpush2.xpose.msra.mxu0 0.0
        %2137 = vmatprep.subr.mxu0 0.0
        %2138 = vmatpush2.xpose.msra.mxu0 0.0
        %2139 = vmatprep.subr.mxu0 0.0
        %2140 = vmatpush2.xpose.msra.mxu0 0.0
        %2141 = vmatprep.subr.mxu0 0.0
        %2142 = vmatpush2.xpose.msra.mxu0 0.0
        %2143 = vmatprep.subr.mxu0 0.0
        %2144 = vmatpush2.xpose.msra.mxu0 0.0
        %2145 = vmatprep.subr.mxu0 0.0
        %2146 = vmatpush2.xpose.msra.mxu0 0.0
        %2147 = vmatprep.subr.mxu0 0.0
        %2148 = vmatpush2.xpose.msra.mxu0 0.0
        %2149 = vmatprep.subr.mxu0 0.0
        %2150 = vmatpush2.xpose.msra.mxu0 0.0
        %2151 = vmatprep.mubr.f32.mxu0 0.0
        %v2152 = vand.u32 %v2001, 4294901760
        %2153 = vmatmul.mubr.f32.gmra.mxu0 %v2152
        %v2154 = vpop.f32.mrf.mxu0
        %v2155 = vadd.f32 %v2079, %v2154
        %v2156 = vpop.f32.mrf.mxu0
        %2157 = vdwg.mxu0
        %2158 = vmatprep.subr.mxu0 0.0
        %2159 = vmatpush1.xpose.msra.mxu0 0.0
        %2160 = vmatprep.subr.mxu0 0.0
        %2161 = vmatpush1.xpose.msra.mxu0 0.0
        %2162 = vmatprep.subr.mxu0 0.0
        %2163 = vmatpush1.xpose.msra.mxu0 0.0
        %2164 = vmatprep.subr.mxu0 0.0
        %2165 = vmatpush1.xpose.msra.mxu0 0.0
        %2166 = vmatprep.subr.mxu0 0.0
        %2167 = vmatpush1.xpose.msra.mxu0 0.0
        %2168 = vmatprep.subr.mxu0 0.0
        %2169 = vmatpush1.xpose.msra.mxu0 0.0
        %2170 = vmatprep.subr.mxu0 0.0
        %2171 = vmatpush1.xpose.msra.mxu0 0.0
        %2172 = vmatprep.subr.mxu0 0.0
        %2173 = vmatpush1.xpose.msra.mxu0 0.0
        %2174 = vmatprep.subr.mxu0 0.0
        %2175 = vmatpush1.xpose.msra.mxu0 0.0
        %2176 = vmatprep.subr.mxu0 0.0
        %2177 = vmatpush1.xpose.msra.mxu0 0.0
        %2178 = vmatprep.subr.mxu0 0.0
        %2179 = vmatpush1.xpose.msra.mxu0 0.0
        %2180 = vmatprep.subr.mxu0 0.0
        %2181 = vmatpush1.xpose.msra.mxu0 0.0
        %2182 = vmatprep.subr.mxu0 0.0
        %2183 = vmatpush1.xpose.msra.mxu0 0.0
        %2184 = vmatprep.subr.mxu0 0.0
        %2185 = vmatpush1.xpose.msra.mxu0 0.0
        %2186 = vmatprep.subr.mxu0 0.0
        %2187 = vmatpush1.xpose.msra.mxu0 0.0
        %2188 = vmatprep.subr.mxu0 0.0
        %v2189 = vand.u32 %v2004, 4294901760
        %v2190 = vsub.f32 %v2004, %v2189
        %2191 = vmatpush1.xpose.msra.mxu0 %v2190
        %2192 = vmatprep.subr.mxu0 0.0
        %2193 = vmatpush2.xpose.msra.mxu0 0.0
        %2194 = vmatprep.subr.mxu0 0.0
        %2195 = vmatpush2.xpose.msra.mxu0 0.0
        %2196 = vmatprep.subr.mxu0 0.0
        %2197 = vmatpush2.xpose.msra.mxu0 0.0
        %2198 = vmatprep.subr.mxu0 0.0
        %2199 = vmatpush2.xpose.msra.mxu0 0.0
        %2200 = vmatprep.subr.mxu0 0.0
        %2201 = vmatpush2.xpose.msra.mxu0 0.0
        %2202 = vmatprep.subr.mxu0 0.0
        %2203 = vmatpush2.xpose.msra.mxu0 0.0
        %2204 = vmatprep.subr.mxu0 0.0
        %2205 = vmatpush2.xpose.msra.mxu0 0.0
        %2206 = vmatprep.subr.mxu0 0.0
        %2207 = vmatpush2.xpose.msra.mxu0 0.0
        %2208 = vmatprep.subr.mxu0 0.0
        %2209 = vmatpush2.xpose.msra.mxu0 0.0
        %2210 = vmatprep.subr.mxu0 0.0
        %2211 = vmatpush2.xpose.msra.mxu0 0.0
        %2212 = vmatprep.subr.mxu0 0.0
        %2213 = vmatpush2.xpose.msra.mxu0 0.0
        %2214 = vmatprep.subr.mxu0 0.0
        %2215 = vmatpush2.xpose.msra.mxu0 0.0
        %2216 = vmatprep.subr.mxu0 0.0
        %2217 = vmatpush2.xpose.msra.mxu0 0.0
        %2218 = vmatprep.subr.mxu0 0.0
        %2219 = vmatpush2.xpose.msra.mxu0 0.0
        %2220 = vmatprep.subr.mxu0 0.0
        %2221 = vmatpush2.xpose.msra.mxu0 0.0
        %2222 = vmatprep.subr.mxu0 0.0
        %2223 = vmatpush2.xpose.msra.mxu0 0.0
        %2224 = vmatprep.mubr.f32.mxu0 0.0
        %v2225 = vand.u32 %v2001, 4294901760
        %v2226 = vsub.f32 %v2001, %v2225
        %2227 = vmatmul.mubr.f32.gmra.mxu0 %v2226
        %v2228 = vpop.f32.mrf.mxu0
        %v2229 = vadd.f32 %v2155, %v2228
        %v2230 = vpop.f32.mrf.mxu0
        %2231 = vdwg.mxu0
        %2232 = vmatprep.subr.mxu0 0.0
        %2233 = vmatpush1.xpose.msra.mxu0 0.0
        %2234 = vmatprep.subr.mxu0 0.0
        %2235 = vmatpush1.xpose.msra.mxu0 0.0
        %2236 = vmatprep.subr.mxu0 0.0
        %2237 = vmatpush1.xpose.msra.mxu0 0.0
        %2238 = vmatprep.subr.mxu0 0.0
        %2239 = vmatpush1.xpose.msra.mxu0 0.0
        %2240 = vmatprep.subr.mxu0 0.0
        %2241 = vmatpush1.xpose.msra.mxu0 0.0
        %2242 = vmatprep.subr.mxu0 0.0
        %2243 = vmatpush1.xpose.msra.mxu0 0.0
        %2244 = vmatprep.subr.mxu0 0.0
        %2245 = vmatpush1.xpose.msra.mxu0 0.0
        %2246 = vmatprep.subr.mxu0 0.0
        %2247 = vmatpush1.xpose.msra.mxu0 0.0
        %2248 = vmatprep.subr.mxu0 0.0
        %2249 = vmatpush1.xpose.msra.mxu0 0.0
        %2250 = vmatprep.subr.mxu0 0.0
        %2251 = vmatpush1.xpose.msra.mxu0 0.0
        %2252 = vmatprep.subr.mxu0 0.0
        %2253 = vmatpush1.xpose.msra.mxu0 0.0
        %2254 = vmatprep.subr.mxu0 0.0
        %2255 = vmatpush1.xpose.msra.mxu0 0.0
        %2256 = vmatprep.subr.mxu0 0.0
        %2257 = vmatpush1.xpose.msra.mxu0 0.0
        %2258 = vmatprep.subr.mxu0 0.0
        %2259 = vmatpush1.xpose.msra.mxu0 0.0
        %2260 = vmatprep.subr.mxu0 0.0
        %2261 = vmatpush1.xpose.msra.mxu0 0.0
        %2262 = vmatprep.subr.mxu0 0.0
        %v2263 = vand.u32 %v2004, 4294901760
        %2264 = vmatpush1.xpose.msra.mxu0 %v2263
        %2265 = vmatprep.subr.mxu0 0.0
        %2266 = vmatpush2.xpose.msra.mxu0 0.0
        %2267 = vmatprep.subr.mxu0 0.0
        %2268 = vmatpush2.xpose.msra.mxu0 0.0
        %2269 = vmatprep.subr.mxu0 0.0
        %2270 = vmatpush2.xpose.msra.mxu0 0.0
        %2271 = vmatprep.subr.mxu0 0.0
        %2272 = vmatpush2.xpose.msra.mxu0 0.0
        %2273 = vmatprep.subr.mxu0 0.0
        %2274 = vmatpush2.xpose.msra.mxu0 0.0
        %2275 = vmatprep.subr.mxu0 0.0
        %2276 = vmatpush2.xpose.msra.mxu0 0.0
        %2277 = vmatprep.subr.mxu0 0.0
        %2278 = vmatpush2.xpose.msra.mxu0 0.0
        %2279 = vmatprep.subr.mxu0 0.0
        %2280 = vmatpush2.xpose.msra.mxu0 0.0
        %2281 = vmatprep.subr.mxu0 0.0
        %2282 = vmatpush2.xpose.msra.mxu0 0.0
        %2283 = vmatprep.subr.mxu0 0.0
        %2284 = vmatpush2.xpose.msra.mxu0 0.0
        %2285 = vmatprep.subr.mxu0 0.0
        %2286 = vmatpush2.xpose.msra.mxu0 0.0
        %2287 = vmatprep.subr.mxu0 0.0
        %2288 = vmatpush2.xpose.msra.mxu0 0.0
        %2289 = vmatprep.subr.mxu0 0.0
        %2290 = vmatpush2.xpose.msra.mxu0 0.0
        %2291 = vmatprep.subr.mxu0 0.0
        %2292 = vmatpush2.xpose.msra.mxu0 0.0
        %2293 = vmatprep.subr.mxu0 0.0
        %2294 = vmatpush2.xpose.msra.mxu0 0.0
        %2295 = vmatprep.subr.mxu0 0.0
        %2296 = vmatpush2.xpose.msra.mxu0 0.0
        %2297 = vmatprep.mubr.f32.mxu0 0.0
        %v2298 = vand.u32 %v2001, 4294901760
        %v2299 = vsub.f32 %v2001, %v2298
        %v2300 = vand.u32 %v2299, 4294901760
        %2301 = vmatmul.mubr.f32.gmra.mxu0 %v2300
        %v2302 = vpop.f32.mrf.mxu0
        %v2303 = vadd.f32 %v2229, %v2302
        %v2304 = vpop.f32.mrf.mxu0
        %2305 = vdwg.mxu0
        %2306 = vmatprep.subr.mxu0 0.0
        %2307 = vmatpush1.xpose.msra.mxu0 0.0
        %2308 = vmatprep.subr.mxu0 0.0
        %2309 = vmatpush1.xpose.msra.mxu0 0.0
        %2310 = vmatprep.subr.mxu0 0.0
        %2311 = vmatpush1.xpose.msra.mxu0 0.0
        %2312 = vmatprep.subr.mxu0 0.0
        %2313 = vmatpush1.xpose.msra.mxu0 0.0
        %2314 = vmatprep.subr.mxu0 0.0
        %2315 = vmatpush1.xpose.msra.mxu0 0.0
        %2316 = vmatprep.subr.mxu0 0.0
        %2317 = vmatpush1.xpose.msra.mxu0 0.0
        %2318 = vmatprep.subr.mxu0 0.0
        %2319 = vmatpush1.xpose.msra.mxu0 0.0
        %2320 = vmatprep.subr.mxu0 0.0
        %2321 = vmatpush1.xpose.msra.mxu0 0.0
        %2322 = vmatprep.subr.mxu0 0.0
        %2323 = vmatpush1.xpose.msra.mxu0 0.0
        %2324 = vmatprep.subr.mxu0 0.0
        %2325 = vmatpush1.xpose.msra.mxu0 0.0
        %2326 = vmatprep.subr.mxu0 0.0
        %2327 = vmatpush1.xpose.msra.mxu0 0.0
        %2328 = vmatprep.subr.mxu0 0.0
        %2329 = vmatpush1.xpose.msra.mxu0 0.0
        %2330 = vmatprep.subr.mxu0 0.0
        %2331 = vmatpush1.xpose.msra.mxu0 0.0
        %2332 = vmatprep.subr.mxu0 0.0
        %2333 = vmatpush1.xpose.msra.mxu0 0.0
        %2334 = vmatprep.subr.mxu0 0.0
        %2335 = vmatpush1.xpose.msra.mxu0 0.0
        %2336 = vmatprep.subr.mxu0 0.0
        %v2337 = vand.u32 %v2004, 4294901760
        %v2338 = vsub.f32 %v2004, %v2337
        %v2339 = vand.u32 %v2338, 4294901760
        %2340 = vmatpush1.xpose.msra.mxu0 %v2339
        %2341 = vmatprep.subr.mxu0 0.0
        %2342 = vmatpush2.xpose.msra.mxu0 0.0
        %2343 = vmatprep.subr.mxu0 0.0
        %2344 = vmatpush2.xpose.msra.mxu0 0.0
        %2345 = vmatprep.subr.mxu0 0.0
        %2346 = vmatpush2.xpose.msra.mxu0 0.0
        %2347 = vmatprep.subr.mxu0 0.0
        %2348 = vmatpush2.xpose.msra.mxu0 0.0
        %2349 = vmatprep.subr.mxu0 0.0
        %2350 = vmatpush2.xpose.msra.mxu0 0.0
        %2351 = vmatprep.subr.mxu0 0.0
        %2352 = vmatpush2.xpose.msra.mxu0 0.0
        %2353 = vmatprep.subr.mxu0 0.0
        %2354 = vmatpush2.xpose.msra.mxu0 0.0
        %2355 = vmatprep.subr.mxu0 0.0
        %2356 = vmatpush2.xpose.msra.mxu0 0.0
        %2357 = vmatprep.subr.mxu0 0.0
        %2358 = vmatpush2.xpose.msra.mxu0 0.0
        %2359 = vmatprep.subr.mxu0 0.0
        %2360 = vmatpush2.xpose.msra.mxu0 0.0
        %2361 = vmatprep.subr.mxu0 0.0
        %2362 = vmatpush2.xpose.msra.mxu0 0.0
        %2363 = vmatprep.subr.mxu0 0.0
        %2364 = vmatpush2.xpose.msra.mxu0 0.0
        %2365 = vmatprep.subr.mxu0 0.0
        %2366 = vmatpush2.xpose.msra.mxu0 0.0
        %2367 = vmatprep.subr.mxu0 0.0
        %2368 = vmatpush2.xpose.msra.mxu0 0.0
        %2369 = vmatprep.subr.mxu0 0.0
        %2370 = vmatpush2.xpose.msra.mxu0 0.0
        %2371 = vmatprep.subr.mxu0 0.0
        %2372 = vmatpush2.xpose.msra.mxu0 0.0
        %2373 = vmatprep.mubr.f32.mxu0 0.0
        %v2374 = vand.u32 %v2001, 4294901760
        %2375 = vmatmul.mubr.f32.gmra.mxu0 %v2374
        %v2376 = vpop.f32.mrf.mxu0
        %v2377 = vadd.f32 %v2303, %v2376
        %v2378 = vpop.f32.mrf.mxu0
        %2379 = vdwg.mxu0
        %2380 = vmatprep.subr.mxu0 0.0
        %2381 = vmatpush1.xpose.msra.mxu0 0.0
        %2382 = vmatprep.subr.mxu0 0.0
        %2383 = vmatpush1.xpose.msra.mxu0 0.0
        %2384 = vmatprep.subr.mxu0 0.0
        %2385 = vmatpush1.xpose.msra.mxu0 0.0
        %2386 = vmatprep.subr.mxu0 0.0
        %2387 = vmatpush1.xpose.msra.mxu0 0.0
        %2388 = vmatprep.subr.mxu0 0.0
        %2389 = vmatpush1.xpose.msra.mxu0 0.0
        %2390 = vmatprep.subr.mxu0 0.0
        %2391 = vmatpush1.xpose.msra.mxu0 0.0
        %2392 = vmatprep.subr.mxu0 0.0
        %2393 = vmatpush1.xpose.msra.mxu0 0.0
        %2394 = vmatprep.subr.mxu0 0.0
        %2395 = vmatpush1.xpose.msra.mxu0 0.0
        %2396 = vmatprep.subr.mxu0 0.0
        %2397 = vmatpush1.xpose.msra.mxu0 0.0
        %2398 = vmatprep.subr.mxu0 0.0
        %2399 = vmatpush1.xpose.msra.mxu0 0.0
        %2400 = vmatprep.subr.mxu0 0.0
        %2401 = vmatpush1.xpose.msra.mxu0 0.0
        %2402 = vmatprep.subr.mxu0 0.0
        %2403 = vmatpush1.xpose.msra.mxu0 0.0
        %2404 = vmatprep.subr.mxu0 0.0
        %2405 = vmatpush1.xpose.msra.mxu0 0.0
        %2406 = vmatprep.subr.mxu0 0.0
        %2407 = vmatpush1.xpose.msra.mxu0 0.0
        %2408 = vmatprep.subr.mxu0 0.0
        %2409 = vmatpush1.xpose.msra.mxu0 0.0
        %2410 = vmatprep.subr.mxu0 0.0
        %v2411 = vand.u32 %v2004, 4294901760
        %2412 = vmatpush1.xpose.msra.mxu0 %v2411
        %2413 = vmatprep.subr.mxu0 0.0
        %2414 = vmatpush2.xpose.msra.mxu0 0.0
        %2415 = vmatprep.subr.mxu0 0.0
        %2416 = vmatpush2.xpose.msra.mxu0 0.0
        %2417 = vmatprep.subr.mxu0 0.0
        %2418 = vmatpush2.xpose.msra.mxu0 0.0
        %2419 = vmatprep.subr.mxu0 0.0
        %2420 = vmatpush2.xpose.msra.mxu0 0.0
        %2421 = vmatprep.subr.mxu0 0.0
        %2422 = vmatpush2.xpose.msra.mxu0 0.0
        %2423 = vmatprep.subr.mxu0 0.0
        %2424 = vmatpush2.xpose.msra.mxu0 0.0
        %2425 = vmatprep.subr.mxu0 0.0
        %2426 = vmatpush2.xpose.msra.mxu0 0.0
        %2427 = vmatprep.subr.mxu0 0.0
        %2428 = vmatpush2.xpose.msra.mxu0 0.0
        %2429 = vmatprep.subr.mxu0 0.0
        %2430 = vmatpush2.xpose.msra.mxu0 0.0
        %2431 = vmatprep.subr.mxu0 0.0
        %2432 = vmatpush2.xpose.msra.mxu0 0.0
        %2433 = vmatprep.subr.mxu0 0.0
        %2434 = vmatpush2.xpose.msra.mxu0 0.0
        %2435 = vmatprep.subr.mxu0 0.0
        %2436 = vmatpush2.xpose.msra.mxu0 0.0
        %2437 = vmatprep.subr.mxu0 0.0
        %2438 = vmatpush2.xpose.msra.mxu0 0.0
        %2439 = vmatprep.subr.mxu0 0.0
        %2440 = vmatpush2.xpose.msra.mxu0 0.0
        %2441 = vmatprep.subr.mxu0 0.0
        %2442 = vmatpush2.xpose.msra.mxu0 0.0
        %2443 = vmatprep.subr.mxu0 0.0
        %2444 = vmatpush2.xpose.msra.mxu0 0.0
        %2445 = vmatprep.mubr.f32.mxu0 0.0
        %v2446 = vand.u32 %v2001, 4294901760
        %2447 = vmatmul.mubr.f32.gmra.mxu0 %v2446
        %v2448 = vpop.f32.mrf.mxu0
        %v2449 = vadd.f32 %v2377, %v2448
        %v2450 = vpop.f32.mrf.mxu0
        %2451 = vdwg.mxu0
        %v2453 = vsel %vm1547, %v1238, 0
        %v2456 = vsel %vm1547, %v1393, 0
        %2458 = vmatprep.subr.mxu0 0.0
        %2459 = vmatpush1.xpose.msra.mxu0 0.0
        %2460 = vmatprep.subr.mxu0 0.0
        %2461 = vmatpush1.xpose.msra.mxu0 0.0
        %2462 = vmatprep.subr.mxu0 0.0
        %2463 = vmatpush1.xpose.msra.mxu0 0.0
        %2464 = vmatprep.subr.mxu0 0.0
        %2465 = vmatpush1.xpose.msra.mxu0 0.0
        %2466 = vmatprep.subr.mxu0 0.0
        %2467 = vmatpush1.xpose.msra.mxu0 0.0
        %2468 = vmatprep.subr.mxu0 0.0
        %2469 = vmatpush1.xpose.msra.mxu0 0.0
        %2470 = vmatprep.subr.mxu0 0.0
        %2471 = vmatpush1.xpose.msra.mxu0 0.0
        %2472 = vmatprep.subr.mxu0 0.0
        %2473 = vmatpush1.xpose.msra.mxu0 0.0
        %2474 = vmatprep.subr.mxu0 0.0
        %2475 = vmatpush1.xpose.msra.mxu0 0.0
        %2476 = vmatprep.subr.mxu0 0.0
        %2477 = vmatpush1.xpose.msra.mxu0 0.0
        %2478 = vmatprep.subr.mxu0 0.0
        %2479 = vmatpush1.xpose.msra.mxu0 0.0
        %2480 = vmatprep.subr.mxu0 0.0
        %2481 = vmatpush1.xpose.msra.mxu0 0.0
        %2482 = vmatprep.subr.mxu0 0.0
        %2483 = vmatpush1.xpose.msra.mxu0 0.0
        %2484 = vmatprep.subr.mxu0 0.0
        %2485 = vmatpush1.xpose.msra.mxu0 0.0
        %2486 = vmatprep.subr.mxu0 0.0
        %2487 = vmatpush1.xpose.msra.mxu0 0.0
        %2488 = vmatprep.subr.mxu0 0.0
        %v2489 = vand.u32 %v2456, 4294901760
        %2490 = vmatpush1.xpose.msra.mxu0 %v2489
        %2491 = vmatprep.subr.mxu0 0.0
        %2492 = vmatpush2.xpose.msra.mxu0 0.0
        %2493 = vmatprep.subr.mxu0 0.0
        %2494 = vmatpush2.xpose.msra.mxu0 0.0
        %2495 = vmatprep.subr.mxu0 0.0
        %2496 = vmatpush2.xpose.msra.mxu0 0.0
        %2497 = vmatprep.subr.mxu0 0.0
        %2498 = vmatpush2.xpose.msra.mxu0 0.0
        %2499 = vmatprep.subr.mxu0 0.0
        %2500 = vmatpush2.xpose.msra.mxu0 0.0
        %2501 = vmatprep.subr.mxu0 0.0
        %2502 = vmatpush2.xpose.msra.mxu0 0.0
        %2503 = vmatprep.subr.mxu0 0.0
        %2504 = vmatpush2.xpose.msra.mxu0 0.0
        %2505 = vmatprep.subr.mxu0 0.0
        %2506 = vmatpush2.xpose.msra.mxu0 0.0
        %2507 = vmatprep.subr.mxu0 0.0
        %2508 = vmatpush2.xpose.msra.mxu0 0.0
        %2509 = vmatprep.subr.mxu0 0.0
        %2510 = vmatpush2.xpose.msra.mxu0 0.0
        %2511 = vmatprep.subr.mxu0 0.0
        %2512 = vmatpush2.xpose.msra.mxu0 0.0
        %2513 = vmatprep.subr.mxu0 0.0
        %2514 = vmatpush2.xpose.msra.mxu0 0.0
        %2515 = vmatprep.subr.mxu0 0.0
        %2516 = vmatpush2.xpose.msra.mxu0 0.0
        %2517 = vmatprep.subr.mxu0 0.0
        %2518 = vmatpush2.xpose.msra.mxu0 0.0
        %2519 = vmatprep.subr.mxu0 0.0
        %2520 = vmatpush2.xpose.msra.mxu0 0.0
        %2521 = vmatprep.subr.mxu0 0.0
        %2522 = vmatpush2.xpose.msra.mxu0 0.0
        %2523 = vmatprep.mubr.f32.mxu0 0.0
        %v2524 = vand.u32 %v2453, 4294901760
        %v2525 = vsub.f32 %v2453, %v2524
        %v2526 = vand.u32 %v2525, 4294901760
        %v2527 = vsub.f32 %v2525, %v2526
        %v2528 = vand.u32 %v2527, 4294901760
        %2529 = vmatmul.mubr.f32.gmra.mxu0 %v2528
        %v2530 = vpop.f32.mrf.mxu0
        %v2531 = vadd.f32 %v1545, %v2530
        %v2532 = vpop.f32.mrf.mxu0
        %2533 = vdwg.mxu0
        %2534 = vmatprep.subr.mxu0 0.0
        %2535 = vmatpush1.xpose.msra.mxu0 0.0
        %2536 = vmatprep.subr.mxu0 0.0
        %2537 = vmatpush1.xpose.msra.mxu0 0.0
        %2538 = vmatprep.subr.mxu0 0.0
        %2539 = vmatpush1.xpose.msra.mxu0 0.0
        %2540 = vmatprep.subr.mxu0 0.0
        %2541 = vmatpush1.xpose.msra.mxu0 0.0
        %2542 = vmatprep.subr.mxu0 0.0
        %2543 = vmatpush1.xpose.msra.mxu0 0.0
        %2544 = vmatprep.subr.mxu0 0.0
        %2545 = vmatpush1.xpose.msra.mxu0 0.0
        %2546 = vmatprep.subr.mxu0 0.0
        %2547 = vmatpush1.xpose.msra.mxu0 0.0
        %2548 = vmatprep.subr.mxu0 0.0
        %2549 = vmatpush1.xpose.msra.mxu0 0.0
        %2550 = vmatprep.subr.mxu0 0.0
        %2551 = vmatpush1.xpose.msra.mxu0 0.0
        %2552 = vmatprep.subr.mxu0 0.0
        %2553 = vmatpush1.xpose.msra.mxu0 0.0
        %2554 = vmatprep.subr.mxu0 0.0
        %2555 = vmatpush1.xpose.msra.mxu0 0.0
        %2556 = vmatprep.subr.mxu0 0.0
        %2557 = vmatpush1.xpose.msra.mxu0 0.0
        %2558 = vmatprep.subr.mxu0 0.0
        %2559 = vmatpush1.xpose.msra.mxu0 0.0
        %2560 = vmatprep.subr.mxu0 0.0
        %2561 = vmatpush1.xpose.msra.mxu0 0.0
        %2562 = vmatprep.subr.mxu0 0.0
        %2563 = vmatpush1.xpose.msra.mxu0 0.0
        %2564 = vmatprep.subr.mxu0 0.0
        %v2565 = vand.u32 %v2456, 4294901760
        %v2566 = vsub.f32 %v2456, %v2565
        %v2567 = vand.u32 %v2566, 4294901760
        %v2568 = vsub.f32 %v2566, %v2567
        %v2569 = vand.u32 %v2568, 4294901760
        %2570 = vmatpush1.xpose.msra.mxu0 %v2569
        %2571 = vmatprep.subr.mxu0 0.0
        %2572 = vmatpush2.xpose.msra.mxu0 0.0
        %2573 = vmatprep.subr.mxu0 0.0
        %2574 = vmatpush2.xpose.msra.mxu0 0.0
        %2575 = vmatprep.subr.mxu0 0.0
        %2576 = vmatpush2.xpose.msra.mxu0 0.0
        %2577 = vmatprep.subr.mxu0 0.0
        %2578 = vmatpush2.xpose.msra.mxu0 0.0
        %2579 = vmatprep.subr.mxu0 0.0
        %2580 = vmatpush2.xpose.msra.mxu0 0.0
        %2581 = vmatprep.subr.mxu0 0.0
        %2582 = vmatpush2.xpose.msra.mxu0 0.0
        %2583 = vmatprep.subr.mxu0 0.0
        %2584 = vmatpush2.xpose.msra.mxu0 0.0
        %2585 = vmatprep.subr.mxu0 0.0
        %2586 = vmatpush2.xpose.msra.mxu0 0.0
        %2587 = vmatprep.subr.mxu0 0.0
        %2588 = vmatpush2.xpose.msra.mxu0 0.0
        %2589 = vmatprep.subr.mxu0 0.0
        %2590 = vmatpush2.xpose.msra.mxu0 0.0
        %2591 = vmatprep.subr.mxu0 0.0
        %2592 = vmatpush2.xpose.msra.mxu0 0.0
        %2593 = vmatprep.subr.mxu0 0.0
        %2594 = vmatpush2.xpose.msra.mxu0 0.0
        %2595 = vmatprep.subr.mxu0 0.0
        %2596 = vmatpush2.xpose.msra.mxu0 0.0
        %2597 = vmatprep.subr.mxu0 0.0
        %2598 = vmatpush2.xpose.msra.mxu0 0.0
        %2599 = vmatprep.subr.mxu0 0.0
        %2600 = vmatpush2.xpose.msra.mxu0 0.0
        %2601 = vmatprep.subr.mxu0 0.0
        %2602 = vmatpush2.xpose.msra.mxu0 0.0
        %2603 = vmatprep.mubr.f32.mxu0 0.0
        %v2604 = vand.u32 %v2453, 4294901760
        %2605 = vmatmul.mubr.f32.gmra.mxu0 %v2604
        %v2606 = vpop.f32.mrf.mxu0
        %v2607 = vadd.f32 %v2531, %v2606
        %v2608 = vpop.f32.mrf.mxu0
        %2609 = vdwg.mxu0
        %2610 = vmatprep.subr.mxu0 0.0
        %2611 = vmatpush1.xpose.msra.mxu0 0.0
        %2612 = vmatprep.subr.mxu0 0.0
        %2613 = vmatpush1.xpose.msra.mxu0 0.0
        %2614 = vmatprep.subr.mxu0 0.0
        %2615 = vmatpush1.xpose.msra.mxu0 0.0
        %2616 = vmatprep.subr.mxu0 0.0
        %2617 = vmatpush1.xpose.msra.mxu0 0.0
        %2618 = vmatprep.subr.mxu0 0.0
        %2619 = vmatpush1.xpose.msra.mxu0 0.0
        %2620 = vmatprep.subr.mxu0 0.0
        %2621 = vmatpush1.xpose.msra.mxu0 0.0
        %2622 = vmatprep.subr.mxu0 0.0
        %2623 = vmatpush1.xpose.msra.mxu0 0.0
        %2624 = vmatprep.subr.mxu0 0.0
        %2625 = vmatpush1.xpose.msra.mxu0 0.0
        %2626 = vmatprep.subr.mxu0 0.0
        %2627 = vmatpush1.xpose.msra.mxu0 0.0
        %2628 = vmatprep.subr.mxu0 0.0
        %2629 = vmatpush1.xpose.msra.mxu0 0.0
        %2630 = vmatprep.subr.mxu0 0.0
        %2631 = vmatpush1.xpose.msra.mxu0 0.0
        %2632 = vmatprep.subr.mxu0 0.0
        %2633 = vmatpush1.xpose.msra.mxu0 0.0
        %2634 = vmatprep.subr.mxu0 0.0
        %2635 = vmatpush1.xpose.msra.mxu0 0.0
        %2636 = vmatprep.subr.mxu0 0.0
        %2637 = vmatpush1.xpose.msra.mxu0 0.0
        %2638 = vmatprep.subr.mxu0 0.0
        %2639 = vmatpush1.xpose.msra.mxu0 0.0
        %2640 = vmatprep.subr.mxu0 0.0
        %v2641 = vand.u32 %v2456, 4294901760
        %v2642 = vsub.f32 %v2456, %v2641
        %2643 = vmatpush1.xpose.msra.mxu0 %v2642
        %2644 = vmatprep.subr.mxu0 0.0
        %2645 = vmatpush2.xpose.msra.mxu0 0.0
        %2646 = vmatprep.subr.mxu0 0.0
        %2647 = vmatpush2.xpose.msra.mxu0 0.0
        %2648 = vmatprep.subr.mxu0 0.0
        %2649 = vmatpush2.xpose.msra.mxu0 0.0
        %2650 = vmatprep.subr.mxu0 0.0
        %2651 = vmatpush2.xpose.msra.mxu0 0.0
        %2652 = vmatprep.subr.mxu0 0.0
        %2653 = vmatpush2.xpose.msra.mxu0 0.0
        %2654 = vmatprep.subr.mxu0 0.0
        %2655 = vmatpush2.xpose.msra.mxu0 0.0
        %2656 = vmatprep.subr.mxu0 0.0
        %2657 = vmatpush2.xpose.msra.mxu0 0.0
        %2658 = vmatprep.subr.mxu0 0.0
        %2659 = vmatpush2.xpose.msra.mxu0 0.0
        %2660 = vmatprep.subr.mxu0 0.0
        %2661 = vmatpush2.xpose.msra.mxu0 0.0
        %2662 = vmatprep.subr.mxu0 0.0
        %2663 = vmatpush2.xpose.msra.mxu0 0.0
        %2664 = vmatprep.subr.mxu0 0.0
        %2665 = vmatpush2.xpose.msra.mxu0 0.0
        %2666 = vmatprep.subr.mxu0 0.0
        %2667 = vmatpush2.xpose.msra.mxu0 0.0
        %2668 = vmatprep.subr.mxu0 0.0
        %2669 = vmatpush2.xpose.msra.mxu0 0.0
        %2670 = vmatprep.subr.mxu0 0.0
        %2671 = vmatpush2.xpose.msra.mxu0 0.0
        %2672 = vmatprep.subr.mxu0 0.0
        %2673 = vmatpush2.xpose.msra.mxu0 0.0
        %2674 = vmatprep.subr.mxu0 0.0
        %2675 = vmatpush2.xpose.msra.mxu0 0.0
        %2676 = vmatprep.mubr.f32.mxu0 0.0
        %v2677 = vand.u32 %v2453, 4294901760
        %v2678 = vsub.f32 %v2453, %v2677
        %2679 = vmatmul.mubr.f32.gmra.mxu0 %v2678
        %v2680 = vpop.f32.mrf.mxu0
        %v2681 = vadd.f32 %v2607, %v2680
        %v2682 = vpop.f32.mrf.mxu0
        %2683 = vdwg.mxu0
        %2684 = vmatprep.subr.mxu0 0.0
        %2685 = vmatpush1.xpose.msra.mxu0 0.0
        %2686 = vmatprep.subr.mxu0 0.0
        %2687 = vmatpush1.xpose.msra.mxu0 0.0
        %2688 = vmatprep.subr.mxu0 0.0
        %2689 = vmatpush1.xpose.msra.mxu0 0.0
        %2690 = vmatprep.subr.mxu0 0.0
        %2691 = vmatpush1.xpose.msra.mxu0 0.0
        %2692 = vmatprep.subr.mxu0 0.0
        %2693 = vmatpush1.xpose.msra.mxu0 0.0
        %2694 = vmatprep.subr.mxu0 0.0
        %2695 = vmatpush1.xpose.msra.mxu0 0.0
        %2696 = vmatprep.subr.mxu0 0.0
        %2697 = vmatpush1.xpose.msra.mxu0 0.0
        %2698 = vmatprep.subr.mxu0 0.0
        %2699 = vmatpush1.xpose.msra.mxu0 0.0
        %2700 = vmatprep.subr.mxu0 0.0
        %2701 = vmatpush1.xpose.msra.mxu0 0.0
        %2702 = vmatprep.subr.mxu0 0.0
        %2703 = vmatpush1.xpose.msra.mxu0 0.0
        %2704 = vmatprep.subr.mxu0 0.0
        %2705 = vmatpush1.xpose.msra.mxu0 0.0
        %2706 = vmatprep.subr.mxu0 0.0
        %2707 = vmatpush1.xpose.msra.mxu0 0.0
        %2708 = vmatprep.subr.mxu0 0.0
        %2709 = vmatpush1.xpose.msra.mxu0 0.0
        %2710 = vmatprep.subr.mxu0 0.0
        %2711 = vmatpush1.xpose.msra.mxu0 0.0
        %2712 = vmatprep.subr.mxu0 0.0
        %2713 = vmatpush1.xpose.msra.mxu0 0.0
        %2714 = vmatprep.subr.mxu0 0.0
        %v2715 = vand.u32 %v2456, 4294901760
        %2716 = vmatpush1.xpose.msra.mxu0 %v2715
        %2717 = vmatprep.subr.mxu0 0.0
        %2718 = vmatpush2.xpose.msra.mxu0 0.0
        %2719 = vmatprep.subr.mxu0 0.0
        %2720 = vmatpush2.xpose.msra.mxu0 0.0
        %2721 = vmatprep.subr.mxu0 0.0
        %2722 = vmatpush2.xpose.msra.mxu0 0.0
        %2723 = vmatprep.subr.mxu0 0.0
        %2724 = vmatpush2.xpose.msra.mxu0 0.0
        %2725 = vmatprep.subr.mxu0 0.0
        %2726 = vmatpush2.xpose.msra.mxu0 0.0
        %2727 = vmatprep.subr.mxu0 0.0
        %2728 = vmatpush2.xpose.msra.mxu0 0.0
        %2729 = vmatprep.subr.mxu0 0.0
        %2730 = vmatpush2.xpose.msra.mxu0 0.0
        %2731 = vmatprep.subr.mxu0 0.0
        %2732 = vmatpush2.xpose.msra.mxu0 0.0
        %2733 = vmatprep.subr.mxu0 0.0
        %2734 = vmatpush2.xpose.msra.mxu0 0.0
        %2735 = vmatprep.subr.mxu0 0.0
        %2736 = vmatpush2.xpose.msra.mxu0 0.0
        %2737 = vmatprep.subr.mxu0 0.0
        %2738 = vmatpush2.xpose.msra.mxu0 0.0
        %2739 = vmatprep.subr.mxu0 0.0
        %2740 = vmatpush2.xpose.msra.mxu0 0.0
        %2741 = vmatprep.subr.mxu0 0.0
        %2742 = vmatpush2.xpose.msra.mxu0 0.0
        %2743 = vmatprep.subr.mxu0 0.0
        %2744 = vmatpush2.xpose.msra.mxu0 0.0
        %2745 = vmatprep.subr.mxu0 0.0
        %2746 = vmatpush2.xpose.msra.mxu0 0.0
        %2747 = vmatprep.subr.mxu0 0.0
        %2748 = vmatpush2.xpose.msra.mxu0 0.0
        %2749 = vmatprep.mubr.f32.mxu0 0.0
        %v2750 = vand.u32 %v2453, 4294901760
        %v2751 = vsub.f32 %v2453, %v2750
        %v2752 = vand.u32 %v2751, 4294901760
        %2753 = vmatmul.mubr.f32.gmra.mxu0 %v2752
        %v2754 = vpop.f32.mrf.mxu0
        %v2755 = vadd.f32 %v2681, %v2754
        %v2756 = vpop.f32.mrf.mxu0
        %2757 = vdwg.mxu0
        %2758 = vmatprep.subr.mxu0 0.0
        %2759 = vmatpush1.xpose.msra.mxu0 0.0
        %2760 = vmatprep.subr.mxu0 0.0
        %2761 = vmatpush1.xpose.msra.mxu0 0.0
        %2762 = vmatprep.subr.mxu0 0.0
        %2763 = vmatpush1.xpose.msra.mxu0 0.0
        %2764 = vmatprep.subr.mxu0 0.0
        %2765 = vmatpush1.xpose.msra.mxu0 0.0
        %2766 = vmatprep.subr.mxu0 0.0
        %2767 = vmatpush1.xpose.msra.mxu0 0.0
        %2768 = vmatprep.subr.mxu0 0.0
        %2769 = vmatpush1.xpose.msra.mxu0 0.0
        %2770 = vmatprep.subr.mxu0 0.0
        %2771 = vmatpush1.xpose.msra.mxu0 0.0
        %2772 = vmatprep.subr.mxu0 0.0
        %2773 = vmatpush1.xpose.msra.mxu0 0.0
        %2774 = vmatprep.subr.mxu0 0.0
        %2775 = vmatpush1.xpose.msra.mxu0 0.0
        %2776 = vmatprep.subr.mxu0 0.0
        %2777 = vmatpush1.xpose.msra.mxu0 0.0
        %2778 = vmatprep.subr.mxu0 0.0
        %2779 = vmatpush1.xpose.msra.mxu0 0.0
        %2780 = vmatprep.subr.mxu0 0.0
        %2781 = vmatpush1.xpose.msra.mxu0 0.0
        %2782 = vmatprep.subr.mxu0 0.0
        %2783 = vmatpush1.xpose.msra.mxu0 0.0
        %2784 = vmatprep.subr.mxu0 0.0
        %2785 = vmatpush1.xpose.msra.mxu0 0.0
        %2786 = vmatprep.subr.mxu0 0.0
        %2787 = vmatpush1.xpose.msra.mxu0 0.0
        %2788 = vmatprep.subr.mxu0 0.0
        %v2789 = vand.u32 %v2456, 4294901760
        %v2790 = vsub.f32 %v2456, %v2789
        %v2791 = vand.u32 %v2790, 4294901760
        %2792 = vmatpush1.xpose.msra.mxu0 %v2791
        %2793 = vmatprep.subr.mxu0 0.0
        %2794 = vmatpush2.xpose.msra.mxu0 0.0
        %2795 = vmatprep.subr.mxu0 0.0
        %2796 = vmatpush2.xpose.msra.mxu0 0.0
        %2797 = vmatprep.subr.mxu0 0.0
        %2798 = vmatpush2.xpose.msra.mxu0 0.0
        %2799 = vmatprep.subr.mxu0 0.0
        %2800 = vmatpush2.xpose.msra.mxu0 0.0
        %2801 = vmatprep.subr.mxu0 0.0
        %2802 = vmatpush2.xpose.msra.mxu0 0.0
        %2803 = vmatprep.subr.mxu0 0.0
        %2804 = vmatpush2.xpose.msra.mxu0 0.0
        %2805 = vmatprep.subr.mxu0 0.0
        %2806 = vmatpush2.xpose.msra.mxu0 0.0
        %2807 = vmatprep.subr.mxu0 0.0
        %2808 = vmatpush2.xpose.msra.mxu0 0.0
        %2809 = vmatprep.subr.mxu0 0.0
        %2810 = vmatpush2.xpose.msra.mxu0 0.0
        %2811 = vmatprep.subr.mxu0 0.0
        %2812 = vmatpush2.xpose.msra.mxu0 0.0
        %2813 = vmatprep.subr.mxu0 0.0
        %2814 = vmatpush2.xpose.msra.mxu0 0.0
        %2815 = vmatprep.subr.mxu0 0.0
        %2816 = vmatpush2.xpose.msra.mxu0 0.0
        %2817 = vmatprep.subr.mxu0 0.0
        %2818 = vmatpush2.xpose.msra.mxu0 0.0
        %2819 = vmatprep.subr.mxu0 0.0
        %2820 = vmatpush2.xpose.msra.mxu0 0.0
        %2821 = vmatprep.subr.mxu0 0.0
        %2822 = vmatpush2.xpose.msra.mxu0 0.0
        %2823 = vmatprep.subr.mxu0 0.0
        %2824 = vmatpush2.xpose.msra.mxu0 0.0
        %2825 = vmatprep.mubr.f32.mxu0 0.0
        %v2826 = vand.u32 %v2453, 4294901760
        %2827 = vmatmul.mubr.f32.gmra.mxu0 %v2826
        %v2828 = vpop.f32.mrf.mxu0
        %v2829 = vadd.f32 %v2755, %v2828
        %v2830 = vpop.f32.mrf.mxu0
        %2831 = vdwg.mxu0
        %2832 = vmatprep.subr.mxu0 0.0
        %2833 = vmatpush1.xpose.msra.mxu0 0.0
        %2834 = vmatprep.subr.mxu0 0.0
        %2835 = vmatpush1.xpose.msra.mxu0 0.0
        %2836 = vmatprep.subr.mxu0 0.0
        %2837 = vmatpush1.xpose.msra.mxu0 0.0
        %2838 = vmatprep.subr.mxu0 0.0
        %2839 = vmatpush1.xpose.msra.mxu0 0.0
        %2840 = vmatprep.subr.mxu0 0.0
        %2841 = vmatpush1.xpose.msra.mxu0 0.0
        %2842 = vmatprep.subr.mxu0 0.0
        %2843 = vmatpush1.xpose.msra.mxu0 0.0
        %2844 = vmatprep.subr.mxu0 0.0
        %2845 = vmatpush1.xpose.msra.mxu0 0.0
        %2846 = vmatprep.subr.mxu0 0.0
        %2847 = vmatpush1.xpose.msra.mxu0 0.0
        %2848 = vmatprep.subr.mxu0 0.0
        %2849 = vmatpush1.xpose.msra.mxu0 0.0
        %2850 = vmatprep.subr.mxu0 0.0
        %2851 = vmatpush1.xpose.msra.mxu0 0.0
        %2852 = vmatprep.subr.mxu0 0.0
        %2853 = vmatpush1.xpose.msra.mxu0 0.0
        %2854 = vmatprep.subr.mxu0 0.0
        %2855 = vmatpush1.xpose.msra.mxu0 0.0
        %2856 = vmatprep.subr.mxu0 0.0
        %2857 = vmatpush1.xpose.msra.mxu0 0.0
        %2858 = vmatprep.subr.mxu0 0.0
        %2859 = vmatpush1.xpose.msra.mxu0 0.0
        %2860 = vmatprep.subr.mxu0 0.0
        %2861 = vmatpush1.xpose.msra.mxu0 0.0
        %2862 = vmatprep.subr.mxu0 0.0
        %v2863 = vand.u32 %v2456, 4294901760
        %2864 = vmatpush1.xpose.msra.mxu0 %v2863
        %2865 = vmatprep.subr.mxu0 0.0
        %2866 = vmatpush2.xpose.msra.mxu0 0.0
        %2867 = vmatprep.subr.mxu0 0.0
        %2868 = vmatpush2.xpose.msra.mxu0 0.0
        %2869 = vmatprep.subr.mxu0 0.0
        %2870 = vmatpush2.xpose.msra.mxu0 0.0
        %2871 = vmatprep.subr.mxu0 0.0
        %2872 = vmatpush2.xpose.msra.mxu0 0.0
        %2873 = vmatprep.subr.mxu0 0.0
        %2874 = vmatpush2.xpose.msra.mxu0 0.0
        %2875 = vmatprep.subr.mxu0 0.0
        %2876 = vmatpush2.xpose.msra.mxu0 0.0
        %2877 = vmatprep.subr.mxu0 0.0
        %2878 = vmatpush2.xpose.msra.mxu0 0.0
        %2879 = vmatprep.subr.mxu0 0.0
        %2880 = vmatpush2.xpose.msra.mxu0 0.0
        %2881 = vmatprep.subr.mxu0 0.0
        %2882 = vmatpush2.xpose.msra.mxu0 0.0
        %2883 = vmatprep.subr.mxu0 0.0
        %2884 = vmatpush2.xpose.msra.mxu0 0.0
        %2885 = vmatprep.subr.mxu0 0.0
        %2886 = vmatpush2.xpose.msra.mxu0 0.0
        %2887 = vmatprep.subr.mxu0 0.0
        %2888 = vmatpush2.xpose.msra.mxu0 0.0
        %2889 = vmatprep.subr.mxu0 0.0
        %2890 = vmatpush2.xpose.msra.mxu0 0.0
        %2891 = vmatprep.subr.mxu0 0.0
        %2892 = vmatpush2.xpose.msra.mxu0 0.0
        %2893 = vmatprep.subr.mxu0 0.0
        %2894 = vmatpush2.xpose.msra.mxu0 0.0
        %2895 = vmatprep.subr.mxu0 0.0
        %2896 = vmatpush2.xpose.msra.mxu0 0.0
        %2897 = vmatprep.mubr.f32.mxu0 0.0
        %v2898 = vand.u32 %v2453, 4294901760
        %2899 = vmatmul.mubr.f32.gmra.mxu0 %v2898
        %v2900 = vpop.f32.mrf.mxu0
        %v2901 = vadd.f32 %v2829, %v2900
        %v2902 = vpop.f32.mrf.mxu0
        %2903 = vdwg.mxu0
        %v2905 = vsel %vm1547, %v1239, 0
        %v2908 = vsel %vm1547, %v1394, 0
        %2910 = vmatprep.subr.mxu0 0.0
        %2911 = vmatpush1.xpose.msra.mxu0 0.0
        %2912 = vmatprep.subr.mxu0 0.0
        %2913 = vmatpush1.xpose.msra.mxu0 0.0
        %2914 = vmatprep.subr.mxu0 0.0
        %2915 = vmatpush1.xpose.msra.mxu0 0.0
        %2916 = vmatprep.subr.mxu0 0.0
        %2917 = vmatpush1.xpose.msra.mxu0 0.0
        %2918 = vmatprep.subr.mxu0 0.0
        %2919 = vmatpush1.xpose.msra.mxu0 0.0
        %2920 = vmatprep.subr.mxu0 0.0
        %2921 = vmatpush1.xpose.msra.mxu0 0.0
        %2922 = vmatprep.subr.mxu0 0.0
        %2923 = vmatpush1.xpose.msra.mxu0 0.0
        %2924 = vmatprep.subr.mxu0 0.0
        %2925 = vmatpush1.xpose.msra.mxu0 0.0
        %2926 = vmatprep.subr.mxu0 0.0
        %2927 = vmatpush1.xpose.msra.mxu0 0.0
        %2928 = vmatprep.subr.mxu0 0.0
        %2929 = vmatpush1.xpose.msra.mxu0 0.0
        %2930 = vmatprep.subr.mxu0 0.0
        %2931 = vmatpush1.xpose.msra.mxu0 0.0
        %2932 = vmatprep.subr.mxu0 0.0
        %2933 = vmatpush1.xpose.msra.mxu0 0.0
        %2934 = vmatprep.subr.mxu0 0.0
        %2935 = vmatpush1.xpose.msra.mxu0 0.0
        %2936 = vmatprep.subr.mxu0 0.0
        %2937 = vmatpush1.xpose.msra.mxu0 0.0
        %2938 = vmatprep.subr.mxu0 0.0
        %2939 = vmatpush1.xpose.msra.mxu0 0.0
        %2940 = vmatprep.subr.mxu0 0.0
        %v2941 = vand.u32 %v2908, 4294901760
        %2942 = vmatpush1.xpose.msra.mxu0 %v2941
        %2943 = vmatprep.subr.mxu0 0.0
        %2944 = vmatpush2.xpose.msra.mxu0 0.0
        %2945 = vmatprep.subr.mxu0 0.0
        %2946 = vmatpush2.xpose.msra.mxu0 0.0
        %2947 = vmatprep.subr.mxu0 0.0
        %2948 = vmatpush2.xpose.msra.mxu0 0.0
        %2949 = vmatprep.subr.mxu0 0.0
        %2950 = vmatpush2.xpose.msra.mxu0 0.0
        %2951 = vmatprep.subr.mxu0 0.0
        %2952 = vmatpush2.xpose.msra.mxu0 0.0
        %2953 = vmatprep.subr.mxu0 0.0
        %2954 = vmatpush2.xpose.msra.mxu0 0.0
        %2955 = vmatprep.subr.mxu0 0.0
        %2956 = vmatpush2.xpose.msra.mxu0 0.0
        %2957 = vmatprep.subr.mxu0 0.0
        %2958 = vmatpush2.xpose.msra.mxu0 0.0
        %2959 = vmatprep.subr.mxu0 0.0
        %2960 = vmatpush2.xpose.msra.mxu0 0.0
        %2961 = vmatprep.subr.mxu0 0.0
        %2962 = vmatpush2.xpose.msra.mxu0 0.0
        %2963 = vmatprep.subr.mxu0 0.0
        %2964 = vmatpush2.xpose.msra.mxu0 0.0
        %2965 = vmatprep.subr.mxu0 0.0
        %2966 = vmatpush2.xpose.msra.mxu0 0.0
        %2967 = vmatprep.subr.mxu0 0.0
        %2968 = vmatpush2.xpose.msra.mxu0 0.0
        %2969 = vmatprep.subr.mxu0 0.0
        %2970 = vmatpush2.xpose.msra.mxu0 0.0
        %2971 = vmatprep.subr.mxu0 0.0
        %2972 = vmatpush2.xpose.msra.mxu0 0.0
        %2973 = vmatprep.subr.mxu0 0.0
        %2974 = vmatpush2.xpose.msra.mxu0 0.0
        %2975 = vmatprep.mubr.f32.mxu0 0.0
        %v2976 = vand.u32 %v2905, 4294901760
        %v2977 = vsub.f32 %v2905, %v2976
        %v2978 = vand.u32 %v2977, 4294901760
        %v2979 = vsub.f32 %v2977, %v2978
        %v2980 = vand.u32 %v2979, 4294901760
        %2981 = vmatmul.mubr.f32.gmra.mxu0 %v2980
        %v2982 = vpop.f32.mrf.mxu0
        %v2983 = vadd.f32 %v1546, %v2982
        %v2984 = vpop.f32.mrf.mxu0
        %2985 = vdwg.mxu0
        %2986 = vmatprep.subr.mxu0 0.0
        %2987 = vmatpush1.xpose.msra.mxu0 0.0
        %2988 = vmatprep.subr.mxu0 0.0
        %2989 = vmatpush1.xpose.msra.mxu0 0.0
        %2990 = vmatprep.subr.mxu0 0.0
        %2991 = vmatpush1.xpose.msra.mxu0 0.0
        %2992 = vmatprep.subr.mxu0 0.0
        %2993 = vmatpush1.xpose.msra.mxu0 0.0
        %2994 = vmatprep.subr.mxu0 0.0
        %2995 = vmatpush1.xpose.msra.mxu0 0.0
        %2996 = vmatprep.subr.mxu0 0.0
        %2997 = vmatpush1.xpose.msra.mxu0 0.0
        %2998 = vmatprep.subr.mxu0 0.0
        %2999 = vmatpush1.xpose.msra.mxu0 0.0
        %3000 = vmatprep.subr.mxu0 0.0
        %3001 = vmatpush1.xpose.msra.mxu0 0.0
        %3002 = vmatprep.subr.mxu0 0.0
        %3003 = vmatpush1.xpose.msra.mxu0 0.0
        %3004 = vmatprep.subr.mxu0 0.0
        %3005 = vmatpush1.xpose.msra.mxu0 0.0
        %3006 = vmatprep.subr.mxu0 0.0
        %3007 = vmatpush1.xpose.msra.mxu0 0.0
        %3008 = vmatprep.subr.mxu0 0.0
        %3009 = vmatpush1.xpose.msra.mxu0 0.0
        %3010 = vmatprep.subr.mxu0 0.0
        %3011 = vmatpush1.xpose.msra.mxu0 0.0
        %3012 = vmatprep.subr.mxu0 0.0
        %3013 = vmatpush1.xpose.msra.mxu0 0.0
        %3014 = vmatprep.subr.mxu0 0.0
        %3015 = vmatpush1.xpose.msra.mxu0 0.0
        %3016 = vmatprep.subr.mxu0 0.0
        %v3017 = vand.u32 %v2908, 4294901760
        %v3018 = vsub.f32 %v2908, %v3017
        %v3019 = vand.u32 %v3018, 4294901760
        %v3020 = vsub.f32 %v3018, %v3019
        %v3021 = vand.u32 %v3020, 4294901760
        %3022 = vmatpush1.xpose.msra.mxu0 %v3021
        %3023 = vmatprep.subr.mxu0 0.0
        %3024 = vmatpush2.xpose.msra.mxu0 0.0
        %3025 = vmatprep.subr.mxu0 0.0
        %3026 = vmatpush2.xpose.msra.mxu0 0.0
        %3027 = vmatprep.subr.mxu0 0.0
        %3028 = vmatpush2.xpose.msra.mxu0 0.0
        %3029 = vmatprep.subr.mxu0 0.0
        %3030 = vmatpush2.xpose.msra.mxu0 0.0
        %3031 = vmatprep.subr.mxu0 0.0
        %3032 = vmatpush2.xpose.msra.mxu0 0.0
        %3033 = vmatprep.subr.mxu0 0.0
        %3034 = vmatpush2.xpose.msra.mxu0 0.0
        %3035 = vmatprep.subr.mxu0 0.0
        %3036 = vmatpush2.xpose.msra.mxu0 0.0
        %3037 = vmatprep.subr.mxu0 0.0
        %3038 = vmatpush2.xpose.msra.mxu0 0.0
        %3039 = vmatprep.subr.mxu0 0.0
        %3040 = vmatpush2.xpose.msra.mxu0 0.0
        %3041 = vmatprep.subr.mxu0 0.0
        %3042 = vmatpush2.xpose.msra.mxu0 0.0
        %3043 = vmatprep.subr.mxu0 0.0
        %3044 = vmatpush2.xpose.msra.mxu0 0.0
        %3045 = vmatprep.subr.mxu0 0.0
        %3046 = vmatpush2.xpose.msra.mxu0 0.0
        %3047 = vmatprep.subr.mxu0 0.0
        %3048 = vmatpush2.xpose.msra.mxu0 0.0
        %3049 = vmatprep.subr.mxu0 0.0
        %3050 = vmatpush2.xpose.msra.mxu0 0.0
        %3051 = vmatprep.subr.mxu0 0.0
        %3052 = vmatpush2.xpose.msra.mxu0 0.0
        %3053 = vmatprep.subr.mxu0 0.0
        %3054 = vmatpush2.xpose.msra.mxu0 0.0
        %3055 = vmatprep.mubr.f32.mxu0 0.0
        %v3056 = vand.u32 %v2905, 4294901760
        %3057 = vmatmul.mubr.f32.gmra.mxu0 %v3056
        %v3058 = vpop.f32.mrf.mxu0
        %v3059 = vadd.f32 %v2983, %v3058
        %v3060 = vpop.f32.mrf.mxu0
        %3061 = vdwg.mxu0
        %3062 = vmatprep.subr.mxu0 0.0
        %3063 = vmatpush1.xpose.msra.mxu0 0.0
        %3064 = vmatprep.subr.mxu0 0.0
        %3065 = vmatpush1.xpose.msra.mxu0 0.0
        %3066 = vmatprep.subr.mxu0 0.0
        %3067 = vmatpush1.xpose.msra.mxu0 0.0
        %3068 = vmatprep.subr.mxu0 0.0
        %3069 = vmatpush1.xpose.msra.mxu0 0.0
        %3070 = vmatprep.subr.mxu0 0.0
        %3071 = vmatpush1.xpose.msra.mxu0 0.0
        %3072 = vmatprep.subr.mxu0 0.0
        %3073 = vmatpush1.xpose.msra.mxu0 0.0
        %3074 = vmatprep.subr.mxu0 0.0
        %3075 = vmatpush1.xpose.msra.mxu0 0.0
        %3076 = vmatprep.subr.mxu0 0.0
        %3077 = vmatpush1.xpose.msra.mxu0 0.0
        %3078 = vmatprep.subr.mxu0 0.0
        %3079 = vmatpush1.xpose.msra.mxu0 0.0
        %3080 = vmatprep.subr.mxu0 0.0
        %3081 = vmatpush1.xpose.msra.mxu0 0.0
        %3082 = vmatprep.subr.mxu0 0.0
        %3083 = vmatpush1.xpose.msra.mxu0 0.0
        %3084 = vmatprep.subr.mxu0 0.0
        %3085 = vmatpush1.xpose.msra.mxu0 0.0
        %3086 = vmatprep.subr.mxu0 0.0
        %3087 = vmatpush1.xpose.msra.mxu0 0.0
        %3088 = vmatprep.subr.mxu0 0.0
        %3089 = vmatpush1.xpose.msra.mxu0 0.0
        %3090 = vmatprep.subr.mxu0 0.0
        %3091 = vmatpush1.xpose.msra.mxu0 0.0
        %3092 = vmatprep.subr.mxu0 0.0
        %v3093 = vand.u32 %v2908, 4294901760
        %v3094 = vsub.f32 %v2908, %v3093
        %3095 = vmatpush1.xpose.msra.mxu0 %v3094
        %3096 = vmatprep.subr.mxu0 0.0
        %3097 = vmatpush2.xpose.msra.mxu0 0.0
        %3098 = vmatprep.subr.mxu0 0.0
        %3099 = vmatpush2.xpose.msra.mxu0 0.0
        %3100 = vmatprep.subr.mxu0 0.0
        %3101 = vmatpush2.xpose.msra.mxu0 0.0
        %3102 = vmatprep.subr.mxu0 0.0
        %3103 = vmatpush2.xpose.msra.mxu0 0.0
        %3104 = vmatprep.subr.mxu0 0.0
        %3105 = vmatpush2.xpose.msra.mxu0 0.0
        %3106 = vmatprep.subr.mxu0 0.0
        %3107 = vmatpush2.xpose.msra.mxu0 0.0
        %3108 = vmatprep.subr.mxu0 0.0
        %3109 = vmatpush2.xpose.msra.mxu0 0.0
        %3110 = vmatprep.subr.mxu0 0.0
        %3111 = vmatpush2.xpose.msra.mxu0 0.0
        %3112 = vmatprep.subr.mxu0 0.0
        %3113 = vmatpush2.xpose.msra.mxu0 0.0
        %3114 = vmatprep.subr.mxu0 0.0
        %3115 = vmatpush2.xpose.msra.mxu0 0.0
        %3116 = vmatprep.subr.mxu0 0.0
        %3117 = vmatpush2.xpose.msra.mxu0 0.0
        %3118 = vmatprep.subr.mxu0 0.0
        %3119 = vmatpush2.xpose.msra.mxu0 0.0
        %3120 = vmatprep.subr.mxu0 0.0
        %3121 = vmatpush2.xpose.msra.mxu0 0.0
        %3122 = vmatprep.subr.mxu0 0.0
        %3123 = vmatpush2.xpose.msra.mxu0 0.0
        %3124 = vmatprep.subr.mxu0 0.0
        %3125 = vmatpush2.xpose.msra.mxu0 0.0
        %3126 = vmatprep.subr.mxu0 0.0
        %3127 = vmatpush2.xpose.msra.mxu0 0.0
        %3128 = vmatprep.mubr.f32.mxu0 0.0
        %v3129 = vand.u32 %v2905, 4294901760
        %v3130 = vsub.f32 %v2905, %v3129
        %3131 = vmatmul.mubr.f32.gmra.mxu0 %v3130
        %v3132 = vpop.f32.mrf.mxu0
        %v3133 = vadd.f32 %v3059, %v3132
        %v3134 = vpop.f32.mrf.mxu0
        %3135 = vdwg.mxu0
        %3136 = vmatprep.subr.mxu0 0.0
        %3137 = vmatpush1.xpose.msra.mxu0 0.0
        %3138 = vmatprep.subr.mxu0 0.0
        %3139 = vmatpush1.xpose.msra.mxu0 0.0
        %3140 = vmatprep.subr.mxu0 0.0
        %3141 = vmatpush1.xpose.msra.mxu0 0.0
        %3142 = vmatprep.subr.mxu0 0.0
        %3143 = vmatpush1.xpose.msra.mxu0 0.0
        %3144 = vmatprep.subr.mxu0 0.0
        %3145 = vmatpush1.xpose.msra.mxu0 0.0
        %3146 = vmatprep.subr.mxu0 0.0
        %3147 = vmatpush1.xpose.msra.mxu0 0.0
        %3148 = vmatprep.subr.mxu0 0.0
        %3149 = vmatpush1.xpose.msra.mxu0 0.0
        %3150 = vmatprep.subr.mxu0 0.0
        %3151 = vmatpush1.xpose.msra.mxu0 0.0
        %3152 = vmatprep.subr.mxu0 0.0
        %3153 = vmatpush1.xpose.msra.mxu0 0.0
        %3154 = vmatprep.subr.mxu0 0.0
        %3155 = vmatpush1.xpose.msra.mxu0 0.0
        %3156 = vmatprep.subr.mxu0 0.0
        %3157 = vmatpush1.xpose.msra.mxu0 0.0
        %3158 = vmatprep.subr.mxu0 0.0
        %3159 = vmatpush1.xpose.msra.mxu0 0.0
        %3160 = vmatprep.subr.mxu0 0.0
        %3161 = vmatpush1.xpose.msra.mxu0 0.0
        %3162 = vmatprep.subr.mxu0 0.0
        %3163 = vmatpush1.xpose.msra.mxu0 0.0
        %3164 = vmatprep.subr.mxu0 0.0
        %3165 = vmatpush1.xpose.msra.mxu0 0.0
        %3166 = vmatprep.subr.mxu0 0.0
        %v3167 = vand.u32 %v2908, 4294901760
        %3168 = vmatpush1.xpose.msra.mxu0 %v3167
        %3169 = vmatprep.subr.mxu0 0.0
        %3170 = vmatpush2.xpose.msra.mxu0 0.0
        %3171 = vmatprep.subr.mxu0 0.0
        %3172 = vmatpush2.xpose.msra.mxu0 0.0
        %3173 = vmatprep.subr.mxu0 0.0
        %3174 = vmatpush2.xpose.msra.mxu0 0.0
        %3175 = vmatprep.subr.mxu0 0.0
        %3176 = vmatpush2.xpose.msra.mxu0 0.0
        %3177 = vmatprep.subr.mxu0 0.0
        %3178 = vmatpush2.xpose.msra.mxu0 0.0
        %3179 = vmatprep.subr.mxu0 0.0
        %3180 = vmatpush2.xpose.msra.mxu0 0.0
        %3181 = vmatprep.subr.mxu0 0.0
        %3182 = vmatpush2.xpose.msra.mxu0 0.0
        %3183 = vmatprep.subr.mxu0 0.0
        %3184 = vmatpush2.xpose.msra.mxu0 0.0
        %3185 = vmatprep.subr.mxu0 0.0
        %3186 = vmatpush2.xpose.msra.mxu0 0.0
        %3187 = vmatprep.subr.mxu0 0.0
        %3188 = vmatpush2.xpose.msra.mxu0 0.0
        %3189 = vmatprep.subr.mxu0 0.0
        %3190 = vmatpush2.xpose.msra.mxu0 0.0
        %3191 = vmatprep.subr.mxu0 0.0
        %3192 = vmatpush2.xpose.msra.mxu0 0.0
        %3193 = vmatprep.subr.mxu0 0.0
        %3194 = vmatpush2.xpose.msra.mxu0 0.0
        %3195 = vmatprep.subr.mxu0 0.0
        %3196 = vmatpush2.xpose.msra.mxu0 0.0
        %3197 = vmatprep.subr.mxu0 0.0
        %3198 = vmatpush2.xpose.msra.mxu0 0.0
        %3199 = vmatprep.subr.mxu0 0.0
        %3200 = vmatpush2.xpose.msra.mxu0 0.0
        %3201 = vmatprep.mubr.f32.mxu0 0.0
        %v3202 = vand.u32 %v2905, 4294901760
        %v3203 = vsub.f32 %v2905, %v3202
        %v3204 = vand.u32 %v3203, 4294901760
        %3205 = vmatmul.mubr.f32.gmra.mxu0 %v3204
        %v3206 = vpop.f32.mrf.mxu0
        %v3207 = vadd.f32 %v3133, %v3206
        %v3208 = vpop.f32.mrf.mxu0
        %3209 = vdwg.mxu0
        %3210 = vmatprep.subr.mxu0 0.0
        %3211 = vmatpush1.xpose.msra.mxu0 0.0
        %3212 = vmatprep.subr.mxu0 0.0
        %3213 = vmatpush1.xpose.msra.mxu0 0.0
        %3214 = vmatprep.subr.mxu0 0.0
        %3215 = vmatpush1.xpose.msra.mxu0 0.0
        %3216 = vmatprep.subr.mxu0 0.0
        %3217 = vmatpush1.xpose.msra.mxu0 0.0
        %3218 = vmatprep.subr.mxu0 0.0
        %3219 = vmatpush1.xpose.msra.mxu0 0.0
        %3220 = vmatprep.subr.mxu0 0.0
        %3221 = vmatpush1.xpose.msra.mxu0 0.0
        %3222 = vmatprep.subr.mxu0 0.0
        %3223 = vmatpush1.xpose.msra.mxu0 0.0
        %3224 = vmatprep.subr.mxu0 0.0
        %3225 = vmatpush1.xpose.msra.mxu0 0.0
        %3226 = vmatprep.subr.mxu0 0.0
        %3227 = vmatpush1.xpose.msra.mxu0 0.0
        %3228 = vmatprep.subr.mxu0 0.0
        %3229 = vmatpush1.xpose.msra.mxu0 0.0
        %3230 = vmatprep.subr.mxu0 0.0
        %3231 = vmatpush1.xpose.msra.mxu0 0.0
        %3232 = vmatprep.subr.mxu0 0.0
        %3233 = vmatpush1.xpose.msra.mxu0 0.0
        %3234 = vmatprep.subr.mxu0 0.0
        %3235 = vmatpush1.xpose.msra.mxu0 0.0
        %3236 = vmatprep.subr.mxu0 0.0
        %3237 = vmatpush1.xpose.msra.mxu0 0.0
        %3238 = vmatprep.subr.mxu0 0.0
        %3239 = vmatpush1.xpose.msra.mxu0 0.0
        %3240 = vmatprep.subr.mxu0 0.0
        %v3241 = vand.u32 %v2908, 4294901760
        %v3242 = vsub.f32 %v2908, %v3241
        %v3243 = vand.u32 %v3242, 4294901760
        %3244 = vmatpush1.xpose.msra.mxu0 %v3243
        %3245 = vmatprep.subr.mxu0 0.0
        %3246 = vmatpush2.xpose.msra.mxu0 0.0
        %3247 = vmatprep.subr.mxu0 0.0
        %3248 = vmatpush2.xpose.msra.mxu0 0.0
        %3249 = vmatprep.subr.mxu0 0.0
        %3250 = vmatpush2.xpose.msra.mxu0 0.0
        %3251 = vmatprep.subr.mxu0 0.0
        %3252 = vmatpush2.xpose.msra.mxu0 0.0
        %3253 = vmatprep.subr.mxu0 0.0
        %3254 = vmatpush2.xpose.msra.mxu0 0.0
        %3255 = vmatprep.subr.mxu0 0.0
        %3256 = vmatpush2.xpose.msra.mxu0 0.0
        %3257 = vmatprep.subr.mxu0 0.0
        %3258 = vmatpush2.xpose.msra.mxu0 0.0
        %3259 = vmatprep.subr.mxu0 0.0
        %3260 = vmatpush2.xpose.msra.mxu0 0.0
        %3261 = vmatprep.subr.mxu0 0.0
        %3262 = vmatpush2.xpose.msra.mxu0 0.0
        %3263 = vmatprep.subr.mxu0 0.0
        %3264 = vmatpush2.xpose.msra.mxu0 0.0
        %3265 = vmatprep.subr.mxu0 0.0
        %3266 = vmatpush2.xpose.msra.mxu0 0.0
        %3267 = vmatprep.subr.mxu0 0.0
        %3268 = vmatpush2.xpose.msra.mxu0 0.0
        %3269 = vmatprep.subr.mxu0 0.0
        %3270 = vmatpush2.xpose.msra.mxu0 0.0
        %3271 = vmatprep.subr.mxu0 0.0
        %3272 = vmatpush2.xpose.msra.mxu0 0.0
        %3273 = vmatprep.subr.mxu0 0.0
        %3274 = vmatpush2.xpose.msra.mxu0 0.0
        %3275 = vmatprep.subr.mxu0 0.0
        %3276 = vmatpush2.xpose.msra.mxu0 0.0
        %3277 = vmatprep.mubr.f32.mxu0 0.0
        %v3278 = vand.u32 %v2905, 4294901760
        %3279 = vmatmul.mubr.f32.gmra.mxu0 %v3278
        %v3280 = vpop.f32.mrf.mxu0
        %v3281 = vadd.f32 %v3207, %v3280
        %v3282 = vpop.f32.mrf.mxu0
        %3283 = vdwg.mxu0
        %3284 = vmatprep.subr.mxu0 0.0
        %3285 = vmatpush1.xpose.msra.mxu0 0.0
        %3286 = vmatprep.subr.mxu0 0.0
        %3287 = vmatpush1.xpose.msra.mxu0 0.0
        %3288 = vmatprep.subr.mxu0 0.0
        %3289 = vmatpush1.xpose.msra.mxu0 0.0
        %3290 = vmatprep.subr.mxu0 0.0
        %3291 = vmatpush1.xpose.msra.mxu0 0.0
        %3292 = vmatprep.subr.mxu0 0.0
        %3293 = vmatpush1.xpose.msra.mxu0 0.0
        %3294 = vmatprep.subr.mxu0 0.0
        %3295 = vmatpush1.xpose.msra.mxu0 0.0
        %3296 = vmatprep.subr.mxu0 0.0
        %3297 = vmatpush1.xpose.msra.mxu0 0.0
        %3298 = vmatprep.subr.mxu0 0.0
        %3299 = vmatpush1.xpose.msra.mxu0 0.0
        %3300 = vmatprep.subr.mxu0 0.0
        %3301 = vmatpush1.xpose.msra.mxu0 0.0
        %3302 = vmatprep.subr.mxu0 0.0
        %3303 = vmatpush1.xpose.msra.mxu0 0.0
        %3304 = vmatprep.subr.mxu0 0.0
        %3305 = vmatpush1.xpose.msra.mxu0 0.0
        %3306 = vmatprep.subr.mxu0 0.0
        %3307 = vmatpush1.xpose.msra.mxu0 0.0
        %3308 = vmatprep.subr.mxu0 0.0
        %3309 = vmatpush1.xpose.msra.mxu0 0.0
        %3310 = vmatprep.subr.mxu0 0.0
        %3311 = vmatpush1.xpose.msra.mxu0 0.0
        %3312 = vmatprep.subr.mxu0 0.0
        %3313 = vmatpush1.xpose.msra.mxu0 0.0
        %3314 = vmatprep.subr.mxu0 0.0
        %v3315 = vand.u32 %v2908, 4294901760
        %3316 = vmatpush1.xpose.msra.mxu0 %v3315
        %3317 = vmatprep.subr.mxu0 0.0
        %3318 = vmatpush2.xpose.msra.mxu0 0.0
        %3319 = vmatprep.subr.mxu0 0.0
        %3320 = vmatpush2.xpose.msra.mxu0 0.0
        %3321 = vmatprep.subr.mxu0 0.0
        %3322 = vmatpush2.xpose.msra.mxu0 0.0
        %3323 = vmatprep.subr.mxu0 0.0
        %3324 = vmatpush2.xpose.msra.mxu0 0.0
        %3325 = vmatprep.subr.mxu0 0.0
        %3326 = vmatpush2.xpose.msra.mxu0 0.0
        %3327 = vmatprep.subr.mxu0 0.0
        %3328 = vmatpush2.xpose.msra.mxu0 0.0
        %3329 = vmatprep.subr.mxu0 0.0
        %3330 = vmatpush2.xpose.msra.mxu0 0.0
        %3331 = vmatprep.subr.mxu0 0.0
        %3332 = vmatpush2.xpose.msra.mxu0 0.0
        %3333 = vmatprep.subr.mxu0 0.0
        %3334 = vmatpush2.xpose.msra.mxu0 0.0
        %3335 = vmatprep.subr.mxu0 0.0
        %3336 = vmatpush2.xpose.msra.mxu0 0.0
        %3337 = vmatprep.subr.mxu0 0.0
        %3338 = vmatpush2.xpose.msra.mxu0 0.0
        %3339 = vmatprep.subr.mxu0 0.0
        %3340 = vmatpush2.xpose.msra.mxu0 0.0
        %3341 = vmatprep.subr.mxu0 0.0
        %3342 = vmatpush2.xpose.msra.mxu0 0.0
        %3343 = vmatprep.subr.mxu0 0.0
        %3344 = vmatpush2.xpose.msra.mxu0 0.0
        %3345 = vmatprep.subr.mxu0 0.0
        %3346 = vmatpush2.xpose.msra.mxu0 0.0
        %3347 = vmatprep.subr.mxu0 0.0
        %3348 = vmatpush2.xpose.msra.mxu0 0.0
        %3349 = vmatprep.mubr.f32.mxu0 0.0
        %v3350 = vand.u32 %v2905, 4294901760
        %3351 = vmatmul.mubr.f32.gmra.mxu0 %v3350
        %v3352 = vpop.f32.mrf.mxu0
        %v3353 = vadd.f32 %v3281, %v3352
        %v3354 = vpop.f32.mrf.mxu0
        %3355 = vdwg.mxu0
        %v3357 = vlaneseq
        %v3358 = vshrl.u32 %v3357, 7
        %v3359 = vsub.s32 0, %v3358
        %v3360 = vrot.slane %v563, %v3359
        %v3362 = vadd.f32 %v1997, %v3360
        %v3363 = vadd.f32 %v2449, %v3360
        %v3364 = vadd.f32 %v2901, %v3360
        %v3365 = vadd.f32 %v3353, %v3360
        %v3366 = vsel %vm1547, %v3362, -inf
        %3367 = vmax.xlane.f32.xlu0 %v3366
        %v3368 = vpop.xlane.xlu0 %3367
        %v3369 = vsel %vm1547, %v3363, -inf
        %3370 = vmax.xlane.f32.xlu0 %v3369
        %v3371 = vpop.xlane.xlu0 %3370
        %v3372 = vsel %vm1547, %v3364, -inf
        %3373 = vmax.xlane.f32.xlu0 %v3372
        %v3374 = vpop.xlane.xlu0 %3373
        %v3375 = vsel %vm1547, %v3365, -inf
        %3376 = vmax.xlane.f32.xlu0 %v3375
        %v3377 = vpop.xlane.xlu0 %3376
        %v3378 = vsub.f32 %v3362, %v3368
        %v3379 = vsub.f32 %v3363, %v3371
        %v3380 = vsub.f32 %v3364, %v3374
        %v3381 = vsub.f32 %v3365, %v3377
        %v3382 = vmul.f32 %v3378, 1.442695
        %v3383 = vpow.pop %v3382
        %v3384 = vmul.f32 %v3379, 1.442695
        %v3385 = vpow.pop %v3384
        %v3386 = vmul.f32 %v3380, 1.442695
        %v3387 = vpow.pop %v3386
        %v3388 = vmul.f32 %v3381, 1.442695
        %v3389 = vpow.pop %v3388
        %v3390 = vsel %vm1547, %v3383, 0.0
        %3391 = vadd.xlane.f32.xlu0 %v3390
        %v3392 = vpop.xlane.xlu0 %3391
        %v3393 = vsel %vm1547, %v3385, 0.0
        %3394 = vadd.xlane.f32.xlu0 %v3393
        %v3395 = vpop.xlane.xlu0 %3394
        %v3396 = vsel %vm1547, %v3387, 0.0
        %3397 = vadd.xlane.f32.xlu0 %v3396
        %v3398 = vpop.xlane.xlu0 %3397
        %v3399 = vsel %vm1547, %v3389, 0.0
        %3400 = vadd.xlane.f32.xlu0 %v3399
        %v3401 = vpop.xlane.xlu0 %3400
        %v3402 = vrcp.pop %v3392
        %v3403 = vmul.f32 1.0, %v3402
        %v3404 = vrcp.pop %v3395
        %v3405 = vmul.f32 1.0, %v3404
        %v3406 = vrcp.pop %v3398
        %v3407 = vmul.f32 1.0, %v3406
        %v3408 = vrcp.pop %v3401
        %v3409 = vmul.f32 1.0, %v3408
        %v3410 = vmul.f32 %v3383, %v3403
        %v3411 = vmul.f32 %v3385, %v3405
        %v3412 = vmul.f32 %v3387, %v3407
        %v3413 = vmul.f32 %v3389, %v3409
        %3414 = vst.msk [vmem:[%s547] sm:$0xff] %vm1547, %v3410
        %3415 = vst.msk [vmem:[%s547 + $0x8] sm:$0xff] %vm1547, %v3411
        %3416 = vst.msk [vmem:[%s547 + $0x10] sm:$0xff] %vm1547, %v3412
        %3417 = vst.msk [vmem:[%s547 + $0x18] sm:$0xff] %vm1547, %v3413
        %v3419 = vsel %vm1547, %v3410, 0
        %3421 = vmatprep.subr.mxu0 0.0
        %3422 = vmatpush1.msra.mxu0 0.0
        %3423 = vmatprep.subr.mxu0 0.0
        %3424 = vmatpush1.msra.mxu0 0.0
        %3425 = vmatprep.subr.mxu0 0.0
        %3426 = vmatpush1.msra.mxu0 0.0
        %3427 = vmatprep.subr.mxu0 0.0
        %3428 = vmatpush1.msra.mxu0 0.0
        %3429 = vmatprep.subr.mxu0 0.0
        %3430 = vmatpush1.msra.mxu0 0.0
        %3431 = vmatprep.subr.mxu0 0.0
        %3432 = vmatpush1.msra.mxu0 0.0
        %3433 = vmatprep.subr.mxu0 0.0
        %3434 = vmatpush1.msra.mxu0 0.0
        %3435 = vmatprep.subr.mxu0 0.0
        %3436 = vmatpush1.msra.mxu0 0.0
        %3437 = vmatprep.subr.mxu0 0.0
        %3438 = vmatpush1.msra.mxu0 0.0
        %3439 = vmatprep.subr.mxu0 0.0
        %3440 = vmatpush1.msra.mxu0 0.0
        %3441 = vmatprep.subr.mxu0 0.0
        %3442 = vmatpush1.msra.mxu0 0.0
        %3443 = vmatprep.subr.mxu0 0.0
        %3444 = vmatpush1.msra.mxu0 0.0
        %3445 = vmatprep.subr.mxu0 0.0
        %3446 = vmatpush1.msra.mxu0 0.0
        %3447 = vmatprep.subr.mxu0 0.0
        %3448 = vmatpush1.msra.mxu0 0.0
        %3449 = vmatprep.subr.mxu0 0.0
        %3450 = vmatpush1.msra.mxu0 0.0
        %3451 = vmatprep.subr.mxu0 0.0
        %v3452 = vand.u32 %v1539, 4294901760
        %3453 = vmatpush1.msra.mxu0 %v3452
        %3454 = vmatprep.subr.mxu0 0.0
        %3455 = vmatpush2.msra.mxu0 0.0
        %3456 = vmatprep.subr.mxu0 0.0
        %3457 = vmatpush2.msra.mxu0 0.0
        %3458 = vmatprep.subr.mxu0 0.0
        %3459 = vmatpush2.msra.mxu0 0.0
        %3460 = vmatprep.subr.mxu0 0.0
        %3461 = vmatpush2.msra.mxu0 0.0
        %3462 = vmatprep.subr.mxu0 0.0
        %3463 = vmatpush2.msra.mxu0 0.0
        %3464 = vmatprep.subr.mxu0 0.0
        %3465 = vmatpush2.msra.mxu0 0.0
        %3466 = vmatprep.subr.mxu0 0.0
        %3467 = vmatpush2.msra.mxu0 0.0
        %3468 = vmatprep.subr.mxu0 0.0
        %3469 = vmatpush2.msra.mxu0 0.0
        %3470 = vmatprep.subr.mxu0 0.0
        %3471 = vmatpush2.msra.mxu0 0.0
        %3472 = vmatprep.subr.mxu0 0.0
        %3473 = vmatpush2.msra.mxu0 0.0
        %3474 = vmatprep.subr.mxu0 0.0
        %3475 = vmatpush2.msra.mxu0 0.0
        %3476 = vmatprep.subr.mxu0 0.0
        %3477 = vmatpush2.msra.mxu0 0.0
        %3478 = vmatprep.subr.mxu0 0.0
        %3479 = vmatpush2.msra.mxu0 0.0
        %3480 = vmatprep.subr.mxu0 0.0
        %3481 = vmatpush2.msra.mxu0 0.0
        %3482 = vmatprep.subr.mxu0 0.0
        %3483 = vmatpush2.msra.mxu0 0.0
        %3484 = vmatprep.subr.mxu0 0.0
        %3485 = vmatpush2.msra.mxu0 0.0
        %3486 = vmatprep.mubr.f32.mxu0 0.0
        %v3487 = vand.u32 %v3419, 4294901760
        %v3488 = vsub.f32 %v3419, %v3487
        %v3489 = vand.u32 %v3488, 4294901760
        %v3490 = vsub.f32 %v3488, %v3489
        %v3491 = vand.u32 %v3490, 4294901760
        %3492 = vmatmul.mubr.f32.gmra.mxu0 %v3491
        %v3493 = vpop.f32.mrf.mxu0
        %v3494 = vadd.f32 0.0, %v3493
        %v3495 = vpop.f32.mrf.mxu0
        %3496 = vdwg.mxu0
        %3497 = vmatprep.subr.mxu0 0.0
        %3498 = vmatpush1.msra.mxu0 0.0
        %3499 = vmatprep.subr.mxu0 0.0
        %3500 = vmatpush1.msra.mxu0 0.0
        %3501 = vmatprep.subr.mxu0 0.0
        %3502 = vmatpush1.msra.mxu0 0.0
        %3503 = vmatprep.subr.mxu0 0.0
        %3504 = vmatpush1.msra.mxu0 0.0
        %3505 = vmatprep.subr.mxu0 0.0
        %3506 = vmatpush1.msra.mxu0 0.0
        %3507 = vmatprep.subr.mxu0 0.0
        %3508 = vmatpush1.msra.mxu0 0.0
        %3509 = vmatprep.subr.mxu0 0.0
        %3510 = vmatpush1.msra.mxu0 0.0
        %3511 = vmatprep.subr.mxu0 0.0
        %3512 = vmatpush1.msra.mxu0 0.0
        %3513 = vmatprep.subr.mxu0 0.0
        %3514 = vmatpush1.msra.mxu0 0.0
        %3515 = vmatprep.subr.mxu0 0.0
        %3516 = vmatpush1.msra.mxu0 0.0
        %3517 = vmatprep.subr.mxu0 0.0
        %3518 = vmatpush1.msra.mxu0 0.0
        %3519 = vmatprep.subr.mxu0 0.0
        %3520 = vmatpush1.msra.mxu0 0.0
        %3521 = vmatprep.subr.mxu0 0.0
        %3522 = vmatpush1.msra.mxu0 0.0
        %3523 = vmatprep.subr.mxu0 0.0
        %3524 = vmatpush1.msra.mxu0 0.0
        %3525 = vmatprep.subr.mxu0 0.0
        %3526 = vmatpush1.msra.mxu0 0.0
        %3527 = vmatprep.subr.mxu0 0.0
        %v3528 = vand.u32 %v1539, 4294901760
        %v3529 = vsub.f32 %v1539, %v3528
        %v3530 = vand.u32 %v3529, 4294901760
        %v3531 = vsub.f32 %v3529, %v3530
        %v3532 = vand.u32 %v3531, 4294901760
        %3533 = vmatpush1.msra.mxu0 %v3532
        %3534 = vmatprep.subr.mxu0 0.0
        %3535 = vmatpush2.msra.mxu0 0.0
        %3536 = vmatprep.subr.mxu0 0.0
        %3537 = vmatpush2.msra.mxu0 0.0
        %3538 = vmatprep.subr.mxu0 0.0
        %3539 = vmatpush2.msra.mxu0 0.0
        %3540 = vmatprep.subr.mxu0 0.0
        %3541 = vmatpush2.msra.mxu0 0.0
        %3542 = vmatprep.subr.mxu0 0.0
        %3543 = vmatpush2.msra.mxu0 0.0
        %3544 = vmatprep.subr.mxu0 0.0
        %3545 = vmatpush2.msra.mxu0 0.0
        %3546 = vmatprep.subr.mxu0 0.0
        %3547 = vmatpush2.msra.mxu0 0.0
        %3548 = vmatprep.subr.mxu0 0.0
        %3549 = vmatpush2.msra.mxu0 0.0
        %3550 = vmatprep.subr.mxu0 0.0
        %3551 = vmatpush2.msra.mxu0 0.0
        %3552 = vmatprep.subr.mxu0 0.0
        %3553 = vmatpush2.msra.mxu0 0.0
        %3554 = vmatprep.subr.mxu0 0.0
        %3555 = vmatpush2.msra.mxu0 0.0
        %3556 = vmatprep.subr.mxu0 0.0
        %3557 = vmatpush2.msra.mxu0 0.0
        %3558 = vmatprep.subr.mxu0 0.0
        %3559 = vmatpush2.msra.mxu0 0.0
        %3560 = vmatprep.subr.mxu0 0.0
        %3561 = vmatpush2.msra.mxu0 0.0
        %3562 = vmatprep.subr.mxu0 0.0
        %3563 = vmatpush2.msra.mxu0 0.0
        %3564 = vmatprep.subr.mxu0 0.0
        %3565 = vmatpush2.msra.mxu0 0.0
        %3566 = vmatprep.mubr.f32.mxu0 0.0
        %v3567 = vand.u32 %v3419, 4294901760
        %3568 = vmatmul.mubr.f32.gmra.mxu0 %v3567
        %v3569 = vpop.f32.mrf.mxu0
        %v3570 = vadd.f32 %v3494, %v3569
        %v3571 = vpop.f32.mrf.mxu0
        %3572 = vdwg.mxu0
        %3573 = vmatprep.subr.mxu0 0.0
        %3574 = vmatpush1.msra.mxu0 0.0
        %3575 = vmatprep.subr.mxu0 0.0
        %3576 = vmatpush1.msra.mxu0 0.0
        %3577 = vmatprep.subr.mxu0 0.0
        %3578 = vmatpush1.msra.mxu0 0.0
        %3579 = vmatprep.subr.mxu0 0.0
        %3580 = vmatpush1.msra.mxu0 0.0
        %3581 = vmatprep.subr.mxu0 0.0
        %3582 = vmatpush1.msra.mxu0 0.0
        %3583 = vmatprep.subr.mxu0 0.0
        %3584 = vmatpush1.msra.mxu0 0.0
        %3585 = vmatprep.subr.mxu0 0.0
        %3586 = vmatpush1.msra.mxu0 0.0
        %3587 = vmatprep.subr.mxu0 0.0
        %3588 = vmatpush1.msra.mxu0 0.0
        %3589 = vmatprep.subr.mxu0 0.0
        %3590 = vmatpush1.msra.mxu0 0.0
        %3591 = vmatprep.subr.mxu0 0.0
        %3592 = vmatpush1.msra.mxu0 0.0
        %3593 = vmatprep.subr.mxu0 0.0
        %3594 = vmatpush1.msra.mxu0 0.0
        %3595 = vmatprep.subr.mxu0 0.0
        %3596 = vmatpush1.msra.mxu0 0.0
        %3597 = vmatprep.subr.mxu0 0.0
        %3598 = vmatpush1.msra.mxu0 0.0
        %3599 = vmatprep.subr.mxu0 0.0
        %3600 = vmatpush1.msra.mxu0 0.0
        %3601 = vmatprep.subr.mxu0 0.0
        %3602 = vmatpush1.msra.mxu0 0.0
        %3603 = vmatprep.subr.mxu0 0.0
        %v3604 = vand.u32 %v1539, 4294901760
        %v3605 = vsub.f32 %v1539, %v3604
        %3606 = vmatpush1.msra.mxu0 %v3605
        %3607 = vmatprep.subr.mxu0 0.0
        %3608 = vmatpush2.msra.mxu0 0.0
        %3609 = vmatprep.subr.mxu0 0.0
        %3610 = vmatpush2.msra.mxu0 0.0
        %3611 = vmatprep.subr.mxu0 0.0
        %3612 = vmatpush2.msra.mxu0 0.0
        %3613 = vmatprep.subr.mxu0 0.0
        %3614 = vmatpush2.msra.mxu0 0.0
        %3615 = vmatprep.subr.mxu0 0.0
        %3616 = vmatpush2.msra.mxu0 0.0
        %3617 = vmatprep.subr.mxu0 0.0
        %3618 = vmatpush2.msra.mxu0 0.0
        %3619 = vmatprep.subr.mxu0 0.0
        %3620 = vmatpush2.msra.mxu0 0.0
        %3621 = vmatprep.subr.mxu0 0.0
        %3622 = vmatpush2.msra.mxu0 0.0
        %3623 = vmatprep.subr.mxu0 0.0
        %3624 = vmatpush2.msra.mxu0 0.0
        %3625 = vmatprep.subr.mxu0 0.0
        %3626 = vmatpush2.msra.mxu0 0.0
        %3627 = vmatprep.subr.mxu0 0.0
        %3628 = vmatpush2.msra.mxu0 0.0
        %3629 = vmatprep.subr.mxu0 0.0
        %3630 = vmatpush2.msra.mxu0 0.0
        %3631 = vmatprep.subr.mxu0 0.0
        %3632 = vmatpush2.msra.mxu0 0.0
        %3633 = vmatprep.subr.mxu0 0.0
        %3634 = vmatpush2.msra.mxu0 0.0
        %3635 = vmatprep.subr.mxu0 0.0
        %3636 = vmatpush2.msra.mxu0 0.0
        %3637 = vmatprep.subr.mxu0 0.0
        %3638 = vmatpush2.msra.mxu0 0.0
        %3639 = vmatprep.mubr.f32.mxu0 0.0
        %v3640 = vand.u32 %v3419, 4294901760
        %v3641 = vsub.f32 %v3419, %v3640
        %3642 = vmatmul.mubr.f32.gmra.mxu0 %v3641
        %v3643 = vpop.f32.mrf.mxu0
        %v3644 = vadd.f32 %v3570, %v3643
        %v3645 = vpop.f32.mrf.mxu0
        %3646 = vdwg.mxu0
        %3647 = vmatprep.subr.mxu0 0.0
        %3648 = vmatpush1.msra.mxu0 0.0
        %3649 = vmatprep.subr.mxu0 0.0
        %3650 = vmatpush1.msra.mxu0 0.0
        %3651 = vmatprep.subr.mxu0 0.0
        %3652 = vmatpush1.msra.mxu0 0.0
        %3653 = vmatprep.subr.mxu0 0.0
        %3654 = vmatpush1.msra.mxu0 0.0
        %3655 = vmatprep.subr.mxu0 0.0
        %3656 = vmatpush1.msra.mxu0 0.0
        %3657 = vmatprep.subr.mxu0 0.0
        %3658 = vmatpush1.msra.mxu0 0.0
        %3659 = vmatprep.subr.mxu0 0.0
        %3660 = vmatpush1.msra.mxu0 0.0
        %3661 = vmatprep.subr.mxu0 0.0
        %3662 = vmatpush1.msra.mxu0 0.0
        %3663 = vmatprep.subr.mxu0 0.0
        %3664 = vmatpush1.msra.mxu0 0.0
        %3665 = vmatprep.subr.mxu0 0.0
        %3666 = vmatpush1.msra.mxu0 0.0
        %3667 = vmatprep.subr.mxu0 0.0
        %3668 = vmatpush1.msra.mxu0 0.0
        %3669 = vmatprep.subr.mxu0 0.0
        %3670 = vmatpush1.msra.mxu0 0.0
        %3671 = vmatprep.subr.mxu0 0.0
        %3672 = vmatpush1.msra.mxu0 0.0
        %3673 = vmatprep.subr.mxu0 0.0
        %3674 = vmatpush1.msra.mxu0 0.0
        %3675 = vmatprep.subr.mxu0 0.0
        %3676 = vmatpush1.msra.mxu0 0.0
        %3677 = vmatprep.subr.mxu0 0.0
        %v3678 = vand.u32 %v1539, 4294901760
        %3679 = vmatpush1.msra.mxu0 %v3678
        %3680 = vmatprep.subr.mxu0 0.0
        %3681 = vmatpush2.msra.mxu0 0.0
        %3682 = vmatprep.subr.mxu0 0.0
        %3683 = vmatpush2.msra.mxu0 0.0
        %3684 = vmatprep.subr.mxu0 0.0
        %3685 = vmatpush2.msra.mxu0 0.0
        %3686 = vmatprep.subr.mxu0 0.0
        %3687 = vmatpush2.msra.mxu0 0.0
        %3688 = vmatprep.subr.mxu0 0.0
        %3689 = vmatpush2.msra.mxu0 0.0
        %3690 = vmatprep.subr.mxu0 0.0
        %3691 = vmatpush2.msra.mxu0 0.0
        %3692 = vmatprep.subr.mxu0 0.0
        %3693 = vmatpush2.msra.mxu0 0.0
        %3694 = vmatprep.subr.mxu0 0.0
        %3695 = vmatpush2.msra.mxu0 0.0
        %3696 = vmatprep.subr.mxu0 0.0
        %3697 = vmatpush2.msra.mxu0 0.0
        %3698 = vmatprep.subr.mxu0 0.0
        %3699 = vmatpush2.msra.mxu0 0.0
        %3700 = vmatprep.subr.mxu0 0.0
        %3701 = vmatpush2.msra.mxu0 0.0
        %3702 = vmatprep.subr.mxu0 0.0
        %3703 = vmatpush2.msra.mxu0 0.0
        %3704 = vmatprep.subr.mxu0 0.0
        %3705 = vmatpush2.msra.mxu0 0.0
        %3706 = vmatprep.subr.mxu0 0.0
        %3707 = vmatpush2.msra.mxu0 0.0
        %3708 = vmatprep.subr.mxu0 0.0
        %3709 = vmatpush2.msra.mxu0 0.0
        %3710 = vmatprep.subr.mxu0 0.0
        %3711 = vmatpush2.msra.mxu0 0.0
        %3712 = vmatprep.mubr.f32.mxu0 0.0
        %v3713 = vand.u32 %v3419, 4294901760
        %v3714 = vsub.f32 %v3419, %v3713
        %v3715 = vand.u32 %v3714, 4294901760
        %3716 = vmatmul.mubr.f32.gmra.mxu0 %v3715
        %v3717 = vpop.f32.mrf.mxu0
        %v3718 = vadd.f32 %v3644, %v3717
        %v3719 = vpop.f32.mrf.mxu0
        %3720 = vdwg.mxu0
        %3721 = vmatprep.subr.mxu0 0.0
        %3722 = vmatpush1.msra.mxu0 0.0
        %3723 = vmatprep.subr.mxu0 0.0
        %3724 = vmatpush1.msra.mxu0 0.0
        %3725 = vmatprep.subr.mxu0 0.0
        %3726 = vmatpush1.msra.mxu0 0.0
        %3727 = vmatprep.subr.mxu0 0.0
        %3728 = vmatpush1.msra.mxu0 0.0
        %3729 = vmatprep.subr.mxu0 0.0
        %3730 = vmatpush1.msra.mxu0 0.0
        %3731 = vmatprep.subr.mxu0 0.0
        %3732 = vmatpush1.msra.mxu0 0.0
        %3733 = vmatprep.subr.mxu0 0.0
        %3734 = vmatpush1.msra.mxu0 0.0
        %3735 = vmatprep.subr.mxu0 0.0
        %3736 = vmatpush1.msra.mxu0 0.0
        %3737 = vmatprep.subr.mxu0 0.0
        %3738 = vmatpush1.msra.mxu0 0.0
        %3739 = vmatprep.subr.mxu0 0.0
        %3740 = vmatpush1.msra.mxu0 0.0
        %3741 = vmatprep.subr.mxu0 0.0
        %3742 = vmatpush1.msra.mxu0 0.0
        %3743 = vmatprep.subr.mxu0 0.0
        %3744 = vmatpush1.msra.mxu0 0.0
        %3745 = vmatprep.subr.mxu0 0.0
        %3746 = vmatpush1.msra.mxu0 0.0
        %3747 = vmatprep.subr.mxu0 0.0
        %3748 = vmatpush1.msra.mxu0 0.0
        %3749 = vmatprep.subr.mxu0 0.0
        %3750 = vmatpush1.msra.mxu0 0.0
        %3751 = vmatprep.subr.mxu0 0.0
        %v3752 = vand.u32 %v1539, 4294901760
        %v3753 = vsub.f32 %v1539, %v3752
        %v3754 = vand.u32 %v3753, 4294901760
        %3755 = vmatpush1.msra.mxu0 %v3754
        %3756 = vmatprep.subr.mxu0 0.0
        %3757 = vmatpush2.msra.mxu0 0.0
        %3758 = vmatprep.subr.mxu0 0.0
        %3759 = vmatpush2.msra.mxu0 0.0
        %3760 = vmatprep.subr.mxu0 0.0
        %3761 = vmatpush2.msra.mxu0 0.0
        %3762 = vmatprep.subr.mxu0 0.0
        %3763 = vmatpush2.msra.mxu0 0.0
        %3764 = vmatprep.subr.mxu0 0.0
        %3765 = vmatpush2.msra.mxu0 0.0
        %3766 = vmatprep.subr.mxu0 0.0
        %3767 = vmatpush2.msra.mxu0 0.0
        %3768 = vmatprep.subr.mxu0 0.0
        %3769 = vmatpush2.msra.mxu0 0.0
        %3770 = vmatprep.subr.mxu0 0.0
        %3771 = vmatpush2.msra.mxu0 0.0
        %3772 = vmatprep.subr.mxu0 0.0
        %3773 = vmatpush2.msra.mxu0 0.0
        %3774 = vmatprep.subr.mxu0 0.0
        %3775 = vmatpush2.msra.mxu0 0.0
        %3776 = vmatprep.subr.mxu0 0.0
        %3777 = vmatpush2.msra.mxu0 0.0
        %3778 = vmatprep.subr.mxu0 0.0
        %3779 = vmatpush2.msra.mxu0 0.0
        %3780 = vmatprep.subr.mxu0 0.0
        %3781 = vmatpush2.msra.mxu0 0.0
        %3782 = vmatprep.subr.mxu0 0.0
        %3783 = vmatpush2.msra.mxu0 0.0
        %3784 = vmatprep.subr.mxu0 0.0
        %3785 = vmatpush2.msra.mxu0 0.0
        %3786 = vmatprep.subr.mxu0 0.0
        %3787 = vmatpush2.msra.mxu0 0.0
        %3788 = vmatprep.mubr.f32.mxu0 0.0
        %v3789 = vand.u32 %v3419, 4294901760
        %3790 = vmatmul.mubr.f32.gmra.mxu0 %v3789
        %v3791 = vpop.f32.mrf.mxu0
        %v3792 = vadd.f32 %v3718, %v3791
        %v3793 = vpop.f32.mrf.mxu0
        %3794 = vdwg.mxu0
        %3795 = vmatprep.subr.mxu0 0.0
        %3796 = vmatpush1.msra.mxu0 0.0
        %3797 = vmatprep.subr.mxu0 0.0
        %3798 = vmatpush1.msra.mxu0 0.0
        %3799 = vmatprep.subr.mxu0 0.0
        %3800 = vmatpush1.msra.mxu0 0.0
        %3801 = vmatprep.subr.mxu0 0.0
        %3802 = vmatpush1.msra.mxu0 0.0
        %3803 = vmatprep.subr.mxu0 0.0
        %3804 = vmatpush1.msra.mxu0 0.0
        %3805 = vmatprep.subr.mxu0 0.0
        %3806 = vmatpush1.msra.mxu0 0.0
        %3807 = vmatprep.subr.mxu0 0.0
        %3808 = vmatpush1.msra.mxu0 0.0
        %3809 = vmatprep.subr.mxu0 0.0
        %3810 = vmatpush1.msra.mxu0 0.0
        %3811 = vmatprep.subr.mxu0 0.0
        %3812 = vmatpush1.msra.mxu0 0.0
        %3813 = vmatprep.subr.mxu0 0.0
        %3814 = vmatpush1.msra.mxu0 0.0
        %3815 = vmatprep.subr.mxu0 0.0
        %3816 = vmatpush1.msra.mxu0 0.0
        %3817 = vmatprep.subr.mxu0 0.0
        %3818 = vmatpush1.msra.mxu0 0.0
        %3819 = vmatprep.subr.mxu0 0.0
        %3820 = vmatpush1.msra.mxu0 0.0
        %3821 = vmatprep.subr.mxu0 0.0
        %3822 = vmatpush1.msra.mxu0 0.0
        %3823 = vmatprep.subr.mxu0 0.0
        %3824 = vmatpush1.msra.mxu0 0.0
        %3825 = vmatprep.subr.mxu0 0.0
        %v3826 = vand.u32 %v1539, 4294901760
        %3827 = vmatpush1.msra.mxu0 %v3826
        %3828 = vmatprep.subr.mxu0 0.0
        %3829 = vmatpush2.msra.mxu0 0.0
        %3830 = vmatprep.subr.mxu0 0.0
        %3831 = vmatpush2.msra.mxu0 0.0
        %3832 = vmatprep.subr.mxu0 0.0
        %3833 = vmatpush2.msra.mxu0 0.0
        %3834 = vmatprep.subr.mxu0 0.0
        %3835 = vmatpush2.msra.mxu0 0.0
        %3836 = vmatprep.subr.mxu0 0.0
        %3837 = vmatpush2.msra.mxu0 0.0
        %3838 = vmatprep.subr.mxu0 0.0
        %3839 = vmatpush2.msra.mxu0 0.0
        %3840 = vmatprep.subr.mxu0 0.0
        %3841 = vmatpush2.msra.mxu0 0.0
        %3842 = vmatprep.subr.mxu0 0.0
        %3843 = vmatpush2.msra.mxu0 0.0
        %3844 = vmatprep.subr.mxu0 0.0
        %3845 = vmatpush2.msra.mxu0 0.0
        %3846 = vmatprep.subr.mxu0 0.0
        %3847 = vmatpush2.msra.mxu0 0.0
        %3848 = vmatprep.subr.mxu0 0.0
        %3849 = vmatpush2.msra.mxu0 0.0
        %3850 = vmatprep.subr.mxu0 0.0
        %3851 = vmatpush2.msra.mxu0 0.0
        %3852 = vmatprep.subr.mxu0 0.0
        %3853 = vmatpush2.msra.mxu0 0.0
        %3854 = vmatprep.subr.mxu0 0.0
        %3855 = vmatpush2.msra.mxu0 0.0
        %3856 = vmatprep.subr.mxu0 0.0
        %3857 = vmatpush2.msra.mxu0 0.0
        %3858 = vmatprep.subr.mxu0 0.0
        %3859 = vmatpush2.msra.mxu0 0.0
        %3860 = vmatprep.mubr.f32.mxu0 0.0
        %v3861 = vand.u32 %v3419, 4294901760
        %3862 = vmatmul.mubr.f32.gmra.mxu0 %v3861
        %v3863 = vpop.f32.mrf.mxu0
        %v3864 = vadd.f32 %v3792, %v3863
        %v3865 = vpop.f32.mrf.mxu0
        %3866 = vdwg.mxu0
        %v3868 = vsel %vm1547, %v3411, 0
        %3870 = vmatprep.subr.mxu0 0.0
        %3871 = vmatpush1.msra.mxu0 0.0
        %3872 = vmatprep.subr.mxu0 0.0
        %3873 = vmatpush1.msra.mxu0 0.0
        %3874 = vmatprep.subr.mxu0 0.0
        %3875 = vmatpush1.msra.mxu0 0.0
        %3876 = vmatprep.subr.mxu0 0.0
        %3877 = vmatpush1.msra.mxu0 0.0
        %3878 = vmatprep.subr.mxu0 0.0
        %3879 = vmatpush1.msra.mxu0 0.0
        %3880 = vmatprep.subr.mxu0 0.0
        %3881 = vmatpush1.msra.mxu0 0.0
        %3882 = vmatprep.subr.mxu0 0.0
        %3883 = vmatpush1.msra.mxu0 0.0
        %3884 = vmatprep.subr.mxu0 0.0
        %3885 = vmatpush1.msra.mxu0 0.0
        %3886 = vmatprep.subr.mxu0 0.0
        %3887 = vmatpush1.msra.mxu0 0.0
        %3888 = vmatprep.subr.mxu0 0.0
        %3889 = vmatpush1.msra.mxu0 0.0
        %3890 = vmatprep.subr.mxu0 0.0
        %3891 = vmatpush1.msra.mxu0 0.0
        %3892 = vmatprep.subr.mxu0 0.0
        %3893 = vmatpush1.msra.mxu0 0.0
        %3894 = vmatprep.subr.mxu0 0.0
        %3895 = vmatpush1.msra.mxu0 0.0
        %3896 = vmatprep.subr.mxu0 0.0
        %3897 = vmatpush1.msra.mxu0 0.0
        %3898 = vmatprep.subr.mxu0 0.0
        %3899 = vmatpush1.msra.mxu0 0.0
        %3900 = vmatprep.subr.mxu0 0.0
        %v3901 = vand.u32 %v1540, 4294901760
        %3902 = vmatpush1.msra.mxu0 %v3901
        %3903 = vmatprep.subr.mxu0 0.0
        %3904 = vmatpush2.msra.mxu0 0.0
        %3905 = vmatprep.subr.mxu0 0.0
        %3906 = vmatpush2.msra.mxu0 0.0
        %3907 = vmatprep.subr.mxu0 0.0
        %3908 = vmatpush2.msra.mxu0 0.0
        %3909 = vmatprep.subr.mxu0 0.0
        %3910 = vmatpush2.msra.mxu0 0.0
        %3911 = vmatprep.subr.mxu0 0.0
        %3912 = vmatpush2.msra.mxu0 0.0
        %3913 = vmatprep.subr.mxu0 0.0
        %3914 = vmatpush2.msra.mxu0 0.0
        %3915 = vmatprep.subr.mxu0 0.0
        %3916 = vmatpush2.msra.mxu0 0.0
        %3917 = vmatprep.subr.mxu0 0.0
        %3918 = vmatpush2.msra.mxu0 0.0
        %3919 = vmatprep.subr.mxu0 0.0
        %3920 = vmatpush2.msra.mxu0 0.0
        %3921 = vmatprep.subr.mxu0 0.0
        %3922 = vmatpush2.msra.mxu0 0.0
        %3923 = vmatprep.subr.mxu0 0.0
        %3924 = vmatpush2.msra.mxu0 0.0
        %3925 = vmatprep.subr.mxu0 0.0
        %3926 = vmatpush2.msra.mxu0 0.0
        %3927 = vmatprep.subr.mxu0 0.0
        %3928 = vmatpush2.msra.mxu0 0.0
        %3929 = vmatprep.subr.mxu0 0.0
        %3930 = vmatpush2.msra.mxu0 0.0
        %3931 = vmatprep.subr.mxu0 0.0
        %3932 = vmatpush2.msra.mxu0 0.0
        %3933 = vmatprep.subr.mxu0 0.0
        %3934 = vmatpush2.msra.mxu0 0.0
        %3935 = vmatprep.mubr.f32.mxu0 0.0
        %v3936 = vand.u32 %v3868, 4294901760
        %v3937 = vsub.f32 %v3868, %v3936
        %v3938 = vand.u32 %v3937, 4294901760
        %v3939 = vsub.f32 %v3937, %v3938
        %v3940 = vand.u32 %v3939, 4294901760
        %3941 = vmatmul.mubr.f32.gmra.mxu0 %v3940
        %v3942 = vpop.f32.mrf.mxu0
        %v3943 = vadd.f32 0.0, %v3942
        %v3944 = vpop.f32.mrf.mxu0
        %3945 = vdwg.mxu0
        %3946 = vmatprep.subr.mxu0 0.0
        %3947 = vmatpush1.msra.mxu0 0.0
        %3948 = vmatprep.subr.mxu0 0.0
        %3949 = vmatpush1.msra.mxu0 0.0
        %3950 = vmatprep.subr.mxu0 0.0
        %3951 = vmatpush1.msra.mxu0 0.0
        %3952 = vmatprep.subr.mxu0 0.0
        %3953 = vmatpush1.msra.mxu0 0.0
        %3954 = vmatprep.subr.mxu0 0.0
        %3955 = vmatpush1.msra.mxu0 0.0
        %3956 = vmatprep.subr.mxu0 0.0
        %3957 = vmatpush1.msra.mxu0 0.0
        %3958 = vmatprep.subr.mxu0 0.0
        %3959 = vmatpush1.msra.mxu0 0.0
        %3960 = vmatprep.subr.mxu0 0.0
        %3961 = vmatpush1.msra.mxu0 0.0
        %3962 = vmatprep.subr.mxu0 0.0
        %3963 = vmatpush1.msra.mxu0 0.0
        %3964 = vmatprep.subr.mxu0 0.0
        %3965 = vmatpush1.msra.mxu0 0.0
        %3966 = vmatprep.subr.mxu0 0.0
        %3967 = vmatpush1.msra.mxu0 0.0
        %3968 = vmatprep.subr.mxu0 0.0
        %3969 = vmatpush1.msra.mxu0 0.0
        %3970 = vmatprep.subr.mxu0 0.0
        %3971 = vmatpush1.msra.mxu0 0.0
        %3972 = vmatprep.subr.mxu0 0.0
        %3973 = vmatpush1.msra.mxu0 0.0
        %3974 = vmatprep.subr.mxu0 0.0
        %3975 = vmatpush1.msra.mxu0 0.0
        %3976 = vmatprep.subr.mxu0 0.0
        %v3977 = vand.u32 %v1540, 4294901760
        %v3978 = vsub.f32 %v1540, %v3977
        %v3979 = vand.u32 %v3978, 4294901760
        %v3980 = vsub.f32 %v3978, %v3979
        %v3981 = vand.u32 %v3980, 4294901760
        %3982 = vmatpush1.msra.mxu0 %v3981
        %3983 = vmatprep.subr.mxu0 0.0
        %3984 = vmatpush2.msra.mxu0 0.0
        %3985 = vmatprep.subr.mxu0 0.0
        %3986 = vmatpush2.msra.mxu0 0.0
        %3987 = vmatprep.subr.mxu0 0.0
        %3988 = vmatpush2.msra.mxu0 0.0
        %3989 = vmatprep.subr.mxu0 0.0
        %3990 = vmatpush2.msra.mxu0 0.0
        %3991 = vmatprep.subr.mxu0 0.0
        %3992 = vmatpush2.msra.mxu0 0.0
        %3993 = vmatprep.subr.mxu0 0.0
        %3994 = vmatpush2.msra.mxu0 0.0
        %3995 = vmatprep.subr.mxu0 0.0
        %3996 = vmatpush2.msra.mxu0 0.0
        %3997 = vmatprep.subr.mxu0 0.0
        %3998 = vmatpush2.msra.mxu0 0.0
        %3999 = vmatprep.subr.mxu0 0.0
        %4000 = vmatpush2.msra.mxu0 0.0
        %4001 = vmatprep.subr.mxu0 0.0
        %4002 = vmatpush2.msra.mxu0 0.0
        %4003 = vmatprep.subr.mxu0 0.0
        %4004 = vmatpush2.msra.mxu0 0.0
        %4005 = vmatprep.subr.mxu0 0.0
        %4006 = vmatpush2.msra.mxu0 0.0
        %4007 = vmatprep.subr.mxu0 0.0
        %4008 = vmatpush2.msra.mxu0 0.0
        %4009 = vmatprep.subr.mxu0 0.0
        %4010 = vmatpush2.msra.mxu0 0.0
        %4011 = vmatprep.subr.mxu0 0.0
        %4012 = vmatpush2.msra.mxu0 0.0
        %4013 = vmatprep.subr.mxu0 0.0
        %4014 = vmatpush2.msra.mxu0 0.0
        %4015 = vmatprep.mubr.f32.mxu0 0.0
        %v4016 = vand.u32 %v3868, 4294901760
        %4017 = vmatmul.mubr.f32.gmra.mxu0 %v4016
        %v4018 = vpop.f32.mrf.mxu0
        %v4019 = vadd.f32 %v3943, %v4018
        %v4020 = vpop.f32.mrf.mxu0
        %4021 = vdwg.mxu0
        %4022 = vmatprep.subr.mxu0 0.0
        %4023 = vmatpush1.msra.mxu0 0.0
        %4024 = vmatprep.subr.mxu0 0.0
        %4025 = vmatpush1.msra.mxu0 0.0
        %4026 = vmatprep.subr.mxu0 0.0
        %4027 = vmatpush1.msra.mxu0 0.0
        %4028 = vmatprep.subr.mxu0 0.0
        %4029 = vmatpush1.msra.mxu0 0.0
        %4030 = vmatprep.subr.mxu0 0.0
        %4031 = vmatpush1.msra.mxu0 0.0
        %4032 = vmatprep.subr.mxu0 0.0
        %4033 = vmatpush1.msra.mxu0 0.0
        %4034 = vmatprep.subr.mxu0 0.0
        %4035 = vmatpush1.msra.mxu0 0.0
        %4036 = vmatprep.subr.mxu0 0.0
        %4037 = vmatpush1.msra.mxu0 0.0
        %4038 = vmatprep.subr.mxu0 0.0
        %4039 = vmatpush1.msra.mxu0 0.0
        %4040 = vmatprep.subr.mxu0 0.0
        %4041 = vmatpush1.msra.mxu0 0.0
        %4042 = vmatprep.subr.mxu0 0.0
        %4043 = vmatpush1.msra.mxu0 0.0
        %4044 = vmatprep.subr.mxu0 0.0
        %4045 = vmatpush1.msra.mxu0 0.0
        %4046 = vmatprep.subr.mxu0 0.0
        %4047 = vmatpush1.msra.mxu0 0.0
        %4048 = vmatprep.subr.mxu0 0.0
        %4049 = vmatpush1.msra.mxu0 0.0
        %4050 = vmatprep.subr.mxu0 0.0
        %4051 = vmatpush1.msra.mxu0 0.0
        %4052 = vmatprep.subr.mxu0 0.0
        %v4053 = vand.u32 %v1540, 4294901760
        %v4054 = vsub.f32 %v1540, %v4053
        %4055 = vmatpush1.msra.mxu0 %v4054
        %4056 = vmatprep.subr.mxu0 0.0
        %4057 = vmatpush2.msra.mxu0 0.0
        %4058 = vmatprep.subr.mxu0 0.0
        %4059 = vmatpush2.msra.mxu0 0.0
        %4060 = vmatprep.subr.mxu0 0.0
        %4061 = vmatpush2.msra.mxu0 0.0
        %4062 = vmatprep.subr.mxu0 0.0
        %4063 = vmatpush2.msra.mxu0 0.0
        %4064 = vmatprep.subr.mxu0 0.0
        %4065 = vmatpush2.msra.mxu0 0.0
        %4066 = vmatprep.subr.mxu0 0.0
        %4067 = vmatpush2.msra.mxu0 0.0
        %4068 = vmatprep.subr.mxu0 0.0
        %4069 = vmatpush2.msra.mxu0 0.0
        %4070 = vmatprep.subr.mxu0 0.0
        %4071 = vmatpush2.msra.mxu0 0.0
        %4072 = vmatprep.subr.mxu0 0.0
        %4073 = vmatpush2.msra.mxu0 0.0
        %4074 = vmatprep.subr.mxu0 0.0
        %4075 = vmatpush2.msra.mxu0 0.0
        %4076 = vmatprep.subr.mxu0 0.0
        %4077 = vmatpush2.msra.mxu0 0.0
        %4078 = vmatprep.subr.mxu0 0.0
        %4079 = vmatpush2.msra.mxu0 0.0
        %4080 = vmatprep.subr.mxu0 0.0
        %4081 = vmatpush2.msra.mxu0 0.0
        %4082 = vmatprep.subr.mxu0 0.0
        %4083 = vmatpush2.msra.mxu0 0.0
        %4084 = vmatprep.subr.mxu0 0.0
        %4085 = vmatpush2.msra.mxu0 0.0
        %4086 = vmatprep.subr.mxu0 0.0
        %4087 = vmatpush2.msra.mxu0 0.0
        %4088 = vmatprep.mubr.f32.mxu0 0.0
        %v4089 = vand.u32 %v3868, 4294901760
        %v4090 = vsub.f32 %v3868, %v4089
        %4091 = vmatmul.mubr.f32.gmra.mxu0 %v4090
        %v4092 = vpop.f32.mrf.mxu0
        %v4093 = vadd.f32 %v4019, %v4092
        %v4094 = vpop.f32.mrf.mxu0
        %4095 = vdwg.mxu0
        %4096 = vmatprep.subr.mxu0 0.0
        %4097 = vmatpush1.msra.mxu0 0.0
        %4098 = vmatprep.subr.mxu0 0.0
        %4099 = vmatpush1.msra.mxu0 0.0
        %4100 = vmatprep.subr.mxu0 0.0
        %4101 = vmatpush1.msra.mxu0 0.0
        %4102 = vmatprep.subr.mxu0 0.0
        %4103 = vmatpush1.msra.mxu0 0.0
        %4104 = vmatprep.subr.mxu0 0.0
        %4105 = vmatpush1.msra.mxu0 0.0
        %4106 = vmatprep.subr.mxu0 0.0
        %4107 = vmatpush1.msra.mxu0 0.0
        %4108 = vmatprep.subr.mxu0 0.0
        %4109 = vmatpush1.msra.mxu0 0.0
        %4110 = vmatprep.subr.mxu0 0.0
        %4111 = vmatpush1.msra.mxu0 0.0
        %4112 = vmatprep.subr.mxu0 0.0
        %4113 = vmatpush1.msra.mxu0 0.0
        %4114 = vmatprep.subr.mxu0 0.0
        %4115 = vmatpush1.msra.mxu0 0.0
        %4116 = vmatprep.subr.mxu0 0.0
        %4117 = vmatpush1.msra.mxu0 0.0
        %4118 = vmatprep.subr.mxu0 0.0
        %4119 = vmatpush1.msra.mxu0 0.0
        %4120 = vmatprep.subr.mxu0 0.0
        %4121 = vmatpush1.msra.mxu0 0.0
        %4122 = vmatprep.subr.mxu0 0.0
        %4123 = vmatpush1.msra.mxu0 0.0
        %4124 = vmatprep.subr.mxu0 0.0
        %4125 = vmatpush1.msra.mxu0 0.0
        %4126 = vmatprep.subr.mxu0 0.0
        %v4127 = vand.u32 %v1540, 4294901760
        %4128 = vmatpush1.msra.mxu0 %v4127
        %4129 = vmatprep.subr.mxu0 0.0
        %4130 = vmatpush2.msra.mxu0 0.0
        %4131 = vmatprep.subr.mxu0 0.0
        %4132 = vmatpush2.msra.mxu0 0.0
        %4133 = vmatprep.subr.mxu0 0.0
        %4134 = vmatpush2.msra.mxu0 0.0
        %4135 = vmatprep.subr.mxu0 0.0
        %4136 = vmatpush2.msra.mxu0 0.0
        %4137 = vmatprep.subr.mxu0 0.0
        %4138 = vmatpush2.msra.mxu0 0.0
        %4139 = vmatprep.subr.mxu0 0.0
        %4140 = vmatpush2.msra.mxu0 0.0
        %4141 = vmatprep.subr.mxu0 0.0
        %4142 = vmatpush2.msra.mxu0 0.0
        %4143 = vmatprep.subr.mxu0 0.0
        %4144 = vmatpush2.msra.mxu0 0.0
        %4145 = vmatprep.subr.mxu0 0.0
        %4146 = vmatpush2.msra.mxu0 0.0
        %4147 = vmatprep.subr.mxu0 0.0
        %4148 = vmatpush2.msra.mxu0 0.0
        %4149 = vmatprep.subr.mxu0 0.0
        %4150 = vmatpush2.msra.mxu0 0.0
        %4151 = vmatprep.subr.mxu0 0.0
        %4152 = vmatpush2.msra.mxu0 0.0
        %4153 = vmatprep.subr.mxu0 0.0
        %4154 = vmatpush2.msra.mxu0 0.0
        %4155 = vmatprep.subr.mxu0 0.0
        %4156 = vmatpush2.msra.mxu0 0.0
        %4157 = vmatprep.subr.mxu0 0.0
        %4158 = vmatpush2.msra.mxu0 0.0
        %4159 = vmatprep.subr.mxu0 0.0
        %4160 = vmatpush2.msra.mxu0 0.0
        %4161 = vmatprep.mubr.f32.mxu0 0.0
        %v4162 = vand.u32 %v3868, 4294901760
        %v4163 = vsub.f32 %v3868, %v4162
        %v4164 = vand.u32 %v4163, 4294901760
        %4165 = vmatmul.mubr.f32.gmra.mxu0 %v4164
        %v4166 = vpop.f32.mrf.mxu0
        %v4167 = vadd.f32 %v4093, %v4166
        %v4168 = vpop.f32.mrf.mxu0
        %4169 = vdwg.mxu0
        %4170 = vmatprep.subr.mxu0 0.0
        %4171 = vmatpush1.msra.mxu0 0.0
        %4172 = vmatprep.subr.mxu0 0.0
        %4173 = vmatpush1.msra.mxu0 0.0
        %4174 = vmatprep.subr.mxu0 0.0
        %4175 = vmatpush1.msra.mxu0 0.0
        %4176 = vmatprep.subr.mxu0 0.0
        %4177 = vmatpush1.msra.mxu0 0.0
        %4178 = vmatprep.subr.mxu0 0.0
        %4179 = vmatpush1.msra.mxu0 0.0
        %4180 = vmatprep.subr.mxu0 0.0
        %4181 = vmatpush1.msra.mxu0 0.0
        %4182 = vmatprep.subr.mxu0 0.0
        %4183 = vmatpush1.msra.mxu0 0.0
        %4184 = vmatprep.subr.mxu0 0.0
        %4185 = vmatpush1.msra.mxu0 0.0
        %4186 = vmatprep.subr.mxu0 0.0
        %4187 = vmatpush1.msra.mxu0 0.0
        %4188 = vmatprep.subr.mxu0 0.0
        %4189 = vmatpush1.msra.mxu0 0.0
        %4190 = vmatprep.subr.mxu0 0.0
        %4191 = vmatpush1.msra.mxu0 0.0
        %4192 = vmatprep.subr.mxu0 0.0
        %4193 = vmatpush1.msra.mxu0 0.0
        %4194 = vmatprep.subr.mxu0 0.0
        %4195 = vmatpush1.msra.mxu0 0.0
        %4196 = vmatprep.subr.mxu0 0.0
        %4197 = vmatpush1.msra.mxu0 0.0
        %4198 = vmatprep.subr.mxu0 0.0
        %4199 = vmatpush1.msra.mxu0 0.0
        %4200 = vmatprep.subr.mxu0 0.0
        %v4201 = vand.u32 %v1540, 4294901760
        %v4202 = vsub.f32 %v1540, %v4201
        %v4203 = vand.u32 %v4202, 4294901760
        %4204 = vmatpush1.msra.mxu0 %v4203
        %4205 = vmatprep.subr.mxu0 0.0
        %4206 = vmatpush2.msra.mxu0 0.0
        %4207 = vmatprep.subr.mxu0 0.0
        %4208 = vmatpush2.msra.mxu0 0.0
        %4209 = vmatprep.subr.mxu0 0.0
        %4210 = vmatpush2.msra.mxu0 0.0
        %4211 = vmatprep.subr.mxu0 0.0
        %4212 = vmatpush2.msra.mxu0 0.0
        %4213 = vmatprep.subr.mxu0 0.0
        %4214 = vmatpush2.msra.mxu0 0.0
        %4215 = vmatprep.subr.mxu0 0.0
        %4216 = vmatpush2.msra.mxu0 0.0
        %4217 = vmatprep.subr.mxu0 0.0
        %4218 = vmatpush2.msra.mxu0 0.0
        %4219 = vmatprep.subr.mxu0 0.0
        %4220 = vmatpush2.msra.mxu0 0.0
        %4221 = vmatprep.subr.mxu0 0.0
        %4222 = vmatpush2.msra.mxu0 0.0
        %4223 = vmatprep.subr.mxu0 0.0
        %4224 = vmatpush2.msra.mxu0 0.0
        %4225 = vmatprep.subr.mxu0 0.0
        %4226 = vmatpush2.msra.mxu0 0.0
        %4227 = vmatprep.subr.mxu0 0.0
        %4228 = vmatpush2.msra.mxu0 0.0
        %4229 = vmatprep.subr.mxu0 0.0
        %4230 = vmatpush2.msra.mxu0 0.0
        %4231 = vmatprep.subr.mxu0 0.0
        %4232 = vmatpush2.msra.mxu0 0.0
        %4233 = vmatprep.subr.mxu0 0.0
        %4234 = vmatpush2.msra.mxu0 0.0
        %4235 = vmatprep.subr.mxu0 0.0
        %4236 = vmatpush2.msra.mxu0 0.0
        %4237 = vmatprep.mubr.f32.mxu0 0.0
        %v4238 = vand.u32 %v3868, 4294901760
        %4239 = vmatmul.mubr.f32.gmra.mxu0 %v4238
        %v4240 = vpop.f32.mrf.mxu0
        %v4241 = vadd.f32 %v4167, %v4240
        %v4242 = vpop.f32.mrf.mxu0
        %4243 = vdwg.mxu0
        %4244 = vmatprep.subr.mxu0 0.0
        %4245 = vmatpush1.msra.mxu0 0.0
        %4246 = vmatprep.subr.mxu0 0.0
        %4247 = vmatpush1.msra.mxu0 0.0
        %4248 = vmatprep.subr.mxu0 0.0
        %4249 = vmatpush1.msra.mxu0 0.0
        %4250 = vmatprep.subr.mxu0 0.0
        %4251 = vmatpush1.msra.mxu0 0.0
        %4252 = vmatprep.subr.mxu0 0.0
        %4253 = vmatpush1.msra.mxu0 0.0
        %4254 = vmatprep.subr.mxu0 0.0
        %4255 = vmatpush1.msra.mxu0 0.0
        %4256 = vmatprep.subr.mxu0 0.0
        %4257 = vmatpush1.msra.mxu0 0.0
        %4258 = vmatprep.subr.mxu0 0.0
        %4259 = vmatpush1.msra.mxu0 0.0
        %4260 = vmatprep.subr.mxu0 0.0
        %4261 = vmatpush1.msra.mxu0 0.0
        %4262 = vmatprep.subr.mxu0 0.0
        %4263 = vmatpush1.msra.mxu0 0.0
        %4264 = vmatprep.subr.mxu0 0.0
        %4265 = vmatpush1.msra.mxu0 0.0
        %4266 = vmatprep.subr.mxu0 0.0
        %4267 = vmatpush1.msra.mxu0 0.0
        %4268 = vmatprep.subr.mxu0 0.0
        %4269 = vmatpush1.msra.mxu0 0.0
        %4270 = vmatprep.subr.mxu0 0.0
        %4271 = vmatpush1.msra.mxu0 0.0
        %4272 = vmatprep.subr.mxu0 0.0
        %4273 = vmatpush1.msra.mxu0 0.0
        %4274 = vmatprep.subr.mxu0 0.0
        %v4275 = vand.u32 %v1540, 4294901760
        %4276 = vmatpush1.msra.mxu0 %v4275
        %4277 = vmatprep.subr.mxu0 0.0
        %4278 = vmatpush2.msra.mxu0 0.0
        %4279 = vmatprep.subr.mxu0 0.0
        %4280 = vmatpush2.msra.mxu0 0.0
        %4281 = vmatprep.subr.mxu0 0.0
        %4282 = vmatpush2.msra.mxu0 0.0
        %4283 = vmatprep.subr.mxu0 0.0
        %4284 = vmatpush2.msra.mxu0 0.0
        %4285 = vmatprep.subr.mxu0 0.0
        %4286 = vmatpush2.msra.mxu0 0.0
        %4287 = vmatprep.subr.mxu0 0.0
        %4288 = vmatpush2.msra.mxu0 0.0
        %4289 = vmatprep.subr.mxu0 0.0
        %4290 = vmatpush2.msra.mxu0 0.0
        %4291 = vmatprep.subr.mxu0 0.0
        %4292 = vmatpush2.msra.mxu0 0.0
        %4293 = vmatprep.subr.mxu0 0.0
        %4294 = vmatpush2.msra.mxu0 0.0
        %4295 = vmatprep.subr.mxu0 0.0
        %4296 = vmatpush2.msra.mxu0 0.0
        %4297 = vmatprep.subr.mxu0 0.0
        %4298 = vmatpush2.msra.mxu0 0.0
        %4299 = vmatprep.subr.mxu0 0.0
        %4300 = vmatpush2.msra.mxu0 0.0
        %4301 = vmatprep.subr.mxu0 0.0
        %4302 = vmatpush2.msra.mxu0 0.0
        %4303 = vmatprep.subr.mxu0 0.0
        %4304 = vmatpush2.msra.mxu0 0.0
        %4305 = vmatprep.subr.mxu0 0.0
        %4306 = vmatpush2.msra.mxu0 0.0
        %4307 = vmatprep.subr.mxu0 0.0
        %4308 = vmatpush2.msra.mxu0 0.0
        %4309 = vmatprep.mubr.f32.mxu0 0.0
        %v4310 = vand.u32 %v3868, 4294901760
        %4311 = vmatmul.mubr.f32.gmra.mxu0 %v4310
        %v4312 = vpop.f32.mrf.mxu0
        %v4313 = vadd.f32 %v4241, %v4312
        %v4314 = vpop.f32.mrf.mxu0
        %4315 = vdwg.mxu0
        %v4317 = vsel %vm1547, %v3412, 0
        %4319 = vmatprep.subr.mxu0 0.0
        %4320 = vmatpush1.msra.mxu0 0.0
        %4321 = vmatprep.subr.mxu0 0.0
        %4322 = vmatpush1.msra.mxu0 0.0
        %4323 = vmatprep.subr.mxu0 0.0
        %4324 = vmatpush1.msra.mxu0 0.0
        %4325 = vmatprep.subr.mxu0 0.0
        %4326 = vmatpush1.msra.mxu0 0.0
        %4327 = vmatprep.subr.mxu0 0.0
        %4328 = vmatpush1.msra.mxu0 0.0
        %4329 = vmatprep.subr.mxu0 0.0
        %4330 = vmatpush1.msra.mxu0 0.0
        %4331 = vmatprep.subr.mxu0 0.0
        %4332 = vmatpush1.msra.mxu0 0.0
        %4333 = vmatprep.subr.mxu0 0.0
        %4334 = vmatpush1.msra.mxu0 0.0
        %4335 = vmatprep.subr.mxu0 0.0
        %4336 = vmatpush1.msra.mxu0 0.0
        %4337 = vmatprep.subr.mxu0 0.0
        %4338 = vmatpush1.msra.mxu0 0.0
        %4339 = vmatprep.subr.mxu0 0.0
        %4340 = vmatpush1.msra.mxu0 0.0
        %4341 = vmatprep.subr.mxu0 0.0
        %4342 = vmatpush1.msra.mxu0 0.0
        %4343 = vmatprep.subr.mxu0 0.0
        %4344 = vmatpush1.msra.mxu0 0.0
        %4345 = vmatprep.subr.mxu0 0.0
        %4346 = vmatpush1.msra.mxu0 0.0
        %4347 = vmatprep.subr.mxu0 0.0
        %4348 = vmatpush1.msra.mxu0 0.0
        %4349 = vmatprep.subr.mxu0 0.0
        %v4350 = vand.u32 %v1541, 4294901760
        %4351 = vmatpush1.msra.mxu0 %v4350
        %4352 = vmatprep.subr.mxu0 0.0
        %4353 = vmatpush2.msra.mxu0 0.0
        %4354 = vmatprep.subr.mxu0 0.0
        %4355 = vmatpush2.msra.mxu0 0.0
        %4356 = vmatprep.subr.mxu0 0.0
        %4357 = vmatpush2.msra.mxu0 0.0
        %4358 = vmatprep.subr.mxu0 0.0
        %4359 = vmatpush2.msra.mxu0 0.0
        %4360 = vmatprep.subr.mxu0 0.0
        %4361 = vmatpush2.msra.mxu0 0.0
        %4362 = vmatprep.subr.mxu0 0.0
        %4363 = vmatpush2.msra.mxu0 0.0
        %4364 = vmatprep.subr.mxu0 0.0
        %4365 = vmatpush2.msra.mxu0 0.0
        %4366 = vmatprep.subr.mxu0 0.0
        %4367 = vmatpush2.msra.mxu0 0.0
        %4368 = vmatprep.subr.mxu0 0.0
        %4369 = vmatpush2.msra.mxu0 0.0
        %4370 = vmatprep.subr.mxu0 0.0
        %4371 = vmatpush2.msra.mxu0 0.0
        %4372 = vmatprep.subr.mxu0 0.0
        %4373 = vmatpush2.msra.mxu0 0.0
        %4374 = vmatprep.subr.mxu0 0.0
        %4375 = vmatpush2.msra.mxu0 0.0
        %4376 = vmatprep.subr.mxu0 0.0
        %4377 = vmatpush2.msra.mxu0 0.0
        %4378 = vmatprep.subr.mxu0 0.0
        %4379 = vmatpush2.msra.mxu0 0.0
        %4380 = vmatprep.subr.mxu0 0.0
        %4381 = vmatpush2.msra.mxu0 0.0
        %4382 = vmatprep.subr.mxu0 0.0
        %4383 = vmatpush2.msra.mxu0 0.0
        %4384 = vmatprep.mubr.f32.mxu0 0.0
        %v4385 = vand.u32 %v4317, 4294901760
        %v4386 = vsub.f32 %v4317, %v4385
        %v4387 = vand.u32 %v4386, 4294901760
        %v4388 = vsub.f32 %v4386, %v4387
        %v4389 = vand.u32 %v4388, 4294901760
        %4390 = vmatmul.mubr.f32.gmra.mxu0 %v4389
        %v4391 = vpop.f32.mrf.mxu0
        %v4392 = vadd.f32 0.0, %v4391
        %v4393 = vpop.f32.mrf.mxu0
        %4394 = vdwg.mxu0
        %4395 = vmatprep.subr.mxu0 0.0
        %4396 = vmatpush1.msra.mxu0 0.0
        %4397 = vmatprep.subr.mxu0 0.0
        %4398 = vmatpush1.msra.mxu0 0.0
        %4399 = vmatprep.subr.mxu0 0.0
        %4400 = vmatpush1.msra.mxu0 0.0
        %4401 = vmatprep.subr.mxu0 0.0
        %4402 = vmatpush1.msra.mxu0 0.0
        %4403 = vmatprep.subr.mxu0 0.0
        %4404 = vmatpush1.msra.mxu0 0.0
        %4405 = vmatprep.subr.mxu0 0.0
        %4406 = vmatpush1.msra.mxu0 0.0
        %4407 = vmatprep.subr.mxu0 0.0
        %4408 = vmatpush1.msra.mxu0 0.0
        %4409 = vmatprep.subr.mxu0 0.0
        %4410 = vmatpush1.msra.mxu0 0.0
        %4411 = vmatprep.subr.mxu0 0.0
        %4412 = vmatpush1.msra.mxu0 0.0
        %4413 = vmatprep.subr.mxu0 0.0
        %4414 = vmatpush1.msra.mxu0 0.0
        %4415 = vmatprep.subr.mxu0 0.0
        %4416 = vmatpush1.msra.mxu0 0.0
        %4417 = vmatprep.subr.mxu0 0.0
        %4418 = vmatpush1.msra.mxu0 0.0
        %4419 = vmatprep.subr.mxu0 0.0
        %4420 = vmatpush1.msra.mxu0 0.0
        %4421 = vmatprep.subr.mxu0 0.0
        %4422 = vmatpush1.msra.mxu0 0.0
        %4423 = vmatprep.subr.mxu0 0.0
        %4424 = vmatpush1.msra.mxu0 0.0
        %4425 = vmatprep.subr.mxu0 0.0
        %v4426 = vand.u32 %v1541, 4294901760
        %v4427 = vsub.f32 %v1541, %v4426
        %v4428 = vand.u32 %v4427, 4294901760
        %v4429 = vsub.f32 %v4427, %v4428
        %v4430 = vand.u32 %v4429, 4294901760
        %4431 = vmatpush1.msra.mxu0 %v4430
        %4432 = vmatprep.subr.mxu0 0.0
        %4433 = vmatpush2.msra.mxu0 0.0
        %4434 = vmatprep.subr.mxu0 0.0
        %4435 = vmatpush2.msra.mxu0 0.0
        %4436 = vmatprep.subr.mxu0 0.0
        %4437 = vmatpush2.msra.mxu0 0.0
        %4438 = vmatprep.subr.mxu0 0.0
        %4439 = vmatpush2.msra.mxu0 0.0
        %4440 = vmatprep.subr.mxu0 0.0
        %4441 = vmatpush2.msra.mxu0 0.0
        %4442 = vmatprep.subr.mxu0 0.0
        %4443 = vmatpush2.msra.mxu0 0.0
        %4444 = vmatprep.subr.mxu0 0.0
        %4445 = vmatpush2.msra.mxu0 0.0
        %4446 = vmatprep.subr.mxu0 0.0
        %4447 = vmatpush2.msra.mxu0 0.0
        %4448 = vmatprep.subr.mxu0 0.0
        %4449 = vmatpush2.msra.mxu0 0.0
        %4450 = vmatprep.subr.mxu0 0.0
        %4451 = vmatpush2.msra.mxu0 0.0
        %4452 = vmatprep.subr.mxu0 0.0
        %4453 = vmatpush2.msra.mxu0 0.0
        %4454 = vmatprep.subr.mxu0 0.0
        %4455 = vmatpush2.msra.mxu0 0.0
        %4456 = vmatprep.subr.mxu0 0.0
        %4457 = vmatpush2.msra.mxu0 0.0
        %4458 = vmatprep.subr.mxu0 0.0
        %4459 = vmatpush2.msra.mxu0 0.0
        %4460 = vmatprep.subr.mxu0 0.0
        %4461 = vmatpush2.msra.mxu0 0.0
        %4462 = vmatprep.subr.mxu0 0.0
        %4463 = vmatpush2.msra.mxu0 0.0
        %4464 = vmatprep.mubr.f32.mxu0 0.0
        %v4465 = vand.u32 %v4317, 4294901760
        %4466 = vmatmul.mubr.f32.gmra.mxu0 %v4465
        %v4467 = vpop.f32.mrf.mxu0
        %v4468 = vadd.f32 %v4392, %v4467
        %v4469 = vpop.f32.mrf.mxu0
        %4470 = vdwg.mxu0
        %4471 = vmatprep.subr.mxu0 0.0
        %4472 = vmatpush1.msra.mxu0 0.0
        %4473 = vmatprep.subr.mxu0 0.0
        %4474 = vmatpush1.msra.mxu0 0.0
        %4475 = vmatprep.subr.mxu0 0.0
        %4476 = vmatpush1.msra.mxu0 0.0
        %4477 = vmatprep.subr.mxu0 0.0
        %4478 = vmatpush1.msra.mxu0 0.0
        %4479 = vmatprep.subr.mxu0 0.0
        %4480 = vmatpush1.msra.mxu0 0.0
        %4481 = vmatprep.subr.mxu0 0.0
        %4482 = vmatpush1.msra.mxu0 0.0
        %4483 = vmatprep.subr.mxu0 0.0
        %4484 = vmatpush1.msra.mxu0 0.0
        %4485 = vmatprep.subr.mxu0 0.0
        %4486 = vmatpush1.msra.mxu0 0.0
        %4487 = vmatprep.subr.mxu0 0.0
        %4488 = vmatpush1.msra.mxu0 0.0
        %4489 = vmatprep.subr.mxu0 0.0
        %4490 = vmatpush1.msra.mxu0 0.0
        %4491 = vmatprep.subr.mxu0 0.0
        %4492 = vmatpush1.msra.mxu0 0.0
        %4493 = vmatprep.subr.mxu0 0.0
        %4494 = vmatpush1.msra.mxu0 0.0
        %4495 = vmatprep.subr.mxu0 0.0
        %4496 = vmatpush1.msra.mxu0 0.0
        %4497 = vmatprep.subr.mxu0 0.0
        %4498 = vmatpush1.msra.mxu0 0.0
        %4499 = vmatprep.subr.mxu0 0.0
        %4500 = vmatpush1.msra.mxu0 0.0
        %4501 = vmatprep.subr.mxu0 0.0
        %v4502 = vand.u32 %v1541, 4294901760
        %v4503 = vsub.f32 %v1541, %v4502
        %4504 = vmatpush1.msra.mxu0 %v4503
        %4505 = vmatprep.subr.mxu0 0.0
        %4506 = vmatpush2.msra.mxu0 0.0
        %4507 = vmatprep.subr.mxu0 0.0
        %4508 = vmatpush2.msra.mxu0 0.0
        %4509 = vmatprep.subr.mxu0 0.0
        %4510 = vmatpush2.msra.mxu0 0.0
        %4511 = vmatprep.subr.mxu0 0.0
        %4512 = vmatpush2.msra.mxu0 0.0
        %4513 = vmatprep.subr.mxu0 0.0
        %4514 = vmatpush2.msra.mxu0 0.0
        %4515 = vmatprep.subr.mxu0 0.0
        %4516 = vmatpush2.msra.mxu0 0.0
        %4517 = vmatprep.subr.mxu0 0.0
        %4518 = vmatpush2.msra.mxu0 0.0
        %4519 = vmatprep.subr.mxu0 0.0
        %4520 = vmatpush2.msra.mxu0 0.0
        %4521 = vmatprep.subr.mxu0 0.0
        %4522 = vmatpush2.msra.mxu0 0.0
        %4523 = vmatprep.subr.mxu0 0.0
        %4524 = vmatpush2.msra.mxu0 0.0
        %4525 = vmatprep.subr.mxu0 0.0
        %4526 = vmatpush2.msra.mxu0 0.0
        %4527 = vmatprep.subr.mxu0 0.0
        %4528 = vmatpush2.msra.mxu0 0.0
        %4529 = vmatprep.subr.mxu0 0.0
        %4530 = vmatpush2.msra.mxu0 0.0
        %4531 = vmatprep.subr.mxu0 0.0
        %4532 = vmatpush2.msra.mxu0 0.0
        %4533 = vmatprep.subr.mxu0 0.0
        %4534 = vmatpush2.msra.mxu0 0.0
        %4535 = vmatprep.subr.mxu0 0.0
        %4536 = vmatpush2.msra.mxu0 0.0
        %4537 = vmatprep.mubr.f32.mxu0 0.0
        %v4538 = vand.u32 %v4317, 4294901760
        %v4539 = vsub.f32 %v4317, %v4538
        %4540 = vmatmul.mubr.f32.gmra.mxu0 %v4539
        %v4541 = vpop.f32.mrf.mxu0
        %v4542 = vadd.f32 %v4468, %v4541
        %v4543 = vpop.f32.mrf.mxu0
        %4544 = vdwg.mxu0
        %4545 = vmatprep.subr.mxu0 0.0
        %4546 = vmatpush1.msra.mxu0 0.0
        %4547 = vmatprep.subr.mxu0 0.0
        %4548 = vmatpush1.msra.mxu0 0.0
        %4549 = vmatprep.subr.mxu0 0.0
        %4550 = vmatpush1.msra.mxu0 0.0
        %4551 = vmatprep.subr.mxu0 0.0
        %4552 = vmatpush1.msra.mxu0 0.0
        %4553 = vmatprep.subr.mxu0 0.0
        %4554 = vmatpush1.msra.mxu0 0.0
        %4555 = vmatprep.subr.mxu0 0.0
        %4556 = vmatpush1.msra.mxu0 0.0
        %4557 = vmatprep.subr.mxu0 0.0
        %4558 = vmatpush1.msra.mxu0 0.0
        %4559 = vmatprep.subr.mxu0 0.0
        %4560 = vmatpush1.msra.mxu0 0.0
        %4561 = vmatprep.subr.mxu0 0.0
        %4562 = vmatpush1.msra.mxu0 0.0
        %4563 = vmatprep.subr.mxu0 0.0
        %4564 = vmatpush1.msra.mxu0 0.0
        %4565 = vmatprep.subr.mxu0 0.0
        %4566 = vmatpush1.msra.mxu0 0.0
        %4567 = vmatprep.subr.mxu0 0.0
        %4568 = vmatpush1.msra.mxu0 0.0
        %4569 = vmatprep.subr.mxu0 0.0
        %4570 = vmatpush1.msra.mxu0 0.0
        %4571 = vmatprep.subr.mxu0 0.0
        %4572 = vmatpush1.msra.mxu0 0.0
        %4573 = vmatprep.subr.mxu0 0.0
        %4574 = vmatpush1.msra.mxu0 0.0
        %4575 = vmatprep.subr.mxu0 0.0
        %v4576 = vand.u32 %v1541, 4294901760
        %4577 = vmatpush1.msra.mxu0 %v4576
        %4578 = vmatprep.subr.mxu0 0.0
        %4579 = vmatpush2.msra.mxu0 0.0
        %4580 = vmatprep.subr.mxu0 0.0
        %4581 = vmatpush2.msra.mxu0 0.0
        %4582 = vmatprep.subr.mxu0 0.0
        %4583 = vmatpush2.msra.mxu0 0.0
        %4584 = vmatprep.subr.mxu0 0.0
        %4585 = vmatpush2.msra.mxu0 0.0
        %4586 = vmatprep.subr.mxu0 0.0
        %4587 = vmatpush2.msra.mxu0 0.0
        %4588 = vmatprep.subr.mxu0 0.0
        %4589 = vmatpush2.msra.mxu0 0.0
        %4590 = vmatprep.subr.mxu0 0.0
        %4591 = vmatpush2.msra.mxu0 0.0
        %4592 = vmatprep.subr.mxu0 0.0
        %4593 = vmatpush2.msra.mxu0 0.0
        %4594 = vmatprep.subr.mxu0 0.0
        %4595 = vmatpush2.msra.mxu0 0.0
        %4596 = vmatprep.subr.mxu0 0.0
        %4597 = vmatpush2.msra.mxu0 0.0
        %4598 = vmatprep.subr.mxu0 0.0
        %4599 = vmatpush2.msra.mxu0 0.0
        %4600 = vmatprep.subr.mxu0 0.0
        %4601 = vmatpush2.msra.mxu0 0.0
        %4602 = vmatprep.subr.mxu0 0.0
        %4603 = vmatpush2.msra.mxu0 0.0
        %4604 = vmatprep.subr.mxu0 0.0
        %4605 = vmatpush2.msra.mxu0 0.0
        %4606 = vmatprep.subr.mxu0 0.0
        %4607 = vmatpush2.msra.mxu0 0.0
        %4608 = vmatprep.subr.mxu0 0.0
        %4609 = vmatpush2.msra.mxu0 0.0
        %4610 = vmatprep.mubr.f32.mxu0 0.0
        %v4611 = vand.u32 %v4317, 4294901760
        %v4612 = vsub.f32 %v4317, %v4611
        %v4613 = vand.u32 %v4612, 4294901760
        %4614 = vmatmul.mubr.f32.gmra.mxu0 %v4613
        %v4615 = vpop.f32.mrf.mxu0
        %v4616 = vadd.f32 %v4542, %v4615
        %v4617 = vpop.f32.mrf.mxu0
        %4618 = vdwg.mxu0
        %4619 = vmatprep.subr.mxu0 0.0
        %4620 = vmatpush1.msra.mxu0 0.0
        %4621 = vmatprep.subr.mxu0 0.0
        %4622 = vmatpush1.msra.mxu0 0.0
        %4623 = vmatprep.subr.mxu0 0.0
        %4624 = vmatpush1.msra.mxu0 0.0
        %4625 = vmatprep.subr.mxu0 0.0
        %4626 = vmatpush1.msra.mxu0 0.0
        %4627 = vmatprep.subr.mxu0 0.0
        %4628 = vmatpush1.msra.mxu0 0.0
        %4629 = vmatprep.subr.mxu0 0.0
        %4630 = vmatpush1.msra.mxu0 0.0
        %4631 = vmatprep.subr.mxu0 0.0
        %4632 = vmatpush1.msra.mxu0 0.0
        %4633 = vmatprep.subr.mxu0 0.0
        %4634 = vmatpush1.msra.mxu0 0.0
        %4635 = vmatprep.subr.mxu0 0.0
        %4636 = vmatpush1.msra.mxu0 0.0
        %4637 = vmatprep.subr.mxu0 0.0
        %4638 = vmatpush1.msra.mxu0 0.0
        %4639 = vmatprep.subr.mxu0 0.0
        %4640 = vmatpush1.msra.mxu0 0.0
        %4641 = vmatprep.subr.mxu0 0.0
        %4642 = vmatpush1.msra.mxu0 0.0
        %4643 = vmatprep.subr.mxu0 0.0
        %4644 = vmatpush1.msra.mxu0 0.0
        %4645 = vmatprep.subr.mxu0 0.0
        %4646 = vmatpush1.msra.mxu0 0.0
        %4647 = vmatprep.subr.mxu0 0.0
        %4648 = vmatpush1.msra.mxu0 0.0
        %4649 = vmatprep.subr.mxu0 0.0
        %v4650 = vand.u32 %v1541, 4294901760
        %v4651 = vsub.f32 %v1541, %v4650
        %v4652 = vand.u32 %v4651, 4294901760
        %4653 = vmatpush1.msra.mxu0 %v4652
        %4654 = vmatprep.subr.mxu0 0.0
        %4655 = vmatpush2.msra.mxu0 0.0
        %4656 = vmatprep.subr.mxu0 0.0
        %4657 = vmatpush2.msra.mxu0 0.0
        %4658 = vmatprep.subr.mxu0 0.0
        %4659 = vmatpush2.msra.mxu0 0.0
        %4660 = vmatprep.subr.mxu0 0.0
        %4661 = vmatpush2.msra.mxu0 0.0
        %4662 = vmatprep.subr.mxu0 0.0
        %4663 = vmatpush2.msra.mxu0 0.0
        %4664 = vmatprep.subr.mxu0 0.0
        %4665 = vmatpush2.msra.mxu0 0.0
        %4666 = vmatprep.subr.mxu0 0.0
        %4667 = vmatpush2.msra.mxu0 0.0
        %4668 = vmatprep.subr.mxu0 0.0
        %4669 = vmatpush2.msra.mxu0 0.0
        %4670 = vmatprep.subr.mxu0 0.0
        %4671 = vmatpush2.msra.mxu0 0.0
        %4672 = vmatprep.subr.mxu0 0.0
        %4673 = vmatpush2.msra.mxu0 0.0
        %4674 = vmatprep.subr.mxu0 0.0
        %4675 = vmatpush2.msra.mxu0 0.0
        %4676 = vmatprep.subr.mxu0 0.0
        %4677 = vmatpush2.msra.mxu0 0.0
        %4678 = vmatprep.subr.mxu0 0.0
        %4679 = vmatpush2.msra.mxu0 0.0
        %4680 = vmatprep.subr.mxu0 0.0
        %4681 = vmatpush2.msra.mxu0 0.0
        %4682 = vmatprep.subr.mxu0 0.0
        %4683 = vmatpush2.msra.mxu0 0.0
        %4684 = vmatprep.subr.mxu0 0.0
        %4685 = vmatpush2.msra.mxu0 0.0
        %4686 = vmatprep.mubr.f32.mxu0 0.0
        %v4687 = vand.u32 %v4317, 4294901760
        %4688 = vmatmul.mubr.f32.gmra.mxu0 %v4687
        %v4689 = vpop.f32.mrf.mxu0
        %v4690 = vadd.f32 %v4616, %v4689
        %v4691 = vpop.f32.mrf.mxu0
        %4692 = vdwg.mxu0
        %4693 = vmatprep.subr.mxu0 0.0
        %4694 = vmatpush1.msra.mxu0 0.0
        %4695 = vmatprep.subr.mxu0 0.0
        %4696 = vmatpush1.msra.mxu0 0.0
        %4697 = vmatprep.subr.mxu0 0.0
        %4698 = vmatpush1.msra.mxu0 0.0
        %4699 = vmatprep.subr.mxu0 0.0
        %4700 = vmatpush1.msra.mxu0 0.0
        %4701 = vmatprep.subr.mxu0 0.0
        %4702 = vmatpush1.msra.mxu0 0.0
        %4703 = vmatprep.subr.mxu0 0.0
        %4704 = vmatpush1.msra.mxu0 0.0
        %4705 = vmatprep.subr.mxu0 0.0
        %4706 = vmatpush1.msra.mxu0 0.0
        %4707 = vmatprep.subr.mxu0 0.0
        %4708 = vmatpush1.msra.mxu0 0.0
        %4709 = vmatprep.subr.mxu0 0.0
        %4710 = vmatpush1.msra.mxu0 0.0
        %4711 = vmatprep.subr.mxu0 0.0
        %4712 = vmatpush1.msra.mxu0 0.0
        %4713 = vmatprep.subr.mxu0 0.0
        %4714 = vmatpush1.msra.mxu0 0.0
        %4715 = vmatprep.subr.mxu0 0.0
        %4716 = vmatpush1.msra.mxu0 0.0
        %4717 = vmatprep.subr.mxu0 0.0
        %4718 = vmatpush1.msra.mxu0 0.0
        %4719 = vmatprep.subr.mxu0 0.0
        %4720 = vmatpush1.msra.mxu0 0.0
        %4721 = vmatprep.subr.mxu0 0.0
        %4722 = vmatpush1.msra.mxu0 0.0
        %4723 = vmatprep.subr.mxu0 0.0
        %v4724 = vand.u32 %v1541, 4294901760
        %4725 = vmatpush1.msra.mxu0 %v4724
        %4726 = vmatprep.subr.mxu0 0.0
        %4727 = vmatpush2.msra.mxu0 0.0
        %4728 = vmatprep.subr.mxu0 0.0
        %4729 = vmatpush2.msra.mxu0 0.0
        %4730 = vmatprep.subr.mxu0 0.0
        %4731 = vmatpush2.msra.mxu0 0.0
        %4732 = vmatprep.subr.mxu0 0.0
        %4733 = vmatpush2.msra.mxu0 0.0
        %4734 = vmatprep.subr.mxu0 0.0
        %4735 = vmatpush2.msra.mxu0 0.0
        %4736 = vmatprep.subr.mxu0 0.0
        %4737 = vmatpush2.msra.mxu0 0.0
        %4738 = vmatprep.subr.mxu0 0.0
        %4739 = vmatpush2.msra.mxu0 0.0
        %4740 = vmatprep.subr.mxu0 0.0
        %4741 = vmatpush2.msra.mxu0 0.0
        %4742 = vmatprep.subr.mxu0 0.0
        %4743 = vmatpush2.msra.mxu0 0.0
        %4744 = vmatprep.subr.mxu0 0.0
        %4745 = vmatpush2.msra.mxu0 0.0
        %4746 = vmatprep.subr.mxu0 0.0
        %4747 = vmatpush2.msra.mxu0 0.0
        %4748 = vmatprep.subr.mxu0 0.0
        %4749 = vmatpush2.msra.mxu0 0.0
        %4750 = vmatprep.subr.mxu0 0.0
        %4751 = vmatpush2.msra.mxu0 0.0
        %4752 = vmatprep.subr.mxu0 0.0
        %4753 = vmatpush2.msra.mxu0 0.0
        %4754 = vmatprep.subr.mxu0 0.0
        %4755 = vmatpush2.msra.mxu0 0.0
        %4756 = vmatprep.subr.mxu0 0.0
        %4757 = vmatpush2.msra.mxu0 0.0
        %4758 = vmatprep.mubr.f32.mxu0 0.0
        %v4759 = vand.u32 %v4317, 4294901760
        %4760 = vmatmul.mubr.f32.gmra.mxu0 %v4759
        %v4761 = vpop.f32.mrf.mxu0
        %v4762 = vadd.f32 %v4690, %v4761
        %v4763 = vpop.f32.mrf.mxu0
        %4764 = vdwg.mxu0
        %v4766 = vsel %vm1547, %v3413, 0
        %4768 = vmatprep.subr.mxu0 0.0
        %4769 = vmatpush1.msra.mxu0 0.0
        %4770 = vmatprep.subr.mxu0 0.0
        %4771 = vmatpush1.msra.mxu0 0.0
        %4772 = vmatprep.subr.mxu0 0.0
        %4773 = vmatpush1.msra.mxu0 0.0
        %4774 = vmatprep.subr.mxu0 0.0
        %4775 = vmatpush1.msra.mxu0 0.0
        %4776 = vmatprep.subr.mxu0 0.0
        %4777 = vmatpush1.msra.mxu0 0.0
        %4778 = vmatprep.subr.mxu0 0.0
        %4779 = vmatpush1.msra.mxu0 0.0
        %4780 = vmatprep.subr.mxu0 0.0
        %4781 = vmatpush1.msra.mxu0 0.0
        %4782 = vmatprep.subr.mxu0 0.0
        %4783 = vmatpush1.msra.mxu0 0.0
        %4784 = vmatprep.subr.mxu0 0.0
        %4785 = vmatpush1.msra.mxu0 0.0
        %4786 = vmatprep.subr.mxu0 0.0
        %4787 = vmatpush1.msra.mxu0 0.0
        %4788 = vmatprep.subr.mxu0 0.0
        %4789 = vmatpush1.msra.mxu0 0.0
        %4790 = vmatprep.subr.mxu0 0.0
        %4791 = vmatpush1.msra.mxu0 0.0
        %4792 = vmatprep.subr.mxu0 0.0
        %4793 = vmatpush1.msra.mxu0 0.0
        %4794 = vmatprep.subr.mxu0 0.0
        %4795 = vmatpush1.msra.mxu0 0.0
        %4796 = vmatprep.subr.mxu0 0.0
        %4797 = vmatpush1.msra.mxu0 0.0
        %4798 = vmatprep.subr.mxu0 0.0
        %v4799 = vand.u32 %v1542, 4294901760
        %4800 = vmatpush1.msra.mxu0 %v4799
        %4801 = vmatprep.subr.mxu0 0.0
        %4802 = vmatpush2.msra.mxu0 0.0
        %4803 = vmatprep.subr.mxu0 0.0
        %4804 = vmatpush2.msra.mxu0 0.0
        %4805 = vmatprep.subr.mxu0 0.0
        %4806 = vmatpush2.msra.mxu0 0.0
        %4807 = vmatprep.subr.mxu0 0.0
        %4808 = vmatpush2.msra.mxu0 0.0
        %4809 = vmatprep.subr.mxu0 0.0
        %4810 = vmatpush2.msra.mxu0 0.0
        %4811 = vmatprep.subr.mxu0 0.0
        %4812 = vmatpush2.msra.mxu0 0.0
        %4813 = vmatprep.subr.mxu0 0.0
        %4814 = vmatpush2.msra.mxu0 0.0
        %4815 = vmatprep.subr.mxu0 0.0
        %4816 = vmatpush2.msra.mxu0 0.0
        %4817 = vmatprep.subr.mxu0 0.0
        %4818 = vmatpush2.msra.mxu0 0.0
        %4819 = vmatprep.subr.mxu0 0.0
        %4820 = vmatpush2.msra.mxu0 0.0
        %4821 = vmatprep.subr.mxu0 0.0
        %4822 = vmatpush2.msra.mxu0 0.0
        %4823 = vmatprep.subr.mxu0 0.0
        %4824 = vmatpush2.msra.mxu0 0.0
        %4825 = vmatprep.subr.mxu0 0.0
        %4826 = vmatpush2.msra.mxu0 0.0
        %4827 = vmatprep.subr.mxu0 0.0
        %4828 = vmatpush2.msra.mxu0 0.0
        %4829 = vmatprep.subr.mxu0 0.0
        %4830 = vmatpush2.msra.mxu0 0.0
        %4831 = vmatprep.subr.mxu0 0.0
        %4832 = vmatpush2.msra.mxu0 0.0
        %4833 = vmatprep.mubr.f32.mxu0 0.0
        %v4834 = vand.u32 %v4766, 4294901760
        %v4835 = vsub.f32 %v4766, %v4834
        %v4836 = vand.u32 %v4835, 4294901760
        %v4837 = vsub.f32 %v4835, %v4836
        %v4838 = vand.u32 %v4837, 4294901760
        %4839 = vmatmul.mubr.f32.gmra.mxu0 %v4838
        %v4840 = vpop.f32.mrf.mxu0
        %v4841 = vadd.f32 0.0, %v4840
        %v4842 = vpop.f32.mrf.mxu0
        %4843 = vdwg.mxu0
        %4844 = vmatprep.subr.mxu0 0.0
        %4845 = vmatpush1.msra.mxu0 0.0
        %4846 = vmatprep.subr.mxu0 0.0
        %4847 = vmatpush1.msra.mxu0 0.0
        %4848 = vmatprep.subr.mxu0 0.0
        %4849 = vmatpush1.msra.mxu0 0.0
        %4850 = vmatprep.subr.mxu0 0.0
        %4851 = vmatpush1.msra.mxu0 0.0
        %4852 = vmatprep.subr.mxu0 0.0
        %4853 = vmatpush1.msra.mxu0 0.0
        %4854 = vmatprep.subr.mxu0 0.0
        %4855 = vmatpush1.msra.mxu0 0.0
        %4856 = vmatprep.subr.mxu0 0.0
        %4857 = vmatpush1.msra.mxu0 0.0
        %4858 = vmatprep.subr.mxu0 0.0
        %4859 = vmatpush1.msra.mxu0 0.0
        %4860 = vmatprep.subr.mxu0 0.0
        %4861 = vmatpush1.msra.mxu0 0.0
        %4862 = vmatprep.subr.mxu0 0.0
        %4863 = vmatpush1.msra.mxu0 0.0
        %4864 = vmatprep.subr.mxu0 0.0
        %4865 = vmatpush1.msra.mxu0 0.0
        %4866 = vmatprep.subr.mxu0 0.0
        %4867 = vmatpush1.msra.mxu0 0.0
        %4868 = vmatprep.subr.mxu0 0.0
        %4869 = vmatpush1.msra.mxu0 0.0
        %4870 = vmatprep.subr.mxu0 0.0
        %4871 = vmatpush1.msra.mxu0 0.0
        %4872 = vmatprep.subr.mxu0 0.0
        %4873 = vmatpush1.msra.mxu0 0.0
        %4874 = vmatprep.subr.mxu0 0.0
        %v4875 = vand.u32 %v1542, 4294901760
        %v4876 = vsub.f32 %v1542, %v4875
        %v4877 = vand.u32 %v4876, 4294901760
        %v4878 = vsub.f32 %v4876, %v4877
        %v4879 = vand.u32 %v4878, 4294901760
        %4880 = vmatpush1.msra.mxu0 %v4879
        %4881 = vmatprep.subr.mxu0 0.0
        %4882 = vmatpush2.msra.mxu0 0.0
        %4883 = vmatprep.subr.mxu0 0.0
        %4884 = vmatpush2.msra.mxu0 0.0
        %4885 = vmatprep.subr.mxu0 0.0
        %4886 = vmatpush2.msra.mxu0 0.0
        %4887 = vmatprep.subr.mxu0 0.0
        %4888 = vmatpush2.msra.mxu0 0.0
        %4889 = vmatprep.subr.mxu0 0.0
        %4890 = vmatpush2.msra.mxu0 0.0
        %4891 = vmatprep.subr.mxu0 0.0
        %4892 = vmatpush2.msra.mxu0 0.0
        %4893 = vmatprep.subr.mxu0 0.0
        %4894 = vmatpush2.msra.mxu0 0.0
        %4895 = vmatprep.subr.mxu0 0.0
        %4896 = vmatpush2.msra.mxu0 0.0
        %4897 = vmatprep.subr.mxu0 0.0
        %4898 = vmatpush2.msra.mxu0 0.0
        %4899 = vmatprep.subr.mxu0 0.0
        %4900 = vmatpush2.msra.mxu0 0.0
        %4901 = vmatprep.subr.mxu0 0.0
        %4902 = vmatpush2.msra.mxu0 0.0
        %4903 = vmatprep.subr.mxu0 0.0
        %4904 = vmatpush2.msra.mxu0 0.0
        %4905 = vmatprep.subr.mxu0 0.0
        %4906 = vmatpush2.msra.mxu0 0.0
        %4907 = vmatprep.subr.mxu0 0.0
        %4908 = vmatpush2.msra.mxu0 0.0
        %4909 = vmatprep.subr.mxu0 0.0
        %4910 = vmatpush2.msra.mxu0 0.0
        %4911 = vmatprep.subr.mxu0 0.0
        %4912 = vmatpush2.msra.mxu0 0.0
        %4913 = vmatprep.mubr.f32.mxu0 0.0
        %v4914 = vand.u32 %v4766, 4294901760
        %4915 = vmatmul.mubr.f32.gmra.mxu0 %v4914
        %v4916 = vpop.f32.mrf.mxu0
        %v4917 = vadd.f32 %v4841, %v4916
        %v4918 = vpop.f32.mrf.mxu0
        %4919 = vdwg.mxu0
        %4920 = vmatprep.subr.mxu0 0.0
        %4921 = vmatpush1.msra.mxu0 0.0
        %4922 = vmatprep.subr.mxu0 0.0
        %4923 = vmatpush1.msra.mxu0 0.0
        %4924 = vmatprep.subr.mxu0 0.0
        %4925 = vmatpush1.msra.mxu0 0.0
        %4926 = vmatprep.subr.mxu0 0.0
        %4927 = vmatpush1.msra.mxu0 0.0
        %4928 = vmatprep.subr.mxu0 0.0
        %4929 = vmatpush1.msra.mxu0 0.0
        %4930 = vmatprep.subr.mxu0 0.0
        %4931 = vmatpush1.msra.mxu0 0.0
        %4932 = vmatprep.subr.mxu0 0.0
        %4933 = vmatpush1.msra.mxu0 0.0
        %4934 = vmatprep.subr.mxu0 0.0
        %4935 = vmatpush1.msra.mxu0 0.0
        %4936 = vmatprep.subr.mxu0 0.0
        %4937 = vmatpush1.msra.mxu0 0.0
        %4938 = vmatprep.subr.mxu0 0.0
        %4939 = vmatpush1.msra.mxu0 0.0
        %4940 = vmatprep.subr.mxu0 0.0
        %4941 = vmatpush1.msra.mxu0 0.0
        %4942 = vmatprep.subr.mxu0 0.0
        %4943 = vmatpush1.msra.mxu0 0.0
        %4944 = vmatprep.subr.mxu0 0.0
        %4945 = vmatpush1.msra.mxu0 0.0
        %4946 = vmatprep.subr.mxu0 0.0
        %4947 = vmatpush1.msra.mxu0 0.0
        %4948 = vmatprep.subr.mxu0 0.0
        %4949 = vmatpush1.msra.mxu0 0.0
        %4950 = vmatprep.subr.mxu0 0.0
        %v4951 = vand.u32 %v1542, 4294901760
        %v4952 = vsub.f32 %v1542, %v4951
        %4953 = vmatpush1.msra.mxu0 %v4952
        %4954 = vmatprep.subr.mxu0 0.0
        %4955 = vmatpush2.msra.mxu0 0.0
        %4956 = vmatprep.subr.mxu0 0.0
        %4957 = vmatpush2.msra.mxu0 0.0
        %4958 = vmatprep.subr.mxu0 0.0
        %4959 = vmatpush2.msra.mxu0 0.0
        %4960 = vmatprep.subr.mxu0 0.0
        %4961 = vmatpush2.msra.mxu0 0.0
        %4962 = vmatprep.subr.mxu0 0.0
        %4963 = vmatpush2.msra.mxu0 0.0
        %4964 = vmatprep.subr.mxu0 0.0
        %4965 = vmatpush2.msra.mxu0 0.0
        %4966 = vmatprep.subr.mxu0 0.0
        %4967 = vmatpush2.msra.mxu0 0.0
        %4968 = vmatprep.subr.mxu0 0.0
        %4969 = vmatpush2.msra.mxu0 0.0
        %4970 = vmatprep.subr.mxu0 0.0
        %4971 = vmatpush2.msra.mxu0 0.0
        %4972 = vmatprep.subr.mxu0 0.0
        %4973 = vmatpush2.msra.mxu0 0.0
        %4974 = vmatprep.subr.mxu0 0.0
        %4975 = vmatpush2.msra.mxu0 0.0
        %4976 = vmatprep.subr.mxu0 0.0
        %4977 = vmatpush2.msra.mxu0 0.0
        %4978 = vmatprep.subr.mxu0 0.0
        %4979 = vmatpush2.msra.mxu0 0.0
        %4980 = vmatprep.subr.mxu0 0.0
        %4981 = vmatpush2.msra.mxu0 0.0
        %4982 = vmatprep.subr.mxu0 0.0
        %4983 = vmatpush2.msra.mxu0 0.0
        %4984 = vmatprep.subr.mxu0 0.0
        %4985 = vmatpush2.msra.mxu0 0.0
        %4986 = vmatprep.mubr.f32.mxu0 0.0
        %v4987 = vand.u32 %v4766, 4294901760
        %v4988 = vsub.f32 %v4766, %v4987
        %4989 = vmatmul.mubr.f32.gmra.mxu0 %v4988
        %v4990 = vpop.f32.mrf.mxu0
        %v4991 = vadd.f32 %v4917, %v4990
        %v4992 = vpop.f32.mrf.mxu0
        %4993 = vdwg.mxu0
        %4994 = vmatprep.subr.mxu0 0.0
        %4995 = vmatpush1.msra.mxu0 0.0
        %4996 = vmatprep.subr.mxu0 0.0
        %4997 = vmatpush1.msra.mxu0 0.0
        %4998 = vmatprep.subr.mxu0 0.0
        %4999 = vmatpush1.msra.mxu0 0.0
        %5000 = vmatprep.subr.mxu0 0.0
        %5001 = vmatpush1.msra.mxu0 0.0
        %5002 = vmatprep.subr.mxu0 0.0
        %5003 = vmatpush1.msra.mxu0 0.0
        %5004 = vmatprep.subr.mxu0 0.0
        %5005 = vmatpush1.msra.mxu0 0.0
        %5006 = vmatprep.subr.mxu0 0.0
        %5007 = vmatpush1.msra.mxu0 0.0
        %5008 = vmatprep.subr.mxu0 0.0
        %5009 = vmatpush1.msra.mxu0 0.0
        %5010 = vmatprep.subr.mxu0 0.0
        %5011 = vmatpush1.msra.mxu0 0.0
        %5012 = vmatprep.subr.mxu0 0.0
        %5013 = vmatpush1.msra.mxu0 0.0
        %5014 = vmatprep.subr.mxu0 0.0
        %5015 = vmatpush1.msra.mxu0 0.0
        %5016 = vmatprep.subr.mxu0 0.0
        %5017 = vmatpush1.msra.mxu0 0.0
        %5018 = vmatprep.subr.mxu0 0.0
        %5019 = vmatpush1.msra.mxu0 0.0
        %5020 = vmatprep.subr.mxu0 0.0
        %5021 = vmatpush1.msra.mxu0 0.0
        %5022 = vmatprep.subr.mxu0 0.0
        %5023 = vmatpush1.msra.mxu0 0.0
        %5024 = vmatprep.subr.mxu0 0.0
        %v5025 = vand.u32 %v1542, 4294901760
        %5026 = vmatpush1.msra.mxu0 %v5025
        %5027 = vmatprep.subr.mxu0 0.0
        %5028 = vmatpush2.msra.mxu0 0.0
        %5029 = vmatprep.subr.mxu0 0.0
        %5030 = vmatpush2.msra.mxu0 0.0
        %5031 = vmatprep.subr.mxu0 0.0
        %5032 = vmatpush2.msra.mxu0 0.0
        %5033 = vmatprep.subr.mxu0 0.0
        %5034 = vmatpush2.msra.mxu0 0.0
        %5035 = vmatprep.subr.mxu0 0.0
        %5036 = vmatpush2.msra.mxu0 0.0
        %5037 = vmatprep.subr.mxu0 0.0
        %5038 = vmatpush2.msra.mxu0 0.0
        %5039 = vmatprep.subr.mxu0 0.0
        %5040 = vmatpush2.msra.mxu0 0.0
        %5041 = vmatprep.subr.mxu0 0.0
        %5042 = vmatpush2.msra.mxu0 0.0
        %5043 = vmatprep.subr.mxu0 0.0
        %5044 = vmatpush2.msra.mxu0 0.0
        %5045 = vmatprep.subr.mxu0 0.0
        %5046 = vmatpush2.msra.mxu0 0.0
        %5047 = vmatprep.subr.mxu0 0.0
        %5048 = vmatpush2.msra.mxu0 0.0
        %5049 = vmatprep.subr.mxu0 0.0
        %5050 = vmatpush2.msra.mxu0 0.0
        %5051 = vmatprep.subr.mxu0 0.0
        %5052 = vmatpush2.msra.mxu0 0.0
        %5053 = vmatprep.subr.mxu0 0.0
        %5054 = vmatpush2.msra.mxu0 0.0
        %5055 = vmatprep.subr.mxu0 0.0
        %5056 = vmatpush2.msra.mxu0 0.0
        %5057 = vmatprep.subr.mxu0 0.0
        %5058 = vmatpush2.msra.mxu0 0.0
        %5059 = vmatprep.mubr.f32.mxu0 0.0
        %v5060 = vand.u32 %v4766, 4294901760
        %v5061 = vsub.f32 %v4766, %v5060
        %v5062 = vand.u32 %v5061, 4294901760
        %5063 = vmatmul.mubr.f32.gmra.mxu0 %v5062
        %v5064 = vpop.f32.mrf.mxu0
        %v5065 = vadd.f32 %v4991, %v5064
        %v5066 = vpop.f32.mrf.mxu0
        %5067 = vdwg.mxu0
        %5068 = vmatprep.subr.mxu0 0.0
        %5069 = vmatpush1.msra.mxu0 0.0
        %5070 = vmatprep.subr.mxu0 0.0
        %5071 = vmatpush1.msra.mxu0 0.0
        %5072 = vmatprep.subr.mxu0 0.0
        %5073 = vmatpush1.msra.mxu0 0.0
        %5074 = vmatprep.subr.mxu0 0.0
        %5075 = vmatpush1.msra.mxu0 0.0
        %5076 = vmatprep.subr.mxu0 0.0
        %5077 = vmatpush1.msra.mxu0 0.0
        %5078 = vmatprep.subr.mxu0 0.0
        %5079 = vmatpush1.msra.mxu0 0.0
        %5080 = vmatprep.subr.mxu0 0.0
        %5081 = vmatpush1.msra.mxu0 0.0
        %5082 = vmatprep.subr.mxu0 0.0
        %5083 = vmatpush1.msra.mxu0 0.0
        %5084 = vmatprep.subr.mxu0 0.0
        %5085 = vmatpush1.msra.mxu0 0.0
        %5086 = vmatprep.subr.mxu0 0.0
        %5087 = vmatpush1.msra.mxu0 0.0
        %5088 = vmatprep.subr.mxu0 0.0
        %5089 = vmatpush1.msra.mxu0 0.0
        %5090 = vmatprep.subr.mxu0 0.0
        %5091 = vmatpush1.msra.mxu0 0.0
        %5092 = vmatprep.subr.mxu0 0.0
        %5093 = vmatpush1.msra.mxu0 0.0
        %5094 = vmatprep.subr.mxu0 0.0
        %5095 = vmatpush1.msra.mxu0 0.0
        %5096 = vmatprep.subr.mxu0 0.0
        %5097 = vmatpush1.msra.mxu0 0.0
        %5098 = vmatprep.subr.mxu0 0.0
        %v5099 = vand.u32 %v1542, 4294901760
        %v5100 = vsub.f32 %v1542, %v5099
        %v5101 = vand.u32 %v5100, 4294901760
        %5102 = vmatpush1.msra.mxu0 %v5101
        %5103 = vmatprep.subr.mxu0 0.0
        %5104 = vmatpush2.msra.mxu0 0.0
        %5105 = vmatprep.subr.mxu0 0.0
        %5106 = vmatpush2.msra.mxu0 0.0
        %5107 = vmatprep.subr.mxu0 0.0
        %5108 = vmatpush2.msra.mxu0 0.0
        %5109 = vmatprep.subr.mxu0 0.0
        %5110 = vmatpush2.msra.mxu0 0.0
        %5111 = vmatprep.subr.mxu0 0.0
        %5112 = vmatpush2.msra.mxu0 0.0
        %5113 = vmatprep.subr.mxu0 0.0
        %5114 = vmatpush2.msra.mxu0 0.0
        %5115 = vmatprep.subr.mxu0 0.0
        %5116 = vmatpush2.msra.mxu0 0.0
        %5117 = vmatprep.subr.mxu0 0.0
        %5118 = vmatpush2.msra.mxu0 0.0
        %5119 = vmatprep.subr.mxu0 0.0
        %5120 = vmatpush2.msra.mxu0 0.0
        %5121 = vmatprep.subr.mxu0 0.0
        %5122 = vmatpush2.msra.mxu0 0.0
        %5123 = vmatprep.subr.mxu0 0.0
        %5124 = vmatpush2.msra.mxu0 0.0
        %5125 = vmatprep.subr.mxu0 0.0
        %5126 = vmatpush2.msra.mxu0 0.0
        %5127 = vmatprep.subr.mxu0 0.0
        %5128 = vmatpush2.msra.mxu0 0.0
        %5129 = vmatprep.subr.mxu0 0.0
        %5130 = vmatpush2.msra.mxu0 0.0
        %5131 = vmatprep.subr.mxu0 0.0
        %5132 = vmatpush2.msra.mxu0 0.0
        %5133 = vmatprep.subr.mxu0 0.0
        %5134 = vmatpush2.msra.mxu0 0.0
        %5135 = vmatprep.mubr.f32.mxu0 0.0
        %v5136 = vand.u32 %v4766, 4294901760
        %5137 = vmatmul.mubr.f32.gmra.mxu0 %v5136
        %v5138 = vpop.f32.mrf.mxu0
        %v5139 = vadd.f32 %v5065, %v5138
        %v5140 = vpop.f32.mrf.mxu0
        %5141 = vdwg.mxu0
        %5142 = vmatprep.subr.mxu0 0.0
        %5143 = vmatpush1.msra.mxu0 0.0
        %5144 = vmatprep.subr.mxu0 0.0
        %5145 = vmatpush1.msra.mxu0 0.0
        %5146 = vmatprep.subr.mxu0 0.0
        %5147 = vmatpush1.msra.mxu0 0.0
        %5148 = vmatprep.subr.mxu0 0.0
        %5149 = vmatpush1.msra.mxu0 0.0
        %5150 = vmatprep.subr.mxu0 0.0
        %5151 = vmatpush1.msra.mxu0 0.0
        %5152 = vmatprep.subr.mxu0 0.0
        %5153 = vmatpush1.msra.mxu0 0.0
        %5154 = vmatprep.subr.mxu0 0.0
        %5155 = vmatpush1.msra.mxu0 0.0
        %5156 = vmatprep.subr.mxu0 0.0
        %5157 = vmatpush1.msra.mxu0 0.0
        %5158 = vmatprep.subr.mxu0 0.0
        %5159 = vmatpush1.msra.mxu0 0.0
        %5160 = vmatprep.subr.mxu0 0.0
        %5161 = vmatpush1.msra.mxu0 0.0
        %5162 = vmatprep.subr.mxu0 0.0
        %5163 = vmatpush1.msra.mxu0 0.0
        %5164 = vmatprep.subr.mxu0 0.0
        %5165 = vmatpush1.msra.mxu0 0.0
        %5166 = vmatprep.subr.mxu0 0.0
        %5167 = vmatpush1.msra.mxu0 0.0
        %5168 = vmatprep.subr.mxu0 0.0
        %5169 = vmatpush1.msra.mxu0 0.0
        %5170 = vmatprep.subr.mxu0 0.0
        %5171 = vmatpush1.msra.mxu0 0.0
        %5172 = vmatprep.subr.mxu0 0.0
        %v5173 = vand.u32 %v1542, 4294901760
        %5174 = vmatpush1.msra.mxu0 %v5173
        %5175 = vmatprep.subr.mxu0 0.0
        %5176 = vmatpush2.msra.mxu0 0.0
        %5177 = vmatprep.subr.mxu0 0.0
        %5178 = vmatpush2.msra.mxu0 0.0
        %5179 = vmatprep.subr.mxu0 0.0
        %5180 = vmatpush2.msra.mxu0 0.0
        %5181 = vmatprep.subr.mxu0 0.0
        %5182 = vmatpush2.msra.mxu0 0.0
        %5183 = vmatprep.subr.mxu0 0.0
        %5184 = vmatpush2.msra.mxu0 0.0
        %5185 = vmatprep.subr.mxu0 0.0
        %5186 = vmatpush2.msra.mxu0 0.0
        %5187 = vmatprep.subr.mxu0 0.0
        %5188 = vmatpush2.msra.mxu0 0.0
        %5189 = vmatprep.subr.mxu0 0.0
        %5190 = vmatpush2.msra.mxu0 0.0
        %5191 = vmatprep.subr.mxu0 0.0
        %5192 = vmatpush2.msra.mxu0 0.0
        %5193 = vmatprep.subr.mxu0 0.0
        %5194 = vmatpush2.msra.mxu0 0.0
        %5195 = vmatprep.subr.mxu0 0.0
        %5196 = vmatpush2.msra.mxu0 0.0
        %5197 = vmatprep.subr.mxu0 0.0
        %5198 = vmatpush2.msra.mxu0 0.0
        %5199 = vmatprep.subr.mxu0 0.0
        %5200 = vmatpush2.msra.mxu0 0.0
        %5201 = vmatprep.subr.mxu0 0.0
        %5202 = vmatpush2.msra.mxu0 0.0
        %5203 = vmatprep.subr.mxu0 0.0
        %5204 = vmatpush2.msra.mxu0 0.0
        %5205 = vmatprep.subr.mxu0 0.0
        %5206 = vmatpush2.msra.mxu0 0.0
        %5207 = vmatprep.mubr.f32.mxu0 0.0
        %v5208 = vand.u32 %v4766, 4294901760
        %5209 = vmatmul.mubr.f32.gmra.mxu0 %v5208
        %v5210 = vpop.f32.mrf.mxu0
        %v5211 = vadd.f32 %v5139, %v5210
        %v5212 = vpop.f32.mrf.mxu0
        %5213 = vdwg.mxu0
        %v5214 = vcombine.low %v3864, %v4762
        %v5215 = vcombine.high %v3864, %v4762
        %v5217 = vunpack.c.l.s4 1983009808
        %v5218 = vunpack.c.0.s8 %v5217
        %v5219 = vlaneseq
        %v5220 = vshrl.u32 %v5219, 7
        %v5221 = vsub.s32 %v5218, %v5220
        %v5222 = vrot.slane %v5214, %v5221
        %v5224 = vunpack.c.l.s4 1983009808
        %v5225 = vunpack.c.0.s8 %v5224
        %v5226 = vlaneseq
        %v5227 = vshrl.u32 %v5226, 7
        %v5228 = vsub.s32 %v5225, %v5227
        %v5229 = vrot.slane %v5215, %v5228
        %v5230 = vcombine.low %v4313, %v5211
        %v5231 = vcombine.high %v4313, %v5211
        %v5233 = vunpack.c.l.s4 1983009808
        %v5234 = vunpack.c.0.s8 %v5233
        %v5235 = vlaneseq
        %v5236 = vshrl.u32 %v5235, 7
        %v5237 = vsub.s32 %v5234, %v5236
        %v5238 = vrot.slane %v5230, %v5237
        %v5240 = vunpack.c.l.s4 1983009808
        %v5241 = vunpack.c.0.s8 %v5240
        %v5242 = vlaneseq
        %v5243 = vshrl.u32 %v5242, 7
        %v5244 = vsub.s32 %v5241, %v5243
        %v5245 = vrot.slane %v5231, %v5244
        %v5246 = vcombine.low %v5222, %v5238
        %v5247 = vcombine.high %v5222, %v5238
        %v5249 = vunpack.c.l.s4 1934713408
        %v5250 = vunpack.c.0.s8 %v5249
        %v5251 = vlaneseq
        %v5252 = vshrl.u32 %v5251, 7
        %v5253 = vsub.s32 %v5250, %v5252
        %v5254 = vrot.slane %v5246, %v5253
        %v5256 = vunpack.c.l.s4 1934713408
        %v5257 = vunpack.c.0.s8 %v5256
        %v5258 = vlaneseq
        %v5259 = vshrl.u32 %v5258, 7
        %v5260 = vsub.s32 %v5257, %v5259
        %v5261 = vrot.slane %v5247, %v5260
        %v5262 = vcombine.low %v5229, %v5245
        %v5263 = vcombine.high %v5229, %v5245
        %v5265 = vunpack.c.l.s4 1934713408
        %v5266 = vunpack.c.0.s8 %v5265
        %v5267 = vlaneseq
        %v5268 = vshrl.u32 %v5267, 7
        %v5269 = vsub.s32 %v5266, %v5268
        %v5270 = vrot.slane %v5262, %v5269
        %v5272 = vunpack.c.l.s4 1934713408
        %v5273 = vunpack.c.0.s8 %v5272
        %v5274 = vlaneseq
        %v5275 = vshrl.u32 %v5274, 7
        %v5276 = vsub.s32 %v5273, %v5275
        %v5277 = vrot.slane %v5263, %v5276
        %v5278 = vcombine.high %v5254, 0.0
        %v5279 = vcombine.high %v5261, 0.0
        %v5280 = vcombine.high %v5270, 0.0
        %v5281 = vcombine.high %v5277, 0.0
        %v5282 = vcombine.low %v5254, %v5261
        %v5284 = vunpack.c.l.s4 1983009808
        %v5285 = vunpack.c.0.s8 %v5284
        %v5286 = vlaneseq
        %v5287 = vshrl.u32 %v5286, 7
        %v5288 = vsub.s32 %v5285, %v5287
        %v5289 = vrot.slane %v5282, %v5288
        %v5290 = vcombine.low %v5278, %v5279
        %v5292 = vunpack.c.l.s4 1983009808
        %v5293 = vunpack.c.0.s8 %v5292
        %v5294 = vlaneseq
        %v5295 = vshrl.u32 %v5294, 7
        %v5296 = vsub.s32 %v5293, %v5295
        %v5297 = vrot.slane %v5290, %v5296
        %v5298 = vcombine.low %v5270, %v5277
        %v5300 = vunpack.c.l.s4 1983009808
        %v5301 = vunpack.c.0.s8 %v5300
        %v5302 = vlaneseq
        %v5303 = vshrl.u32 %v5302, 7
        %v5304 = vsub.s32 %v5301, %v5303
        %v5305 = vrot.slane %v5298, %v5304
        %v5306 = vcombine.low %v5280, %v5281
        %v5308 = vunpack.c.l.s4 1983009808
        %v5309 = vunpack.c.0.s8 %v5308
        %v5310 = vlaneseq
        %v5311 = vshrl.u32 %v5310, 7
        %v5312 = vsub.s32 %v5309, %v5311
        %v5313 = vrot.slane %v5306, %v5312
        %v5314 = vcombine.low %v5289, %v5297
        %v5315 = vcombine.high %v5289, %v5297
        %v5317 = vunpack.c.l.s4 1934713408
        %v5318 = vunpack.c.0.s8 %v5317
        %v5319 = vlaneseq
        %v5320 = vshrl.u32 %v5319, 7
        %v5321 = vsub.s32 %v5318, %v5320
        %v5322 = vrot.slane %v5314, %v5321
        %v5324 = vunpack.c.l.s4 1934713408
        %v5325 = vunpack.c.0.s8 %v5324
        %v5326 = vlaneseq
        %v5327 = vshrl.u32 %v5326, 7
        %v5328 = vsub.s32 %v5325, %v5327
        %v5329 = vrot.slane %v5315, %v5328
        %v5330 = vcombine.low %v5305, %v5313
        %v5331 = vcombine.high %v5305, %v5313
        %v5333 = vunpack.c.l.s4 1934713408
        %v5334 = vunpack.c.0.s8 %v5333
        %v5335 = vlaneseq
        %v5336 = vshrl.u32 %v5335, 7
        %v5337 = vsub.s32 %v5334, %v5336
        %v5338 = vrot.slane %v5330, %v5337
        %v5340 = vunpack.c.l.s4 1934713408
        %v5341 = vunpack.c.0.s8 %v5340
        %v5342 = vlaneseq
        %v5343 = vshrl.u32 %v5342, 7
        %v5344 = vsub.s32 %v5341, %v5343
        %v5345 = vrot.slane %v5331, %v5344
        %v5346 = vcombine.low %v5322, %v5338
        %v5347 = vcombine.high %v5322, %v5338
        %v5348 = vcombine.low %v5329, %v5345
        %v5349 = vcombine.high %v5329, %v5345
        %5351 = vrot.lane.b32.xlu0 %v5347, 8
        %v5352 = vpop.permute.xlu0 %5351
        %5355 = vrot.lane.b32.xlu0 %v5348, 16
        %v5356 = vpop.permute.xlu0 %5355
        %5359 = vrot.lane.b32.xlu0 %v5349, 24
        %v5360 = vpop.permute.xlu0 %5359
        %v5362 = vsel %vm1547, %v5346, %v5352
        %vm5363 = vcmask 130048
        %v5364 = vsel %vm5363, %v5362, %v5356
        %vm5365 = vcmask 195584
        %v5366 = vsel %vm5365, %v5364, %v5360
        %v5367 = vld [vmem:[%s7] sm:$0xff]
        %v5368 = vld [vmem:[%s7 + $0x8] sm:$0xff]
        %v5369 = vld [vmem:[%s7 + $0x10] sm:$0xff]
        %v5370 = vld [vmem:[%s7 + $0x18] sm:$0xff]
        %v5371 = vld [vmem:[%s8] sm:$0x1]
        %v5373 = vlaneseq
        %v5374 = vshrl.u32 %v5373, 7
        %v5375 = vsub.s32 0, %v5374
        %v5376 = vrot.slane %v5371, %v5375
        %v5379 = vsel %vm566, %v5366, 0
        %5381 = vmatprep.subr.mxu0 0.0
        %5382 = vmatpush1.msra.mxu0 0.0
        %5383 = vmatprep.subr.mxu0 0.0
        %5384 = vmatpush1.msra.mxu0 0.0
        %5385 = vmatprep.subr.mxu0 0.0
        %5386 = vmatpush1.msra.mxu0 0.0
        %5387 = vmatprep.subr.mxu0 0.0
        %5388 = vmatpush1.msra.mxu0 0.0
        %5389 = vmatprep.subr.mxu0 0.0
        %5390 = vmatpush1.msra.mxu0 0.0
        %5391 = vmatprep.subr.mxu0 0.0
        %5392 = vmatpush1.msra.mxu0 0.0
        %5393 = vmatprep.subr.mxu0 0.0
        %5394 = vmatpush1.msra.mxu0 0.0
        %5395 = vmatprep.subr.mxu0 0.0
        %5396 = vmatpush1.msra.mxu0 0.0
        %5397 = vmatprep.subr.mxu0 0.0
        %5398 = vmatpush1.msra.mxu0 0.0
        %5399 = vmatprep.subr.mxu0 0.0
        %5400 = vmatpush1.msra.mxu0 0.0
        %5401 = vmatprep.subr.mxu0 0.0
        %5402 = vmatpush1.msra.mxu0 0.0
        %5403 = vmatprep.subr.mxu0 0.0
        %5404 = vmatpush1.msra.mxu0 0.0
        %5405 = vmatprep.subr.mxu0 0.0
        %v5406 = vand.u32 %v5370, 4294901760
        %5407 = vmatpush1.msra.mxu0 %v5406
        %5408 = vmatprep.subr.mxu0 0.0
        %v5409 = vand.u32 %v5369, 4294901760
        %5410 = vmatpush1.msra.mxu0 %v5409
        %5411 = vmatprep.subr.mxu0 0.0
        %v5412 = vand.u32 %v5368, 4294901760
        %5413 = vmatpush1.msra.mxu0 %v5412
        %5414 = vmatprep.subr.mxu0 0.0
        %v5415 = vand.u32 %v5367, 4294901760
        %5416 = vmatpush1.msra.mxu0 %v5415
        %5417 = vmatprep.subr.mxu0 0.0
        %5418 = vmatpush2.msra.mxu0 0.0
        %5419 = vmatprep.subr.mxu0 0.0
        %5420 = vmatpush2.msra.mxu0 0.0
        %5421 = vmatprep.subr.mxu0 0.0
        %5422 = vmatpush2.msra.mxu0 0.0
        %5423 = vmatprep.subr.mxu0 0.0
        %5424 = vmatpush2.msra.mxu0 0.0
        %5425 = vmatprep.subr.mxu0 0.0
        %5426 = vmatpush2.msra.mxu0 0.0
        %5427 = vmatprep.subr.mxu0 0.0
        %5428 = vmatpush2.msra.mxu0 0.0
        %5429 = vmatprep.subr.mxu0 0.0
        %5430 = vmatpush2.msra.mxu0 0.0
        %5431 = vmatprep.subr.mxu0 0.0
        %5432 = vmatpush2.msra.mxu0 0.0
        %5433 = vmatprep.subr.mxu0 0.0
        %5434 = vmatpush2.msra.mxu0 0.0
        %5435 = vmatprep.subr.mxu0 0.0
        %5436 = vmatpush2.msra.mxu0 0.0
        %5437 = vmatprep.subr.mxu0 0.0
        %5438 = vmatpush2.msra.mxu0 0.0
        %5439 = vmatprep.subr.mxu0 0.0
        %5440 = vmatpush2.msra.mxu0 0.0
        %5441 = vmatprep.subr.mxu0 0.0
        %5442 = vmatpush2.msra.mxu0 0.0
        %5443 = vmatprep.subr.mxu0 0.0
        %5444 = vmatpush2.msra.mxu0 0.0
        %5445 = vmatprep.subr.mxu0 0.0
        %5446 = vmatpush2.msra.mxu0 0.0
        %5447 = vmatprep.subr.mxu0 0.0
        %5448 = vmatpush2.msra.mxu0 0.0
        %5449 = vmatprep.mubr.f32.mxu0 0.0
        %v5450 = vand.u32 %v5379, 4294901760
        %v5451 = vsub.f32 %v5379, %v5450
        %v5452 = vand.u32 %v5451, 4294901760
        %v5453 = vsub.f32 %v5451, %v5452
        %v5454 = vand.u32 %v5453, 4294901760
        %5455 = vmatmul.mubr.f32.gmra.mxu0 %v5454
        %v5456 = vpop.f32.mrf.mxu0
        %v5457 = vadd.f32 %v5376, %v5456
        %v5458 = vpop.f32.mrf.mxu0
        %5459 = vdwg.mxu0
        %5460 = vmatprep.subr.mxu0 0.0
        %5461 = vmatpush1.msra.mxu0 0.0
        %5462 = vmatprep.subr.mxu0 0.0
        %5463 = vmatpush1.msra.mxu0 0.0
        %5464 = vmatprep.subr.mxu0 0.0
        %5465 = vmatpush1.msra.mxu0 0.0
        %5466 = vmatprep.subr.mxu0 0.0
        %5467 = vmatpush1.msra.mxu0 0.0
        %5468 = vmatprep.subr.mxu0 0.0
        %5469 = vmatpush1.msra.mxu0 0.0
        %5470 = vmatprep.subr.mxu0 0.0
        %5471 = vmatpush1.msra.mxu0 0.0
        %5472 = vmatprep.subr.mxu0 0.0
        %5473 = vmatpush1.msra.mxu0 0.0
        %5474 = vmatprep.subr.mxu0 0.0
        %5475 = vmatpush1.msra.mxu0 0.0
        %5476 = vmatprep.subr.mxu0 0.0
        %5477 = vmatpush1.msra.mxu0 0.0
        %5478 = vmatprep.subr.mxu0 0.0
        %5479 = vmatpush1.msra.mxu0 0.0
        %5480 = vmatprep.subr.mxu0 0.0
        %5481 = vmatpush1.msra.mxu0 0.0
        %5482 = vmatprep.subr.mxu0 0.0
        %5483 = vmatpush1.msra.mxu0 0.0
        %5484 = vmatprep.subr.mxu0 0.0
        %v5485 = vand.u32 %v5370, 4294901760
        %v5486 = vsub.f32 %v5370, %v5485
        %v5487 = vand.u32 %v5486, 4294901760
        %v5488 = vsub.f32 %v5486, %v5487
        %v5489 = vand.u32 %v5488, 4294901760
        %5490 = vmatpush1.msra.mxu0 %v5489
        %5491 = vmatprep.subr.mxu0 0.0
        %v5492 = vand.u32 %v5369, 4294901760
        %v5493 = vsub.f32 %v5369, %v5492
        %v5494 = vand.u32 %v5493, 4294901760
        %v5495 = vsub.f32 %v5493, %v5494
        %v5496 = vand.u32 %v5495, 4294901760
        %5497 = vmatpush1.msra.mxu0 %v5496
        %5498 = vmatprep.subr.mxu0 0.0
        %v5499 = vand.u32 %v5368, 4294901760
        %v5500 = vsub.f32 %v5368, %v5499
        %v5501 = vand.u32 %v5500, 4294901760
        %v5502 = vsub.f32 %v5500, %v5501
        %v5503 = vand.u32 %v5502, 4294901760
        %5504 = vmatpush1.msra.mxu0 %v5503
        %5505 = vmatprep.subr.mxu0 0.0
        %v5506 = vand.u32 %v5367, 4294901760
        %v5507 = vsub.f32 %v5367, %v5506
        %v5508 = vand.u32 %v5507, 4294901760
        %v5509 = vsub.f32 %v5507, %v5508
        %v5510 = vand.u32 %v5509, 4294901760
        %5511 = vmatpush1.msra.mxu0 %v5510
        %5512 = vmatprep.subr.mxu0 0.0
        %5513 = vmatpush2.msra.mxu0 0.0
        %5514 = vmatprep.subr.mxu0 0.0
        %5515 = vmatpush2.msra.mxu0 0.0
        %5516 = vmatprep.subr.mxu0 0.0
        %5517 = vmatpush2.msra.mxu0 0.0
        %5518 = vmatprep.subr.mxu0 0.0
        %5519 = vmatpush2.msra.mxu0 0.0
        %5520 = vmatprep.subr.mxu0 0.0
        %5521 = vmatpush2.msra.mxu0 0.0
        %5522 = vmatprep.subr.mxu0 0.0
        %5523 = vmatpush2.msra.mxu0 0.0
        %5524 = vmatprep.subr.mxu0 0.0
        %5525 = vmatpush2.msra.mxu0 0.0
        %5526 = vmatprep.subr.mxu0 0.0
        %5527 = vmatpush2.msra.mxu0 0.0
        %5528 = vmatprep.subr.mxu0 0.0
        %5529 = vmatpush2.msra.mxu0 0.0
        %5530 = vmatprep.subr.mxu0 0.0
        %5531 = vmatpush2.msra.mxu0 0.0
        %5532 = vmatprep.subr.mxu0 0.0
        %5533 = vmatpush2.msra.mxu0 0.0
        %5534 = vmatprep.subr.mxu0 0.0
        %5535 = vmatpush2.msra.mxu0 0.0
        %5536 = vmatprep.subr.mxu0 0.0
        %5537 = vmatpush2.msra.mxu0 0.0
        %5538 = vmatprep.subr.mxu0 0.0
        %5539 = vmatpush2.msra.mxu0 0.0
        %5540 = vmatprep.subr.mxu0 0.0
        %5541 = vmatpush2.msra.mxu0 0.0
        %5542 = vmatprep.subr.mxu0 0.0
        %5543 = vmatpush2.msra.mxu0 0.0
        %5544 = vmatprep.mubr.f32.mxu0 0.0
        %v5545 = vand.u32 %v5379, 4294901760
        %5546 = vmatmul.mubr.f32.gmra.mxu0 %v5545
        %v5547 = vpop.f32.mrf.mxu0
        %v5548 = vadd.f32 %v5457, %v5547
        %v5549 = vpop.f32.mrf.mxu0
        %5550 = vdwg.mxu0
        %5551 = vmatprep.subr.mxu0 0.0
        %5552 = vmatpush1.msra.mxu0 0.0
        %5553 = vmatprep.subr.mxu0 0.0
        %5554 = vmatpush1.msra.mxu0 0.0
        %5555 = vmatprep.subr.mxu0 0.0
        %5556 = vmatpush1.msra.mxu0 0.0
        %5557 = vmatprep.subr.mxu0 0.0
        %5558 = vmatpush1.msra.mxu0 0.0
        %5559 = vmatprep.subr.mxu0 0.0
        %5560 = vmatpush1.msra.mxu0 0.0
        %5561 = vmatprep.subr.mxu0 0.0
        %5562 = vmatpush1.msra.mxu0 0.0
        %5563 = vmatprep.subr.mxu0 0.0
        %5564 = vmatpush1.msra.mxu0 0.0
        %5565 = vmatprep.subr.mxu0 0.0
        %5566 = vmatpush1.msra.mxu0 0.0
        %5567 = vmatprep.subr.mxu0 0.0
        %5568 = vmatpush1.msra.mxu0 0.0
        %5569 = vmatprep.subr.mxu0 0.0
        %5570 = vmatpush1.msra.mxu0 0.0
        %5571 = vmatprep.subr.mxu0 0.0
        %5572 = vmatpush1.msra.mxu0 0.0
        %5573 = vmatprep.subr.mxu0 0.0
        %5574 = vmatpush1.msra.mxu0 0.0
        %5575 = vmatprep.subr.mxu0 0.0
        %v5576 = vand.u32 %v5370, 4294901760
        %v5577 = vsub.f32 %v5370, %v5576
        %5578 = vmatpush1.msra.mxu0 %v5577
        %5579 = vmatprep.subr.mxu0 0.0
        %v5580 = vand.u32 %v5369, 4294901760
        %v5581 = vsub.f32 %v5369, %v5580
        %5582 = vmatpush1.msra.mxu0 %v5581
        %5583 = vmatprep.subr.mxu0 0.0
        %v5584 = vand.u32 %v5368, 4294901760
        %v5585 = vsub.f32 %v5368, %v5584
        %5586 = vmatpush1.msra.mxu0 %v5585
        %5587 = vmatprep.subr.mxu0 0.0
        %v5588 = vand.u32 %v5367, 4294901760
        %v5589 = vsub.f32 %v5367, %v5588
        %5590 = vmatpush1.msra.mxu0 %v5589
        %5591 = vmatprep.subr.mxu0 0.0
        %5592 = vmatpush2.msra.mxu0 0.0
        %5593 = vmatprep.subr.mxu0 0.0
        %5594 = vmatpush2.msra.mxu0 0.0
        %5595 = vmatprep.subr.mxu0 0.0
        %5596 = vmatpush2.msra.mxu0 0.0
        %5597 = vmatprep.subr.mxu0 0.0
        %5598 = vmatpush2.msra.mxu0 0.0
        %5599 = vmatprep.subr.mxu0 0.0
        %5600 = vmatpush2.msra.mxu0 0.0
        %5601 = vmatprep.subr.mxu0 0.0
        %5602 = vmatpush2.msra.mxu0 0.0
        %5603 = vmatprep.subr.mxu0 0.0
        %5604 = vmatpush2.msra.mxu0 0.0
        %5605 = vmatprep.subr.mxu0 0.0
        %5606 = vmatpush2.msra.mxu0 0.0
        %5607 = vmatprep.subr.mxu0 0.0
        %5608 = vmatpush2.msra.mxu0 0.0
        %5609 = vmatprep.subr.mxu0 0.0
        %5610 = vmatpush2.msra.mxu0 0.0
        %5611 = vmatprep.subr.mxu0 0.0
        %5612 = vmatpush2.msra.mxu0 0.0
        %5613 = vmatprep.subr.mxu0 0.0
        %5614 = vmatpush2.msra.mxu0 0.0
        %5615 = vmatprep.subr.mxu0 0.0
        %5616 = vmatpush2.msra.mxu0 0.0
        %5617 = vmatprep.subr.mxu0 0.0
        %5618 = vmatpush2.msra.mxu0 0.0
        %5619 = vmatprep.subr.mxu0 0.0
        %5620 = vmatpush2.msra.mxu0 0.0
        %5621 = vmatprep.subr.mxu0 0.0
        %5622 = vmatpush2.msra.mxu0 0.0
        %5623 = vmatprep.mubr.f32.mxu0 0.0
        %v5624 = vand.u32 %v5379, 4294901760
        %v5625 = vsub.f32 %v5379, %v5624
        %5626 = vmatmul.mubr.f32.gmra.mxu0 %v5625
        %v5627 = vpop.f32.mrf.mxu0
        %v5628 = vadd.f32 %v5548, %v5627
        %v5629 = vpop.f32.mrf.mxu0
        %5630 = vdwg.mxu0
        %5631 = vmatprep.subr.mxu0 0.0
        %5632 = vmatpush1.msra.mxu0 0.0
        %5633 = vmatprep.subr.mxu0 0.0
        %5634 = vmatpush1.msra.mxu0 0.0
        %5635 = vmatprep.subr.mxu0 0.0
        %5636 = vmatpush1.msra.mxu0 0.0
        %5637 = vmatprep.subr.mxu0 0.0
        %5638 = vmatpush1.msra.mxu0 0.0
        %5639 = vmatprep.subr.mxu0 0.0
        %5640 = vmatpush1.msra.mxu0 0.0
        %5641 = vmatprep.subr.mxu0 0.0
        %5642 = vmatpush1.msra.mxu0 0.0
        %5643 = vmatprep.subr.mxu0 0.0
        %5644 = vmatpush1.msra.mxu0 0.0
        %5645 = vmatprep.subr.mxu0 0.0
        %5646 = vmatpush1.msra.mxu0 0.0
        %5647 = vmatprep.subr.mxu0 0.0
        %5648 = vmatpush1.msra.mxu0 0.0
        %5649 = vmatprep.subr.mxu0 0.0
        %5650 = vmatpush1.msra.mxu0 0.0
        %5651 = vmatprep.subr.mxu0 0.0
        %5652 = vmatpush1.msra.mxu0 0.0
        %5653 = vmatprep.subr.mxu0 0.0
        %5654 = vmatpush1.msra.mxu0 0.0
        %5655 = vmatprep.subr.mxu0 0.0
        %v5656 = vand.u32 %v5370, 4294901760
        %5657 = vmatpush1.msra.mxu0 %v5656
        %5658 = vmatprep.subr.mxu0 0.0
        %v5659 = vand.u32 %v5369, 4294901760
        %5660 = vmatpush1.msra.mxu0 %v5659
        %5661 = vmatprep.subr.mxu0 0.0
        %v5662 = vand.u32 %v5368, 4294901760
        %5663 = vmatpush1.msra.mxu0 %v5662
        %5664 = vmatprep.subr.mxu0 0.0
        %v5665 = vand.u32 %v5367, 4294901760
        %5666 = vmatpush1.msra.mxu0 %v5665
        %5667 = vmatprep.subr.mxu0 0.0
        %5668 = vmatpush2.msra.mxu0 0.0
        %5669 = vmatprep.subr.mxu0 0.0
        %5670 = vmatpush2.msra.mxu0 0.0
        %5671 = vmatprep.subr.mxu0 0.0
        %5672 = vmatpush2.msra.mxu0 0.0
        %5673 = vmatprep.subr.mxu0 0.0
        %5674 = vmatpush2.msra.mxu0 0.0
        %5675 = vmatprep.subr.mxu0 0.0
        %5676 = vmatpush2.msra.mxu0 0.0
        %5677 = vmatprep.subr.mxu0 0.0
        %5678 = vmatpush2.msra.mxu0 0.0
        %5679 = vmatprep.subr.mxu0 0.0
        %5680 = vmatpush2.msra.mxu0 0.0
        %5681 = vmatprep.subr.mxu0 0.0
        %5682 = vmatpush2.msra.mxu0 0.0
        %5683 = vmatprep.subr.mxu0 0.0
        %5684 = vmatpush2.msra.mxu0 0.0
        %5685 = vmatprep.subr.mxu0 0.0
        %5686 = vmatpush2.msra.mxu0 0.0
        %5687 = vmatprep.subr.mxu0 0.0
        %5688 = vmatpush2.msra.mxu0 0.0
        %5689 = vmatprep.subr.mxu0 0.0
        %5690 = vmatpush2.msra.mxu0 0.0
        %5691 = vmatprep.subr.mxu0 0.0
        %5692 = vmatpush2.msra.mxu0 0.0
        %5693 = vmatprep.subr.mxu0 0.0
        %5694 = vmatpush2.msra.mxu0 0.0
        %5695 = vmatprep.subr.mxu0 0.0
        %5696 = vmatpush2.msra.mxu0 0.0
        %5697 = vmatprep.subr.mxu0 0.0
        %5698 = vmatpush2.msra.mxu0 0.0
        %5699 = vmatprep.mubr.f32.mxu0 0.0
        %v5700 = vand.u32 %v5379, 4294901760
        %v5701 = vsub.f32 %v5379, %v5700
        %v5702 = vand.u32 %v5701, 4294901760
        %5703 = vmatmul.mubr.f32.gmra.mxu0 %v5702
        %v5704 = vpop.f32.mrf.mxu0
        %v5705 = vadd.f32 %v5628, %v5704
        %v5706 = vpop.f32.mrf.mxu0
        %5707 = vdwg.mxu0
        %5708 = vmatprep.subr.mxu0 0.0
        %5709 = vmatpush1.msra.mxu0 0.0
        %5710 = vmatprep.subr.mxu0 0.0
        %5711 = vmatpush1.msra.mxu0 0.0
        %5712 = vmatprep.subr.mxu0 0.0
        %5713 = vmatpush1.msra.mxu0 0.0
        %5714 = vmatprep.subr.mxu0 0.0
        %5715 = vmatpush1.msra.mxu0 0.0
        %5716 = vmatprep.subr.mxu0 0.0
        %5717 = vmatpush1.msra.mxu0 0.0
        %5718 = vmatprep.subr.mxu0 0.0
        %5719 = vmatpush1.msra.mxu0 0.0
        %5720 = vmatprep.subr.mxu0 0.0
        %5721 = vmatpush1.msra.mxu0 0.0
        %5722 = vmatprep.subr.mxu0 0.0
        %5723 = vmatpush1.msra.mxu0 0.0
        %5724 = vmatprep.subr.mxu0 0.0
        %5725 = vmatpush1.msra.mxu0 0.0
        %5726 = vmatprep.subr.mxu0 0.0
        %5727 = vmatpush1.msra.mxu0 0.0
        %5728 = vmatprep.subr.mxu0 0.0
        %5729 = vmatpush1.msra.mxu0 0.0
        %5730 = vmatprep.subr.mxu0 0.0
        %5731 = vmatpush1.msra.mxu0 0.0
        %5732 = vmatprep.subr.mxu0 0.0
        %v5733 = vand.u32 %v5370, 4294901760
        %v5734 = vsub.f32 %v5370, %v5733
        %v5735 = vand.u32 %v5734, 4294901760
        %5736 = vmatpush1.msra.mxu0 %v5735
        %5737 = vmatprep.subr.mxu0 0.0
        %v5738 = vand.u32 %v5369, 4294901760
        %v5739 = vsub.f32 %v5369, %v5738
        %v5740 = vand.u32 %v5739, 4294901760
        %5741 = vmatpush1.msra.mxu0 %v5740
        %5742 = vmatprep.subr.mxu0 0.0
        %v5743 = vand.u32 %v5368, 4294901760
        %v5744 = vsub.f32 %v5368, %v5743
        %v5745 = vand.u32 %v5744, 4294901760
        %5746 = vmatpush1.msra.mxu0 %v5745
        %5747 = vmatprep.subr.mxu0 0.0
        %v5748 = vand.u32 %v5367, 4294901760
        %v5749 = vsub.f32 %v5367, %v5748
        %v5750 = vand.u32 %v5749, 4294901760
        %5751 = vmatpush1.msra.mxu0 %v5750
        %5752 = vmatprep.subr.mxu0 0.0
        %5753 = vmatpush2.msra.mxu0 0.0
        %5754 = vmatprep.subr.mxu0 0.0
        %5755 = vmatpush2.msra.mxu0 0.0
        %5756 = vmatprep.subr.mxu0 0.0
        %5757 = vmatpush2.msra.mxu0 0.0
        %5758 = vmatprep.subr.mxu0 0.0
        %5759 = vmatpush2.msra.mxu0 0.0
        %5760 = vmatprep.subr.mxu0 0.0
        %5761 = vmatpush2.msra.mxu0 0.0
        %5762 = vmatprep.subr.mxu0 0.0
        %5763 = vmatpush2.msra.mxu0 0.0
        %5764 = vmatprep.subr.mxu0 0.0
        %5765 = vmatpush2.msra.mxu0 0.0
        %5766 = vmatprep.subr.mxu0 0.0
        %5767 = vmatpush2.msra.mxu0 0.0
        %5768 = vmatprep.subr.mxu0 0.0
        %5769 = vmatpush2.msra.mxu0 0.0
        %5770 = vmatprep.subr.mxu0 0.0
        %5771 = vmatpush2.msra.mxu0 0.0
        %5772 = vmatprep.subr.mxu0 0.0
        %5773 = vmatpush2.msra.mxu0 0.0
        %5774 = vmatprep.subr.mxu0 0.0
        %5775 = vmatpush2.msra.mxu0 0.0
        %5776 = vmatprep.subr.mxu0 0.0
        %5777 = vmatpush2.msra.mxu0 0.0
        %5778 = vmatprep.subr.mxu0 0.0
        %5779 = vmatpush2.msra.mxu0 0.0
        %5780 = vmatprep.subr.mxu0 0.0
        %5781 = vmatpush2.msra.mxu0 0.0
        %5782 = vmatprep.subr.mxu0 0.0
        %5783 = vmatpush2.msra.mxu0 0.0
        %5784 = vmatprep.mubr.f32.mxu0 0.0
        %v5785 = vand.u32 %v5379, 4294901760
        %5786 = vmatmul.mubr.f32.gmra.mxu0 %v5785
        %v5787 = vpop.f32.mrf.mxu0
        %v5788 = vadd.f32 %v5705, %v5787
        %v5789 = vpop.f32.mrf.mxu0
        %5790 = vdwg.mxu0
        %5791 = vmatprep.subr.mxu0 0.0
        %5792 = vmatpush1.msra.mxu0 0.0
        %5793 = vmatprep.subr.mxu0 0.0
        %5794 = vmatpush1.msra.mxu0 0.0
        %5795 = vmatprep.subr.mxu0 0.0
        %5796 = vmatpush1.msra.mxu0 0.0
        %5797 = vmatprep.subr.mxu0 0.0
        %5798 = vmatpush1.msra.mxu0 0.0
        %5799 = vmatprep.subr.mxu0 0.0
        %5800 = vmatpush1.msra.mxu0 0.0
        %5801 = vmatprep.subr.mxu0 0.0
        %5802 = vmatpush1.msra.mxu0 0.0
        %5803 = vmatprep.subr.mxu0 0.0
        %5804 = vmatpush1.msra.mxu0 0.0
        %5805 = vmatprep.subr.mxu0 0.0
        %5806 = vmatpush1.msra.mxu0 0.0
        %5807 = vmatprep.subr.mxu0 0.0
        %5808 = vmatpush1.msra.mxu0 0.0
        %5809 = vmatprep.subr.mxu0 0.0
        %5810 = vmatpush1.msra.mxu0 0.0
        %5811 = vmatprep.subr.mxu0 0.0
        %5812 = vmatpush1.msra.mxu0 0.0
        %5813 = vmatprep.subr.mxu0 0.0
        %5814 = vmatpush1.msra.mxu0 0.0
        %5815 = vmatprep.subr.mxu0 0.0
        %v5816 = vand.u32 %v5370, 4294901760
        %5817 = vmatpush1.msra.mxu0 %v5816
        %5818 = vmatprep.subr.mxu0 0.0
        %v5819 = vand.u32 %v5369, 4294901760
        %5820 = vmatpush1.msra.mxu0 %v5819
        %5821 = vmatprep.subr.mxu0 0.0
        %v5822 = vand.u32 %v5368, 4294901760
        %5823 = vmatpush1.msra.mxu0 %v5822
        %5824 = vmatprep.subr.mxu0 0.0
        %v5825 = vand.u32 %v5367, 4294901760
        %5826 = vmatpush1.msra.mxu0 %v5825
        %5827 = vmatprep.subr.mxu0 0.0
        %5828 = vmatpush2.msra.mxu0 0.0
        %5829 = vmatprep.subr.mxu0 0.0
        %5830 = vmatpush2.msra.mxu0 0.0
        %5831 = vmatprep.subr.mxu0 0.0
        %5832 = vmatpush2.msra.mxu0 0.0
        %5833 = vmatprep.subr.mxu0 0.0
        %5834 = vmatpush2.msra.mxu0 0.0
        %5835 = vmatprep.subr.mxu0 0.0
        %5836 = vmatpush2.msra.mxu0 0.0
        %5837 = vmatprep.subr.mxu0 0.0
        %5838 = vmatpush2.msra.mxu0 0.0
        %5839 = vmatprep.subr.mxu0 0.0
        %5840 = vmatpush2.msra.mxu0 0.0
        %5841 = vmatprep.subr.mxu0 0.0
        %5842 = vmatpush2.msra.mxu0 0.0
        %5843 = vmatprep.subr.mxu0 0.0
        %5844 = vmatpush2.msra.mxu0 0.0
        %5845 = vmatprep.subr.mxu0 0.0
        %5846 = vmatpush2.msra.mxu0 0.0
        %5847 = vmatprep.subr.mxu0 0.0
        %5848 = vmatpush2.msra.mxu0 0.0
        %5849 = vmatprep.subr.mxu0 0.0
        %5850 = vmatpush2.msra.mxu0 0.0
        %5851 = vmatprep.subr.mxu0 0.0
        %5852 = vmatpush2.msra.mxu0 0.0
        %5853 = vmatprep.subr.mxu0 0.0
        %5854 = vmatpush2.msra.mxu0 0.0
        %5855 = vmatprep.subr.mxu0 0.0
        %5856 = vmatpush2.msra.mxu0 0.0
        %5857 = vmatprep.subr.mxu0 0.0
        %5858 = vmatpush2.msra.mxu0 0.0
        %5859 = vmatprep.mubr.f32.mxu0 0.0
        %v5860 = vand.u32 %v5379, 4294901760
        %5861 = vmatmul.mubr.f32.gmra.mxu0 %v5860
        %v5862 = vpop.f32.mrf.mxu0
        %v5863 = vadd.f32 %v5788, %v5862
        %v5864 = vpop.f32.mrf.mxu0
        %5865 = vdwg.mxu0
        %v5866 = vadd.f32 %v559, %v5863
        %v5867 = vld [vmem:[%s9] sm:$0x1]
        %v5868 = vld [vmem:[%s10] sm:$0x1]
        %v5869 = vsel %vm566, %v5866, 0.0
        %5870 = vadd.xlane.f32.xlu0 %v5869
        %v5871 = vpop.xlane.xlu0 %5870
        %v5872 = vmul.f32 %v5871, %v570
        %v5873 = vsub.f32 %v5866, %v5872
        %v5874 = vmul.f32 %v5873, %v5873
        %v5875 = vsel %vm566, %v5874, 0.0
        %5876 = vadd.xlane.f32.xlu0 %v5875
        %v5877 = vpop.xlane.xlu0 %5876
        %v5878 = vmul.f32 %v5877, %v570
        %v5879 = vadd.f32 %v5878, 1e-05
        %v5880 = vrsqrt.pop %v5879
        %v5881 = vmul.f32 %v5873, %v5880
        %v5883 = vlaneseq
        %v5884 = vshrl.u32 %v5883, 7
        %v5885 = vsub.s32 0, %v5884
        %v5886 = vrot.slane %v5867, %v5885
        %v5888 = vmul.f32 %v5881, %v5886
        %v5890 = vlaneseq
        %v5891 = vshrl.u32 %v5890, 7
        %v5892 = vsub.s32 0, %v5891
        %v5893 = vrot.slane %v5868, %v5892
        %v5895 = vadd.f32 %v5888, %v5893
        %v5896 = vmul.f32 %v5895, %v598
        %v5897 = vld [vmem:[%s11] sm:$0xff]
        %v5898 = vld [vmem:[%s11 + $0x8] sm:$0xff]
        %v5899 = vld [vmem:[%s11 + $0x10] sm:$0xff]
        %v5900 = vld [vmem:[%s11 + $0x18] sm:$0xff]
        %v5901 = vld [vmem:[%s12] sm:$0x1]
        %v5903 = vlaneseq
        %v5904 = vshrl.u32 %v5903, 7
        %v5905 = vsub.s32 0, %v5904
        %v5906 = vrot.slane %v5901, %v5905
        %v5909 = vsel %vm566, %v5896, 0
        %5911 = vmatprep.subr.mxu0 0.0
        %5912 = vmatpush1.msra.mxu0 0.0
        %5913 = vmatprep.subr.mxu0 0.0
        %5914 = vmatpush1.msra.mxu0 0.0
        %5915 = vmatprep.subr.mxu0 0.0
        %5916 = vmatpush1.msra.mxu0 0.0
        %5917 = vmatprep.subr.mxu0 0.0
        %5918 = vmatpush1.msra.mxu0 0.0
        %5919 = vmatprep.subr.mxu0 0.0
        %5920 = vmatpush1.msra.mxu0 0.0
        %5921 = vmatprep.subr.mxu0 0.0
        %5922 = vmatpush1.msra.mxu0 0.0
        %5923 = vmatprep.subr.mxu0 0.0
        %5924 = vmatpush1.msra.mxu0 0.0
        %5925 = vmatprep.subr.mxu0 0.0
        %5926 = vmatpush1.msra.mxu0 0.0
        %5927 = vmatprep.subr.mxu0 0.0
        %5928 = vmatpush1.msra.mxu0 0.0
        %5929 = vmatprep.subr.mxu0 0.0
        %5930 = vmatpush1.msra.mxu0 0.0
        %5931 = vmatprep.subr.mxu0 0.0
        %5932 = vmatpush1.msra.mxu0 0.0
        %5933 = vmatprep.subr.mxu0 0.0
        %5934 = vmatpush1.msra.mxu0 0.0
        %5935 = vmatprep.subr.mxu0 0.0
        %v5936 = vand.u32 %v5900, 4294901760
        %5937 = vmatpush1.msra.mxu0 %v5936
        %5938 = vmatprep.subr.mxu0 0.0
        %v5939 = vand.u32 %v5899, 4294901760
        %5940 = vmatpush1.msra.mxu0 %v5939
        %5941 = vmatprep.subr.mxu0 0.0
        %v5942 = vand.u32 %v5898, 4294901760
        %5943 = vmatpush1.msra.mxu0 %v5942
        %5944 = vmatprep.subr.mxu0 0.0
        %v5945 = vand.u32 %v5897, 4294901760
        %5946 = vmatpush1.msra.mxu0 %v5945
        %5947 = vmatprep.subr.mxu0 0.0
        %5948 = vmatpush2.msra.mxu0 0.0
        %5949 = vmatprep.subr.mxu0 0.0
        %5950 = vmatpush2.msra.mxu0 0.0
        %5951 = vmatprep.subr.mxu0 0.0
        %5952 = vmatpush2.msra.mxu0 0.0
        %5953 = vmatprep.subr.mxu0 0.0
        %5954 = vmatpush2.msra.mxu0 0.0
        %5955 = vmatprep.subr.mxu0 0.0
        %5956 = vmatpush2.msra.mxu0 0.0
        %5957 = vmatprep.subr.mxu0 0.0
        %5958 = vmatpush2.msra.mxu0 0.0
        %5959 = vmatprep.subr.mxu0 0.0
        %5960 = vmatpush2.msra.mxu0 0.0
        %5961 = vmatprep.subr.mxu0 0.0
        %5962 = vmatpush2.msra.mxu0 0.0
        %5963 = vmatprep.subr.mxu0 0.0
        %5964 = vmatpush2.msra.mxu0 0.0
        %5965 = vmatprep.subr.mxu0 0.0
        %5966 = vmatpush2.msra.mxu0 0.0
        %5967 = vmatprep.subr.mxu0 0.0
        %5968 = vmatpush2.msra.mxu0 0.0
        %5969 = vmatprep.subr.mxu0 0.0
        %5970 = vmatpush2.msra.mxu0 0.0
        %5971 = vmatprep.subr.mxu0 0.0
        %5972 = vmatpush2.msra.mxu0 0.0
        %5973 = vmatprep.subr.mxu0 0.0
        %5974 = vmatpush2.msra.mxu0 0.0
        %5975 = vmatprep.subr.mxu0 0.0
        %5976 = vmatpush2.msra.mxu0 0.0
        %5977 = vmatprep.subr.mxu0 0.0
        %5978 = vmatpush2.msra.mxu0 0.0
        %5979 = vmatprep.mubr.f32.mxu0 0.0
        %v5980 = vand.u32 %v5909, 4294901760
        %v5981 = vsub.f32 %v5909, %v5980
        %v5982 = vand.u32 %v5981, 4294901760
        %v5983 = vsub.f32 %v5981, %v5982
        %v5984 = vand.u32 %v5983, 4294901760
        %5985 = vmatmul.mubr.f32.gmra.mxu0 %v5984
        %v5986 = vpop.f32.mrf.mxu0
        %v5987 = vadd.f32 %v5906, %v5986
        %v5988 = vpop.f32.mrf.mxu0
        %5989 = vdwg.mxu0
        %5990 = vmatprep.subr.mxu0 0.0
        %5991 = vmatpush1.msra.mxu0 0.0
        %5992 = vmatprep.subr.mxu0 0.0
        %5993 = vmatpush1.msra.mxu0 0.0
        %5994 = vmatprep.subr.mxu0 0.0
        %5995 = vmatpush1.msra.mxu0 0.0
        %5996 = vmatprep.subr.mxu0 0.0
        %5997 = vmatpush1.msra.mxu0 0.0
        %5998 = vmatprep.subr.mxu0 0.0
        %5999 = vmatpush1.msra.mxu0 0.0
        %6000 = vmatprep.subr.mxu0 0.0
        %6001 = vmatpush1.msra.mxu0 0.0
        %6002 = vmatprep.subr.mxu0 0.0
        %6003 = vmatpush1.msra.mxu0 0.0
        %6004 = vmatprep.subr.mxu0 0.0
        %6005 = vmatpush1.msra.mxu0 0.0
        %6006 = vmatprep.subr.mxu0 0.0
        %6007 = vmatpush1.msra.mxu0 0.0
        %6008 = vmatprep.subr.mxu0 0.0
        %6009 = vmatpush1.msra.mxu0 0.0
        %6010 = vmatprep.subr.mxu0 0.0
        %6011 = vmatpush1.msra.mxu0 0.0
        %6012 = vmatprep.subr.mxu0 0.0
        %6013 = vmatpush1.msra.mxu0 0.0
        %6014 = vmatprep.subr.mxu0 0.0
        %v6015 = vand.u32 %v5900, 4294901760
        %v6016 = vsub.f32 %v5900, %v6015
        %v6017 = vand.u32 %v6016, 4294901760
        %v6018 = vsub.f32 %v6016, %v6017
        %v6019 = vand.u32 %v6018, 4294901760
        %6020 = vmatpush1.msra.mxu0 %v6019
        %6021 = vmatprep.subr.mxu0 0.0
        %v6022 = vand.u32 %v5899, 4294901760
        %v6023 = vsub.f32 %v5899, %v6022
        %v6024 = vand.u32 %v6023, 4294901760
        %v6025 = vsub.f32 %v6023, %v6024
        %v6026 = vand.u32 %v6025, 4294901760
        %6027 = vmatpush1.msra.mxu0 %v6026
        %6028 = vmatprep.subr.mxu0 0.0
        %v6029 = vand.u32 %v5898, 4294901760
        %v6030 = vsub.f32 %v5898, %v6029
        %v6031 = vand.u32 %v6030, 4294901760
        %v6032 = vsub.f32 %v6030, %v6031
        %v6033 = vand.u32 %v6032, 4294901760
        %6034 = vmatpush1.msra.mxu0 %v6033
        %6035 = vmatprep.subr.mxu0 0.0
        %v6036 = vand.u32 %v5897, 4294901760
        %v6037 = vsub.f32 %v5897, %v6036
        %v6038 = vand.u32 %v6037, 4294901760
        %v6039 = vsub.f32 %v6037, %v6038
        %v6040 = vand.u32 %v6039, 4294901760
        %6041 = vmatpush1.msra.mxu0 %v6040
        %6042 = vmatprep.subr.mxu0 0.0
        %6043 = vmatpush2.msra.mxu0 0.0
        %6044 = vmatprep.subr.mxu0 0.0
        %6045 = vmatpush2.msra.mxu0 0.0
        %6046 = vmatprep.subr.mxu0 0.0
        %6047 = vmatpush2.msra.mxu0 0.0
        %6048 = vmatprep.subr.mxu0 0.0
        %6049 = vmatpush2.msra.mxu0 0.0
        %6050 = vmatprep.subr.mxu0 0.0
        %6051 = vmatpush2.msra.mxu0 0.0
        %6052 = vmatprep.subr.mxu0 0.0
        %6053 = vmatpush2.msra.mxu0 0.0
        %6054 = vmatprep.subr.mxu0 0.0
        %6055 = vmatpush2.msra.mxu0 0.0
        %6056 = vmatprep.subr.mxu0 0.0
        %6057 = vmatpush2.msra.mxu0 0.0
        %6058 = vmatprep.subr.mxu0 0.0
        %6059 = vmatpush2.msra.mxu0 0.0
        %6060 = vmatprep.subr.mxu0 0.0
        %6061 = vmatpush2.msra.mxu0 0.0
        %6062 = vmatprep.subr.mxu0 0.0
        %6063 = vmatpush2.msra.mxu0 0.0
        %6064 = vmatprep.subr.mxu0 0.0
        %6065 = vmatpush2.msra.mxu0 0.0
        %6066 = vmatprep.subr.mxu0 0.0
        %6067 = vmatpush2.msra.mxu0 0.0
        %6068 = vmatprep.subr.mxu0 0.0
        %6069 = vmatpush2.msra.mxu0 0.0
        %6070 = vmatprep.subr.mxu0 0.0
        %6071 = vmatpush2.msra.mxu0 0.0
        %6072 = vmatprep.subr.mxu0 0.0
        %6073 = vmatpush2.msra.mxu0 0.0
        %6074 = vmatprep.mubr.f32.mxu0 0.0
        %v6075 = vand.u32 %v5909, 4294901760
        %6076 = vmatmul.mubr.f32.gmra.mxu0 %v6075
        %v6077 = vpop.f32.mrf.mxu0
        %v6078 = vadd.f32 %v5987, %v6077
        %v6079 = vpop.f32.mrf.mxu0
        %6080 = vdwg.mxu0
        %6081 = vmatprep.subr.mxu0 0.0
        %6082 = vmatpush1.msra.mxu0 0.0
        %6083 = vmatprep.subr.mxu0 0.0
        %6084 = vmatpush1.msra.mxu0 0.0
        %6085 = vmatprep.subr.mxu0 0.0
        %6086 = vmatpush1.msra.mxu0 0.0
        %6087 = vmatprep.subr.mxu0 0.0
        %6088 = vmatpush1.msra.mxu0 0.0
        %6089 = vmatprep.subr.mxu0 0.0
        %6090 = vmatpush1.msra.mxu0 0.0
        %6091 = vmatprep.subr.mxu0 0.0
        %6092 = vmatpush1.msra.mxu0 0.0
        %6093 = vmatprep.subr.mxu0 0.0
        %6094 = vmatpush1.msra.mxu0 0.0
        %6095 = vmatprep.subr.mxu0 0.0
        %6096 = vmatpush1.msra.mxu0 0.0
        %6097 = vmatprep.subr.mxu0 0.0
        %6098 = vmatpush1.msra.mxu0 0.0
        %6099 = vmatprep.subr.mxu0 0.0
        %6100 = vmatpush1.msra.mxu0 0.0
        %6101 = vmatprep.subr.mxu0 0.0
        %6102 = vmatpush1.msra.mxu0 0.0
        %6103 = vmatprep.subr.mxu0 0.0
        %6104 = vmatpush1.msra.mxu0 0.0
        %6105 = vmatprep.subr.mxu0 0.0
        %v6106 = vand.u32 %v5900, 4294901760
        %v6107 = vsub.f32 %v5900, %v6106
        %6108 = vmatpush1.msra.mxu0 %v6107
        %6109 = vmatprep.subr.mxu0 0.0
        %v6110 = vand.u32 %v5899, 4294901760
        %v6111 = vsub.f32 %v5899, %v6110
        %6112 = vmatpush1.msra.mxu0 %v6111
        %6113 = vmatprep.subr.mxu0 0.0
        %v6114 = vand.u32 %v5898, 4294901760
        %v6115 = vsub.f32 %v5898, %v6114
        %6116 = vmatpush1.msra.mxu0 %v6115
        %6117 = vmatprep.subr.mxu0 0.0
        %v6118 = vand.u32 %v5897, 4294901760
        %v6119 = vsub.f32 %v5897, %v6118
        %6120 = vmatpush1.msra.mxu0 %v6119
        %6121 = vmatprep.subr.mxu0 0.0
        %6122 = vmatpush2.msra.mxu0 0.0
        %6123 = vmatprep.subr.mxu0 0.0
        %6124 = vmatpush2.msra.mxu0 0.0
        %6125 = vmatprep.subr.mxu0 0.0
        %6126 = vmatpush2.msra.mxu0 0.0
        %6127 = vmatprep.subr.mxu0 0.0
        %6128 = vmatpush2.msra.mxu0 0.0
        %6129 = vmatprep.subr.mxu0 0.0
        %6130 = vmatpush2.msra.mxu0 0.0
        %6131 = vmatprep.subr.mxu0 0.0
        %6132 = vmatpush2.msra.mxu0 0.0
        %6133 = vmatprep.subr.mxu0 0.0
        %6134 = vmatpush2.msra.mxu0 0.0
        %6135 = vmatprep.subr.mxu0 0.0
        %6136 = vmatpush2.msra.mxu0 0.0
        %6137 = vmatprep.subr.mxu0 0.0
        %6138 = vmatpush2.msra.mxu0 0.0
        %6139 = vmatprep.subr.mxu0 0.0
        %6140 = vmatpush2.msra.mxu0 0.0
        %6141 = vmatprep.subr.mxu0 0.0
        %6142 = vmatpush2.msra.mxu0 0.0
        %6143 = vmatprep.subr.mxu0 0.0
        %6144 = vmatpush2.msra.mxu0 0.0
        %6145 = vmatprep.subr.mxu0 0.0
        %6146 = vmatpush2.msra.mxu0 0.0
        %6147 = vmatprep.subr.mxu0 0.0
        %6148 = vmatpush2.msra.mxu0 0.0
        %6149 = vmatprep.subr.mxu0 0.0
        %6150 = vmatpush2.msra.mxu0 0.0
        %6151 = vmatprep.subr.mxu0 0.0
        %6152 = vmatpush2.msra.mxu0 0.0
        %6153 = vmatprep.mubr.f32.mxu0 0.0
        %v6154 = vand.u32 %v5909, 4294901760
        %v6155 = vsub.f32 %v5909, %v6154
        %6156 = vmatmul.mubr.f32.gmra.mxu0 %v6155
        %v6157 = vpop.f32.mrf.mxu0
        %v6158 = vadd.f32 %v6078, %v6157
        %v6159 = vpop.f32.mrf.mxu0
        %6160 = vdwg.mxu0
        %6161 = vmatprep.subr.mxu0 0.0
        %6162 = vmatpush1.msra.mxu0 0.0
        %6163 = vmatprep.subr.mxu0 0.0
        %6164 = vmatpush1.msra.mxu0 0.0
        %6165 = vmatprep.subr.mxu0 0.0
        %6166 = vmatpush1.msra.mxu0 0.0
        %6167 = vmatprep.subr.mxu0 0.0
        %6168 = vmatpush1.msra.mxu0 0.0
        %6169 = vmatprep.subr.mxu0 0.0
        %6170 = vmatpush1.msra.mxu0 0.0
        %6171 = vmatprep.subr.mxu0 0.0
        %6172 = vmatpush1.msra.mxu0 0.0
        %6173 = vmatprep.subr.mxu0 0.0
        %6174 = vmatpush1.msra.mxu0 0.0
        %6175 = vmatprep.subr.mxu0 0.0
        %6176 = vmatpush1.msra.mxu0 0.0
        %6177 = vmatprep.subr.mxu0 0.0
        %6178 = vmatpush1.msra.mxu0 0.0
        %6179 = vmatprep.subr.mxu0 0.0
        %6180 = vmatpush1.msra.mxu0 0.0
        %6181 = vmatprep.subr.mxu0 0.0
        %6182 = vmatpush1.msra.mxu0 0.0
        %6183 = vmatprep.subr.mxu0 0.0
        %6184 = vmatpush1.msra.mxu0 0.0
        %6185 = vmatprep.subr.mxu0 0.0
        %v6186 = vand.u32 %v5900, 4294901760
        %6187 = vmatpush1.msra.mxu0 %v6186
        %6188 = vmatprep.subr.mxu0 0.0
        %v6189 = vand.u32 %v5899, 4294901760
        %6190 = vmatpush1.msra.mxu0 %v6189
        %6191 = vmatprep.subr.mxu0 0.0
        %v6192 = vand.u32 %v5898, 4294901760
        %6193 = vmatpush1.msra.mxu0 %v6192
        %6194 = vmatprep.subr.mxu0 0.0
        %v6195 = vand.u32 %v5897, 4294901760
        %6196 = vmatpush1.msra.mxu0 %v6195
        %6197 = vmatprep.subr.mxu0 0.0
        %6198 = vmatpush2.msra.mxu0 0.0
        %6199 = vmatprep.subr.mxu0 0.0
        %6200 = vmatpush2.msra.mxu0 0.0
        %6201 = vmatprep.subr.mxu0 0.0
        %6202 = vmatpush2.msra.mxu0 0.0
        %6203 = vmatprep.subr.mxu0 0.0
        %6204 = vmatpush2.msra.mxu0 0.0
        %6205 = vmatprep.subr.mxu0 0.0
        %6206 = vmatpush2.msra.mxu0 0.0
        %6207 = vmatprep.subr.mxu0 0.0
        %6208 = vmatpush2.msra.mxu0 0.0
        %6209 = vmatprep.subr.mxu0 0.0
        %6210 = vmatpush2.msra.mxu0 0.0
        %6211 = vmatprep.subr.mxu0 0.0
        %6212 = vmatpush2.msra.mxu0 0.0
        %6213 = vmatprep.subr.mxu0 0.0
        %6214 = vmatpush2.msra.mxu0 0.0
        %6215 = vmatprep.subr.mxu0 0.0
        %6216 = vmatpush2.msra.mxu0 0.0
        %6217 = vmatprep.subr.mxu0 0.0
        %6218 = vmatpush2.msra.mxu0 0.0
        %6219 = vmatprep.subr.mxu0 0.0
        %6220 = vmatpush2.msra.mxu0 0.0
        %6221 = vmatprep.subr.mxu0 0.0
        %6222 = vmatpush2.msra.mxu0 0.0
        %6223 = vmatprep.subr.mxu0 0.0
        %6224 = vmatpush2.msra.mxu0 0.0
        %6225 = vmatprep.subr.mxu0 0.0
        %6226 = vmatpush2.msra.mxu0 0.0
        %6227 = vmatprep.subr.mxu0 0.0
        %6228 = vmatpush2.msra.mxu0 0.0
        %6229 = vmatprep.mubr.f32.mxu0 0.0
        %v6230 = vand.u32 %v5909, 4294901760
        %v6231 = vsub.f32 %v5909, %v6230
        %v6232 = vand.u32 %v6231, 4294901760
        %6233 = vmatmul.mubr.f32.gmra.mxu0 %v6232
        %v6234 = vpop.f32.mrf.mxu0
        %v6235 = vadd.f32 %v6158, %v6234
        %v6236 = vpop.f32.mrf.mxu0
        %6237 = vdwg.mxu0
        %6238 = vmatprep.subr.mxu0 0.0
        %6239 = vmatpush1.msra.mxu0 0.0
        %6240 = vmatprep.subr.mxu0 0.0
        %6241 = vmatpush1.msra.mxu0 0.0
        %6242 = vmatprep.subr.mxu0 0.0
        %6243 = vmatpush1.msra.mxu0 0.0
        %6244 = vmatprep.subr.mxu0 0.0
        %6245 = vmatpush1.msra.mxu0 0.0
        %6246 = vmatprep.subr.mxu0 0.0
        %6247 = vmatpush1.msra.mxu0 0.0
        %6248 = vmatprep.subr.mxu0 0.0
        %6249 = vmatpush1.msra.mxu0 0.0
        %6250 = vmatprep.subr.mxu0 0.0
        %6251 = vmatpush1.msra.mxu0 0.0
        %6252 = vmatprep.subr.mxu0 0.0
        %6253 = vmatpush1.msra.mxu0 0.0
        %6254 = vmatprep.subr.mxu0 0.0
        %6255 = vmatpush1.msra.mxu0 0.0
        %6256 = vmatprep.subr.mxu0 0.0
        %6257 = vmatpush1.msra.mxu0 0.0
        %6258 = vmatprep.subr.mxu0 0.0
        %6259 = vmatpush1.msra.mxu0 0.0
        %6260 = vmatprep.subr.mxu0 0.0
        %6261 = vmatpush1.msra.mxu0 0.0
        %6262 = vmatprep.subr.mxu0 0.0
        %v6263 = vand.u32 %v5900, 4294901760
        %v6264 = vsub.f32 %v5900, %v6263
        %v6265 = vand.u32 %v6264, 4294901760
        %6266 = vmatpush1.msra.mxu0 %v6265
        %6267 = vmatprep.subr.mxu0 0.0
        %v6268 = vand.u32 %v5899, 4294901760
        %v6269 = vsub.f32 %v5899, %v6268
        %v6270 = vand.u32 %v6269, 4294901760
        %6271 = vmatpush1.msra.mxu0 %v6270
        %6272 = vmatprep.subr.mxu0 0.0
        %v6273 = vand.u32 %v5898, 4294901760
        %v6274 = vsub.f32 %v5898, %v6273
        %v6275 = vand.u32 %v6274, 4294901760
        %6276 = vmatpush1.msra.mxu0 %v6275
        %6277 = vmatprep.subr.mxu0 0.0
        %v6278 = vand.u32 %v5897, 4294901760
        %v6279 = vsub.f32 %v5897, %v6278
        %v6280 = vand.u32 %v6279, 4294901760
        %6281 = vmatpush1.msra.mxu0 %v6280
        %6282 = vmatprep.subr.mxu0 0.0
        %6283 = vmatpush2.msra.mxu0 0.0
        %6284 = vmatprep.subr.mxu0 0.0
        %6285 = vmatpush2.msra.mxu0 0.0
        %6286 = vmatprep.subr.mxu0 0.0
        %6287 = vmatpush2.msra.mxu0 0.0
        %6288 = vmatprep.subr.mxu0 0.0
        %6289 = vmatpush2.msra.mxu0 0.0
        %6290 = vmatprep.subr.mxu0 0.0
        %6291 = vmatpush2.msra.mxu0 0.0
        %6292 = vmatprep.subr.mxu0 0.0
        %6293 = vmatpush2.msra.mxu0 0.0
        %6294 = vmatprep.subr.mxu0 0.0
        %6295 = vmatpush2.msra.mxu0 0.0
        %6296 = vmatprep.subr.mxu0 0.0
        %6297 = vmatpush2.msra.mxu0 0.0
        %6298 = vmatprep.subr.mxu0 0.0
        %6299 = vmatpush2.msra.mxu0 0.0
        %6300 = vmatprep.subr.mxu0 0.0
        %6301 = vmatpush2.msra.mxu0 0.0
        %6302 = vmatprep.subr.mxu0 0.0
        %6303 = vmatpush2.msra.mxu0 0.0
        %6304 = vmatprep.subr.mxu0 0.0
        %6305 = vmatpush2.msra.mxu0 0.0
        %6306 = vmatprep.subr.mxu0 0.0
        %6307 = vmatpush2.msra.mxu0 0.0
        %6308 = vmatprep.subr.mxu0 0.0
        %6309 = vmatpush2.msra.mxu0 0.0
        %6310 = vmatprep.subr.mxu0 0.0
        %6311 = vmatpush2.msra.mxu0 0.0
        %6312 = vmatprep.subr.mxu0 0.0
        %6313 = vmatpush2.msra.mxu0 0.0
        %6314 = vmatprep.mubr.f32.mxu0 0.0
        %v6315 = vand.u32 %v5909, 4294901760
        %6316 = vmatmul.mubr.f32.gmra.mxu0 %v6315
        %v6317 = vpop.f32.mrf.mxu0
        %v6318 = vadd.f32 %v6235, %v6317
        %v6319 = vpop.f32.mrf.mxu0
        %6320 = vdwg.mxu0
        %6321 = vmatprep.subr.mxu0 0.0
        %6322 = vmatpush1.msra.mxu0 0.0
        %6323 = vmatprep.subr.mxu0 0.0
        %6324 = vmatpush1.msra.mxu0 0.0
        %6325 = vmatprep.subr.mxu0 0.0
        %6326 = vmatpush1.msra.mxu0 0.0
        %6327 = vmatprep.subr.mxu0 0.0
        %6328 = vmatpush1.msra.mxu0 0.0
        %6329 = vmatprep.subr.mxu0 0.0
        %6330 = vmatpush1.msra.mxu0 0.0
        %6331 = vmatprep.subr.mxu0 0.0
        %6332 = vmatpush1.msra.mxu0 0.0
        %6333 = vmatprep.subr.mxu0 0.0
        %6334 = vmatpush1.msra.mxu0 0.0
        %6335 = vmatprep.subr.mxu0 0.0
        %6336 = vmatpush1.msra.mxu0 0.0
        %6337 = vmatprep.subr.mxu0 0.0
        %6338 = vmatpush1.msra.mxu0 0.0
        %6339 = vmatprep.subr.mxu0 0.0
        %6340 = vmatpush1.msra.mxu0 0.0
        %6341 = vmatprep.subr.mxu0 0.0
        %6342 = vmatpush1.msra.mxu0 0.0
        %6343 = vmatprep.subr.mxu0 0.0
        %6344 = vmatpush1.msra.mxu0 0.0
        %6345 = vmatprep.subr.mxu0 0.0
        %v6346 = vand.u32 %v5900, 4294901760
        %6347 = vmatpush1.msra.mxu0 %v6346
        %6348 = vmatprep.subr.mxu0 0.0
        %v6349 = vand.u32 %v5899, 4294901760
        %6350 = vmatpush1.msra.mxu0 %v6349
        %6351 = vmatprep.subr.mxu0 0.0
        %v6352 = vand.u32 %v5898, 4294901760
        %6353 = vmatpush1.msra.mxu0 %v6352
        %6354 = vmatprep.subr.mxu0 0.0
        %v6355 = vand.u32 %v5897, 4294901760
        %6356 = vmatpush1.msra.mxu0 %v6355
        %6357 = vmatprep.subr.mxu0 0.0
        %6358 = vmatpush2.msra.mxu0 0.0
        %6359 = vmatprep.subr.mxu0 0.0
        %6360 = vmatpush2.msra.mxu0 0.0
        %6361 = vmatprep.subr.mxu0 0.0
        %6362 = vmatpush2.msra.mxu0 0.0
        %6363 = vmatprep.subr.mxu0 0.0
        %6364 = vmatpush2.msra.mxu0 0.0
        %6365 = vmatprep.subr.mxu0 0.0
        %6366 = vmatpush2.msra.mxu0 0.0
        %6367 = vmatprep.subr.mxu0 0.0
        %6368 = vmatpush2.msra.mxu0 0.0
        %6369 = vmatprep.subr.mxu0 0.0
        %6370 = vmatpush2.msra.mxu0 0.0
        %6371 = vmatprep.subr.mxu0 0.0
        %6372 = vmatpush2.msra.mxu0 0.0
        %6373 = vmatprep.subr.mxu0 0.0
        %6374 = vmatpush2.msra.mxu0 0.0
        %6375 = vmatprep.subr.mxu0 0.0
        %6376 = vmatpush2.msra.mxu0 0.0
        %6377 = vmatprep.subr.mxu0 0.0
        %6378 = vmatpush2.msra.mxu0 0.0
        %6379 = vmatprep.subr.mxu0 0.0
        %6380 = vmatpush2.msra.mxu0 0.0
        %6381 = vmatprep.subr.mxu0 0.0
        %6382 = vmatpush2.msra.mxu0 0.0
        %6383 = vmatprep.subr.mxu0 0.0
        %6384 = vmatpush2.msra.mxu0 0.0
        %6385 = vmatprep.subr.mxu0 0.0
        %6386 = vmatpush2.msra.mxu0 0.0
        %6387 = vmatprep.subr.mxu0 0.0
        %6388 = vmatpush2.msra.mxu0 0.0
        %6389 = vmatprep.mubr.f32.mxu0 0.0
        %v6390 = vand.u32 %v5909, 4294901760
        %6391 = vmatmul.mubr.f32.gmra.mxu0 %v6390
        %v6392 = vpop.f32.mrf.mxu0
        %v6393 = vadd.f32 %v6318, %v6392
        %v6394 = vpop.f32.mrf.mxu0
        %6395 = vdwg.mxu0
        %v6396 = vmul.f32 %v6393, 0.5
        %v6397 = vmul.f32 %v6393, 0.044715
        %v6398 = vmul.f32 %v6397, %v6393
        %v6399 = vmul.f32 %v6398, %v6393
        %v6400 = vadd.f32 %v6393, %v6399
        %v6401 = vmul.f32 %v6400, 0.7978846
        %v6402 = vtanh.pop %v6401
        %v6403 = vadd.f32 %v6402, 1.0
        %v6404 = vmul.f32 %v6396, %v6403
        %v6405 = vld [vmem:[%s13] sm:$0xff]
        %v6406 = vld [vmem:[%s13 + $0x8] sm:$0xff]
        %v6407 = vld [vmem:[%s13 + $0x10] sm:$0xff]
        %v6408 = vld [vmem:[%s13 + $0x18] sm:$0xff]
        %v6409 = vld [vmem:[%s13 + $0x20] sm:$0xff]
        %v6410 = vld [vmem:[%s13 + $0x28] sm:$0xff]
        %v6411 = vld [vmem:[%s13 + $0x30] sm:$0xff]
        %v6412 = vld [vmem:[%s13 + $0x38] sm:$0xff]
        %v6413 = vld [vmem:[%s13 + $0x40] sm:$0xff]
        %v6414 = vld [vmem:[%s13 + $0x48] sm:$0xff]
        %v6415 = vld [vmem:[%s13 + $0x50] sm:$0xff]
        %v6416 = vld [vmem:[%s13 + $0x58] sm:$0xff]
        %v6417 = vld [vmem:[%s13 + $0x60] sm:$0xff]
        %v6418 = vld [vmem:[%s13 + $0x68] sm:$0xff]
        %v6419 = vld [vmem:[%s13 + $0x70] sm:$0xff]
        %v6420 = vld [vmem:[%s13 + $0x78] sm:$0xff]
        %v6421 = vld [vmem:[%s14] sm:$0x1]
        %v6423 = vlaneseq
        %v6424 = vshrl.u32 %v6423, 7
        %v6425 = vsub.s32 0, %v6424
        %v6426 = vrot.slane %v6421, %v6425
        %6428 = vmatprep.subr.mxu0 0.0
        %v6429 = vand.u32 %v6420, 4294901760
        %6430 = vmatpush1.msra.mxu0 %v6429
        %6431 = vmatprep.subr.mxu0 0.0
        %v6432 = vand.u32 %v6419, 4294901760
        %6433 = vmatpush1.msra.mxu0 %v6432
        %6434 = vmatprep.subr.mxu0 0.0
        %v6435 = vand.u32 %v6418, 4294901760
        %6436 = vmatpush1.msra.mxu0 %v6435
        %6437 = vmatprep.subr.mxu0 0.0
        %v6438 = vand.u32 %v6417, 4294901760
        %6439 = vmatpush1.msra.mxu0 %v6438
        %6440 = vmatprep.subr.mxu0 0.0
        %v6441 = vand.u32 %v6416, 4294901760
        %6442 = vmatpush1.msra.mxu0 %v6441
        %6443 = vmatprep.subr.mxu0 0.0
        %v6444 = vand.u32 %v6415, 4294901760
        %6445 = vmatpush1.msra.mxu0 %v6444
        %6446 = vmatprep.subr.mxu0 0.0
        %v6447 = vand.u32 %v6414, 4294901760
        %6448 = vmatpush1.msra.mxu0 %v6447
        %6449 = vmatprep.subr.mxu0 0.0
        %v6450 = vand.u32 %v6413, 4294901760
        %6451 = vmatpush1.msra.mxu0 %v6450
        %6452 = vmatprep.subr.mxu0 0.0
        %v6453 = vand.u32 %v6412, 4294901760
        %6454 = vmatpush1.msra.mxu0 %v6453
        %6455 = vmatprep.subr.mxu0 0.0
        %v6456 = vand.u32 %v6411, 4294901760
        %6457 = vmatpush1.msra.mxu0 %v6456
        %6458 = vmatprep.subr.mxu0 0.0
        %v6459 = vand.u32 %v6410, 4294901760
        %6460 = vmatpush1.msra.mxu0 %v6459
        %6461 = vmatprep.subr.mxu0 0.0
        %v6462 = vand.u32 %v6409, 4294901760
        %6463 = vmatpush1.msra.mxu0 %v6462
        %6464 = vmatprep.subr.mxu0 0.0
        %v6465 = vand.u32 %v6408, 4294901760
        %6466 = vmatpush1.msra.mxu0 %v6465
        %6467 = vmatprep.subr.mxu0 0.0
        %v6468 = vand.u32 %v6407, 4294901760
        %6469 = vmatpush1.msra.mxu0 %v6468
        %6470 = vmatprep.subr.mxu0 0.0
        %v6471 = vand.u32 %v6406, 4294901760
        %6472 = vmatpush1.msra.mxu0 %v6471
        %6473 = vmatprep.subr.mxu0 0.0
        %v6474 = vand.u32 %v6405, 4294901760
        %6475 = vmatpush1.msra.mxu0 %v6474
        %6476 = vmatprep.subr.mxu0 0.0
        %6477 = vmatpush2.msra.mxu0 0.0
        %6478 = vmatprep.subr.mxu0 0.0
        %6479 = vmatpush2.msra.mxu0 0.0
        %6480 = vmatprep.subr.mxu0 0.0
        %6481 = vmatpush2.msra.mxu0 0.0
        %6482 = vmatprep.subr.mxu0 0.0
        %6483 = vmatpush2.msra.mxu0 0.0
        %6484 = vmatprep.subr.mxu0 0.0
        %6485 = vmatpush2.msra.mxu0 0.0
        %6486 = vmatprep.subr.mxu0 0.0
        %6487 = vmatpush2.msra.mxu0 0.0
        %6488 = vmatprep.subr.mxu0 0.0
        %6489 = vmatpush2.msra.mxu0 0.0
        %6490 = vmatprep.subr.mxu0 0.0
        %6491 = vmatpush2.msra.mxu0 0.0
        %6492 = vmatprep.subr.mxu0 0.0
        %6493 = vmatpush2.msra.mxu0 0.0
        %6494 = vmatprep.subr.mxu0 0.0
        %6495 = vmatpush2.msra.mxu0 0.0
        %6496 = vmatprep.subr.mxu0 0.0
        %6497 = vmatpush2.msra.mxu0 0.0
        %6498 = vmatprep.subr.mxu0 0.0
        %6499 = vmatpush2.msra.mxu0 0.0
        %6500 = vmatprep.subr.mxu0 0.0
        %6501 = vmatpush2.msra.mxu0 0.0
        %6502 = vmatprep.subr.mxu0 0.0
        %6503 = vmatpush2.msra.mxu0 0.0
        %6504 = vmatprep.subr.mxu0 0.0
        %6505 = vmatpush2.msra.mxu0 0.0
        %6506 = vmatprep.subr.mxu0 0.0
        %6507 = vmatpush2.msra.mxu0 0.0
        %6508 = vmatprep.mubr.f32.mxu0 0.0
        %v6509 = vand.u32 %v6404, 4294901760
        %v6510 = vsub.f32 %v6404, %v6509
        %v6511 = vand.u32 %v6510, 4294901760
        %v6512 = vsub.f32 %v6510, %v6511
        %v6513 = vand.u32 %v6512, 4294901760
        %6514 = vmatmul.mubr.f32.gmra.mxu0 %v6513
        %v6515 = vpop.f32.mrf.mxu0
        %v6516 = vadd.f32 %v6426, %v6515
        %v6517 = vpop.f32.mrf.mxu0
        %6518 = vdwg.mxu0
        %6519 = vmatprep.subr.mxu0 0.0
        %v6520 = vand.u32 %v6420, 4294901760
        %v6521 = vsub.f32 %v6420, %v6520
        %v6522 = vand.u32 %v6521, 4294901760
        %v6523 = vsub.f32 %v6521, %v6522
        %v6524 = vand.u32 %v6523, 4294901760
        %6525 = vmatpush1.msra.mxu0 %v6524
        %6526 = vmatprep.subr.mxu0 0.0
        %v6527 = vand.u32 %v6419, 4294901760
        %v6528 = vsub.f32 %v6419, %v6527
        %v6529 = vand.u32 %v6528, 4294901760
        %v6530 = vsub.f32 %v6528, %v6529
        %v6531 = vand.u32 %v6530, 4294901760
        %6532 = vmatpush1.msra.mxu0 %v6531
        %6533 = vmatprep.subr.mxu0 0.0
        %v6534 = vand.u32 %v6418, 4294901760
        %v6535 = vsub.f32 %v6418, %v6534
        %v6536 = vand.u32 %v6535, 4294901760
        %v6537 = vsub.f32 %v6535, %v6536
        %v6538 = vand.u32 %v6537, 4294901760
        %6539 = vmatpush1.msra.mxu0 %v6538
        %6540 = vmatprep.subr.mxu0 0.0
        %v6541 = vand.u32 %v6417, 4294901760
        %v6542 = vsub.f32 %v6417, %v6541
        %v6543 = vand.u32 %v6542, 4294901760
        %v6544 = vsub.f32 %v6542, %v6543
        %v6545 = vand.u32 %v6544, 4294901760
        %6546 = vmatpush1.msra.mxu0 %v6545
        %6547 = vmatprep.subr.mxu0 0.0
        %v6548 = vand.u32 %v6416, 4294901760
        %v6549 = vsub.f32 %v6416, %v6548
        %v6550 = vand.u32 %v6549, 4294901760
        %v6551 = vsub.f32 %v6549, %v6550
        %v6552 = vand.u32 %v6551, 4294901760
        %6553 = vmatpush1.msra.mxu0 %v6552
        %6554 = vmatprep.subr.mxu0 0.0
        %v6555 = vand.u32 %v6415, 4294901760
        %v6556 = vsub.f32 %v6415, %v6555
        %v6557 = vand.u32 %v6556, 4294901760
        %v6558 = vsub.f32 %v6556, %v6557
        %v6559 = vand.u32 %v6558, 4294901760
        %6560 = vmatpush1.msra.mxu0 %v6559
        %6561 = vmatprep.subr.mxu0 0.0
        %v6562 = vand.u32 %v6414, 4294901760
        %v6563 = vsub.f32 %v6414, %v6562
        %v6564 = vand.u32 %v6563, 4294901760
        %v6565 = vsub.f32 %v6563, %v6564
        %v6566 = vand.u32 %v6565, 4294901760
        %6567 = vmatpush1.msra.mxu0 %v6566
        %6568 = vmatprep.subr.mxu0 0.0
        %v6569 = vand.u32 %v6413, 4294901760
        %v6570 = vsub.f32 %v6413, %v6569
        %v6571 = vand.u32 %v6570, 4294901760
        %v6572 = vsub.f32 %v6570, %v6571
        %v6573 = vand.u32 %v6572, 4294901760
        %6574 = vmatpush1.msra.mxu0 %v6573
        %6575 = vmatprep.subr.mxu0 0.0
        %v6576 = vand.u32 %v6412, 4294901760
        %v6577 = vsub.f32 %v6412, %v6576
        %v6578 = vand.u32 %v6577, 4294901760
        %v6579 = vsub.f32 %v6577, %v6578
        %v6580 = vand.u32 %v6579, 4294901760
        %6581 = vmatpush1.msra.mxu0 %v6580
        %6582 = vmatprep.subr.mxu0 0.0
        %v6583 = vand.u32 %v6411, 4294901760
        %v6584 = vsub.f32 %v6411, %v6583
        %v6585 = vand.u32 %v6584, 4294901760
        %v6586 = vsub.f32 %v6584, %v6585
        %v6587 = vand.u32 %v6586, 4294901760
        %6588 = vmatpush1.msra.mxu0 %v6587
        %6589 = vmatprep.subr.mxu0 0.0
        %v6590 = vand.u32 %v6410, 4294901760
        %v6591 = vsub.f32 %v6410, %v6590
        %v6592 = vand.u32 %v6591, 4294901760
        %v6593 = vsub.f32 %v6591, %v6592
        %v6594 = vand.u32 %v6593, 4294901760
        %6595 = vmatpush1.msra.mxu0 %v6594
        %6596 = vmatprep.subr.mxu0 0.0
        %v6597 = vand.u32 %v6409, 4294901760
        %v6598 = vsub.f32 %v6409, %v6597
        %v6599 = vand.u32 %v6598, 4294901760
        %v6600 = vsub.f32 %v6598, %v6599
        %v6601 = vand.u32 %v6600, 4294901760
        %6602 = vmatpush1.msra.mxu0 %v6601
        %6603 = vmatprep.subr.mxu0 0.0
        %v6604 = vand.u32 %v6408, 4294901760
        %v6605 = vsub.f32 %v6408, %v6604
        %v6606 = vand.u32 %v6605, 4294901760
        %v6607 = vsub.f32 %v6605, %v6606
        %v6608 = vand.u32 %v6607, 4294901760
        %6609 = vmatpush1.msra.mxu0 %v6608
        %6610 = vmatprep.subr.mxu0 0.0
        %v6611 = vand.u32 %v6407, 4294901760
        %v6612 = vsub.f32 %v6407, %v6611
        %v6613 = vand.u32 %v6612, 4294901760
        %v6614 = vsub.f32 %v6612, %v6613
        %v6615 = vand.u32 %v6614, 4294901760
        %6616 = vmatpush1.msra.mxu0 %v6615
        %6617 = vmatprep.subr.mxu0 0.0
        %v6618 = vand.u32 %v6406, 4294901760
        %v6619 = vsub.f32 %v6406, %v6618
        %v6620 = vand.u32 %v6619, 4294901760
        %v6621 = vsub.f32 %v6619, %v6620
        %v6622 = vand.u32 %v6621, 4294901760
        %6623 = vmatpush1.msra.mxu0 %v6622
        %6624 = vmatprep.subr.mxu0 0.0
        %v6625 = vand.u32 %v6405, 4294901760
        %v6626 = vsub.f32 %v6405, %v6625
        %v6627 = vand.u32 %v6626, 4294901760
        %v6628 = vsub.f32 %v6626, %v6627
        %v6629 = vand.u32 %v6628, 4294901760
        %6630 = vmatpush1.msra.mxu0 %v6629
        %6631 = vmatprep.subr.mxu0 0.0
        %6632 = vmatpush2.msra.mxu0 0.0
        %6633 = vmatprep.subr.mxu0 0.0
        %6634 = vmatpush2.msra.mxu0 0.0
        %6635 = vmatprep.subr.mxu0 0.0
        %6636 = vmatpush2.msra.mxu0 0.0
        %6637 = vmatprep.subr.mxu0 0.0
        %6638 = vmatpush2.msra.mxu0 0.0
        %6639 = vmatprep.subr.mxu0 0.0
        %6640 = vmatpush2.msra.mxu0 0.0
        %6641 = vmatprep.subr.mxu0 0.0
        %6642 = vmatpush2.msra.mxu0 0.0
        %6643 = vmatprep.subr.mxu0 0.0
        %6644 = vmatpush2.msra.mxu0 0.0
        %6645 = vmatprep.subr.mxu0 0.0
        %6646 = vmatpush2.msra.mxu0 0.0
        %6647 = vmatprep.subr.mxu0 0.0
        %6648 = vmatpush2.msra.mxu0 0.0
        %6649 = vmatprep.subr.mxu0 0.0
        %6650 = vmatpush2.msra.mxu0 0.0
        %6651 = vmatprep.subr.mxu0 0.0
        %6652 = vmatpush2.msra.mxu0 0.0
        %6653 = vmatprep.subr.mxu0 0.0
        %6654 = vmatpush2.msra.mxu0 0.0
        %6655 = vmatprep.subr.mxu0 0.0
        %6656 = vmatpush2.msra.mxu0 0.0
        %6657 = vmatprep.subr.mxu0 0.0
        %6658 = vmatpush2.msra.mxu0 0.0
        %6659 = vmatprep.subr.mxu0 0.0
        %6660 = vmatpush2.msra.mxu0 0.0
        %6661 = vmatprep.subr.mxu0 0.0
        %6662 = vmatpush2.msra.mxu0 0.0
        %6663 = vmatprep.mubr.f32.mxu0 0.0
        %v6664 = vand.u32 %v6404, 4294901760
        %6665 = vmatmul.mubr.f32.gmra.mxu0 %v6664
        %v6666 = vpop.f32.mrf.mxu0
        %v6667 = vadd.f32 %v6516, %v6666
        %v6668 = vpop.f32.mrf.mxu0
        %6669 = vdwg.mxu0
        %6670 = vmatprep.subr.mxu0 0.0
        %v6671 = vand.u32 %v6420, 4294901760
        %v6672 = vsub.f32 %v6420, %v6671
        %6673 = vmatpush1.msra.mxu0 %v6672
        %6674 = vmatprep.subr.mxu0 0.0
        %v6675 = vand.u32 %v6419, 4294901760
        %v6676 = vsub.f32 %v6419, %v6675
        %6677 = vmatpush1.msra.mxu0 %v6676
        %6678 = vmatprep.subr.mxu0 0.0
        %v6679 = vand.u32 %v6418, 4294901760
        %v6680 = vsub.f32 %v6418, %v6679
        %6681 = vmatpush1.msra.mxu0 %v6680
        %6682 = vmatprep.subr.mxu0 0.0
        %v6683 = vand.u32 %v6417, 4294901760
        %v6684 = vsub.f32 %v6417, %v6683
        %6685 = vmatpush1.msra.mxu0 %v6684
        %6686 = vmatprep.subr.mxu0 0.0
        %v6687 = vand.u32 %v6416, 4294901760
        %v6688 = vsub.f32 %v6416, %v6687
        %6689 = vmatpush1.msra.mxu0 %v6688
        %6690 = vmatprep.subr.mxu0 0.0
        %v6691 = vand.u32 %v6415, 4294901760
        %v6692 = vsub.f32 %v6415, %v6691
        %6693 = vmatpush1.msra.mxu0 %v6692
        %6694 = vmatprep.subr.mxu0 0.0
        %v6695 = vand.u32 %v6414, 4294901760
        %v6696 = vsub.f32 %v6414, %v6695
        %6697 = vmatpush1.msra.mxu0 %v6696
        %6698 = vmatprep.subr.mxu0 0.0
        %v6699 = vand.u32 %v6413, 4294901760
        %v6700 = vsub.f32 %v6413, %v6699
        %6701 = vmatpush1.msra.mxu0 %v6700
        %6702 = vmatprep.subr.mxu0 0.0
        %v6703 = vand.u32 %v6412, 4294901760
        %v6704 = vsub.f32 %v6412, %v6703
        %6705 = vmatpush1.msra.mxu0 %v6704
        %6706 = vmatprep.subr.mxu0 0.0
        %v6707 = vand.u32 %v6411, 4294901760
        %v6708 = vsub.f32 %v6411, %v6707
        %6709 = vmatpush1.msra.mxu0 %v6708
        %6710 = vmatprep.subr.mxu0 0.0
        %v6711 = vand.u32 %v6410, 4294901760
        %v6712 = vsub.f32 %v6410, %v6711
        %6713 = vmatpush1.msra.mxu0 %v6712
        %6714 = vmatprep.subr.mxu0 0.0
        %v6715 = vand.u32 %v6409, 4294901760
        %v6716 = vsub.f32 %v6409, %v6715
        %6717 = vmatpush1.msra.mxu0 %v6716
        %6718 = vmatprep.subr.mxu0 0.0
        %v6719 = vand.u32 %v6408, 4294901760
        %v6720 = vsub.f32 %v6408, %v6719
        %6721 = vmatpush1.msra.mxu0 %v6720
        %6722 = vmatprep.subr.mxu0 0.0
        %v6723 = vand.u32 %v6407, 4294901760
        %v6724 = vsub.f32 %v6407, %v6723
        %6725 = vmatpush1.msra.mxu0 %v6724
        %6726 = vmatprep.subr.mxu0 0.0
        %v6727 = vand.u32 %v6406, 4294901760
        %v6728 = vsub.f32 %v6406, %v6727
        %6729 = vmatpush1.msra.mxu0 %v6728
        %6730 = vmatprep.subr.mxu0 0.0
        %v6731 = vand.u32 %v6405, 4294901760
        %v6732 = vsub.f32 %v6405, %v6731
        %6733 = vmatpush1.msra.mxu0 %v6732
        %6734 = vmatprep.subr.mxu0 0.0
        %6735 = vmatpush2.msra.mxu0 0.0
        %6736 = vmatprep.subr.mxu0 0.0
        %6737 = vmatpush2.msra.mxu0 0.0
        %6738 = vmatprep.subr.mxu0 0.0
        %6739 = vmatpush2.msra.mxu0 0.0
        %6740 = vmatprep.subr.mxu0 0.0
        %6741 = vmatpush2.msra.mxu0 0.0
        %6742 = vmatprep.subr.mxu0 0.0
        %6743 = vmatpush2.msra.mxu0 0.0
        %6744 = vmatprep.subr.mxu0 0.0
        %6745 = vmatpush2.msra.mxu0 0.0
        %6746 = vmatprep.subr.mxu0 0.0
        %6747 = vmatpush2.msra.mxu0 0.0
        %6748 = vmatprep.subr.mxu0 0.0
        %6749 = vmatpush2.msra.mxu0 0.0
        %6750 = vmatprep.subr.mxu0 0.0
        %6751 = vmatpush2.msra.mxu0 0.0
        %6752 = vmatprep.subr.mxu0 0.0
        %6753 = vmatpush2.msra.mxu0 0.0
        %6754 = vmatprep.subr.mxu0 0.0
        %6755 = vmatpush2.msra.mxu0 0.0
        %6756 = vmatprep.subr.mxu0 0.0
        %6757 = vmatpush2.msra.mxu0 0.0
        %6758 = vmatprep.subr.mxu0 0.0
        %6759 = vmatpush2.msra.mxu0 0.0
        %6760 = vmatprep.subr.mxu0 0.0
        %6761 = vmatpush2.msra.mxu0 0.0
        %6762 = vmatprep.subr.mxu0 0.0
        %6763 = vmatpush2.msra.mxu0 0.0
        %6764 = vmatprep.subr.mxu0 0.0
        %6765 = vmatpush2.msra.mxu0 0.0
        %6766 = vmatprep.mubr.f32.mxu0 0.0
        %v6767 = vand.u32 %v6404, 4294901760
        %v6768 = vsub.f32 %v6404, %v6767
        %6769 = vmatmul.mubr.f32.gmra.mxu0 %v6768
        %v6770 = vpop.f32.mrf.mxu0
        %v6771 = vadd.f32 %v6667, %v6770
        %v6772 = vpop.f32.mrf.mxu0
        %6773 = vdwg.mxu0
        %6774 = vmatprep.subr.mxu0 0.0
        %v6775 = vand.u32 %v6420, 4294901760
        %6776 = vmatpush1.msra.mxu0 %v6775
        %6777 = vmatprep.subr.mxu0 0.0
        %v6778 = vand.u32 %v6419, 4294901760
        %6779 = vmatpush1.msra.mxu0 %v6778
        %6780 = vmatprep.subr.mxu0 0.0
        %v6781 = vand.u32 %v6418, 4294901760
        %6782 = vmatpush1.msra.mxu0 %v6781
        %6783 = vmatprep.subr.mxu0 0.0
        %v6784 = vand.u32 %v6417, 4294901760
        %6785 = vmatpush1.msra.mxu0 %v6784
        %6786 = vmatprep.subr.mxu0 0.0
        %v6787 = vand.u32 %v6416, 4294901760
        %6788 = vmatpush1.msra.mxu0 %v6787
        %6789 = vmatprep.subr.mxu0 0.0
        %v6790 = vand.u32 %v6415, 4294901760
        %6791 = vmatpush1.msra.mxu0 %v6790
        %6792 = vmatprep.subr.mxu0 0.0
        %v6793 = vand.u32 %v6414, 4294901760
        %6794 = vmatpush1.msra.mxu0 %v6793
        %6795 = vmatprep.subr.mxu0 0.0
        %v6796 = vand.u32 %v6413, 4294901760
        %6797 = vmatpush1.msra.mxu0 %v6796
        %6798 = vmatprep.subr.mxu0 0.0
        %v6799 = vand.u32 %v6412, 4294901760
        %6800 = vmatpush1.msra.mxu0 %v6799
        %6801 = vmatprep.subr.mxu0 0.0
        %v6802 = vand.u32 %v6411, 4294901760
        %6803 = vmatpush1.msra.mxu0 %v6802
        %6804 = vmatprep.subr.mxu0 0.0
        %v6805 = vand.u32 %v6410, 4294901760
        %6806 = vmatpush1.msra.mxu0 %v6805
        %6807 = vmatprep.subr.mxu0 0.0
        %v6808 = vand.u32 %v6409, 4294901760
        %6809 = vmatpush1.msra.mxu0 %v6808
        %6810 = vmatprep.subr.mxu0 0.0
        %v6811 = vand.u32 %v6408, 4294901760
        %6812 = vmatpush1.msra.mxu0 %v6811
        %6813 = vmatprep.subr.mxu0 0.0
        %v6814 = vand.u32 %v6407, 4294901760
        %6815 = vmatpush1.msra.mxu0 %v6814
        %6816 = vmatprep.subr.mxu0 0.0
        %v6817 = vand.u32 %v6406, 4294901760
        %6818 = vmatpush1.msra.mxu0 %v6817
        %6819 = vmatprep.subr.mxu0 0.0
        %v6820 = vand.u32 %v6405, 4294901760
        %6821 = vmatpush1.msra.mxu0 %v6820
        %6822 = vmatprep.subr.mxu0 0.0
        %6823 = vmatpush2.msra.mxu0 0.0
        %6824 = vmatprep.subr.mxu0 0.0
        %6825 = vmatpush2.msra.mxu0 0.0
        %6826 = vmatprep.subr.mxu0 0.0
        %6827 = vmatpush2.msra.mxu0 0.0
        %6828 = vmatprep.subr.mxu0 0.0
        %6829 = vmatpush2.msra.mxu0 0.0
        %6830 = vmatprep.subr.mxu0 0.0
        %6831 = vmatpush2.msra.mxu0 0.0
        %6832 = vmatprep.subr.mxu0 0.0
        %6833 = vmatpush2.msra.mxu0 0.0
        %6834 = vmatprep.subr.mxu0 0.0
        %6835 = vmatpush2.msra.mxu0 0.0
        %6836 = vmatprep.subr.mxu0 0.0
        %6837 = vmatpush2.msra.mxu0 0.0
        %6838 = vmatprep.subr.mxu0 0.0
        %6839 = vmatpush2.msra.mxu0 0.0
        %6840 = vmatprep.subr.mxu0 0.0
        %6841 = vmatpush2.msra.mxu0 0.0
        %6842 = vmatprep.subr.mxu0 0.0
        %6843 = vmatpush2.msra.mxu0 0.0
        %6844 = vmatprep.subr.mxu0 0.0
        %6845 = vmatpush2.msra.mxu0 0.0
        %6846 = vmatprep.subr.mxu0 0.0
        %6847 = vmatpush2.msra.mxu0 0.0
        %6848 = vmatprep.subr.mxu0 0.0
        %6849 = vmatpush2.msra.mxu0 0.0
        %6850 = vmatprep.subr.mxu0 0.0
        %6851 = vmatpush2.msra.mxu0 0.0
        %6852 = vmatprep.subr.mxu0 0.0
        %6853 = vmatpush2.msra.mxu0 0.0
        %6854 = vmatprep.mubr.f32.mxu0 0.0
        %v6855 = vand.u32 %v6404, 4294901760
        %v6856 = vsub.f32 %v6404, %v6855
        %v6857 = vand.u32 %v6856, 4294901760
        %6858 = vmatmul.mubr.f32.gmra.mxu0 %v6857
        %v6859 = vpop.f32.mrf.mxu0
        %v6860 = vadd.f32 %v6771, %v6859
        %v6861 = vpop.f32.mrf.mxu0
        %6862 = vdwg.mxu0
        %6863 = vmatprep.subr.mxu0 0.0
        %v6864 = vand.u32 %v6420, 4294901760
        %v6865 = vsub.f32 %v6420, %v6864
        %v6866 = vand.u32 %v6865, 4294901760
        %6867 = vmatpush1.msra.mxu0 %v6866
        %6868 = vmatprep.subr.mxu0 0.0
        %v6869 = vand.u32 %v6419, 4294901760
        %v6870 = vsub.f32 %v6419, %v6869
        %v6871 = vand.u32 %v6870, 4294901760
        %6872 = vmatpush1.msra.mxu0 %v6871
        %6873 = vmatprep.subr.mxu0 0.0
        %v6874 = vand.u32 %v6418, 4294901760
        %v6875 = vsub.f32 %v6418, %v6874
        %v6876 = vand.u32 %v6875, 4294901760
        %6877 = vmatpush1.msra.mxu0 %v6876
        %6878 = vmatprep.subr.mxu0 0.0
        %v6879 = vand.u32 %v6417, 4294901760
        %v6880 = vsub.f32 %v6417, %v6879
        %v6881 = vand.u32 %v6880, 4294901760
        %6882 = vmatpush1.msra.mxu0 %v6881
        %6883 = vmatprep.subr.mxu0 0.0
        %v6884 = vand.u32 %v6416, 4294901760
        %v6885 = vsub.f32 %v6416, %v6884
        %v6886 = vand.u32 %v6885, 4294901760
        %6887 = vmatpush1.msra.mxu0 %v6886
        %6888 = vmatprep.subr.mxu0 0.0
        %v6889 = vand.u32 %v6415, 4294901760
        %v6890 = vsub.f32 %v6415, %v6889
        %v6891 = vand.u32 %v6890, 4294901760
        %6892 = vmatpush1.msra.mxu0 %v6891
        %6893 = vmatprep.subr.mxu0 0.0
        %v6894 = vand.u32 %v6414, 4294901760
        %v6895 = vsub.f32 %v6414, %v6894
        %v6896 = vand.u32 %v6895, 4294901760
        %6897 = vmatpush1.msra.mxu0 %v6896
        %6898 = vmatprep.subr.mxu0 0.0
        %v6899 = vand.u32 %v6413, 4294901760
        %v6900 = vsub.f32 %v6413, %v6899
        %v6901 = vand.u32 %v6900, 4294901760
        %6902 = vmatpush1.msra.mxu0 %v6901
        %6903 = vmatprep.subr.mxu0 0.0
        %v6904 = vand.u32 %v6412, 4294901760
        %v6905 = vsub.f32 %v6412, %v6904
        %v6906 = vand.u32 %v6905, 4294901760
        %6907 = vmatpush1.msra.mxu0 %v6906
        %6908 = vmatprep.subr.mxu0 0.0
        %v6909 = vand.u32 %v6411, 4294901760
        %v6910 = vsub.f32 %v6411, %v6909
        %v6911 = vand.u32 %v6910, 4294901760
        %6912 = vmatpush1.msra.mxu0 %v6911
        %6913 = vmatprep.subr.mxu0 0.0
        %v6914 = vand.u32 %v6410, 4294901760
        %v6915 = vsub.f32 %v6410, %v6914
        %v6916 = vand.u32 %v6915, 4294901760
        %6917 = vmatpush1.msra.mxu0 %v6916
        %6918 = vmatprep.subr.mxu0 0.0
        %v6919 = vand.u32 %v6409, 4294901760
        %v6920 = vsub.f32 %v6409, %v6919
        %v6921 = vand.u32 %v6920, 4294901760
        %6922 = vmatpush1.msra.mxu0 %v6921
        %6923 = vmatprep.subr.mxu0 0.0
        %v6924 = vand.u32 %v6408, 4294901760
        %v6925 = vsub.f32 %v6408, %v6924
        %v6926 = vand.u32 %v6925, 4294901760
        %6927 = vmatpush1.msra.mxu0 %v6926
        %6928 = vmatprep.subr.mxu0 0.0
        %v6929 = vand.u32 %v6407, 4294901760
        %v6930 = vsub.f32 %v6407, %v6929
        %v6931 = vand.u32 %v6930, 4294901760
        %6932 = vmatpush1.msra.mxu0 %v6931
        %6933 = vmatprep.subr.mxu0 0.0
        %v6934 = vand.u32 %v6406, 4294901760
        %v6935 = vsub.f32 %v6406, %v6934
        %v6936 = vand.u32 %v6935, 4294901760
        %6937 = vmatpush1.msra.mxu0 %v6936
        %6938 = vmatprep.subr.mxu0 0.0
        %v6939 = vand.u32 %v6405, 4294901760
        %v6940 = vsub.f32 %v6405, %v6939
        %v6941 = vand.u32 %v6940, 4294901760
        %6942 = vmatpush1.msra.mxu0 %v6941
        %6943 = vmatprep.subr.mxu0 0.0
        %6944 = vmatpush2.msra.mxu0 0.0
        %6945 = vmatprep.subr.mxu0 0.0
        %6946 = vmatpush2.msra.mxu0 0.0
        %6947 = vmatprep.subr.mxu0 0.0
        %6948 = vmatpush2.msra.mxu0 0.0
        %6949 = vmatprep.subr.mxu0 0.0
        %6950 = vmatpush2.msra.mxu0 0.0
        %6951 = vmatprep.subr.mxu0 0.0
        %6952 = vmatpush2.msra.mxu0 0.0
        %6953 = vmatprep.subr.mxu0 0.0
        %6954 = vmatpush2.msra.mxu0 0.0
        %6955 = vmatprep.subr.mxu0 0.0
        %6956 = vmatpush2.msra.mxu0 0.0
        %6957 = vmatprep.subr.mxu0 0.0
        %6958 = vmatpush2.msra.mxu0 0.0
        %6959 = vmatprep.subr.mxu0 0.0
        %6960 = vmatpush2.msra.mxu0 0.0
        %6961 = vmatprep.subr.mxu0 0.0
        %6962 = vmatpush2.msra.mxu0 0.0
        %6963 = vmatprep.subr.mxu0 0.0
        %6964 = vmatpush2.msra.mxu0 0.0
        %6965 = vmatprep.subr.mxu0 0.0
        %6966 = vmatpush2.msra.mxu0 0.0
        %6967 = vmatprep.subr.mxu0 0.0
        %6968 = vmatpush2.msra.mxu0 0.0
        %6969 = vmatprep.subr.mxu0 0.0
        %6970 = vmatpush2.msra.mxu0 0.0
        %6971 = vmatprep.subr.mxu0 0.0
        %6972 = vmatpush2.msra.mxu0 0.0
        %6973 = vmatprep.subr.mxu0 0.0
        %6974 = vmatpush2.msra.mxu0 0.0
        %6975 = vmatprep.mubr.f32.mxu0 0.0
        %v6976 = vand.u32 %v6404, 4294901760
        %6977 = vmatmul.mubr.f32.gmra.mxu0 %v6976
        %v6978 = vpop.f32.mrf.mxu0
        %v6979 = vadd.f32 %v6860, %v6978
        %v6980 = vpop.f32.mrf.mxu0
        %6981 = vdwg.mxu0
        %6982 = vmatprep.subr.mxu0 0.0
        %v6983 = vand.u32 %v6420, 4294901760
        %6984 = vmatpush1.msra.mxu0 %v6983
        %6985 = vmatprep.subr.mxu0 0.0
        %v6986 = vand.u32 %v6419, 4294901760
        %6987 = vmatpush1.msra.mxu0 %v6986
        %6988 = vmatprep.subr.mxu0 0.0
        %v6989 = vand.u32 %v6418, 4294901760
        %6990 = vmatpush1.msra.mxu0 %v6989
        %6991 = vmatprep.subr.mxu0 0.0
        %v6992 = vand.u32 %v6417, 4294901760
        %6993 = vmatpush1.msra.mxu0 %v6992
        %6994 = vmatprep.subr.mxu0 0.0
        %v6995 = vand.u32 %v6416, 4294901760
        %6996 = vmatpush1.msra.mxu0 %v6995
        %6997 = vmatprep.subr.mxu0 0.0
        %v6998 = vand.u32 %v6415, 4294901760
        %6999 = vmatpush1.msra.mxu0 %v6998
        %7000 = vmatprep.subr.mxu0 0.0
        %v7001 = vand.u32 %v6414, 4294901760
        %7002 = vmatpush1.msra.mxu0 %v7001
        %7003 = vmatprep.subr.mxu0 0.0
        %v7004 = vand.u32 %v6413, 4294901760
        %7005 = vmatpush1.msra.mxu0 %v7004
        %7006 = vmatprep.subr.mxu0 0.0
        %v7007 = vand.u32 %v6412, 4294901760
        %7008 = vmatpush1.msra.mxu0 %v7007
        %7009 = vmatprep.subr.mxu0 0.0
        %v7010 = vand.u32 %v6411, 4294901760
        %7011 = vmatpush1.msra.mxu0 %v7010
        %7012 = vmatprep.subr.mxu0 0.0
        %v7013 = vand.u32 %v6410, 4294901760
        %7014 = vmatpush1.msra.mxu0 %v7013
        %7015 = vmatprep.subr.mxu0 0.0
        %v7016 = vand.u32 %v6409, 4294901760
        %7017 = vmatpush1.msra.mxu0 %v7016
        %7018 = vmatprep.subr.mxu0 0.0
        %v7019 = vand.u32 %v6408, 4294901760
        %7020 = vmatpush1.msra.mxu0 %v7019
        %7021 = vmatprep.subr.mxu0 0.0
        %v7022 = vand.u32 %v6407, 4294901760
        %7023 = vmatpush1.msra.mxu0 %v7022
        %7024 = vmatprep.subr.mxu0 0.0
        %v7025 = vand.u32 %v6406, 4294901760
        %7026 = vmatpush1.msra.mxu0 %v7025
        %7027 = vmatprep.subr.mxu0 0.0
        %v7028 = vand.u32 %v6405, 4294901760
        %7029 = vmatpush1.msra.mxu0 %v7028
        %7030 = vmatprep.subr.mxu0 0.0
        %7031 = vmatpush2.msra.mxu0 0.0
        %7032 = vmatprep.subr.mxu0 0.0
        %7033 = vmatpush2.msra.mxu0 0.0
        %7034 = vmatprep.subr.mxu0 0.0
        %7035 = vmatpush2.msra.mxu0 0.0
        %7036 = vmatprep.subr.mxu0 0.0
        %7037 = vmatpush2.msra.mxu0 0.0
        %7038 = vmatprep.subr.mxu0 0.0
        %7039 = vmatpush2.msra.mxu0 0.0
        %7040 = vmatprep.subr.mxu0 0.0
        %7041 = vmatpush2.msra.mxu0 0.0
        %7042 = vmatprep.subr.mxu0 0.0
        %7043 = vmatpush2.msra.mxu0 0.0
        %7044 = vmatprep.subr.mxu0 0.0
        %7045 = vmatpush2.msra.mxu0 0.0
        %7046 = vmatprep.subr.mxu0 0.0
        %7047 = vmatpush2.msra.mxu0 0.0
        %7048 = vmatprep.subr.mxu0 0.0
        %7049 = vmatpush2.msra.mxu0 0.0
        %7050 = vmatprep.subr.mxu0 0.0
        %7051 = vmatpush2.msra.mxu0 0.0
        %7052 = vmatprep.subr.mxu0 0.0
        %7053 = vmatpush2.msra.mxu0 0.0
        %7054 = vmatprep.subr.mxu0 0.0
        %7055 = vmatpush2.msra.mxu0 0.0
        %7056 = vmatprep.subr.mxu0 0.0
        %7057 = vmatpush2.msra.mxu0 0.0
        %7058 = vmatprep.subr.mxu0 0.0
        %7059 = vmatpush2.msra.mxu0 0.0
        %7060 = vmatprep.subr.mxu0 0.0
        %7061 = vmatpush2.msra.mxu0 0.0
        %7062 = vmatprep.mubr.f32.mxu0 0.0
        %v7063 = vand.u32 %v6404, 4294901760
        %7064 = vmatmul.mubr.f32.gmra.mxu0 %v7063
        %v7065 = vpop.f32.mrf.mxu0
        %v7066 = vadd.f32 %v6979, %v7065
        %v7067 = vpop.f32.mrf.mxu0
        %7068 = vdwg.mxu0
        %v7069 = vmul.f32 %v7066, %v598
        %v7070 = vadd.f32 %v5866, %v7069
        %7071 = vst.msk [vmem:[%s540] sm:$0xff] %vm566, %v7070
        %s7072 = sand.u32 %s372, 1
        %s7073 = scalar_lea.sflag [#allocation3], %s7072
        %s7074 = sand.u32 %s372, 1
        %s7075 = smul.addr %s7074, 8
        %s7076 = scalar_lea.vmem [#allocation2], %s7075
        %s7077 = sand.u32 %s398, 1
        %s7078 = scalar_lea.sflag [#allocation5], %s7077
        %s7079 = sand.u32 %s398, 1
        %s7080 = smul.addr %s7079, 32
        %s7081 = scalar_lea.vmem [#allocation4], %s7080
        // Predicated region
        $region81: #{tpu_custom_call.1} parent=79 // pred_check
          %p7082 = pneg %p382
        $region82: #{tpu_custom_call.1} parent=79 // pred_check_branch
          %7084 = sbr.rel (%p7082) target = $region84
        $region83: #{tpu_custom_call.1} parent=79 // pred_region
          %s7086 = ssub.s32 128, 128
          %7087 = vsyncadd %s7073, %s7086
          %s7088 = smul.addr %s34, 128
          %s7089 = scalar_lea.hbm %s15, %s7088
          %s7091 = sshll.u32 %s7076, 4
          %s7092 = int_to_ptr.vmem [resolvable:$true] %s7091
          %7094 = dma.vmem_to_hbm [thread:$0]  %s7092, 128, %s7089, %s7073
        $region84: #{tpu_custom_call.1} parent=79 // pred_fallthru
          _
        // Predicated region
        $region85: #{tpu_custom_call.1} parent=79 // pred_check
          %p7095 = pneg %p408
        $region86: #{tpu_custom_call.1} parent=79 // pred_check_branch
          %7097 = sbr.rel (%p7095) target = $region88
        $region87: #{tpu_custom_call.1} parent=79 // pred_region
          %s7099 = ssub.s32 512, 512
          %7100 = vsyncadd %s7078, %s7099
          %s7101 = smul.addr %s34, 4
          %s7102 = smul.addr %s7101, 128
          %s7103 = scalar_lea.hbm %s16, %s7102
          %s7104 = sshll.u32 %s7081, 4
          %s7105 = int_to_ptr.vmem [resolvable:$true] %s7104
          %7110 = dma.vmem_to_hbm [thread:$0]  %s7105, 512, %s7103, %s7078, 128, 128, 8
        $region88: #{tpu_custom_call.1} parent=79 // pred_fallthru
          _
      $region80: #{tpu_custom_call.1} parent=5 // pred_fallthru
        _
      %p7111 = scmp.le.s32.totalorder 2, %s29
      // Predicated region
      $region89: #{tpu_custom_call.1} parent=5 // pred_check
        %p7112 = pneg %p7111
      $region90: #{tpu_custom_call.1} parent=5 // pred_check_branch
        %7114 = sbr.rel (%p7112) target = $region92
      $region91: #{tpu_custom_call.1} parent=5 // pred_region
        %s7115 = ssub.s32 %s29, 2
        // Predicated region
        $region93: #{tpu_custom_call.1} parent=91 // pred_check
          %p7116 = pneg %p388
        $region94: #{tpu_custom_call.1} parent=91 // pred_check_branch
          %7118 = sbr.rel (%p7116) target = $region96
        $region95: #{tpu_custom_call.1} parent=91 // pred_region
          %s7119 = sand.u32 %s373, 1
          %s7120 = scalar_lea.sflag [#allocation3], %s7119
          %s7121 = sand.u32 %s373, 1
          %s7122 = smul.addr %s7121, 8
          %s7123 = scalar_lea.vmem [#allocation2], %s7122
          %7124 = dma.done %s7120, 128
        $region96: #{tpu_custom_call.1} parent=91 // pred_fallthru
          _
        // Predicated region
        $region97: #{tpu_custom_call.1} parent=91 // pred_check
          %p7125 = pneg %p414
        $region98: #{tpu_custom_call.1} parent=91 // pred_check_branch
          %7127 = sbr.rel (%p7125) target = $region100
        $region99: #{tpu_custom_call.1} parent=91 // pred_region
          %s7128 = sand.u32 %s399, 1
          %s7129 = scalar_lea.sflag [#allocation5], %s7128
          %s7130 = sand.u32 %s399, 1
          %s7131 = smul.addr %s7130, 32
          %s7132 = scalar_lea.vmem [#allocation4], %s7131
          %7133 = dma.done %s7129, 512
        $region100: #{tpu_custom_call.1} parent=91 // pred_fallthru
          _
      $region92: #{tpu_custom_call.1} parent=5 // pred_fallthru
        _
    $region6: #{tpu_custom_call.1} parent=1 // loop_footer
      %s33 = sadd.s32 1, %s29
    $region7: #{tpu_custom_call.1} parent=1 // loop_footer_branch
      %28 = sbr.rel target = $region3
    $region8: #{tpu_custom_call.1} parent=1 // loop_exit
      _
    %7134 = vsyncpa [#allocation3], 1
    %s7135 = scalar_lea.sflag [#allocation3], 1
    %7136 = vsyncpa %s7135, 1
    %7137 = vsyncpa [#allocation5], 1
    %s7138 = scalar_lea.sflag [#allocation5], 1
    %7139 = vsyncpa %s7138, 1

</llo_original>
